<compile_context>
chip_gen: v5e
topology: v5e:2x2
jax: 0.10.0
libtpu: 0.0.40
codegen_flags: <defaults>
</compile_context>

<pallas_src>
import jax
import jax.numpy as jnp
from jax.experimental import pallas as pl
from jax.experimental.pallas import tpu as pltpu


# ---------------------------------------------------------------------------
# Fused conv-chain Pallas kernel
# ---------------------------------------------------------------------------

def _make_chain_kernel(ops, Wp, F, M, n_extra):
    """ops: sequence of ('conv', act) | ('rb',) | ('add',).

    Kernel refs (after batch-dim squeeze): x (C, F), w (n_conv, Cout, 9C) bf16,
    b (n_conv, Cout, 1) f32, mask (1, F), *extras (C, F), out (Cout, F),
    scratch: xp (C, F + 2M) f32, tap (9C, F) f32.
    """
    shifts = tuple((ky - 1) * Wp + (kx - 1) for ky in range(3) for kx in range(3))

    def kernel(*refs):
        x_ref, w_ref, b_ref, mask_ref = refs[:4]
        extra_refs = refs[4:4 + n_extra]
        o_ref = refs[4 + n_extra]
        xp_ref = refs[5 + n_extra]                  # (C, F + 2M) padded act
        tap_ref = refs[6 + n_extra]                 # (9C, F) tap stack (dot K)

        C = x_ref.shape[0]
        mask = mask_ref[...]                        # 1 interior / 0 pad+tail

        # Zero only the +/-M halo margins; the interior is rewritten per conv.
        xp_ref[:, :M] = jnp.zeros((C, M), xp_ref.dtype)
        xp_ref[:, M + F:] = jnp.zeros((C, M), xp_ref.dtype)

        def conv3x3(v, ci, act):
            # v: (C, F) f32 activation over the padded (Hp x Wp [+tail]) grid.
            xp_ref[:, M:M + F] = v * mask           # re-zero pad positions
            for t, s in enumerate(shifts):          # 9 shifted slices -> stack
                tap_ref[t * C:(t + 1) * C, :] = xp_ref[:, M + s:M + s + F]
            acc = jnp.dot(w_ref[ci],                # (Cout, 9C) bf16 weights
                          tap_ref[...].astype(jnp.bfloat16),
                          preferred_element_type=jnp.float32)
            acc = acc + b_ref[ci]                   # (Cout, 1) f32 bias
            if act == "relu":
                acc = jnp.maximum(acc, 0.0)
            elif act == "lrelu":                    # LeakyReLU(0.1)
                acc = jnp.where(acc >= 0.0, acc, 0.1 * acc)
            return acc

        v = x_ref[...].astype(jnp.float32)
        ci = 0
        ei = 0
        for op in ops:
            if op[0] == "conv":
                v = conv3x3(v, ci, op[1])
                ci += 1
            elif op[0] == "rb":                     # ResidualBlockNoBN
                h = conv3x3(v, ci, "relu")
                v = v + conv3x3(h, ci + 1, "none")  # res_scale = 1
                ci += 2
            else:                                   # cross-level skip add
                v = v + extra_refs[ei][...].astype(jnp.float32)
                ei += 1
        o_ref[...] = v.astype(o_ref.dtype)

    return kernel


def _chain_call(x, w_stack, b_stack, mask, extras, ops, *, Wp, F, M, c_feat):
    """x, extras: (N, c_feat, F); returns (N, c_feat, F) f32."""
    N = x.shape[0]
    n_extra = len(extras)
    kernel = _make_chain_kernel(tuple(ops), Wp, F, M, n_extra)

    act_spec = pl.BlockSpec((None, c_feat, F), lambda n: (n, 0, 0))
    in_specs = [
        act_spec,
        pl.BlockSpec(w_stack.shape, lambda n: (0, 0, 0)),   # resident weights
        pl.BlockSpec(b_stack.shape, lambda n: (0, 0, 0)),   # resident bias
        pl.BlockSpec(mask.shape, lambda n: (0, 0)),         # resident mask
    ] + [act_spec] * n_extra

    return pl.pallas_call(
        kernel,
        out_shape=jax.ShapeDtypeStruct((N, c_feat, F), jnp.float32),
        grid=(N,),
        in_specs=in_specs,
        out_specs=pl.BlockSpec((None, c_feat, F), lambda n: (n, 0, 0)),
        scratch_shapes=[
            pltpu.VMEM((c_feat, F + 2 * M), jnp.float32),    # padded activation
            pltpu.VMEM((9 * c_feat, F), jnp.float32),        # tap stack (K=9C)
        ],
        compiler_params=pltpu.CompilerParams(
            dimension_semantics=("parallel",),               # megacore on v7x
            vmem_limit_bytes=48 * 1024 * 1024),
    )(x, w_stack, b_stack, mask, *extras)


# ---------------------------------------------------------------------------
# Layout glue (plain JAX; tiny tensors, static slices only)
# ---------------------------------------------------------------------------

def _round_up(x, m):
    return -(-x // m) * m


def _geom(H, W):
    Hp, Wp = H + 2, W + 2
    F = _round_up(Hp * Wp, 128)        # lane-dense flattened length
    M = _round_up(Wp + 1, 128)         # halo margin covering the 9 tap shifts
    return Hp, Wp, F, M


def _pad_flatten(x, F):
    """(N, C, H, W) -> (N, C, F): zero spatial pad + flatten + lane-tail pad."""
    N, C, H, W = x.shape
    xp = jnp.pad(x, ((0, 0), (0, 0), (1, 1), (1, 1)))
    xf = xp.reshape(N, C, (H + 2) * (W + 2))
    return jnp.pad(xf, ((0, 0), (0, 0), (0, F - (H + 2) * (W + 2))))


def _interior_mask(H, W, F):
    Hp, Wp = H + 2, W + 2
    r = jnp.arange(Hp)
    c = jnp.arange(Wp)
    m = (((r >= 1) & (r <= H))[:, None] & ((c >= 1) & (c <= W))[None, :])
    m = m.astype(jnp.float32).reshape(1, Hp * Wp)
    return jnp.pad(m, ((0, 0), (0, F - Hp * Wp)))


def _unflatten_crop(y, H, W):
    N, C, _ = y.shape
    Hp, Wp = H + 2, W + 2
    return y[:, :, :Hp * Wp].reshape(N, C, Hp, Wp)[:, :, 1:1 + H, 1:1 + W]


def _run_chain(x_nchw, chain_p, ops, extras=(), stride_out=1):
    """Fused conv / residual-block chain; optional ::2 subsample of the output."""
    N, C, H, W = x_nchw.shape
    _, Wp, F, M = _geom(H, W)
    y = _chain_call(_pad_flatten(x_nchw, F), chain_p["w"], chain_p["b"],
                    _interior_mask(H, W, F),
                    [_pad_flatten(e, F) for e in extras], ops,
                    Wp=Wp, F=F, M=M, c_feat=chain_p["w"].shape[1])
    y = _unflatten_crop(y, H, W)
    if stride_out != 1:
        # TODO(synk): fuse this subsample + next-level re-pad into the kernel
        # epilogue to drop the full-resolution HBM round trip at HR sizes.
        y = y[:, :, ::stride_out, ::stride_out]
    return y


def _upsample_bilinear_x2(x):
    """NCHW bilinear x2, align_corners=False, via static-slice 0.75/0.25 blends."""
    def up_axis(v, axis):
        n = v.shape[axis]
        sl = lambda a, b: jax.lax.slice_in_dim(v, a, b, axis=axis)
        prev = jnp.concatenate([sl(0, 1), sl(0, n - 1)], axis=axis)   # clamp lo
        nxt = jnp.concatenate([sl(1, n), sl(n - 1, n)], axis=axis)    # clamp hi
        even = 0.75 * v + 0.25 * prev
        odd = 0.75 * v + 0.25 * nxt
        out = jnp.stack([even, odd], axis=axis + 1)
        shape = list(v.shape)
        shape[axis] = 2 * n
        return out.reshape(shape)

    return up_axis(up_axis(x, 2), 3)


# ---------------------------------------------------------------------------
# Forward pass (hr_in=True)
# ---------------------------------------------------------------------------

def predeblur_forward(kparams, x_nchw):
    """PredeblurModule.forward with hr_in=True.  x_nchw: (N, num_in_ch, H, W)."""
    kp = kparams
    nf = kp["hr2"]["w"].shape[1]
    x = x_nchw.astype(jnp.float32)
    if x.shape[1] < nf:                      # channel-pad input to num_feat
        x = jnp.pad(x, ((0, 0), (0, nf - x.shape[1]), (0, 0), (0, 0)))

    # conv_first + stride_conv_hr1 fused (same full-res grid), then ::2.
    feat = _run_chain(x, kp["first_hr1"],
                      (("conv", "lrelu"), ("conv", "lrelu")), stride_out=2)
    feat_l1 = _run_chain(feat, kp["hr2"], (("conv", "lrelu"),), stride_out=2)
    feat_l2 = _run_chain(feat_l1, kp["l2c"], (("conv", "lrelu"),), stride_out=2)
    feat_l3 = _run_chain(feat_l2, kp["l3c"], (("conv", "lrelu"),), stride_out=2)

    # L3: resblock_l3, then x2 upsample.
    feat_l3 = _run_chain(feat_l3, kp["l3_chain"], (("rb",),))
    feat_l3_up = _upsample_bilinear_x2(feat_l3)

    # L2: resblock_l2_1 + up(l3), resblock_l2_2 fused, then x2 upsample.
    feat_l2 = _run_chain(feat_l2, kp["l2_chain"],
                         (("rb",), ("add",), ("rb",)), extras=(feat_l3_up,))
    feat_l2_up = _upsample_bilinear_x2(feat_l2)

    # L1: rb0, rb1, + up(l2), rb2, rb3, rb4 fused into one kernel.
    feat_l1 = _run_chain(feat_l1, kp["l1_chain"],
                         (("rb",), ("rb",), ("add",), ("rb",), ("rb",), ("rb",)),
                         extras=(feat_l2_up,))
    return feat_l1


# ---------------------------------------------------------------------------
# Parameters: PyTorch OIHW layout -> kernel (tap-folded K, bf16, stacked)
# ---------------------------------------------------------------------------

def init_params(key, num_in_ch=3, num_feat=8):
    """Deterministic synthetic parameters in the PyTorch layout (OIHW)."""
    def conv_init(k, cin, cout, scale=0.1):
        kw, kb = jax.random.split(k)
        return {"w": jax.random.normal(kw, (cout, cin, 3, 3), jnp.float32) * scale,
                "b": jax.random.normal(kb, (cout,), jnp.float32) * scale}

    def rb_init(k, feat):
        k1, k2 = jax.random.split(k)
        return {"conv1": conv_init(k1, feat, feat),
                "conv2": conv_init(k2, feat, feat)}

    keys = jax.random.split(key, 13)
    return {
        "conv_first": conv_init(keys[0], num_in_ch, num_feat),
        "stride_conv_hr1": conv_init(keys[1], num_feat, num_feat),
        "stride_conv_hr2": conv_init(keys[2], num_feat, num_feat),
        "stride_conv_l2": conv_init(keys[3], num_feat, num_feat),
        "stride_conv_l3": conv_init(keys[4], num_feat, num_feat),
        "resblock_l3": rb_init(keys[5], num_feat),
        "resblock_l2_1": rb_init(keys[6], num_feat),
        "resblock_l2_2": rb_init(keys[7], num_feat),
        "resblock_l1": [rb_init(keys[8 + i], num_feat) for i in range(5)],
    }


def _prep_conv(c, cin_pad):
    """OIHW (Cout, Cin, 3, 3) -> lane-dense tap-folded (Cout, 9*cin_pad) bf16."""
    w = c["w"]
    cout, cin = w.shape[0], w.shape[1]
    if cin < cin_pad:                              # zero-pad input channels
        w = jnp.pad(w, ((0, 0), (0, cin_pad - cin), (0, 0), (0, 0)))
    w = jnp.transpose(w, (0, 2, 3, 1)).reshape(cout, 9 * cin_pad)
    return w.astype(jnp.bfloat16), c["b"].reshape(cout, 1).astype(jnp.float32)


def _stack_convs(convs, cin_pad):
    ws, bs = zip(*(_prep_conv(c, cin_pad) for c in convs))
    return {"w": jnp.stack(ws, axis=0),    # (n_conv, Cout, 9*cin_pad) bf16
            "b": jnp.stack(bs, axis=0)}    # (n_conv, Cout, 1) f32


def prepare_params(p, num_feat):
    def s(convs):
        return _stack_convs(convs, num_feat)
    return {
        "first_hr1": s([p["conv_first"], p["stride_conv_hr1"]]),
        "hr2": s([p["stride_conv_hr2"]]),
        "l2c": s([p["stride_conv_l2"]]),
        "l3c": s([p["stride_conv_l3"]]),
        "l3_chain": s([p["resblock_l3"]["conv1"], p["resblock_l3"]["conv2"]]),
        "l2_chain": s([p["resblock_l2_1"]["conv1"], p["resblock_l2_1"]["conv2"],
                       p["resblock_l2_2"]["conv1"], p["resblock_l2_2"]["conv2"]]),
        "l1_chain": s([c for rb in p["resblock_l1"]
                       for c in (rb["conv1"], rb["conv2"])]),
    }


# ---------------------------------------------------------------------------
# Pure-JAX references (independent formulation, for correctness cross-check)
# ---------------------------------------------------------------------------

def _ref_conv(x, w, b, *, stride=1, act=None, bf16=False):
    if bf16:
        xx, ww, prec = x.astype(jnp.bfloat16), w.astype(jnp.bfloat16), None
    else:
        xx, ww, prec = x, w, jax.lax.Precision.HIGHEST
    y = jax.lax.conv_general_dilated(
        xx, ww, window_strides=(stride, stride), padding=((1, 1), (1, 1)),
        dimension_numbers=("NCHW", "OIHW", "NCHW"),
        preferred_element_type=jnp.float32, precision=prec)
    y = y + b[None, :, None, None]
    if act == "relu":
        y = jnp.maximum(y, 0.0)
    elif act == "lrelu":
        y = jnp.where(y >= 0.0, y, 0.1 * y)
    return y


def _ref_rb(x, rb, bf16):
    h = _ref_conv(x, rb["conv1"]["w"], rb["conv1"]["b"], act="relu", bf16=bf16)
    return x + _ref_conv(h, rb["conv2"]["w"], rb["conv2"]["b"], bf16=bf16)


def _ref_upsample(x):  # NCHW bilinear x2, align_corners=False
    N, C, H, W = x.shape

    def coords(size):
        out = jnp.arange(2 * size, dtype=jnp.float32)
        src = (out + 0.5) / 2.0 - 0.5
        i0 = jnp.floor(src)
        frac = src - i0
        lo = jnp.clip(i0, 0, size - 1).astype(jnp.int32)
        hi = jnp.clip(i0 + 1.0, 0, size - 1).astype(jnp.int32)
        return lo, hi, frac

    h0, h1, fh = coords(H)
    w0, w1, fw = coords(W)
    xh = (x[:, :, h0, :] * (1.0 - fh)[None, None, :, None]
          + x[:, :, h1, :] * fh[None, None, :, None])
    return (xh[:, :, :, w0] * (1.0 - fw)[None, None, None, :]
            + xh[:, :, :, w1] * fw[None, None, None, :])


def reference_forward(p, x, *, bf16=False):
    f = _ref_conv(x, p["conv_first"]["w"], p["conv_first"]["b"],
                  act="lrelu", bf16=bf16)
    f = _ref_conv(f, p["stride_conv_hr1"]["w"], p["stride_conv_hr1"]["b"],
                  stride=2, act="lrelu", bf16=bf16)
    feat_l1 = _ref_conv(f, p["stride_conv_hr2"]["w"], p["stride_conv_hr2"]["b"],
                        stride=2, act="lrelu", bf16=bf16)
    feat_l2 = _ref_conv(feat_l1, p["stride_conv_l2"]["w"],
                        p["stride_conv_l2"]["b"], stride=2, act="lrelu", bf16=bf16)
    feat_l3 = _ref_conv(feat_l2, p["stride_conv_l3"]["w"],
                        p["stride_conv_l3"]["b"], stride=2, act="lrelu", bf16=bf16)
    feat_l3 = _ref_upsample(_ref_rb(feat_l3, p["resblock_l3"], bf16))
    feat_l2 = _ref_rb(feat_l2, p["resblock_l2_1"], bf16) + feat_l3
    feat_l2 = _ref_upsample(_ref_rb(feat_l2, p["resblock_l2_2"], bf16))
    for i in range(2):
        feat_l1 = _ref_rb(feat_l1, p["resblock_l1"][i], bf16)
    feat_l1 = feat_l1 + feat_l2
    for i in range(2, 5):
        feat_l1 = _ref_rb(feat_l1, p["resblock_l1"][i], bf16)
    return feat_l1


# ---------------------------------------------------------------------------

if __name__ == "__main__":
    key = jax.random.PRNGKey(0)
    kx, kp = jax.random.split(key)

    num_in_ch, num_feat = 3, 8
    # hr_in=True: two HR stride-2 convs + two more pyramid levels -> /16 total.
    x = jax.random.normal(kx, (2, num_in_ch, 32, 32), jnp.float32)  # NCHW

    raw_params = init_params(kp, num_in_ch=num_in_ch, num_feat=num_feat)
    kparams = prepare_params(raw_params, num_feat=num_feat)

    out = jax.jit(predeblur_forward)(kparams, x)
    jax.block_until_ready(out)
    assert out.shape == (2, num_feat, 8, 8), out.shape
    assert bool(jnp.all(jnp.isfinite(out)))

    # (1) Tight check vs a reference using the same bf16 operand quantization.
    ref_bf16 = reference_forward(raw_params, x, bf16=True)
    rel_m = float(jnp.max(jnp.abs(out - ref_bf16))
                  / (jnp.max(jnp.abs(ref_bf16)) + 1e-6))
    assert rel_m < 2e-2, rel_m

    # (2) Loose sanity check vs a full-f32 HIGHEST-precision reference.
    ref_f32 = reference_forward(raw_params, x, bf16=False)
    rel_f = float(jnp.max(jnp.abs(out - ref_f32))
                  / (jnp.max(jnp.abs(ref_f32)) + 1e-6))
    assert rel_f < 2.5e-1, rel_f

    print("KERNEL_OK")
</pallas_src>

<mosaic_0001>
module attributes {stable_mosaic.version = 11 : i64} {
  func.func @kernel(%arg0: i32, %arg1: memref<1x8x1280xf32, #tpu.memory_space<vmem>>, %arg2: memref<2x8x72xbf16, #tpu.memory_space<vmem>>, %arg3: memref<2x8x1xf32, #tpu.memory_space<vmem>>, %arg4: memref<1x1280xf32, #tpu.memory_space<vmem>>, %arg5: memref<1x8x1280xf32, #tpu.memory_space<vmem>>, %arg6: memref<8x1536xf32, #tpu.memory_space<vmem>>, %arg7: memref<72x1280xf32, #tpu.memory_space<vmem>>) attributes {dimension_semantics = [#tpu.dimension_semantics<parallel>], iteration_bounds = array<i64: 2>, scalar_prefetch = 0 : i64, scratch_operands = 2 : i64, tpu.core_type = #tpu.core_type<tc>, window_params = [{transform_indices = @transform_0, window_bounds = array<i64: 1, 8, 1280>}, {pipeline_mode = #tpu.pipeline_mode<synchronous>, transform_indices = @transform_1, window_bounds = array<i64: 2, 8, 72>}, {pipeline_mode = #tpu.pipeline_mode<synchronous>, transform_indices = @transform_2, window_bounds = array<i64: 2, 8, 1>}, {pipeline_mode = #tpu.pipeline_mode<synchronous>, transform_indices = @transform_3, window_bounds = array<i64: 1, 1280>}, {transform_indices = @transform_4, window_bounds = array<i64: 1, 8, 1280>}]} {
    %c0 = arith.constant 0 : index
    %c0_0 = arith.constant 0 : index
    %0 = vector.load %arg4[%c0, %c0_0] : memref<1x1280xf32, #tpu.memory_space<vmem>>, vector<1x1280xf32>
    %cst = arith.constant 0.000000e+00 : f32
    %1 = vector.broadcast %cst : f32 to vector<8x128xf32>
    %c0_1 = arith.constant 0 : index
    %c0_2 = arith.constant 0 : index
    %2 = vector.load %arg6[%c0_1, %c0_2] : memref<8x1536xf32, #tpu.memory_space<vmem>>, vector<8x128xf32>
    tpu.vector_store %arg6[%c0_1, %c0_2], %1 {strides = array<i32>} : memref<8x1536xf32, #tpu.memory_space<vmem>>, vector<8x128xf32>,
    %cst_3 = arith.constant 0.000000e+00 : f32
    %3 = vector.broadcast %cst_3 : f32 to vector<8x128xf32>
    %c0_4 = arith.constant 0 : index
    %c1408 = arith.constant 1408 : index
    %4 = vector.load %arg6[%c0_4, %c1408] : memref<8x1536xf32, #tpu.memory_space<vmem>>, vector<8x128xf32>
    tpu.vector_store %arg6[%c0_4, %c1408], %3 {strides = array<i32>} : memref<8x1536xf32, #tpu.memory_space<vmem>>, vector<8x128xf32>,
    %c0_5 = arith.constant 0 : index
    %c0_6 = arith.constant 0 : index
    %c0_7 = arith.constant 0 : index
    %5 = vector.load %arg1[%c0_5, %c0_6, %c0_7] : memref<1x8x1280xf32, #tpu.memory_space<vmem>>, vector<1x8x1280xf32>
    %6 = vector.shape_cast %5 : vector<1x8x1280xf32> to vector<8x1280xf32>
    %7 = vector.broadcast %0 : vector<1x1280xf32> to vector<8x1280xf32>
    %8 = arith.mulf %6, %7 : vector<8x1280xf32>
    %c0_8 = arith.constant 0 : index
    %c128 = arith.constant 128 : index
    %9 = vector.load %arg6[%c0_8, %c128] : memref<8x1536xf32, #tpu.memory_space<vmem>>, vector<8x1280xf32>
    tpu.vector_store %arg6[%c0_8, %c128], %8 {strides = array<i32>} : memref<8x1536xf32, #tpu.memory_space<vmem>>, vector<8x1280xf32>,
    %c0_9 = arith.constant 0 : index
    %c93 = arith.constant 93 : index
    %10 = vector.load %arg6[%c0_9, %c93] : memref<8x1536xf32, #tpu.memory_space<vmem>>, vector<8x1280xf32>
    %c0_10 = arith.constant 0 : index
    %c0_11 = arith.constant 0 : index
    %11 = vector.load %arg7[%c0_10, %c0_11] : memref<72x1280xf32, #tpu.memory_space<vmem>>, vector<8x1280xf32>
    tpu.vector_store %arg7[%c0_10, %c0_11], %10 {strides = array<i32>} : memref<72x1280xf32, #tpu.memory_space<vmem>>, vector<8x1280xf32>,
    %c0_12 = arith.constant 0 : index
    %c94 = arith.constant 94 : index
    %12 = vector.load %arg6[%c0_12, %c94] : memref<8x1536xf32, #tpu.memory_space<vmem>>, vector<8x1280xf32>
    %c8 = arith.constant 8 : index
    %c0_13 = arith.constant 0 : index
    %13 = vector.load %arg7[%c8, %c0_13] : memref<72x1280xf32, #tpu.memory_space<vmem>>, vector<8x1280xf32>
    tpu.vector_store %arg7[%c8, %c0_13], %12 {strides = array<i32>} : memref<72x1280xf32, #tpu.memory_space<vmem>>, vector<8x1280xf32>,
    %c0_14 = arith.constant 0 : index
    %c95 = arith.constant 95 : index
    %14 = vector.load %arg6[%c0_14, %c95] : memref<8x1536xf32, #tpu.memory_space<vmem>>, vector<8x1280xf32>
    %c16 = arith.constant 16 : index
    %c0_15 = arith.constant 0 : index
    %15 = vector.load %arg7[%c16, %c0_15] : memref<72x1280xf32, #tpu.memory_space<vmem>>, vector<8x1280xf32>
    tpu.vector_store %arg7[%c16, %c0_15], %14 {strides = array<i32>} : memref<72x1280xf32, #tpu.memory_space<vmem>>, vector<8x1280xf32>,
    %c0_16 = arith.constant 0 : index
    %c127 = arith.constant 127 : index
    %16 = vector.load %arg6[%c0_16, %c127] : memref<8x1536xf32, #tpu.memory_space<vmem>>, vector<8x1280xf32>
    %c24 = arith.constant 24 : index
    %c0_17 = arith.constant 0 : index
    %17 = vector.load %arg7[%c24, %c0_17] : memref<72x1280xf32, #tpu.memory_space<vmem>>, vector<8x1280xf32>
    tpu.vector_store %arg7[%c24, %c0_17], %16 {strides = array<i32>} : memref<72x1280xf32, #tpu.memory_space<vmem>>, vector<8x1280xf32>,
    %c0_18 = arith.constant 0 : index
    %c128_19 = arith.constant 128 : index
    %18 = vector.load %arg6[%c0_18, %c128_19] : memref<8x1536xf32, #tpu.memory_space<vmem>>, vector<8x1280xf32>
    %c32 = arith.constant 32 : index
    %c0_20 = arith.constant 0 : index
    %19 = vector.load %arg7[%c32, %c0_20] : memref<72x1280xf32, #tpu.memory_space<vmem>>, vector<8x1280xf32>
    tpu.vector_store %arg7[%c32, %c0_20], %18 {strides = array<i32>} : memref<72x1280xf32, #tpu.memory_space<vmem>>, vector<8x1280xf32>,
    %c0_21 = arith.constant 0 : index
    %c129 = arith.constant 129 : index
    %20 = vector.load %arg6[%c0_21, %c129] : memref<8x1536xf32, #tpu.memory_space<vmem>>, vector<8x1280xf32>
    %c40 = arith.constant 40 : index
    %c0_22 = arith.constant 0 : index
    %21 = vector.load %arg7[%c40, %c0_22] : memref<72x1280xf32, #tpu.memory_space<vmem>>, vector<8x1280xf32>
    tpu.vector_store %arg7[%c40, %c0_22], %20 {strides = array<i32>} : memref<72x1280xf32, #tpu.memory_space<vmem>>, vector<8x1280xf32>,
    %c0_23 = arith.constant 0 : index
    %c161 = arith.constant 161 : index
    %22 = vector.load %arg6[%c0_23, %c161] : memref<8x1536xf32, #tpu.memory_space<vmem>>, vector<8x1280xf32>
    %c48 = arith.constant 48 : index
    %c0_24 = arith.constant 0 : index
    %23 = vector.load %arg7[%c48, %c0_24] : memref<72x1280xf32, #tpu.memory_space<vmem>>, vector<8x1280xf32>
    tpu.vector_store %arg7[%c48, %c0_24], %22 {strides = array<i32>} : memref<72x1280xf32, #tpu.memory_space<vmem>>, vector<8x1280xf32>,
    %c0_25 = arith.constant 0 : index
    %c162 = arith.constant 162 : index
    %24 = vector.load %arg6[%c0_25, %c162] : memref<8x1536xf32, #tpu.memory_space<vmem>>, vector<8x1280xf32>
    %c56 = arith.constant 56 : index
    %c0_26 = arith.constant 0 : index
    %25 = vector.load %arg7[%c56, %c0_26] : memref<72x1280xf32, #tpu.memory_space<vmem>>, vector<8x1280xf32>
    tpu.vector_store %arg7[%c56, %c0_26], %24 {strides = array<i32>} : memref<72x1280xf32, #tpu.memory_space<vmem>>, vector<8x1280xf32>,
    %c0_27 = arith.constant 0 : index
    %c163 = arith.constant 163 : index
    %26 = vector.load %arg6[%c0_27, %c163] : memref<8x1536xf32, #tpu.memory_space<vmem>>, vector<8x1280xf32>
    %c64 = arith.constant 64 : index
    %c0_28 = arith.constant 0 : index
    %27 = vector.load %arg7[%c64, %c0_28] : memref<72x1280xf32, #tpu.memory_space<vmem>>, vector<8x1280xf32>
    tpu.vector_store %arg7[%c64, %c0_28], %26 {strides = array<i32>} : memref<72x1280xf32, #tpu.memory_space<vmem>>, vector<8x1280xf32>,
    %c0_29 = arith.constant 0 : index
    %c0_30 = arith.constant 0 : index
    %c0_31 = arith.constant 0 : index
    %28 = vector.load %arg2[%c0_29, %c0_30, %c0_31] : memref<2x8x72xbf16, #tpu.memory_space<vmem>>, vector<1x8x72xbf16>
    %29 = vector.shape_cast %28 : vector<1x8x72xbf16> to vector<8x72xbf16>
    %c0_32 = arith.constant 0 : index
    %c0_33 = arith.constant 0 : index
    %30 = vector.load %arg7[%c0_32, %c0_33] : memref<72x1280xf32, #tpu.memory_space<vmem>>, vector<72x1280xf32>
    %31 = arith.truncf %30 : vector<72x1280xf32> to vector<72x1280xbf16>
    %cst_34 = arith.constant dense<0.000000e+00> : vector<8x1280xf32>
    %32 = tpu.matmul %29, %31, %cst_34 {dimension_numbers = #tpu.dot_dimension_numbers<[1], [0], [0], [1], [0, 0, 1, 1], [], []>} : vector<8x72xbf16>, vector<72x1280xbf16>, vector<8x1280xf32> -> vector<8x1280xf32>
    %c0_35 = arith.constant 0 : index
    %c0_36 = arith.constant 0 : index
    %c0_37 = arith.constant 0 : index
    %33 = vector.load %arg3[%c0_35, %c0_36, %c0_37] : memref<2x8x1xf32, #tpu.memory_space<vmem>>, vector<1x8x1xf32>
    %34 = vector.shape_cast %33 : vector<1x8x1xf32> to vector<8x1xf32>
    %35 = vector.broadcast %34 : vector<8x1xf32> to vector<8x1280xf32>
    %36 = arith.addf %32, %35 : vector<8x1280xf32>
    %cst_38 = arith.constant 0.000000e+00 : f32
    %37 = vector.broadcast %cst_38 : f32 to vector<8x1280xf32>
    %38 = arith.cmpf oge, %36, %37 : vector<8x1280xf32>
    %cst_39 = arith.constant 1.000000e-01 : f32
    %39 = vector.broadcast %cst_39 : f32 to vector<8x1280xf32>
    %40 = arith.mulf %39, %36 : vector<8x1280xf32>
    %41 = arith.select %38, %36, %40 : vector<8x1280xi1>, vector<8x1280xf32>
    %42 = vector.broadcast %0 : vector<1x1280xf32> to vector<8x1280xf32>
    %43 = arith.mulf %41, %42 : vector<8x1280xf32>
    %c0_40 = arith.constant 0 : index
    %c128_41 = arith.constant 128 : index
    %44 = vector.load %arg6[%c0_40, %c128_41] : memref<8x1536xf32, #tpu.memory_space<vmem>>, vector<8x1280xf32>
    tpu.vector_store %arg6[%c0_40, %c128_41], %43 {strides = array<i32>} : memref<8x1536xf32, #tpu.memory_space<vmem>>, vector<8x1280xf32>,
    %c0_42 = arith.constant 0 : index
    %c93_43 = arith.constant 93 : index
    %45 = vector.load %arg6[%c0_42, %c93_43] : memref<8x1536xf32, #tpu.memory_space<vmem>>, vector<8x1280xf32>
    %c0_44 = arith.constant 0 : index
    %c0_45 = arith.constant 0 : index
    %46 = vector.load %arg7[%c0_44, %c0_45] : memref<72x1280xf32, #tpu.memory_space<vmem>>, vector<8x1280xf32>
    tpu.vector_store %arg7[%c0_44, %c0_45], %45 {strides = array<i32>} : memref<72x1280xf32, #tpu.memory_space<vmem>>, vector<8x1280xf32>,
    %c0_46 = arith.constant 0 : index
    %c94_47 = arith.constant 94 : index
    %47 = vector.load %arg6[%c0_46, %c94_47] : memref<8x1536xf32, #tpu.memory_space<vmem>>, vector<8x1280xf32>
    %c8_48 = arith.constant 8 : index
    %c0_49 = arith.constant 0 : index
    %48 = vector.load %arg7[%c8_48, %c0_49] : memref<72x1280xf32, #tpu.memory_space<vmem>>, vector<8x1280xf32>
    tpu.vector_store %arg7[%c8_48, %c0_49], %47 {strides = array<i32>} : memref<72x1280xf32, #tpu.memory_space<vmem>>, vector<8x1280xf32>,
    %c0_50 = arith.constant 0 : index
    %c95_51 = arith.constant 95 : index
    %49 = vector.load %arg6[%c0_50, %c95_51] : memref<8x1536xf32, #tpu.memory_space<vmem>>, vector<8x1280xf32>
    %c16_52 = arith.constant 16 : index
    %c0_53 = arith.constant 0 : index
    %50 = vector.load %arg7[%c16_52, %c0_53] : memref<72x1280xf32, #tpu.memory_space<vmem>>, vector<8x1280xf32>
    tpu.vector_store %arg7[%c16_52, %c0_53], %49 {strides = array<i32>} : memref<72x1280xf32, #tpu.memory_space<vmem>>, vector<8x1280xf32>,
    %c0_54 = arith.constant 0 : index
    %c127_55 = arith.constant 127 : index
    %51 = vector.load %arg6[%c0_54, %c127_55] : memref<8x1536xf32, #tpu.memory_space<vmem>>, vector<8x1280xf32>
    %c24_56 = arith.constant 24 : index
    %c0_57 = arith.constant 0 : index
    %52 = vector.load %arg7[%c24_56, %c0_57] : memref<72x1280xf32, #tpu.memory_space<vmem>>, vector<8x1280xf32>
    tpu.vector_store %arg7[%c24_56, %c0_57], %51 {strides = array<i32>} : memref<72x1280xf32, #tpu.memory_space<vmem>>, vector<8x1280xf32>,
    %c0_58 = arith.constant 0 : index
    %c128_59 = arith.constant 128 : index
    %53 = vector.load %arg6[%c0_58, %c128_59] : memref<8x1536xf32, #tpu.memory_space<vmem>>, vector<8x1280xf32>
    %c32_60 = arith.constant 32 : index
    %c0_61 = arith.constant 0 : index
    %54 = vector.load %arg7[%c32_60, %c0_61] : memref<72x1280xf32, #tpu.memory_space<vmem>>, vector<8x1280xf32>
    tpu.vector_store %arg7[%c32_60, %c0_61], %53 {strides = array<i32>} : memref<72x1280xf32, #tpu.memory_space<vmem>>, vector<8x1280xf32>,
    %c0_62 = arith.constant 0 : index
    %c129_63 = arith.constant 129 : index
    %55 = vector.load %arg6[%c0_62, %c129_63] : memref<8x1536xf32, #tpu.memory_space<vmem>>, vector<8x1280xf32>
    %c40_64 = arith.constant 40 : index
    %c0_65 = arith.constant 0 : index
    %56 = vector.load %arg7[%c40_64, %c0_65] : memref<72x1280xf32, #tpu.memory_space<vmem>>, vector<8x1280xf32>
    tpu.vector_store %arg7[%c40_64, %c0_65], %55 {strides = array<i32>} : memref<72x1280xf32, #tpu.memory_space<vmem>>, vector<8x1280xf32>,
    %c0_66 = arith.constant 0 : index
    %c161_67 = arith.constant 161 : index
    %57 = vector.load %arg6[%c0_66, %c161_67] : memref<8x1536xf32, #tpu.memory_space<vmem>>, vector<8x1280xf32>
    %c48_68 = arith.constant 48 : index
    %c0_69 = arith.constant 0 : index
    %58 = vector.load %arg7[%c48_68, %c0_69] : memref<72x1280xf32, #tpu.memory_space<vmem>>, vector<8x1280xf32>
    tpu.vector_store %arg7[%c48_68, %c0_69], %57 {strides = array<i32>} : memref<72x1280xf32, #tpu.memory_space<vmem>>, vector<8x1280xf32>,
    %c0_70 = arith.constant 0 : index
    %c162_71 = arith.constant 162 : index
    %59 = vector.load %arg6[%c0_70, %c162_71] : memref<8x1536xf32, #tpu.memory_space<vmem>>, vector<8x1280xf32>
    %c56_72 = arith.constant 56 : index
    %c0_73 = arith.constant 0 : index
    %60 = vector.load %arg7[%c56_72, %c0_73] : memref<72x1280xf32, #tpu.memory_space<vmem>>, vector<8x1280xf32>
    tpu.vector_store %arg7[%c56_72, %c0_73], %59 {strides = array<i32>} : memref<72x1280xf32, #tpu.memory_space<vmem>>, vector<8x1280xf32>,
    %c0_74 = arith.constant 0 : index
    %c163_75 = arith.constant 163 : index
    %61 = vector.load %arg6[%c0_74, %c163_75] : memref<8x1536xf32, #tpu.memory_space<vmem>>, vector<8x1280xf32>
    %c64_76 = arith.constant 64 : index
    %c0_77 = arith.constant 0 : index
    %62 = vector.load %arg7[%c64_76, %c0_77] : memref<72x1280xf32, #tpu.memory_space<vmem>>, vector<8x1280xf32>
    tpu.vector_store %arg7[%c64_76, %c0_77], %61 {strides = array<i32>} : memref<72x1280xf32, #tpu.memory_space<vmem>>, vector<8x1280xf32>,
    %c1 = arith.constant 1 : index
    %c0_78 = arith.constant 0 : index
    %c0_79 = arith.constant 0 : index
    %63 = vector.load %arg2[%c1, %c0_78, %c0_79] : memref<2x8x72xbf16, #tpu.memory_space<vmem>>, vector<1x8x72xbf16>
    %64 = vector.shape_cast %63 : vector<1x8x72xbf16> to vector<8x72xbf16>
    %c0_80 = arith.constant 0 : index
    %c0_81 = arith.constant 0 : index
    %65 = vector.load %arg7[%c0_80, %c0_81] : memref<72x1280xf32, #tpu.memory_space<vmem>>, vector<72x1280xf32>
    %66 = arith.truncf %65 : vector<72x1280xf32> to vector<72x1280xbf16>
    %cst_82 = arith.constant dense<0.000000e+00> : vector<8x1280xf32>
    %67 = tpu.matmul %64, %66, %cst_82 {dimension_numbers = #tpu.dot_dimension_numbers<[1], [0], [0], [1], [0, 0, 1, 1], [], []>} : vector<8x72xbf16>, vector<72x1280xbf16>, vector<8x1280xf32> -> vector<8x1280xf32>
    %c1_83 = arith.constant 1 : index
    %c0_84 = arith.constant 0 : index
    %c0_85 = arith.constant 0 : index
    %68 = vector.load %arg3[%c1_83, %c0_84, %c0_85] : memref<2x8x1xf32, #tpu.memory_space<vmem>>, vector<1x8x1xf32>
    %69 = vector.shape_cast %68 : vector<1x8x1xf32> to vector<8x1xf32>
    %70 = vector.broadcast %69 : vector<8x1xf32> to vector<8x1280xf32>
    %71 = arith.addf %67, %70 : vector<8x1280xf32>
    %cst_86 = arith.constant 0.000000e+00 : f32
    %72 = vector.broadcast %cst_86 : f32 to vector<8x1280xf32>
    %73 = arith.cmpf oge, %71, %72 : vector<8x1280xf32>
    %cst_87 = arith.constant 1.000000e-01 : f32
    %74 = vector.broadcast %cst_87 : f32 to vector<8x1280xf32>
    %75 = arith.mulf %74, %71 : vector<8x1280xf32>
    %76 = arith.select %73, %71, %75 : vector<8x1280xi1>, vector<8x1280xf32>
    %c0_88 = arith.constant 0 : index
    %c0_89 = arith.constant 0 : index
    %c0_90 = arith.constant 0 : index
    %77 = vector.load %arg5[%c0_88, %c0_89, %c0_90] : memref<1x8x1280xf32, #tpu.memory_space<vmem>>, vector<1x8x1280xf32>
    %78 = vector.shape_cast %77 : vector<1x8x1280xf32> to vector<8x1280xf32>
    %79 = vector.shape_cast %76 : vector<8x1280xf32> to vector<1x8x1280xf32>
    tpu.vector_store %arg5[%c0_88, %c0_89, %c0_90], %79 {strides = array<i32>} : memref<1x8x1280xf32, #tpu.memory_space<vmem>>, vector<1x8x1280xf32>,
    return
  }
  func.func @transform_0(%arg0: i32) -> (i32, i32, i32) {
    %c0_i32 = arith.constant 0 : i32
    %c0_i32_0 = arith.constant 0 : i32
    %c0_i32_1 = arith.constant 0 : i32
    return %arg0, %c0_i32, %c0_i32_0 : i32, i32, i32
  }
  func.func @transform_1(%arg0: i32) -> (i32, i32, i32) {
    %c0_i32 = arith.constant 0 : i32
    %c0_i32_0 = arith.constant 0 : i32
    %c0_i32_1 = arith.constant 0 : i32
    %c0_i32_2 = arith.constant 0 : i32
    return %c0_i32, %c0_i32_0, %c0_i32_1 : i32, i32, i32
  }
  func.func @transform_2(%arg0: i32) -> (i32, i32, i32) {
    %c0_i32 = arith.constant 0 : i32
    %c0_i32_0 = arith.constant 0 : i32
    %c0_i32_1 = arith.constant 0 : i32
    %c0_i32_2 = arith.constant 0 : i32
    return %c0_i32, %c0_i32_0, %c0_i32_1 : i32, i32, i32
  }
  func.func @transform_3(%arg0: i32) -> (i32, i32) {
    %c0_i32 = arith.constant 0 : i32
    %c0_i32_0 = arith.constant 0 : i32
    %c0_i32_1 = arith.constant 0 : i32
    return %c0_i32, %c0_i32_0 : i32, i32
  }
  func.func @transform_4(%arg0: i32) -> (i32, i32, i32) {
    %c0_i32 = arith.constant 0 : i32
    %c0_i32_0 = arith.constant 0 : i32
    %c0_i32_1 = arith.constant 0 : i32
    return %arg0, %c0_i32, %c0_i32_0 : i32, i32, i32
  }
}

module attributes {stable_mosaic.version = 11 : i64} {
  func.func @kernel(%arg0: i32, %arg1: memref<1x8x384xf32, #tpu.memory_space<vmem>>, %arg2: memref<1x8x72xbf16, #tpu.memory_space<vmem>>, %arg3: memref<1x8x1xf32, #tpu.memory_space<vmem>>, %arg4: memref<1x384xf32, #tpu.memory_space<vmem>>, %arg5: memref<1x8x384xf32, #tpu.memory_space<vmem>>, %arg6: memref<8x640xf32, #tpu.memory_space<vmem>>, %arg7: memref<72x384xf32, #tpu.memory_space<vmem>>) attributes {dimension_semantics = [#tpu.dimension_semantics<parallel>], iteration_bounds = array<i64: 2>, scalar_prefetch = 0 : i64, scratch_operands = 2 : i64, tpu.core_type = #tpu.core_type<tc>, window_params = [{transform_indices = @transform_0, window_bounds = array<i64: 1, 8, 384>}, {pipeline_mode = #tpu.pipeline_mode<synchronous>, transform_indices = @transform_1, window_bounds = array<i64: 1, 8, 72>}, {pipeline_mode = #tpu.pipeline_mode<synchronous>, transform_indices = @transform_2, window_bounds = array<i64: 1, 8, 1>}, {pipeline_mode = #tpu.pipeline_mode<synchronous>, transform_indices = @transform_3, window_bounds = array<i64: 1, 384>}, {transform_indices = @transform_4, window_bounds = array<i64: 1, 8, 384>}]} {
    %c0 = arith.constant 0 : index
    %c0_0 = arith.constant 0 : index
    %0 = vector.load %arg4[%c0, %c0_0] : memref<1x384xf32, #tpu.memory_space<vmem>>, vector<1x384xf32>
    %cst = arith.constant 0.000000e+00 : f32
    %1 = vector.broadcast %cst : f32 to vector<8x128xf32>
    %c0_1 = arith.constant 0 : index
    %c0_2 = arith.constant 0 : index
    %2 = vector.load %arg6[%c0_1, %c0_2] : memref<8x640xf32, #tpu.memory_space<vmem>>, vector<8x128xf32>
    tpu.vector_store %arg6[%c0_1, %c0_2], %1 {strides = array<i32>} : memref<8x640xf32, #tpu.memory_space<vmem>>, vector<8x128xf32>,
    %cst_3 = arith.constant 0.000000e+00 : f32
    %3 = vector.broadcast %cst_3 : f32 to vector<8x128xf32>
    %c0_4 = arith.constant 0 : index
    %c512 = arith.constant 512 : index
    %4 = vector.load %arg6[%c0_4, %c512] : memref<8x640xf32, #tpu.memory_space<vmem>>, vector<8x128xf32>
    tpu.vector_store %arg6[%c0_4, %c512], %3 {strides = array<i32>} : memref<8x640xf32, #tpu.memory_space<vmem>>, vector<8x128xf32>,
    %c0_5 = arith.constant 0 : index
    %c0_6 = arith.constant 0 : index
    %c0_7 = arith.constant 0 : index
    %5 = vector.load %arg1[%c0_5, %c0_6, %c0_7] : memref<1x8x384xf32, #tpu.memory_space<vmem>>, vector<1x8x384xf32>
    %6 = vector.shape_cast %5 : vector<1x8x384xf32> to vector<8x384xf32>
    %7 = vector.broadcast %0 : vector<1x384xf32> to vector<8x384xf32>
    %8 = arith.mulf %6, %7 : vector<8x384xf32>
    %c0_8 = arith.constant 0 : index
    %c128 = arith.constant 128 : index
    %9 = vector.load %arg6[%c0_8, %c128] : memref<8x640xf32, #tpu.memory_space<vmem>>, vector<8x384xf32>
    tpu.vector_store %arg6[%c0_8, %c128], %8 {strides = array<i32>} : memref<8x640xf32, #tpu.memory_space<vmem>>, vector<8x384xf32>,
    %c0_9 = arith.constant 0 : index
    %c109 = arith.constant 109 : index
    %10 = vector.load %arg6[%c0_9, %c109] : memref<8x640xf32, #tpu.memory_space<vmem>>, vector<8x384xf32>
    %c0_10 = arith.constant 0 : index
    %c0_11 = arith.constant 0 : index
    %11 = vector.load %arg7[%c0_10, %c0_11] : memref<72x384xf32, #tpu.memory_space<vmem>>, vector<8x384xf32>
    tpu.vector_store %arg7[%c0_10, %c0_11], %10 {strides = array<i32>} : memref<72x384xf32, #tpu.memory_space<vmem>>, vector<8x384xf32>,
    %c0_12 = arith.constant 0 : index
    %c110 = arith.constant 110 : index
    %12 = vector.load %arg6[%c0_12, %c110] : memref<8x640xf32, #tpu.memory_space<vmem>>, vector<8x384xf32>
    %c8 = arith.constant 8 : index
    %c0_13 = arith.constant 0 : index
    %13 = vector.load %arg7[%c8, %c0_13] : memref<72x384xf32, #tpu.memory_space<vmem>>, vector<8x384xf32>
    tpu.vector_store %arg7[%c8, %c0_13], %12 {strides = array<i32>} : memref<72x384xf32, #tpu.memory_space<vmem>>, vector<8x384xf32>,
    %c0_14 = arith.constant 0 : index
    %c111 = arith.constant 111 : index
    %14 = vector.load %arg6[%c0_14, %c111] : memref<8x640xf32, #tpu.memory_space<vmem>>, vector<8x384xf32>
    %c16 = arith.constant 16 : index
    %c0_15 = arith.constant 0 : index
    %15 = vector.load %arg7[%c16, %c0_15] : memref<72x384xf32, #tpu.memory_space<vmem>>, vector<8x384xf32>
    tpu.vector_store %arg7[%c16, %c0_15], %14 {strides = array<i32>} : memref<72x384xf32, #tpu.memory_space<vmem>>, vector<8x384xf32>,
    %c0_16 = arith.constant 0 : index
    %c127 = arith.constant 127 : index
    %16 = vector.load %arg6[%c0_16, %c127] : memref<8x640xf32, #tpu.memory_space<vmem>>, vector<8x384xf32>
    %c24 = arith.constant 24 : index
    %c0_17 = arith.constant 0 : index
    %17 = vector.load %arg7[%c24, %c0_17] : memref<72x384xf32, #tpu.memory_space<vmem>>, vector<8x384xf32>
    tpu.vector_store %arg7[%c24, %c0_17], %16 {strides = array<i32>} : memref<72x384xf32, #tpu.memory_space<vmem>>, vector<8x384xf32>,
    %c0_18 = arith.constant 0 : index
    %c128_19 = arith.constant 128 : index
    %18 = vector.load %arg6[%c0_18, %c128_19] : memref<8x640xf32, #tpu.memory_space<vmem>>, vector<8x384xf32>
    %c32 = arith.constant 32 : index
    %c0_20 = arith.constant 0 : index
    %19 = vector.load %arg7[%c32, %c0_20] : memref<72x384xf32, #tpu.memory_space<vmem>>, vector<8x384xf32>
    tpu.vector_store %arg7[%c32, %c0_20], %18 {strides = array<i32>} : memref<72x384xf32, #tpu.memory_space<vmem>>, vector<8x384xf32>,
    %c0_21 = arith.constant 0 : index
    %c129 = arith.constant 129 : index
    %20 = vector.load %arg6[%c0_21, %c129] : memref<8x640xf32, #tpu.memory_space<vmem>>, vector<8x384xf32>
    %c40 = arith.constant 40 : index
    %c0_22 = arith.constant 0 : index
    %21 = vector.load %arg7[%c40, %c0_22] : memref<72x384xf32, #tpu.memory_space<vmem>>, vector<8x384xf32>
    tpu.vector_store %arg7[%c40, %c0_22], %20 {strides = array<i32>} : memref<72x384xf32, #tpu.memory_space<vmem>>, vector<8x384xf32>,
    %c0_23 = arith.constant 0 : index
    %c145 = arith.constant 145 : index
    %22 = vector.load %arg6[%c0_23, %c145] : memref<8x640xf32, #tpu.memory_space<vmem>>, vector<8x384xf32>
    %c48 = arith.constant 48 : index
    %c0_24 = arith.constant 0 : index
    %23 = vector.load %arg7[%c48, %c0_24] : memref<72x384xf32, #tpu.memory_space<vmem>>, vector<8x384xf32>
    tpu.vector_store %arg7[%c48, %c0_24], %22 {strides = array<i32>} : memref<72x384xf32, #tpu.memory_space<vmem>>, vector<8x384xf32>,
    %c0_25 = arith.constant 0 : index
    %c146 = arith.constant 146 : index
    %24 = vector.load %arg6[%c0_25, %c146] : memref<8x640xf32, #tpu.memory_space<vmem>>, vector<8x384xf32>
    %c56 = arith.constant 56 : index
    %c0_26 = arith.constant 0 : index
    %25 = vector.load %arg7[%c56, %c0_26] : memref<72x384xf32, #tpu.memory_space<vmem>>, vector<8x384xf32>
    tpu.vector_store %arg7[%c56, %c0_26], %24 {strides = array<i32>} : memref<72x384xf32, #tpu.memory_space<vmem>>, vector<8x384xf32>,
    %c0_27 = arith.constant 0 : index
    %c147 = arith.constant 147 : index
    %26 = vector.load %arg6[%c0_27, %c147] : memref<8x640xf32, #tpu.memory_space<vmem>>, vector<8x384xf32>
    %c64 = arith.constant 64 : index
    %c0_28 = arith.constant 0 : index
    %27 = vector.load %arg7[%c64, %c0_28] : memref<72x384xf32, #tpu.memory_space<vmem>>, vector<8x384xf32>
    tpu.vector_store %arg7[%c64, %c0_28], %26 {strides = array<i32>} : memref<72x384xf32, #tpu.memory_space<vmem>>, vector<8x384xf32>,
    %c0_29 = arith.constant 0 : index
    %c0_30 = arith.constant 0 : index
    %c0_31 = arith.constant 0 : index
    %28 = vector.load %arg2[%c0_29, %c0_30, %c0_31] : memref<1x8x72xbf16, #tpu.memory_space<vmem>>, vector<1x8x72xbf16>
    %29 = vector.shape_cast %28 : vector<1x8x72xbf16> to vector<8x72xbf16>
    %c0_32 = arith.constant 0 : index
    %c0_33 = arith.constant 0 : index
    %30 = vector.load %arg7[%c0_32, %c0_33] : memref<72x384xf32, #tpu.memory_space<vmem>>, vector<72x384xf32>
    %31 = arith.truncf %30 : vector<72x384xf32> to vector<72x384xbf16>
    %cst_34 = arith.constant dense<0.000000e+00> : vector<8x384xf32>
    %32 = tpu.matmul %29, %31, %cst_34 {dimension_numbers = #tpu.dot_dimension_numbers<[1], [0], [0], [1], [0, 0, 1, 1], [], []>} : vector<8x72xbf16>, vector<72x384xbf16>, vector<8x384xf32> -> vector<8x384xf32>
    %c0_35 = arith.constant 0 : index
    %c0_36 = arith.constant 0 : index
    %c0_37 = arith.constant 0 : index
    %33 = vector.load %arg3[%c0_35, %c0_36, %c0_37] : memref<1x8x1xf32, #tpu.memory_space<vmem>>, vector<1x8x1xf32>
    %34 = vector.shape_cast %33 : vector<1x8x1xf32> to vector<8x1xf32>
    %35 = vector.broadcast %34 : vector<8x1xf32> to vector<8x384xf32>
    %36 = arith.addf %32, %35 : vector<8x384xf32>
    %cst_38 = arith.constant 0.000000e+00 : f32
    %37 = vector.broadcast %cst_38 : f32 to vector<8x384xf32>
    %38 = arith.cmpf oge, %36, %37 : vector<8x384xf32>
    %cst_39 = arith.constant 1.000000e-01 : f32
    %39 = vector.broadcast %cst_39 : f32 to vector<8x384xf32>
    %40 = arith.mulf %39, %36 : vector<8x384xf32>
    %41 = arith.select %38, %36, %40 : vector<8x384xi1>, vector<8x384xf32>
    %c0_40 = arith.constant 0 : index
    %c0_41 = arith.constant 0 : index
    %c0_42 = arith.constant 0 : index
    %42 = vector.load %arg5[%c0_40, %c0_41, %c0_42] : memref<1x8x384xf32, #tpu.memory_space<vmem>>, vector<1x8x384xf32>
    %43 = vector.shape_cast %42 : vector<1x8x384xf32> to vector<8x384xf32>
    %44 = vector.shape_cast %41 : vector<8x384xf32> to vector<1x8x384xf32>
    tpu.vector_store %arg5[%c0_40, %c0_41, %c0_42], %44 {strides = array<i32>} : memref<1x8x384xf32, #tpu.memory_space<vmem>>, vector<1x8x384xf32>,
    return
  }
  func.func @transform_0(%arg0: i32) -> (i32, i32, i32) {
    %c0_i32 = arith.constant 0 : i32
    %c0_i32_0 = arith.constant 0 : i32
    %c0_i32_1 = arith.constant 0 : i32
    return %arg0, %c0_i32, %c0_i32_0 : i32, i32, i32
  }
  func.func @transform_1(%arg0: i32) -> (i32, i32, i32) {
    %c0_i32 = arith.constant 0 : i32
    %c0_i32_0 = arith.constant 0 : i32
    %c0_i32_1 = arith.constant 0 : i32
    %c0_i32_2 = arith.constant 0 : i32
    return %c0_i32, %c0_i32_0, %c0_i32_1 : i32, i32, i32
  }
  func.func @transform_2(%arg0: i32) -> (i32, i32, i32) {
    %c0_i32 = arith.constant 0 : i32
    %c0_i32_0 = arith.constant 0 : i32
    %c0_i32_1 = arith.constant 0 : i32
    %c0_i32_2 = arith.constant 0 : i32
    return %c0_i32, %c0_i32_0, %c0_i32_1 : i32, i32, i32
  }
  func.func @transform_3(%arg0: i32) -> (i32, i32) {
    %c0_i32 = arith.constant 0 : i32
    %c0_i32_0 = arith.constant 0 : i32
    %c0_i32_1 = arith.constant 0 : i32
    return %c0_i32, %c0_i32_0 : i32, i32
  }
  func.func @transform_4(%arg0: i32) -> (i32, i32, i32) {
    %c0_i32 = arith.constant 0 : i32
    %c0_i32_0 = arith.constant 0 : i32
    %c0_i32_1 = arith.constant 0 : i32
    return %arg0, %c0_i32, %c0_i32_0 : i32, i32, i32
  }
}

module attributes {stable_mosaic.version = 11 : i64} {
  func.func @kernel(%arg0: i32, %arg1: memref<1x8x128xf32, #tpu.memory_space<vmem>>, %arg2: memref<1x8x72xbf16, #tpu.memory_space<vmem>>, %arg3: memref<1x8x1xf32, #tpu.memory_space<vmem>>, %arg4: memref<1x128xf32, #tpu.memory_space<vmem>>, %arg5: memref<1x8x128xf32, #tpu.memory_space<vmem>>, %arg6: memref<8x384xf32, #tpu.memory_space<vmem>>, %arg7: memref<72x128xf32, #tpu.memory_space<vmem>>) attributes {dimension_semantics = [#tpu.dimension_semantics<parallel>], iteration_bounds = array<i64: 2>, scalar_prefetch = 0 : i64, scratch_operands = 2 : i64, tpu.core_type = #tpu.core_type<tc>, window_params = [{transform_indices = @transform_0, window_bounds = array<i64: 1, 8, 128>}, {pipeline_mode = #tpu.pipeline_mode<synchronous>, transform_indices = @transform_1, window_bounds = array<i64: 1, 8, 72>}, {pipeline_mode = #tpu.pipeline_mode<synchronous>, transform_indices = @transform_2, window_bounds = array<i64: 1, 8, 1>}, {pipeline_mode = #tpu.pipeline_mode<synchronous>, transform_indices = @transform_3, window_bounds = array<i64: 1, 128>}, {transform_indices = @transform_4, window_bounds = array<i64: 1, 8, 128>}]} {
    %c0 = arith.constant 0 : index
    %c0_0 = arith.constant 0 : index
    %0 = vector.load %arg4[%c0, %c0_0] : memref<1x128xf32, #tpu.memory_space<vmem>>, vector<1x128xf32>
    %cst = arith.constant 0.000000e+00 : f32
    %1 = vector.broadcast %cst : f32 to vector<8x128xf32>
    %c0_1 = arith.constant 0 : index
    %c0_2 = arith.constant 0 : index
    %2 = vector.load %arg6[%c0_1, %c0_2] : memref<8x384xf32, #tpu.memory_space<vmem>>, vector<8x128xf32>
    tpu.vector_store %arg6[%c0_1, %c0_2], %1 {strides = array<i32>} : memref<8x384xf32, #tpu.memory_space<vmem>>, vector<8x128xf32>,
    %cst_3 = arith.constant 0.000000e+00 : f32
    %3 = vector.broadcast %cst_3 : f32 to vector<8x128xf32>
    %c0_4 = arith.constant 0 : index
    %c256 = arith.constant 256 : index
    %4 = vector.load %arg6[%c0_4, %c256] : memref<8x384xf32, #tpu.memory_space<vmem>>, vector<8x128xf32>
    tpu.vector_store %arg6[%c0_4, %c256], %3 {strides = array<i32>} : memref<8x384xf32, #tpu.memory_space<vmem>>, vector<8x128xf32>,
    %c0_5 = arith.constant 0 : index
    %c0_6 = arith.constant 0 : index
    %c0_7 = arith.constant 0 : index
    %5 = vector.load %arg1[%c0_5, %c0_6, %c0_7] : memref<1x8x128xf32, #tpu.memory_space<vmem>>, vector<1x8x128xf32>
    %6 = vector.shape_cast %5 : vector<1x8x128xf32> to vector<8x128xf32>
    %7 = vector.broadcast %0 : vector<1x128xf32> to vector<8x128xf32>
    %8 = arith.mulf %6, %7 : vector<8x128xf32>
    %c0_8 = arith.constant 0 : index
    %c128 = arith.constant 128 : index
    %9 = vector.load %arg6[%c0_8, %c128] : memref<8x384xf32, #tpu.memory_space<vmem>>, vector<8x128xf32>
    tpu.vector_store %arg6[%c0_8, %c128], %8 {strides = array<i32>} : memref<8x384xf32, #tpu.memory_space<vmem>>, vector<8x128xf32>,
    %c0_9 = arith.constant 0 : index
    %c117 = arith.constant 117 : index
    %10 = vector.load %arg6[%c0_9, %c117] : memref<8x384xf32, #tpu.memory_space<vmem>>, vector<8x128xf32>
    %c0_10 = arith.constant 0 : index
    %c0_11 = arith.constant 0 : index
    %11 = vector.load %arg7[%c0_10, %c0_11] : memref<72x128xf32, #tpu.memory_space<vmem>>, vector<8x128xf32>
    tpu.vector_store %arg7[%c0_10, %c0_11], %10 {strides = array<i32>} : memref<72x128xf32, #tpu.memory_space<vmem>>, vector<8x128xf32>,
    %c0_12 = arith.constant 0 : index
    %c118 = arith.constant 118 : index
    %12 = vector.load %arg6[%c0_12, %c118] : memref<8x384xf32, #tpu.memory_space<vmem>>, vector<8x128xf32>
    %c8 = arith.constant 8 : index
    %c0_13 = arith.constant 0 : index
    %13 = vector.load %arg7[%c8, %c0_13] : memref<72x128xf32, #tpu.memory_space<vmem>>, vector<8x128xf32>
    tpu.vector_store %arg7[%c8, %c0_13], %12 {strides = array<i32>} : memref<72x128xf32, #tpu.memory_space<vmem>>, vector<8x128xf32>,
    %c0_14 = arith.constant 0 : index
    %c119 = arith.constant 119 : index
    %14 = vector.load %arg6[%c0_14, %c119] : memref<8x384xf32, #tpu.memory_space<vmem>>, vector<8x128xf32>
    %c16 = arith.constant 16 : index
    %c0_15 = arith.constant 0 : index
    %15 = vector.load %arg7[%c16, %c0_15] : memref<72x128xf32, #tpu.memory_space<vmem>>, vector<8x128xf32>
    tpu.vector_store %arg7[%c16, %c0_15], %14 {strides = array<i32>} : memref<72x128xf32, #tpu.memory_space<vmem>>, vector<8x128xf32>,
    %c0_16 = arith.constant 0 : index
    %c127 = arith.constant 127 : index
    %16 = vector.load %arg6[%c0_16, %c127] : memref<8x384xf32, #tpu.memory_space<vmem>>, vector<8x128xf32>
    %c24 = arith.constant 24 : index
    %c0_17 = arith.constant 0 : index
    %17 = vector.load %arg7[%c24, %c0_17] : memref<72x128xf32, #tpu.memory_space<vmem>>, vector<8x128xf32>
    tpu.vector_store %arg7[%c24, %c0_17], %16 {strides = array<i32>} : memref<72x128xf32, #tpu.memory_space<vmem>>, vector<8x128xf32>,
    %c0_18 = arith.constant 0 : index
    %c128_19 = arith.constant 128 : index
    %18 = vector.load %arg6[%c0_18, %c128_19] : memref<8x384xf32, #tpu.memory_space<vmem>>, vector<8x128xf32>
    %c32 = arith.constant 32 : index
    %c0_20 = arith.constant 0 : index
    %19 = vector.load %arg7[%c32, %c0_20] : memref<72x128xf32, #tpu.memory_space<vmem>>, vector<8x128xf32>
    tpu.vector_store %arg7[%c32, %c0_20], %18 {strides = array<i32>} : memref<72x128xf32, #tpu.memory_space<vmem>>, vector<8x128xf32>,
    %c0_21 = arith.constant 0 : index
    %c129 = arith.constant 129 : index
    %20 = vector.load %arg6[%c0_21, %c129] : memref<8x384xf32, #tpu.memory_space<vmem>>, vector<8x128xf32>
    %c40 = arith.constant 40 : index
    %c0_22 = arith.constant 0 : index
    %21 = vector.load %arg7[%c40, %c0_22] : memref<72x128xf32, #tpu.memory_space<vmem>>, vector<8x128xf32>
    tpu.vector_store %arg7[%c40, %c0_22], %20 {strides = array<i32>} : memref<72x128xf32, #tpu.memory_space<vmem>>, vector<8x128xf32>,
    %c0_23 = arith.constant 0 : index
    %c137 = arith.constant 137 : index
    %22 = vector.load %arg6[%c0_23, %c137] : memref<8x384xf32, #tpu.memory_space<vmem>>, vector<8x128xf32>
    %c48 = arith.constant 48 : index
    %c0_24 = arith.constant 0 : index
    %23 = vector.load %arg7[%c48, %c0_24] : memref<72x128xf32, #tpu.memory_space<vmem>>, vector<8x128xf32>
    tpu.vector_store %arg7[%c48, %c0_24], %22 {strides = array<i32>} : memref<72x128xf32, #tpu.memory_space<vmem>>, vector<8x128xf32>,
    %c0_25 = arith.constant 0 : index
    %c138 = arith.constant 138 : index
    %24 = vector.load %arg6[%c0_25, %c138] : memref<8x384xf32, #tpu.memory_space<vmem>>, vector<8x128xf32>
    %c56 = arith.constant 56 : index
    %c0_26 = arith.constant 0 : index
    %25 = vector.load %arg7[%c56, %c0_26] : memref<72x128xf32, #tpu.memory_space<vmem>>, vector<8x128xf32>
    tpu.vector_store %arg7[%c56, %c0_26], %24 {strides = array<i32>} : memref<72x128xf32, #tpu.memory_space<vmem>>, vector<8x128xf32>,
    %c0_27 = arith.constant 0 : index
    %c139 = arith.constant 139 : index
    %26 = vector.load %arg6[%c0_27, %c139] : memref<8x384xf32, #tpu.memory_space<vmem>>, vector<8x128xf32>
    %c64 = arith.constant 64 : index
    %c0_28 = arith.constant 0 : index
    %27 = vector.load %arg7[%c64, %c0_28] : memref<72x128xf32, #tpu.memory_space<vmem>>, vector<8x128xf32>
    tpu.vector_store %arg7[%c64, %c0_28], %26 {strides = array<i32>} : memref<72x128xf32, #tpu.memory_space<vmem>>, vector<8x128xf32>,
    %c0_29 = arith.constant 0 : index
    %c0_30 = arith.constant 0 : index
    %c0_31 = arith.constant 0 : index
    %28 = vector.load %arg2[%c0_29, %c0_30, %c0_31] : memref<1x8x72xbf16, #tpu.memory_space<vmem>>, vector<1x8x72xbf16>
    %29 = vector.shape_cast %28 : vector<1x8x72xbf16> to vector<8x72xbf16>
    %c0_32 = arith.constant 0 : index
    %c0_33 = arith.constant 0 : index
    %30 = vector.load %arg7[%c0_32, %c0_33] : memref<72x128xf32, #tpu.memory_space<vmem>>, vector<72x128xf32>
    %31 = arith.truncf %30 : vector<72x128xf32> to vector<72x128xbf16>
    %cst_34 = arith.constant dense<0.000000e+00> : vector<8x128xf32>
    %32 = tpu.matmul %29, %31, %cst_34 {dimension_numbers = #tpu.dot_dimension_numbers<[1], [0], [0], [1], [0, 0, 1, 1], [], []>} : vector<8x72xbf16>, vector<72x128xbf16>, vector<8x128xf32> -> vector<8x128xf32>
    %c0_35 = arith.constant 0 : index
    %c0_36 = arith.constant 0 : index
    %c0_37 = arith.constant 0 : index
    %33 = vector.load %arg3[%c0_35, %c0_36, %c0_37] : memref<1x8x1xf32, #tpu.memory_space<vmem>>, vector<1x8x1xf32>
    %34 = vector.shape_cast %33 : vector<1x8x1xf32> to vector<8x1xf32>
    %35 = vector.broadcast %34 : vector<8x1xf32> to vector<8x128xf32>
    %36 = arith.addf %32, %35 : vector<8x128xf32>
    %cst_38 = arith.constant 0.000000e+00 : f32
    %37 = vector.broadcast %cst_38 : f32 to vector<8x128xf32>
    %38 = arith.cmpf oge, %36, %37 : vector<8x128xf32>
    %cst_39 = arith.constant 1.000000e-01 : f32
    %39 = vector.broadcast %cst_39 : f32 to vector<8x128xf32>
    %40 = arith.mulf %39, %36 : vector<8x128xf32>
    %41 = arith.select %38, %36, %40 : vector<8x128xi1>, vector<8x128xf32>
    %c0_40 = arith.constant 0 : index
    %c0_41 = arith.constant 0 : index
    %c0_42 = arith.constant 0 : index
    %42 = vector.load %arg5[%c0_40, %c0_41, %c0_42] : memref<1x8x128xf32, #tpu.memory_space<vmem>>, vector<1x8x128xf32>
    %43 = vector.shape_cast %42 : vector<1x8x128xf32> to vector<8x128xf32>
    %44 = vector.shape_cast %41 : vector<8x128xf32> to vector<1x8x128xf32>
    tpu.vector_store %arg5[%c0_40, %c0_41, %c0_42], %44 {strides = array<i32>} : memref<1x8x128xf32, #tpu.memory_space<vmem>>, vector<1x8x128xf32>,
    return
  }
  func.func @transform_0(%arg0: i32) -> (i32, i32, i32) {
    %c0_i32 = arith.constant 0 : i32
    %c0_i32_0 = arith.constant 0 : i32
    %c0_i32_1 = arith.constant 0 : i32
    return %arg0, %c0_i32, %c0_i32_0 : i32, i32, i32
  }
  func.func @transform_1(%arg0: i32) -> (i32, i32, i32) {
    %c0_i32 = arith.constant 0 : i32
    %c0_i32_0 = arith.constant 0 : i32
    %c0_i32_1 = arith.constant 0 : i32
    %c0_i32_2 = arith.constant 0 : i32
    return %c0_i32, %c0_i32_0, %c0_i32_1 : i32, i32, i32
  }
  func.func @transform_2(%arg0: i32) -> (i32, i32, i32) {
    %c0_i32 = arith.constant 0 : i32
    %c0_i32_0 = arith.constant 0 : i32
    %c0_i32_1 = arith.constant 0 : i32
    %c0_i32_2 = arith.constant 0 : i32
    return %c0_i32, %c0_i32_0, %c0_i32_1 : i32, i32, i32
  }
  func.func @transform_3(%arg0: i32) -> (i32, i32) {
    %c0_i32 = arith.constant 0 : i32
    %c0_i32_0 = arith.constant 0 : i32
    %c0_i32_1 = arith.constant 0 : i32
    return %c0_i32, %c0_i32_0 : i32, i32
  }
  func.func @transform_4(%arg0: i32) -> (i32, i32, i32) {
    %c0_i32 = arith.constant 0 : i32
    %c0_i32_0 = arith.constant 0 : i32
    %c0_i32_1 = arith.constant 0 : i32
    return %arg0, %c0_i32, %c0_i32_0 : i32, i32, i32
  }
}

module attributes {stable_mosaic.version = 11 : i64} {
  func.func @kernel(%arg0: i32, %arg1: memref<1x8x128xf32, #tpu.memory_space<vmem>>, %arg2: memref<1x8x72xbf16, #tpu.memory_space<vmem>>, %arg3: memref<1x8x1xf32, #tpu.memory_space<vmem>>, %arg4: memref<1x128xf32, #tpu.memory_space<vmem>>, %arg5: memref<1x8x128xf32, #tpu.memory_space<vmem>>, %arg6: memref<8x384xf32, #tpu.memory_space<vmem>>, %arg7: memref<72x128xf32, #tpu.memory_space<vmem>>) attributes {dimension_semantics = [#tpu.dimension_semantics<parallel>], iteration_bounds = array<i64: 2>, scalar_prefetch = 0 : i64, scratch_operands = 2 : i64, tpu.core_type = #tpu.core_type<tc>, window_params = [{transform_indices = @transform_0, window_bounds = array<i64: 1, 8, 128>}, {pipeline_mode = #tpu.pipeline_mode<synchronous>, transform_indices = @transform_1, window_bounds = array<i64: 1, 8, 72>}, {pipeline_mode = #tpu.pipeline_mode<synchronous>, transform_indices = @transform_2, window_bounds = array<i64: 1, 8, 1>}, {pipeline_mode = #tpu.pipeline_mode<synchronous>, transform_indices = @transform_3, window_bounds = array<i64: 1, 128>}, {transform_indices = @transform_4, window_bounds = array<i64: 1, 8, 128>}]} {
    %c0 = arith.constant 0 : index
    %c0_0 = arith.constant 0 : index
    %0 = vector.load %arg4[%c0, %c0_0] : memref<1x128xf32, #tpu.memory_space<vmem>>, vector<1x128xf32>
    %cst = arith.constant 0.000000e+00 : f32
    %1 = vector.broadcast %cst : f32 to vector<8x128xf32>
    %c0_1 = arith.constant 0 : index
    %c0_2 = arith.constant 0 : index
    %2 = vector.load %arg6[%c0_1, %c0_2] : memref<8x384xf32, #tpu.memory_space<vmem>>, vector<8x128xf32>
    tpu.vector_store %arg6[%c0_1, %c0_2], %1 {strides = array<i32>} : memref<8x384xf32, #tpu.memory_space<vmem>>, vector<8x128xf32>,
    %cst_3 = arith.constant 0.000000e+00 : f32
    %3 = vector.broadcast %cst_3 : f32 to vector<8x128xf32>
    %c0_4 = arith.constant 0 : index
    %c256 = arith.constant 256 : index
    %4 = vector.load %arg6[%c0_4, %c256] : memref<8x384xf32, #tpu.memory_space<vmem>>, vector<8x128xf32>
    tpu.vector_store %arg6[%c0_4, %c256], %3 {strides = array<i32>} : memref<8x384xf32, #tpu.memory_space<vmem>>, vector<8x128xf32>,
    %c0_5 = arith.constant 0 : index
    %c0_6 = arith.constant 0 : index
    %c0_7 = arith.constant 0 : index
    %5 = vector.load %arg1[%c0_5, %c0_6, %c0_7] : memref<1x8x128xf32, #tpu.memory_space<vmem>>, vector<1x8x128xf32>
    %6 = vector.shape_cast %5 : vector<1x8x128xf32> to vector<8x128xf32>
    %7 = vector.broadcast %0 : vector<1x128xf32> to vector<8x128xf32>
    %8 = arith.mulf %6, %7 : vector<8x128xf32>
    %c0_8 = arith.constant 0 : index
    %c128 = arith.constant 128 : index
    %9 = vector.load %arg6[%c0_8, %c128] : memref<8x384xf32, #tpu.memory_space<vmem>>, vector<8x128xf32>
    tpu.vector_store %arg6[%c0_8, %c128], %8 {strides = array<i32>} : memref<8x384xf32, #tpu.memory_space<vmem>>, vector<8x128xf32>,
    %c0_9 = arith.constant 0 : index
    %c121 = arith.constant 121 : index
    %10 = vector.load %arg6[%c0_9, %c121] : memref<8x384xf32, #tpu.memory_space<vmem>>, vector<8x128xf32>
    %c0_10 = arith.constant 0 : index
    %c0_11 = arith.constant 0 : index
    %11 = vector.load %arg7[%c0_10, %c0_11] : memref<72x128xf32, #tpu.memory_space<vmem>>, vector<8x128xf32>
    tpu.vector_store %arg7[%c0_10, %c0_11], %10 {strides = array<i32>} : memref<72x128xf32, #tpu.memory_space<vmem>>, vector<8x128xf32>,
    %c0_12 = arith.constant 0 : index
    %c122 = arith.constant 122 : index
    %12 = vector.load %arg6[%c0_12, %c122] : memref<8x384xf32, #tpu.memory_space<vmem>>, vector<8x128xf32>
    %c8 = arith.constant 8 : index
    %c0_13 = arith.constant 0 : index
    %13 = vector.load %arg7[%c8, %c0_13] : memref<72x128xf32, #tpu.memory_space<vmem>>, vector<8x128xf32>
    tpu.vector_store %arg7[%c8, %c0_13], %12 {strides = array<i32>} : memref<72x128xf32, #tpu.memory_space<vmem>>, vector<8x128xf32>,
    %c0_14 = arith.constant 0 : index
    %c123 = arith.constant 123 : index
    %14 = vector.load %arg6[%c0_14, %c123] : memref<8x384xf32, #tpu.memory_space<vmem>>, vector<8x128xf32>
    %c16 = arith.constant 16 : index
    %c0_15 = arith.constant 0 : index
    %15 = vector.load %arg7[%c16, %c0_15] : memref<72x128xf32, #tpu.memory_space<vmem>>, vector<8x128xf32>
    tpu.vector_store %arg7[%c16, %c0_15], %14 {strides = array<i32>} : memref<72x128xf32, #tpu.memory_space<vmem>>, vector<8x128xf32>,
    %c0_16 = arith.constant 0 : index
    %c127 = arith.constant 127 : index
    %16 = vector.load %arg6[%c0_16, %c127] : memref<8x384xf32, #tpu.memory_space<vmem>>, vector<8x128xf32>
    %c24 = arith.constant 24 : index
    %c0_17 = arith.constant 0 : index
    %17 = vector.load %arg7[%c24, %c0_17] : memref<72x128xf32, #tpu.memory_space<vmem>>, vector<8x128xf32>
    tpu.vector_store %arg7[%c24, %c0_17], %16 {strides = array<i32>} : memref<72x128xf32, #tpu.memory_space<vmem>>, vector<8x128xf32>,
    %c0_18 = arith.constant 0 : index
    %c128_19 = arith.constant 128 : index
    %18 = vector.load %arg6[%c0_18, %c128_19] : memref<8x384xf32, #tpu.memory_space<vmem>>, vector<8x128xf32>
    %c32 = arith.constant 32 : index
    %c0_20 = arith.constant 0 : index
    %19 = vector.load %arg7[%c32, %c0_20] : memref<72x128xf32, #tpu.memory_space<vmem>>, vector<8x128xf32>
    tpu.vector_store %arg7[%c32, %c0_20], %18 {strides = array<i32>} : memref<72x128xf32, #tpu.memory_space<vmem>>, vector<8x128xf32>,
    %c0_21 = arith.constant 0 : index
    %c129 = arith.constant 129 : index
    %20 = vector.load %arg6[%c0_21, %c129] : memref<8x384xf32, #tpu.memory_space<vmem>>, vector<8x128xf32>
    %c40 = arith.constant 40 : index
    %c0_22 = arith.constant 0 : index
    %21 = vector.load %arg7[%c40, %c0_22] : memref<72x128xf32, #tpu.memory_space<vmem>>, vector<8x128xf32>
    tpu.vector_store %arg7[%c40, %c0_22], %20 {strides = array<i32>} : memref<72x128xf32, #tpu.memory_space<vmem>>, vector<8x128xf32>,
    %c0_23 = arith.constant 0 : index
    %c133 = arith.constant 133 : index
    %22 = vector.load %arg6[%c0_23, %c133] : memref<8x384xf32, #tpu.memory_space<vmem>>, vector<8x128xf32>
    %c48 = arith.constant 48 : index
    %c0_24 = arith.constant 0 : index
    %23 = vector.load %arg7[%c48, %c0_24] : memref<72x128xf32, #tpu.memory_space<vmem>>, vector<8x128xf32>
    tpu.vector_store %arg7[%c48, %c0_24], %22 {strides = array<i32>} : memref<72x128xf32, #tpu.memory_space<vmem>>, vector<8x128xf32>,
    %c0_25 = arith.constant 0 : index
    %c134 = arith.constant 134 : index
    %24 = vector.load %arg6[%c0_25, %c134] : memref<8x384xf32, #tpu.memory_space<vmem>>, vector<8x128xf32>
    %c56 = arith.constant 56 : index
    %c0_26 = arith.constant 0 : index
    %25 = vector.load %arg7[%c56, %c0_26] : memref<72x128xf32, #tpu.memory_space<vmem>>, vector<8x128xf32>
    tpu.vector_store %arg7[%c56, %c0_26], %24 {strides = array<i32>} : memref<72x128xf32, #tpu.memory_space<vmem>>, vector<8x128xf32>,
    %c0_27 = arith.constant 0 : index
    %c135 = arith.constant 135 : index
    %26 = vector.load %arg6[%c0_27, %c135] : memref<8x384xf32, #tpu.memory_space<vmem>>, vector<8x128xf32>
    %c64 = arith.constant 64 : index
    %c0_28 = arith.constant 0 : index
    %27 = vector.load %arg7[%c64, %c0_28] : memref<72x128xf32, #tpu.memory_space<vmem>>, vector<8x128xf32>
    tpu.vector_store %arg7[%c64, %c0_28], %26 {strides = array<i32>} : memref<72x128xf32, #tpu.memory_space<vmem>>, vector<8x128xf32>,
    %c0_29 = arith.constant 0 : index
    %c0_30 = arith.constant 0 : index
    %c0_31 = arith.constant 0 : index
    %28 = vector.load %arg2[%c0_29, %c0_30, %c0_31] : memref<1x8x72xbf16, #tpu.memory_space<vmem>>, vector<1x8x72xbf16>
    %29 = vector.shape_cast %28 : vector<1x8x72xbf16> to vector<8x72xbf16>
    %c0_32 = arith.constant 0 : index
    %c0_33 = arith.constant 0 : index
    %30 = vector.load %arg7[%c0_32, %c0_33] : memref<72x128xf32, #tpu.memory_space<vmem>>, vector<72x128xf32>
    %31 = arith.truncf %30 : vector<72x128xf32> to vector<72x128xbf16>
    %cst_34 = arith.constant dense<0.000000e+00> : vector<8x128xf32>
    %32 = tpu.matmul %29, %31, %cst_34 {dimension_numbers = #tpu.dot_dimension_numbers<[1], [0], [0], [1], [0, 0, 1, 1], [], []>} : vector<8x72xbf16>, vector<72x128xbf16>, vector<8x128xf32> -> vector<8x128xf32>
    %c0_35 = arith.constant 0 : index
    %c0_36 = arith.constant 0 : index
    %c0_37 = arith.constant 0 : index
    %33 = vector.load %arg3[%c0_35, %c0_36, %c0_37] : memref<1x8x1xf32, #tpu.memory_space<vmem>>, vector<1x8x1xf32>
    %34 = vector.shape_cast %33 : vector<1x8x1xf32> to vector<8x1xf32>
    %35 = vector.broadcast %34 : vector<8x1xf32> to vector<8x128xf32>
    %36 = arith.addf %32, %35 : vector<8x128xf32>
    %cst_38 = arith.constant 0.000000e+00 : f32
    %37 = vector.broadcast %cst_38 : f32 to vector<8x128xf32>
    %38 = arith.cmpf oge, %36, %37 : vector<8x128xf32>
    %cst_39 = arith.constant 1.000000e-01 : f32
    %39 = vector.broadcast %cst_39 : f32 to vector<8x128xf32>
    %40 = arith.mulf %39, %36 : vector<8x128xf32>
    %41 = arith.select %38, %36, %40 : vector<8x128xi1>, vector<8x128xf32>
    %c0_40 = arith.constant 0 : index
    %c0_41 = arith.constant 0 : index
    %c0_42 = arith.constant 0 : index
    %42 = vector.load %arg5[%c0_40, %c0_41, %c0_42] : memref<1x8x128xf32, #tpu.memory_space<vmem>>, vector<1x8x128xf32>
    %43 = vector.shape_cast %42 : vector<1x8x128xf32> to vector<8x128xf32>
    %44 = vector.shape_cast %41 : vector<8x128xf32> to vector<1x8x128xf32>
    tpu.vector_store %arg5[%c0_40, %c0_41, %c0_42], %44 {strides = array<i32>} : memref<1x8x128xf32, #tpu.memory_space<vmem>>, vector<1x8x128xf32>,
    return
  }
  func.func @transform_0(%arg0: i32) -> (i32, i32, i32) {
    %c0_i32 = arith.constant 0 : i32
    %c0_i32_0 = arith.constant 0 : i32
    %c0_i32_1 = arith.constant 0 : i32
    return %arg0, %c0_i32, %c0_i32_0 : i32, i32, i32
  }
  func.func @transform_1(%arg0: i32) -> (i32, i32, i32) {
    %c0_i32 = arith.constant 0 : i32
    %c0_i32_0 = arith.constant 0 : i32
    %c0_i32_1 = arith.constant 0 : i32
    %c0_i32_2 = arith.constant 0 : i32
    return %c0_i32, %c0_i32_0, %c0_i32_1 : i32, i32, i32
  }
  func.func @transform_2(%arg0: i32) -> (i32, i32, i32) {
    %c0_i32 = arith.constant 0 : i32
    %c0_i32_0 = arith.constant 0 : i32
    %c0_i32_1 = arith.constant 0 : i32
    %c0_i32_2 = arith.constant 0 : i32
    return %c0_i32, %c0_i32_0, %c0_i32_1 : i32, i32, i32
  }
  func.func @transform_3(%arg0: i32) -> (i32, i32) {
    %c0_i32 = arith.constant 0 : i32
    %c0_i32_0 = arith.constant 0 : i32
    %c0_i32_1 = arith.constant 0 : i32
    return %c0_i32, %c0_i32_0 : i32, i32
  }
  func.func @transform_4(%arg0: i32) -> (i32, i32, i32) {
    %c0_i32 = arith.constant 0 : i32
    %c0_i32_0 = arith.constant 0 : i32
    %c0_i32_1 = arith.constant 0 : i32
    return %arg0, %c0_i32, %c0_i32_0 : i32, i32, i32
  }
}

module attributes {stable_mosaic.version = 11 : i64} {
  func.func @kernel(%arg0: i32, %arg1: memref<1x8x128xf32, #tpu.memory_space<vmem>>, %arg2: memref<2x8x72xbf16, #tpu.memory_space<vmem>>, %arg3: memref<2x8x1xf32, #tpu.memory_space<vmem>>, %arg4: memref<1x128xf32, #tpu.memory_space<vmem>>, %arg5: memref<1x8x128xf32, #tpu.memory_space<vmem>>, %arg6: memref<8x384xf32, #tpu.memory_space<vmem>>, %arg7: memref<72x128xf32, #tpu.memory_space<vmem>>) attributes {dimension_semantics = [#tpu.dimension_semantics<parallel>], iteration_bounds = array<i64: 2>, scalar_prefetch = 0 : i64, scratch_operands = 2 : i64, tpu.core_type = #tpu.core_type<tc>, window_params = [{transform_indices = @transform_0, window_bounds = array<i64: 1, 8, 128>}, {pipeline_mode = #tpu.pipeline_mode<synchronous>, transform_indices = @transform_1, window_bounds = array<i64: 2, 8, 72>}, {pipeline_mode = #tpu.pipeline_mode<synchronous>, transform_indices = @transform_2, window_bounds = array<i64: 2, 8, 1>}, {pipeline_mode = #tpu.pipeline_mode<synchronous>, transform_indices = @transform_3, window_bounds = array<i64: 1, 128>}, {transform_indices = @transform_4, window_bounds = array<i64: 1, 8, 128>}]} {
    %c0 = arith.constant 0 : index
    %c0_0 = arith.constant 0 : index
    %0 = vector.load %arg4[%c0, %c0_0] : memref<1x128xf32, #tpu.memory_space<vmem>>, vector<1x128xf32>
    %cst = arith.constant 0.000000e+00 : f32
    %1 = vector.broadcast %cst : f32 to vector<8x128xf32>
    %c0_1 = arith.constant 0 : index
    %c0_2 = arith.constant 0 : index
    %2 = vector.load %arg6[%c0_1, %c0_2] : memref<8x384xf32, #tpu.memory_space<vmem>>, vector<8x128xf32>
    tpu.vector_store %arg6[%c0_1, %c0_2], %1 {strides = array<i32>} : memref<8x384xf32, #tpu.memory_space<vmem>>, vector<8x128xf32>,
    %cst_3 = arith.constant 0.000000e+00 : f32
    %3 = vector.broadcast %cst_3 : f32 to vector<8x128xf32>
    %c0_4 = arith.constant 0 : index
    %c256 = arith.constant 256 : index
    %4 = vector.load %arg6[%c0_4, %c256] : memref<8x384xf32, #tpu.memory_space<vmem>>, vector<8x128xf32>
    tpu.vector_store %arg6[%c0_4, %c256], %3 {strides = array<i32>} : memref<8x384xf32, #tpu.memory_space<vmem>>, vector<8x128xf32>,
    %c0_5 = arith.constant 0 : index
    %c0_6 = arith.constant 0 : index
    %c0_7 = arith.constant 0 : index
    %5 = vector.load %arg1[%c0_5, %c0_6, %c0_7] : memref<1x8x128xf32, #tpu.memory_space<vmem>>, vector<1x8x128xf32>
    %6 = vector.shape_cast %5 : vector<1x8x128xf32> to vector<8x128xf32>
    %7 = vector.broadcast %0 : vector<1x128xf32> to vector<8x128xf32>
    %8 = arith.mulf %6, %7 : vector<8x128xf32>
    %c0_8 = arith.constant 0 : index
    %c128 = arith.constant 128 : index
    %9 = vector.load %arg6[%c0_8, %c128] : memref<8x384xf32, #tpu.memory_space<vmem>>, vector<8x128xf32>
    tpu.vector_store %arg6[%c0_8, %c128], %8 {strides = array<i32>} : memref<8x384xf32, #tpu.memory_space<vmem>>, vector<8x128xf32>,
    %c0_9 = arith.constant 0 : index
    %c123 = arith.constant 123 : index
    %10 = vector.load %arg6[%c0_9, %c123] : memref<8x384xf32, #tpu.memory_space<vmem>>, vector<8x128xf32>
    %c0_10 = arith.constant 0 : index
    %c0_11 = arith.constant 0 : index
    %11 = vector.load %arg7[%c0_10, %c0_11] : memref<72x128xf32, #tpu.memory_space<vmem>>, vector<8x128xf32>
    tpu.vector_store %arg7[%c0_10, %c0_11], %10 {strides = array<i32>} : memref<72x128xf32, #tpu.memory_space<vmem>>, vector<8x128xf32>,
    %c0_12 = arith.constant 0 : index
    %c124 = arith.constant 124 : index
    %12 = vector.load %arg6[%c0_12, %c124] : memref<8x384xf32, #tpu.memory_space<vmem>>, vector<8x128xf32>
    %c8 = arith.constant 8 : index
    %c0_13 = arith.constant 0 : index
    %13 = vector.load %arg7[%c8, %c0_13] : memref<72x128xf32, #tpu.memory_space<vmem>>, vector<8x128xf32>
    tpu.vector_store %arg7[%c8, %c0_13], %12 {strides = array<i32>} : memref<72x128xf32, #tpu.memory_space<vmem>>, vector<8x128xf32>,
    %c0_14 = arith.constant 0 : index
    %c125 = arith.constant 125 : index
    %14 = vector.load %arg6[%c0_14, %c125] : memref<8x384xf32, #tpu.memory_space<vmem>>, vector<8x128xf32>
    %c16 = arith.constant 16 : index
    %c0_15 = arith.constant 0 : index
    %15 = vector.load %arg7[%c16, %c0_15] : memref<72x128xf32, #tpu.memory_space<vmem>>, vector<8x128xf32>
    tpu.vector_store %arg7[%c16, %c0_15], %14 {strides = array<i32>} : memref<72x128xf32, #tpu.memory_space<vmem>>, vector<8x128xf32>,
    %c0_16 = arith.constant 0 : index
    %c127 = arith.constant 127 : index
    %16 = vector.load %arg6[%c0_16, %c127] : memref<8x384xf32, #tpu.memory_space<vmem>>, vector<8x128xf32>
    %c24 = arith.constant 24 : index
    %c0_17 = arith.constant 0 : index
    %17 = vector.load %arg7[%c24, %c0_17] : memref<72x128xf32, #tpu.memory_space<vmem>>, vector<8x128xf32>
    tpu.vector_store %arg7[%c24, %c0_17], %16 {strides = array<i32>} : memref<72x128xf32, #tpu.memory_space<vmem>>, vector<8x128xf32>,
    %c0_18 = arith.constant 0 : index
    %c128_19 = arith.constant 128 : index
    %18 = vector.load %arg6[%c0_18, %c128_19] : memref<8x384xf32, #tpu.memory_space<vmem>>, vector<8x128xf32>
    %c32 = arith.constant 32 : index
    %c0_20 = arith.constant 0 : index
    %19 = vector.load %arg7[%c32, %c0_20] : memref<72x128xf32, #tpu.memory_space<vmem>>, vector<8x128xf32>
    tpu.vector_store %arg7[%c32, %c0_20], %18 {strides = array<i32>} : memref<72x128xf32, #tpu.memory_space<vmem>>, vector<8x128xf32>,
    %c0_21 = arith.constant 0 : index
    %c129 = arith.constant 129 : index
    %20 = vector.load %arg6[%c0_21, %c129] : memref<8x384xf32, #tpu.memory_space<vmem>>, vector<8x128xf32>
    %c40 = arith.constant 40 : index
    %c0_22 = arith.constant 0 : index
    %21 = vector.load %arg7[%c40, %c0_22] : memref<72x128xf32, #tpu.memory_space<vmem>>, vector<8x128xf32>
    tpu.vector_store %arg7[%c40, %c0_22], %20 {strides = array<i32>} : memref<72x128xf32, #tpu.memory_space<vmem>>, vector<8x128xf32>,
    %c0_23 = arith.constant 0 : index
    %c131 = arith.constant 131 : index
    %22 = vector.load %arg6[%c0_23, %c131] : memref<8x384xf32, #tpu.memory_space<vmem>>, vector<8x128xf32>
    %c48 = arith.constant 48 : index
    %c0_24 = arith.constant 0 : index
    %23 = vector.load %arg7[%c48, %c0_24] : memref<72x128xf32, #tpu.memory_space<vmem>>, vector<8x128xf32>
    tpu.vector_store %arg7[%c48, %c0_24], %22 {strides = array<i32>} : memref<72x128xf32, #tpu.memory_space<vmem>>, vector<8x128xf32>,
    %c0_25 = arith.constant 0 : index
    %c132 = arith.constant 132 : index
    %24 = vector.load %arg6[%c0_25, %c132] : memref<8x384xf32, #tpu.memory_space<vmem>>, vector<8x128xf32>
    %c56 = arith.constant 56 : index
    %c0_26 = arith.constant 0 : index
    %25 = vector.load %arg7[%c56, %c0_26] : memref<72x128xf32, #tpu.memory_space<vmem>>, vector<8x128xf32>
    tpu.vector_store %arg7[%c56, %c0_26], %24 {strides = array<i32>} : memref<72x128xf32, #tpu.memory_space<vmem>>, vector<8x128xf32>,
    %c0_27 = arith.constant 0 : index
    %c133 = arith.constant 133 : index
    %26 = vector.load %arg6[%c0_27, %c133] : memref<8x384xf32, #tpu.memory_space<vmem>>, vector<8x128xf32>
    %c64 = arith.constant 64 : index
    %c0_28 = arith.constant 0 : index
    %27 = vector.load %arg7[%c64, %c0_28] : memref<72x128xf32, #tpu.memory_space<vmem>>, vector<8x128xf32>
    tpu.vector_store %arg7[%c64, %c0_28], %26 {strides = array<i32>} : memref<72x128xf32, #tpu.memory_space<vmem>>, vector<8x128xf32>,
    %c0_29 = arith.constant 0 : index
    %c0_30 = arith.constant 0 : index
    %c0_31 = arith.constant 0 : index
    %28 = vector.load %arg2[%c0_29, %c0_30, %c0_31] : memref<2x8x72xbf16, #tpu.memory_space<vmem>>, vector<1x8x72xbf16>
    %29 = vector.shape_cast %28 : vector<1x8x72xbf16> to vector<8x72xbf16>
    %c0_32 = arith.constant 0 : index
    %c0_33 = arith.constant 0 : index
    %30 = vector.load %arg7[%c0_32, %c0_33] : memref<72x128xf32, #tpu.memory_space<vmem>>, vector<72x128xf32>
    %31 = arith.truncf %30 : vector<72x128xf32> to vector<72x128xbf16>
    %cst_34 = arith.constant dense<0.000000e+00> : vector<8x128xf32>
    %32 = tpu.matmul %29, %31, %cst_34 {dimension_numbers = #tpu.dot_dimension_numbers<[1], [0], [0], [1], [0, 0, 1, 1], [], []>} : vector<8x72xbf16>, vector<72x128xbf16>, vector<8x128xf32> -> vector<8x128xf32>
    %c0_35 = arith.constant 0 : index
    %c0_36 = arith.constant 0 : index
    %c0_37 = arith.constant 0 : index
    %33 = vector.load %arg3[%c0_35, %c0_36, %c0_37] : memref<2x8x1xf32, #tpu.memory_space<vmem>>, vector<1x8x1xf32>
    %34 = vector.shape_cast %33 : vector<1x8x1xf32> to vector<8x1xf32>
    %35 = vector.broadcast %34 : vector<8x1xf32> to vector<8x128xf32>
    %36 = arith.addf %32, %35 : vector<8x128xf32>
    %cst_38 = arith.constant 0.000000e+00 : f32
    %37 = vector.broadcast %cst_38 : f32 to vector<8x128xf32>
    %38 = arith.maximumf %36, %37 : vector<8x128xf32>
    %39 = vector.broadcast %0 : vector<1x128xf32> to vector<8x128xf32>
    %40 = arith.mulf %38, %39 : vector<8x128xf32>
    %c0_39 = arith.constant 0 : index
    %c128_40 = arith.constant 128 : index
    %41 = vector.load %arg6[%c0_39, %c128_40] : memref<8x384xf32, #tpu.memory_space<vmem>>, vector<8x128xf32>
    tpu.vector_store %arg6[%c0_39, %c128_40], %40 {strides = array<i32>} : memref<8x384xf32, #tpu.memory_space<vmem>>, vector<8x128xf32>,
    %c0_41 = arith.constant 0 : index
    %c123_42 = arith.constant 123 : index
    %42 = vector.load %arg6[%c0_41, %c123_42] : memref<8x384xf32, #tpu.memory_space<vmem>>, vector<8x128xf32>
    %c0_43 = arith.constant 0 : index
    %c0_44 = arith.constant 0 : index
    %43 = vector.load %arg7[%c0_43, %c0_44] : memref<72x128xf32, #tpu.memory_space<vmem>>, vector<8x128xf32>
    tpu.vector_store %arg7[%c0_43, %c0_44], %42 {strides = array<i32>} : memref<72x128xf32, #tpu.memory_space<vmem>>, vector<8x128xf32>,
    %c0_45 = arith.constant 0 : index
    %c124_46 = arith.constant 124 : index
    %44 = vector.load %arg6[%c0_45, %c124_46] : memref<8x384xf32, #tpu.memory_space<vmem>>, vector<8x128xf32>
    %c8_47 = arith.constant 8 : index
    %c0_48 = arith.constant 0 : index
    %45 = vector.load %arg7[%c8_47, %c0_48] : memref<72x128xf32, #tpu.memory_space<vmem>>, vector<8x128xf32>
    tpu.vector_store %arg7[%c8_47, %c0_48], %44 {strides = array<i32>} : memref<72x128xf32, #tpu.memory_space<vmem>>, vector<8x128xf32>,
    %c0_49 = arith.constant 0 : index
    %c125_50 = arith.constant 125 : index
    %46 = vector.load %arg6[%c0_49, %c125_50] : memref<8x384xf32, #tpu.memory_space<vmem>>, vector<8x128xf32>
    %c16_51 = arith.constant 16 : index
    %c0_52 = arith.constant 0 : index
    %47 = vector.load %arg7[%c16_51, %c0_52] : memref<72x128xf32, #tpu.memory_space<vmem>>, vector<8x128xf32>
    tpu.vector_store %arg7[%c16_51, %c0_52], %46 {strides = array<i32>} : memref<72x128xf32, #tpu.memory_space<vmem>>, vector<8x128xf32>,
    %c0_53 = arith.constant 0 : index
    %c127_54 = arith.constant 127 : index
    %48 = vector.load %arg6[%c0_53, %c127_54] : memref<8x384xf32, #tpu.memory_space<vmem>>, vector<8x128xf32>
    %c24_55 = arith.constant 24 : index
    %c0_56 = arith.constant 0 : index
    %49 = vector.load %arg7[%c24_55, %c0_56] : memref<72x128xf32, #tpu.memory_space<vmem>>, vector<8x128xf32>
    tpu.vector_store %arg7[%c24_55, %c0_56], %48 {strides = array<i32>} : memref<72x128xf32, #tpu.memory_space<vmem>>, vector<8x128xf32>,
    %c0_57 = arith.constant 0 : index
    %c128_58 = arith.constant 128 : index
    %50 = vector.load %arg6[%c0_57, %c128_58] : memref<8x384xf32, #tpu.memory_space<vmem>>, vector<8x128xf32>
    %c32_59 = arith.constant 32 : index
    %c0_60 = arith.constant 0 : index
    %51 = vector.load %arg7[%c32_59, %c0_60] : memref<72x128xf32, #tpu.memory_space<vmem>>, vector<8x128xf32>
    tpu.vector_store %arg7[%c32_59, %c0_60], %50 {strides = array<i32>} : memref<72x128xf32, #tpu.memory_space<vmem>>, vector<8x128xf32>,
    %c0_61 = arith.constant 0 : index
    %c129_62 = arith.constant 129 : index
    %52 = vector.load %arg6[%c0_61, %c129_62] : memref<8x384xf32, #tpu.memory_space<vmem>>, vector<8x128xf32>
    %c40_63 = arith.constant 40 : index
    %c0_64 = arith.constant 0 : index
    %53 = vector.load %arg7[%c40_63, %c0_64] : memref<72x128xf32, #tpu.memory_space<vmem>>, vector<8x128xf32>
    tpu.vector_store %arg7[%c40_63, %c0_64], %52 {strides = array<i32>} : memref<72x128xf32, #tpu.memory_space<vmem>>, vector<8x128xf32>,
    %c0_65 = arith.constant 0 : index
    %c131_66 = arith.constant 131 : index
    %54 = vector.load %arg6[%c0_65, %c131_66] : memref<8x384xf32, #tpu.memory_space<vmem>>, vector<8x128xf32>
    %c48_67 = arith.constant 48 : index
    %c0_68 = arith.constant 0 : index
    %55 = vector.load %arg7[%c48_67, %c0_68] : memref<72x128xf32, #tpu.memory_space<vmem>>, vector<8x128xf32>
    tpu.vector_store %arg7[%c48_67, %c0_68], %54 {strides = array<i32>} : memref<72x128xf32, #tpu.memory_space<vmem>>, vector<8x128xf32>,
    %c0_69 = arith.constant 0 : index
    %c132_70 = arith.constant 132 : index
    %56 = vector.load %arg6[%c0_69, %c132_70] : memref<8x384xf32, #tpu.memory_space<vmem>>, vector<8x128xf32>
    %c56_71 = arith.constant 56 : index
    %c0_72 = arith.constant 0 : index
    %57 = vector.load %arg7[%c56_71, %c0_72] : memref<72x128xf32, #tpu.memory_space<vmem>>, vector<8x128xf32>
    tpu.vector_store %arg7[%c56_71, %c0_72], %56 {strides = array<i32>} : memref<72x128xf32, #tpu.memory_space<vmem>>, vector<8x128xf32>,
    %c0_73 = arith.constant 0 : index
    %c133_74 = arith.constant 133 : index
    %58 = vector.load %arg6[%c0_73, %c133_74] : memref<8x384xf32, #tpu.memory_space<vmem>>, vector<8x128xf32>
    %c64_75 = arith.constant 64 : index
    %c0_76 = arith.constant 0 : index
    %59 = vector.load %arg7[%c64_75, %c0_76] : memref<72x128xf32, #tpu.memory_space<vmem>>, vector<8x128xf32>
    tpu.vector_store %arg7[%c64_75, %c0_76], %58 {strides = array<i32>} : memref<72x128xf32, #tpu.memory_space<vmem>>, vector<8x128xf32>,
    %c1 = arith.constant 1 : index
    %c0_77 = arith.constant 0 : index
    %c0_78 = arith.constant 0 : index
    %60 = vector.load %arg2[%c1, %c0_77, %c0_78] : memref<2x8x72xbf16, #tpu.memory_space<vmem>>, vector<1x8x72xbf16>
    %61 = vector.shape_cast %60 : vector<1x8x72xbf16> to vector<8x72xbf16>
    %c0_79 = arith.constant 0 : index
    %c0_80 = arith.constant 0 : index
    %62 = vector.load %arg7[%c0_79, %c0_80] : memref<72x128xf32, #tpu.memory_space<vmem>>, vector<72x128xf32>
    %63 = arith.truncf %62 : vector<72x128xf32> to vector<72x128xbf16>
    %cst_81 = arith.constant dense<0.000000e+00> : vector<8x128xf32>
    %64 = tpu.matmul %61, %63, %cst_81 {dimension_numbers = #tpu.dot_dimension_numbers<[1], [0], [0], [1], [0, 0, 1, 1], [], []>} : vector<8x72xbf16>, vector<72x128xbf16>, vector<8x128xf32> -> vector<8x128xf32>
    %c1_82 = arith.constant 1 : index
    %c0_83 = arith.constant 0 : index
    %c0_84 = arith.constant 0 : index
    %65 = vector.load %arg3[%c1_82, %c0_83, %c0_84] : memref<2x8x1xf32, #tpu.memory_space<vmem>>, vector<1x8x1xf32>
    %66 = vector.shape_cast %65 : vector<1x8x1xf32> to vector<8x1xf32>
    %67 = vector.broadcast %66 : vector<8x1xf32> to vector<8x128xf32>
    %68 = arith.addf %64, %67 : vector<8x128xf32>
    %69 = arith.addf %6, %68 : vector<8x128xf32>
    %c0_85 = arith.constant 0 : index
    %c0_86 = arith.constant 0 : index
    %c0_87 = arith.constant 0 : index
    %70 = vector.load %arg5[%c0_85, %c0_86, %c0_87] : memref<1x8x128xf32, #tpu.memory_space<vmem>>, vector<1x8x128xf32>
    %71 = vector.shape_cast %70 : vector<1x8x128xf32> to vector<8x128xf32>
    %72 = vector.shape_cast %69 : vector<8x128xf32> to vector<1x8x128xf32>
    tpu.vector_store %arg5[%c0_85, %c0_86, %c0_87], %72 {strides = array<i32>} : memref<1x8x128xf32, #tpu.memory_space<vmem>>, vector<1x8x128xf32>,
    return
  }
  func.func @transform_0(%arg0: i32) -> (i32, i32, i32) {
    %c0_i32 = arith.constant 0 : i32
    %c0_i32_0 = arith.constant 0 : i32
    %c0_i32_1 = arith.constant 0 : i32
    return %arg0, %c0_i32, %c0_i32_0 : i32, i32, i32
  }
  func.func @transform_1(%arg0: i32) -> (i32, i32, i32) {
    %c0_i32 = arith.constant 0 : i32
    %c0_i32_0 = arith.constant 0 : i32
    %c0_i32_1 = arith.constant 0 : i32
    %c0_i32_2 = arith.constant 0 : i32
    return %c0_i32, %c0_i32_0, %c0_i32_1 : i32, i32, i32
  }
  func.func @transform_2(%arg0: i32) -> (i32, i32, i32) {
    %c0_i32 = arith.constant 0 : i32
    %c0_i32_0 = arith.constant 0 : i32
    %c0_i32_1 = arith.constant 0 : i32
    %c0_i32_2 = arith.constant 0 : i32
    return %c0_i32, %c0_i32_0, %c0_i32_1 : i32, i32, i32
  }
  func.func @transform_3(%arg0: i32) -> (i32, i32) {
    %c0_i32 = arith.constant 0 : i32
    %c0_i32_0 = arith.constant 0 : i32
    %c0_i32_1 = arith.constant 0 : i32
    return %c0_i32, %c0_i32_0 : i32, i32
  }
  func.func @transform_4(%arg0: i32) -> (i32, i32, i32) {
    %c0_i32 = arith.constant 0 : i32
    %c0_i32_0 = arith.constant 0 : i32
    %c0_i32_1 = arith.constant 0 : i32
    return %arg0, %c0_i32, %c0_i32_0 : i32, i32, i32
  }
}

module attributes {stable_mosaic.version = 11 : i64} {
  func.func @kernel(%arg0: i32, %arg1: memref<1x8x128xf32, #tpu.memory_space<vmem>>, %arg2: memref<4x8x72xbf16, #tpu.memory_space<vmem>>, %arg3: memref<4x8x1xf32, #tpu.memory_space<vmem>>, %arg4: memref<1x128xf32, #tpu.memory_space<vmem>>, %arg5: memref<1x8x128xf32, #tpu.memory_space<vmem>>, %arg6: memref<1x8x128xf32, #tpu.memory_space<vmem>>, %arg7: memref<8x384xf32, #tpu.memory_space<vmem>>, %arg8: memref<72x128xf32, #tpu.memory_space<vmem>>) attributes {dimension_semantics = [#tpu.dimension_semantics<parallel>], iteration_bounds = array<i64: 2>, scalar_prefetch = 0 : i64, scratch_operands = 2 : i64, tpu.core_type = #tpu.core_type<tc>, window_params = [{transform_indices = @transform_0, window_bounds = array<i64: 1, 8, 128>}, {pipeline_mode = #tpu.pipeline_mode<synchronous>, transform_indices = @transform_1, window_bounds = array<i64: 4, 8, 72>}, {pipeline_mode = #tpu.pipeline_mode<synchronous>, transform_indices = @transform_2, window_bounds = array<i64: 4, 8, 1>}, {pipeline_mode = #tpu.pipeline_mode<synchronous>, transform_indices = @transform_3, window_bounds = array<i64: 1, 128>}, {transform_indices = @transform_4, window_bounds = array<i64: 1, 8, 128>}, {transform_indices = @transform_5, window_bounds = array<i64: 1, 8, 128>}]} {
    %c0 = arith.constant 0 : index
    %c0_0 = arith.constant 0 : index
    %0 = vector.load %arg4[%c0, %c0_0] : memref<1x128xf32, #tpu.memory_space<vmem>>, vector<1x128xf32>
    %cst = arith.constant 0.000000e+00 : f32
    %1 = vector.broadcast %cst : f32 to vector<8x128xf32>
    %c0_1 = arith.constant 0 : index
    %c0_2 = arith.constant 0 : index
    %2 = vector.load %arg7[%c0_1, %c0_2] : memref<8x384xf32, #tpu.memory_space<vmem>>, vector<8x128xf32>
    tpu.vector_store %arg7[%c0_1, %c0_2], %1 {strides = array<i32>} : memref<8x384xf32, #tpu.memory_space<vmem>>, vector<8x128xf32>,
    %cst_3 = arith.constant 0.000000e+00 : f32
    %3 = vector.broadcast %cst_3 : f32 to vector<8x128xf32>
    %c0_4 = arith.constant 0 : index
    %c256 = arith.constant 256 : index
    %4 = vector.load %arg7[%c0_4, %c256] : memref<8x384xf32, #tpu.memory_space<vmem>>, vector<8x128xf32>
    tpu.vector_store %arg7[%c0_4, %c256], %3 {strides = array<i32>} : memref<8x384xf32, #tpu.memory_space<vmem>>, vector<8x128xf32>,
    %c0_5 = arith.constant 0 : index
    %c0_6 = arith.constant 0 : index
    %c0_7 = arith.constant 0 : index
    %5 = vector.load %arg1[%c0_5, %c0_6, %c0_7] : memref<1x8x128xf32, #tpu.memory_space<vmem>>, vector<1x8x128xf32>
    %6 = vector.shape_cast %5 : vector<1x8x128xf32> to vector<8x128xf32>
    %7 = vector.broadcast %0 : vector<1x128xf32> to vector<8x128xf32>
    %8 = arith.mulf %6, %7 : vector<8x128xf32>
    %c0_8 = arith.constant 0 : index
    %c128 = arith.constant 128 : index
    %9 = vector.load %arg7[%c0_8, %c128] : memref<8x384xf32, #tpu.memory_space<vmem>>, vector<8x128xf32>
    tpu.vector_store %arg7[%c0_8, %c128], %8 {strides = array<i32>} : memref<8x384xf32, #tpu.memory_space<vmem>>, vector<8x128xf32>,
    %c0_9 = arith.constant 0 : index
    %c121 = arith.constant 121 : index
    %10 = vector.load %arg7[%c0_9, %c121] : memref<8x384xf32, #tpu.memory_space<vmem>>, vector<8x128xf32>
    %c0_10 = arith.constant 0 : index
    %c0_11 = arith.constant 0 : index
    %11 = vector.load %arg8[%c0_10, %c0_11] : memref<72x128xf32, #tpu.memory_space<vmem>>, vector<8x128xf32>
    tpu.vector_store %arg8[%c0_10, %c0_11], %10 {strides = array<i32>} : memref<72x128xf32, #tpu.memory_space<vmem>>, vector<8x128xf32>,
    %c0_12 = arith.constant 0 : index
    %c122 = arith.constant 122 : index
    %12 = vector.load %arg7[%c0_12, %c122] : memref<8x384xf32, #tpu.memory_space<vmem>>, vector<8x128xf32>
    %c8 = arith.constant 8 : index
    %c0_13 = arith.constant 0 : index
    %13 = vector.load %arg8[%c8, %c0_13] : memref<72x128xf32, #tpu.memory_space<vmem>>, vector<8x128xf32>
    tpu.vector_store %arg8[%c8, %c0_13], %12 {strides = array<i32>} : memref<72x128xf32, #tpu.memory_space<vmem>>, vector<8x128xf32>,
    %c0_14 = arith.constant 0 : index
    %c123 = arith.constant 123 : index
    %14 = vector.load %arg7[%c0_14, %c123] : memref<8x384xf32, #tpu.memory_space<vmem>>, vector<8x128xf32>
    %c16 = arith.constant 16 : index
    %c0_15 = arith.constant 0 : index
    %15 = vector.load %arg8[%c16, %c0_15] : memref<72x128xf32, #tpu.memory_space<vmem>>, vector<8x128xf32>
    tpu.vector_store %arg8[%c16, %c0_15], %14 {strides = array<i32>} : memref<72x128xf32, #tpu.memory_space<vmem>>, vector<8x128xf32>,
    %c0_16 = arith.constant 0 : index
    %c127 = arith.constant 127 : index
    %16 = vector.load %arg7[%c0_16, %c127] : memref<8x384xf32, #tpu.memory_space<vmem>>, vector<8x128xf32>
    %c24 = arith.constant 24 : index
    %c0_17 = arith.constant 0 : index
    %17 = vector.load %arg8[%c24, %c0_17] : memref<72x128xf32, #tpu.memory_space<vmem>>, vector<8x128xf32>
    tpu.vector_store %arg8[%c24, %c0_17], %16 {strides = array<i32>} : memref<72x128xf32, #tpu.memory_space<vmem>>, vector<8x128xf32>,
    %c0_18 = arith.constant 0 : index
    %c128_19 = arith.constant 128 : index
    %18 = vector.load %arg7[%c0_18, %c128_19] : memref<8x384xf32, #tpu.memory_space<vmem>>, vector<8x128xf32>
    %c32 = arith.constant 32 : index
    %c0_20 = arith.constant 0 : index
    %19 = vector.load %arg8[%c32, %c0_20] : memref<72x128xf32, #tpu.memory_space<vmem>>, vector<8x128xf32>
    tpu.vector_store %arg8[%c32, %c0_20], %18 {strides = array<i32>} : memref<72x128xf32, #tpu.memory_space<vmem>>, vector<8x128xf32>,
    %c0_21 = arith.constant 0 : index
    %c129 = arith.constant 129 : index
    %20 = vector.load %arg7[%c0_21, %c129] : memref<8x384xf32, #tpu.memory_space<vmem>>, vector<8x128xf32>
    %c40 = arith.constant 40 : index
    %c0_22 = arith.constant 0 : index
    %21 = vector.load %arg8[%c40, %c0_22] : memref<72x128xf32, #tpu.memory_space<vmem>>, vector<8x128xf32>
    tpu.vector_store %arg8[%c40, %c0_22], %20 {strides = array<i32>} : memref<72x128xf32, #tpu.memory_space<vmem>>, vector<8x128xf32>,
    %c0_23 = arith.constant 0 : index
    %c133 = arith.constant 133 : index
    %22 = vector.load %arg7[%c0_23, %c133] : memref<8x384xf32, #tpu.memory_space<vmem>>, vector<8x128xf32>
    %c48 = arith.constant 48 : index
    %c0_24 = arith.constant 0 : index
    %23 = vector.load %arg8[%c48, %c0_24] : memref<72x128xf32, #tpu.memory_space<vmem>>, vector<8x128xf32>
    tpu.vector_store %arg8[%c48, %c0_24], %22 {strides = array<i32>} : memref<72x128xf32, #tpu.memory_space<vmem>>, vector<8x128xf32>,
    %c0_25 = arith.constant 0 : index
    %c134 = arith.constant 134 : index
    %24 = vector.load %arg7[%c0_25, %c134] : memref<8x384xf32, #tpu.memory_space<vmem>>, vector<8x128xf32>
    %c56 = arith.constant 56 : index
    %c0_26 = arith.constant 0 : index
    %25 = vector.load %arg8[%c56, %c0_26] : memref<72x128xf32, #tpu.memory_space<vmem>>, vector<8x128xf32>
    tpu.vector_store %arg8[%c56, %c0_26], %24 {strides = array<i32>} : memref<72x128xf32, #tpu.memory_space<vmem>>, vector<8x128xf32>,
    %c0_27 = arith.constant 0 : index
    %c135 = arith.constant 135 : index
    %26 = vector.load %arg7[%c0_27, %c135] : memref<8x384xf32, #tpu.memory_space<vmem>>, vector<8x128xf32>
    %c64 = arith.constant 64 : index
    %c0_28 = arith.constant 0 : index
    %27 = vector.load %arg8[%c64, %c0_28] : memref<72x128xf32, #tpu.memory_space<vmem>>, vector<8x128xf32>
    tpu.vector_store %arg8[%c64, %c0_28], %26 {strides = array<i32>} : memref<72x128xf32, #tpu.memory_space<vmem>>, vector<8x128xf32>,
    %c0_29 = arith.constant 0 : index
    %c0_30 = arith.constant 0 : index
    %c0_31 = arith.constant 0 : index
    %28 = vector.load %arg2[%c0_29, %c0_30, %c0_31] : memref<4x8x72xbf16, #tpu.memory_space<vmem>>, vector<1x8x72xbf16>
    %29 = vector.shape_cast %28 : vector<1x8x72xbf16> to vector<8x72xbf16>
    %c0_32 = arith.constant 0 : index
    %c0_33 = arith.constant 0 : index
    %30 = vector.load %arg8[%c0_32, %c0_33] : memref<72x128xf32, #tpu.memory_space<vmem>>, vector<72x128xf32>
    %31 = arith.truncf %30 : vector<72x128xf32> to vector<72x128xbf16>
    %cst_34 = arith.constant dense<0.000000e+00> : vector<8x128xf32>
    %32 = tpu.matmul %29, %31, %cst_34 {dimension_numbers = #tpu.dot_dimension_numbers<[1], [0], [0], [1], [0, 0, 1, 1], [], []>} : vector<8x72xbf16>, vector<72x128xbf16>, vector<8x128xf32> -> vector<8x128xf32>
    %c0_35 = arith.constant 0 : index
    %c0_36 = arith.constant 0 : index
    %c0_37 = arith.constant 0 : index
    %33 = vector.load %arg3[%c0_35, %c0_36, %c0_37] : memref<4x8x1xf32, #tpu.memory_space<vmem>>, vector<1x8x1xf32>
    %34 = vector.shape_cast %33 : vector<1x8x1xf32> to vector<8x1xf32>
    %35 = vector.broadcast %34 : vector<8x1xf32> to vector<8x128xf32>
    %36 = arith.addf %32, %35 : vector<8x128xf32>
    %cst_38 = arith.constant 0.000000e+00 : f32
    %37 = vector.broadcast %cst_38 : f32 to vector<8x128xf32>
    %38 = arith.maximumf %36, %37 : vector<8x128xf32>
    %39 = vector.broadcast %0 : vector<1x128xf32> to vector<8x128xf32>
    %40 = arith.mulf %38, %39 : vector<8x128xf32>
    %c0_39 = arith.constant 0 : index
    %c128_40 = arith.constant 128 : index
    %41 = vector.load %arg7[%c0_39, %c128_40] : memref<8x384xf32, #tpu.memory_space<vmem>>, vector<8x128xf32>
    tpu.vector_store %arg7[%c0_39, %c128_40], %40 {strides = array<i32>} : memref<8x384xf32, #tpu.memory_space<vmem>>, vector<8x128xf32>,
    %c0_41 = arith.constant 0 : index
    %c121_42 = arith.constant 121 : index
    %42 = vector.load %arg7[%c0_41, %c121_42] : memref<8x384xf32, #tpu.memory_space<vmem>>, vector<8x128xf32>
    %c0_43 = arith.constant 0 : index
    %c0_44 = arith.constant 0 : index
    %43 = vector.load %arg8[%c0_43, %c0_44] : memref<72x128xf32, #tpu.memory_space<vmem>>, vector<8x128xf32>
    tpu.vector_store %arg8[%c0_43, %c0_44], %42 {strides = array<i32>} : memref<72x128xf32, #tpu.memory_space<vmem>>, vector<8x128xf32>,
    %c0_45 = arith.constant 0 : index
    %c122_46 = arith.constant 122 : index
    %44 = vector.load %arg7[%c0_45, %c122_46] : memref<8x384xf32, #tpu.memory_space<vmem>>, vector<8x128xf32>
    %c8_47 = arith.constant 8 : index
    %c0_48 = arith.constant 0 : index
    %45 = vector.load %arg8[%c8_47, %c0_48] : memref<72x128xf32, #tpu.memory_space<vmem>>, vector<8x128xf32>
    tpu.vector_store %arg8[%c8_47, %c0_48], %44 {strides = array<i32>} : memref<72x128xf32, #tpu.memory_space<vmem>>, vector<8x128xf32>,
    %c0_49 = arith.constant 0 : index
    %c123_50 = arith.constant 123 : index
    %46 = vector.load %arg7[%c0_49, %c123_50] : memref<8x384xf32, #tpu.memory_space<vmem>>, vector<8x128xf32>
    %c16_51 = arith.constant 16 : index
    %c0_52 = arith.constant 0 : index
    %47 = vector.load %arg8[%c16_51, %c0_52] : memref<72x128xf32, #tpu.memory_space<vmem>>, vector<8x128xf32>
    tpu.vector_store %arg8[%c16_51, %c0_52], %46 {strides = array<i32>} : memref<72x128xf32, #tpu.memory_space<vmem>>, vector<8x128xf32>,
    %c0_53 = arith.constant 0 : index
    %c127_54 = arith.constant 127 : index
    %48 = vector.load %arg7[%c0_53, %c127_54] : memref<8x384xf32, #tpu.memory_space<vmem>>, vector<8x128xf32>
    %c24_55 = arith.constant 24 : index
    %c0_56 = arith.constant 0 : index
    %49 = vector.load %arg8[%c24_55, %c0_56] : memref<72x128xf32, #tpu.memory_space<vmem>>, vector<8x128xf32>
    tpu.vector_store %arg8[%c24_55, %c0_56], %48 {strides = array<i32>} : memref<72x128xf32, #tpu.memory_space<vmem>>, vector<8x128xf32>,
    %c0_57 = arith.constant 0 : index
    %c128_58 = arith.constant 128 : index
    %50 = vector.load %arg7[%c0_57, %c128_58] : memref<8x384xf32, #tpu.memory_space<vmem>>, vector<8x128xf32>
    %c32_59 = arith.constant 32 : index
    %c0_60 = arith.constant 0 : index
    %51 = vector.load %arg8[%c32_59, %c0_60] : memref<72x128xf32, #tpu.memory_space<vmem>>, vector<8x128xf32>
    tpu.vector_store %arg8[%c32_59, %c0_60], %50 {strides = array<i32>} : memref<72x128xf32, #tpu.memory_space<vmem>>, vector<8x128xf32>,
    %c0_61 = arith.constant 0 : index
    %c129_62 = arith.constant 129 : index
    %52 = vector.load %arg7[%c0_61, %c129_62] : memref<8x384xf32, #tpu.memory_space<vmem>>, vector<8x128xf32>
    %c40_63 = arith.constant 40 : index
    %c0_64 = arith.constant 0 : index
    %53 = vector.load %arg8[%c40_63, %c0_64] : memref<72x128xf32, #tpu.memory_space<vmem>>, vector<8x128xf32>
    tpu.vector_store %arg8[%c40_63, %c0_64], %52 {strides = array<i32>} : memref<72x128xf32, #tpu.memory_space<vmem>>, vector<8x128xf32>,
    %c0_65 = arith.constant 0 : index
    %c133_66 = arith.constant 133 : index
    %54 = vector.load %arg7[%c0_65, %c133_66] : memref<8x384xf32, #tpu.memory_space<vmem>>, vector<8x128xf32>
    %c48_67 = arith.constant 48 : index
    %c0_68 = arith.constant 0 : index
    %55 = vector.load %arg8[%c48_67, %c0_68] : memref<72x128xf32, #tpu.memory_space<vmem>>, vector<8x128xf32>
    tpu.vector_store %arg8[%c48_67, %c0_68], %54 {strides = array<i32>} : memref<72x128xf32, #tpu.memory_space<vmem>>, vector<8x128xf32>,
    %c0_69 = arith.constant 0 : index
    %c134_70 = arith.constant 134 : index
    %56 = vector.load %arg7[%c0_69, %c134_70] : memref<8x384xf32, #tpu.memory_space<vmem>>, vector<8x128xf32>
    %c56_71 = arith.constant 56 : index
    %c0_72 = arith.constant 0 : index
    %57 = vector.load %arg8[%c56_71, %c0_72] : memref<72x128xf32, #tpu.memory_space<vmem>>, vector<8x128xf32>
    tpu.vector_store %arg8[%c56_71, %c0_72], %56 {strides = array<i32>} : memref<72x128xf32, #tpu.memory_space<vmem>>, vector<8x128xf32>,
    %c0_73 = arith.constant 0 : index
    %c135_74 = arith.constant 135 : index
    %58 = vector.load %arg7[%c0_73, %c135_74] : memref<8x384xf32, #tpu.memory_space<vmem>>, vector<8x128xf32>
    %c64_75 = arith.constant 64 : index
    %c0_76 = arith.constant 0 : index
    %59 = vector.load %arg8[%c64_75, %c0_76] : memref<72x128xf32, #tpu.memory_space<vmem>>, vector<8x128xf32>
    tpu.vector_store %arg8[%c64_75, %c0_76], %58 {strides = array<i32>} : memref<72x128xf32, #tpu.memory_space<vmem>>, vector<8x128xf32>,
    %c1 = arith.constant 1 : index
    %c0_77 = arith.constant 0 : index
    %c0_78 = arith.constant 0 : index
    %60 = vector.load %arg2[%c1, %c0_77, %c0_78] : memref<4x8x72xbf16, #tpu.memory_space<vmem>>, vector<1x8x72xbf16>
    %61 = vector.shape_cast %60 : vector<1x8x72xbf16> to vector<8x72xbf16>
    %c0_79 = arith.constant 0 : index
    %c0_80 = arith.constant 0 : index
    %62 = vector.load %arg8[%c0_79, %c0_80] : memref<72x128xf32, #tpu.memory_space<vmem>>, vector<72x128xf32>
    %63 = arith.truncf %62 : vector<72x128xf32> to vector<72x128xbf16>
    %cst_81 = arith.constant dense<0.000000e+00> : vector<8x128xf32>
    %64 = tpu.matmul %61, %63, %cst_81 {dimension_numbers = #tpu.dot_dimension_numbers<[1], [0], [0], [1], [0, 0, 1, 1], [], []>} : vector<8x72xbf16>, vector<72x128xbf16>, vector<8x128xf32> -> vector<8x128xf32>
    %c1_82 = arith.constant 1 : index
    %c0_83 = arith.constant 0 : index
    %c0_84 = arith.constant 0 : index
    %65 = vector.load %arg3[%c1_82, %c0_83, %c0_84] : memref<4x8x1xf32, #tpu.memory_space<vmem>>, vector<1x8x1xf32>
    %66 = vector.shape_cast %65 : vector<1x8x1xf32> to vector<8x1xf32>
    %67 = vector.broadcast %66 : vector<8x1xf32> to vector<8x128xf32>
    %68 = arith.addf %64, %67 : vector<8x128xf32>
    %69 = arith.addf %6, %68 : vector<8x128xf32>
    %c0_85 = arith.constant 0 : index
    %c0_86 = arith.constant 0 : index
    %c0_87 = arith.constant 0 : index
    %70 = vector.load %arg5[%c0_85, %c0_86, %c0_87] : memref<1x8x128xf32, #tpu.memory_space<vmem>>, vector<1x8x128xf32>
    %71 = vector.shape_cast %70 : vector<1x8x128xf32> to vector<8x128xf32>
    %72 = arith.addf %69, %71 : vector<8x128xf32>
    %73 = vector.broadcast %0 : vector<1x128xf32> to vector<8x128xf32>
    %74 = arith.mulf %72, %73 : vector<8x128xf32>
    %c0_88 = arith.constant 0 : index
    %c128_89 = arith.constant 128 : index
    %75 = vector.load %arg7[%c0_88, %c128_89] : memref<8x384xf32, #tpu.memory_space<vmem>>, vector<8x128xf32>
    tpu.vector_store %arg7[%c0_88, %c128_89], %74 {strides = array<i32>} : memref<8x384xf32, #tpu.memory_space<vmem>>, vector<8x128xf32>,
    %c0_90 = arith.constant 0 : index
    %c121_91 = arith.constant 121 : index
    %76 = vector.load %arg7[%c0_90, %c121_91] : memref<8x384xf32, #tpu.memory_space<vmem>>, vector<8x128xf32>
    %c0_92 = arith.constant 0 : index
    %c0_93 = arith.constant 0 : index
    %77 = vector.load %arg8[%c0_92, %c0_93] : memref<72x128xf32, #tpu.memory_space<vmem>>, vector<8x128xf32>
    tpu.vector_store %arg8[%c0_92, %c0_93], %76 {strides = array<i32>} : memref<72x128xf32, #tpu.memory_space<vmem>>, vector<8x128xf32>,
    %c0_94 = arith.constant 0 : index
    %c122_95 = arith.constant 122 : index
    %78 = vector.load %arg7[%c0_94, %c122_95] : memref<8x384xf32, #tpu.memory_space<vmem>>, vector<8x128xf32>
    %c8_96 = arith.constant 8 : index
    %c0_97 = arith.constant 0 : index
    %79 = vector.load %arg8[%c8_96, %c0_97] : memref<72x128xf32, #tpu.memory_space<vmem>>, vector<8x128xf32>
    tpu.vector_store %arg8[%c8_96, %c0_97], %78 {strides = array<i32>} : memref<72x128xf32, #tpu.memory_space<vmem>>, vector<8x128xf32>,
    %c0_98 = arith.constant 0 : index
    %c123_99 = arith.constant 123 : index
    %80 = vector.load %arg7[%c0_98, %c123_99] : memref<8x384xf32, #tpu.memory_space<vmem>>, vector<8x128xf32>
    %c16_100 = arith.constant 16 : index
    %c0_101 = arith.constant 0 : index
    %81 = vector.load %arg8[%c16_100, %c0_101] : memref<72x128xf32, #tpu.memory_space<vmem>>, vector<8x128xf32>
    tpu.vector_store %arg8[%c16_100, %c0_101], %80 {strides = array<i32>} : memref<72x128xf32, #tpu.memory_space<vmem>>, vector<8x128xf32>,
    %c0_102 = arith.constant 0 : index
    %c127_103 = arith.constant 127 : index
    %82 = vector.load %arg7[%c0_102, %c127_103] : memref<8x384xf32, #tpu.memory_space<vmem>>, vector<8x128xf32>
    %c24_104 = arith.constant 24 : index
    %c0_105 = arith.constant 0 : index
    %83 = vector.load %arg8[%c24_104, %c0_105] : memref<72x128xf32, #tpu.memory_space<vmem>>, vector<8x128xf32>
    tpu.vector_store %arg8[%c24_104, %c0_105], %82 {strides = array<i32>} : memref<72x128xf32, #tpu.memory_space<vmem>>, vector<8x128xf32>,
    %c0_106 = arith.constant 0 : index
    %c128_107 = arith.constant 128 : index
    %84 = vector.load %arg7[%c0_106, %c128_107] : memref<8x384xf32, #tpu.memory_space<vmem>>, vector<8x128xf32>
    %c32_108 = arith.constant 32 : index
    %c0_109 = arith.constant 0 : index
    %85 = vector.load %arg8[%c32_108, %c0_109] : memref<72x128xf32, #tpu.memory_space<vmem>>, vector<8x128xf32>
    tpu.vector_store %arg8[%c32_108, %c0_109], %84 {strides = array<i32>} : memref<72x128xf32, #tpu.memory_space<vmem>>, vector<8x128xf32>,
    %c0_110 = arith.constant 0 : index
    %c129_111 = arith.constant 129 : index
    %86 = vector.load %arg7[%c0_110, %c129_111] : memref<8x384xf32, #tpu.memory_space<vmem>>, vector<8x128xf32>
    %c40_112 = arith.constant 40 : index
    %c0_113 = arith.constant 0 : index
    %87 = vector.load %arg8[%c40_112, %c0_113] : memref<72x128xf32, #tpu.memory_space<vmem>>, vector<8x128xf32>
    tpu.vector_store %arg8[%c40_112, %c0_113], %86 {strides = array<i32>} : memref<72x128xf32, #tpu.memory_space<vmem>>, vector<8x128xf32>,
    %c0_114 = arith.constant 0 : index
    %c133_115 = arith.constant 133 : index
    %88 = vector.load %arg7[%c0_114, %c133_115] : memref<8x384xf32, #tpu.memory_space<vmem>>, vector<8x128xf32>
    %c48_116 = arith.constant 48 : index
    %c0_117 = arith.constant 0 : index
    %89 = vector.load %arg8[%c48_116, %c0_117] : memref<72x128xf32, #tpu.memory_space<vmem>>, vector<8x128xf32>
    tpu.vector_store %arg8[%c48_116, %c0_117], %88 {strides = array<i32>} : memref<72x128xf32, #tpu.memory_space<vmem>>, vector<8x128xf32>,
    %c0_118 = arith.constant 0 : index
    %c134_119 = arith.constant 134 : index
    %90 = vector.load %arg7[%c0_118, %c134_119] : memref<8x384xf32, #tpu.memory_space<vmem>>, vector<8x128xf32>
    %c56_120 = arith.constant 56 : index
    %c0_121 = arith.constant 0 : index
    %91 = vector.load %arg8[%c56_120, %c0_121] : memref<72x128xf32, #tpu.memory_space<vmem>>, vector<8x128xf32>
    tpu.vector_store %arg8[%c56_120, %c0_121], %90 {strides = array<i32>} : memref<72x128xf32, #tpu.memory_space<vmem>>, vector<8x128xf32>,
    %c0_122 = arith.constant 0 : index
    %c135_123 = arith.constant 135 : index
    %92 = vector.load %arg7[%c0_122, %c135_123] : memref<8x384xf32, #tpu.memory_space<vmem>>, vector<8x128xf32>
    %c64_124 = arith.constant 64 : index
    %c0_125 = arith.constant 0 : index
    %93 = vector.load %arg8[%c64_124, %c0_125] : memref<72x128xf32, #tpu.memory_space<vmem>>, vector<8x128xf32>
    tpu.vector_store %arg8[%c64_124, %c0_125], %92 {strides = array<i32>} : memref<72x128xf32, #tpu.memory_space<vmem>>, vector<8x128xf32>,
    %c2 = arith.constant 2 : index
    %c0_126 = arith.constant 0 : index
    %c0_127 = arith.constant 0 : index
    %94 = vector.load %arg2[%c2, %c0_126, %c0_127] : memref<4x8x72xbf16, #tpu.memory_space<vmem>>, vector<1x8x72xbf16>
    %95 = vector.shape_cast %94 : vector<1x8x72xbf16> to vector<8x72xbf16>
    %c0_128 = arith.constant 0 : index
    %c0_129 = arith.constant 0 : index
    %96 = vector.load %arg8[%c0_128, %c0_129] : memref<72x128xf32, #tpu.memory_space<vmem>>, vector<72x128xf32>
    %97 = arith.truncf %96 : vector<72x128xf32> to vector<72x128xbf16>
    %cst_130 = arith.constant dense<0.000000e+00> : vector<8x128xf32>
    %98 = tpu.matmul %95, %97, %cst_130 {dimension_numbers = #tpu.dot_dimension_numbers<[1], [0], [0], [1], [0, 0, 1, 1], [], []>} : vector<8x72xbf16>, vector<72x128xbf16>, vector<8x128xf32> -> vector<8x128xf32>
    %c2_131 = arith.constant 2 : index
    %c0_132 = arith.constant 0 : index
    %c0_133 = arith.constant 0 : index
    %99 = vector.load %arg3[%c2_131, %c0_132, %c0_133] : memref<4x8x1xf32, #tpu.memory_space<vmem>>, vector<1x8x1xf32>
    %100 = vector.shape_cast %99 : vector<1x8x1xf32> to vector<8x1xf32>
    %101 = vector.broadcast %100 : vector<8x1xf32> to vector<8x128xf32>
    %102 = arith.addf %98, %101 : vector<8x128xf32>
    %cst_134 = arith.constant 0.000000e+00 : f32
    %103 = vector.broadcast %cst_134 : f32 to vector<8x128xf32>
    %104 = arith.maximumf %102, %103 : vector<8x128xf32>
    %105 = vector.broadcast %0 : vector<1x128xf32> to vector<8x128xf32>
    %106 = arith.mulf %104, %105 : vector<8x128xf32>
    %c0_135 = arith.constant 0 : index
    %c128_136 = arith.constant 128 : index
    %107 = vector.load %arg7[%c0_135, %c128_136] : memref<8x384xf32, #tpu.memory_space<vmem>>, vector<8x128xf32>
    tpu.vector_store %arg7[%c0_135, %c128_136], %106 {strides = array<i32>} : memref<8x384xf32, #tpu.memory_space<vmem>>, vector<8x128xf32>,
    %c0_137 = arith.constant 0 : index
    %c121_138 = arith.constant 121 : index
    %108 = vector.load %arg7[%c0_137, %c121_138] : memref<8x384xf32, #tpu.memory_space<vmem>>, vector<8x128xf32>
    %c0_139 = arith.constant 0 : index
    %c0_140 = arith.constant 0 : index
    %109 = vector.load %arg8[%c0_139, %c0_140] : memref<72x128xf32, #tpu.memory_space<vmem>>, vector<8x128xf32>
    tpu.vector_store %arg8[%c0_139, %c0_140], %108 {strides = array<i32>} : memref<72x128xf32, #tpu.memory_space<vmem>>, vector<8x128xf32>,
    %c0_141 = arith.constant 0 : index
    %c122_142 = arith.constant 122 : index
    %110 = vector.load %arg7[%c0_141, %c122_142] : memref<8x384xf32, #tpu.memory_space<vmem>>, vector<8x128xf32>
    %c8_143 = arith.constant 8 : index
    %c0_144 = arith.constant 0 : index
    %111 = vector.load %arg8[%c8_143, %c0_144] : memref<72x128xf32, #tpu.memory_space<vmem>>, vector<8x128xf32>
    tpu.vector_store %arg8[%c8_143, %c0_144], %110 {strides = array<i32>} : memref<72x128xf32, #tpu.memory_space<vmem>>, vector<8x128xf32>,
    %c0_145 = arith.constant 0 : index
    %c123_146 = arith.constant 123 : index
    %112 = vector.load %arg7[%c0_145, %c123_146] : memref<8x384xf32, #tpu.memory_space<vmem>>, vector<8x128xf32>
    %c16_147 = arith.constant 16 : index
    %c0_148 = arith.constant 0 : index
    %113 = vector.load %arg8[%c16_147, %c0_148] : memref<72x128xf32, #tpu.memory_space<vmem>>, vector<8x128xf32>
    tpu.vector_store %arg8[%c16_147, %c0_148], %112 {strides = array<i32>} : memref<72x128xf32, #tpu.memory_space<vmem>>, vector<8x128xf32>,
    %c0_149 = arith.constant 0 : index
    %c127_150 = arith.constant 127 : index
    %114 = vector.load %arg7[%c0_149, %c127_150] : memref<8x384xf32, #tpu.memory_space<vmem>>, vector<8x128xf32>
    %c24_151 = arith.constant 24 : index
    %c0_152 = arith.constant 0 : index
    %115 = vector.load %arg8[%c24_151, %c0_152] : memref<72x128xf32, #tpu.memory_space<vmem>>, vector<8x128xf32>
    tpu.vector_store %arg8[%c24_151, %c0_152], %114 {strides = array<i32>} : memref<72x128xf32, #tpu.memory_space<vmem>>, vector<8x128xf32>,
    %c0_153 = arith.constant 0 : index
    %c128_154 = arith.constant 128 : index
    %116 = vector.load %arg7[%c0_153, %c128_154] : memref<8x384xf32, #tpu.memory_space<vmem>>, vector<8x128xf32>
    %c32_155 = arith.constant 32 : index
    %c0_156 = arith.constant 0 : index
    %117 = vector.load %arg8[%c32_155, %c0_156] : memref<72x128xf32, #tpu.memory_space<vmem>>, vector<8x128xf32>
    tpu.vector_store %arg8[%c32_155, %c0_156], %116 {strides = array<i32>} : memref<72x128xf32, #tpu.memory_space<vmem>>, vector<8x128xf32>,
    %c0_157 = arith.constant 0 : index
    %c129_158 = arith.constant 129 : index
    %118 = vector.load %arg7[%c0_157, %c129_158] : memref<8x384xf32, #tpu.memory_space<vmem>>, vector<8x128xf32>
    %c40_159 = arith.constant 40 : index
    %c0_160 = arith.constant 0 : index
    %119 = vector.load %arg8[%c40_159, %c0_160] : memref<72x128xf32, #tpu.memory_space<vmem>>, vector<8x128xf32>
    tpu.vector_store %arg8[%c40_159, %c0_160], %118 {strides = array<i32>} : memref<72x128xf32, #tpu.memory_space<vmem>>, vector<8x128xf32>,
    %c0_161 = arith.constant 0 : index
    %c133_162 = arith.constant 133 : index
    %120 = vector.load %arg7[%c0_161, %c133_162] : memref<8x384xf32, #tpu.memory_space<vmem>>, vector<8x128xf32>
    %c48_163 = arith.constant 48 : index
    %c0_164 = arith.constant 0 : index
    %121 = vector.load %arg8[%c48_163, %c0_164] : memref<72x128xf32, #tpu.memory_space<vmem>>, vector<8x128xf32>
    tpu.vector_store %arg8[%c48_163, %c0_164], %120 {strides = array<i32>} : memref<72x128xf32, #tpu.memory_space<vmem>>, vector<8x128xf32>,
    %c0_165 = arith.constant 0 : index
    %c134_166 = arith.constant 134 : index
    %122 = vector.load %arg7[%c0_165, %c134_166] : memref<8x384xf32, #tpu.memory_space<vmem>>, vector<8x128xf32>
    %c56_167 = arith.constant 56 : index
    %c0_168 = arith.constant 0 : index
    %123 = vector.load %arg8[%c56_167, %c0_168] : memref<72x128xf32, #tpu.memory_space<vmem>>, vector<8x128xf32>
    tpu.vector_store %arg8[%c56_167, %c0_168], %122 {strides = array<i32>} : memref<72x128xf32, #tpu.memory_space<vmem>>, vector<8x128xf32>,
    %c0_169 = arith.constant 0 : index
    %c135_170 = arith.constant 135 : index
    %124 = vector.load %arg7[%c0_169, %c135_170] : memref<8x384xf32, #tpu.memory_space<vmem>>, vector<8x128xf32>
    %c64_171 = arith.constant 64 : index
    %c0_172 = arith.constant 0 : index
    %125 = vector.load %arg8[%c64_171, %c0_172] : memref<72x128xf32, #tpu.memory_space<vmem>>, vector<8x128xf32>
    tpu.vector_store %arg8[%c64_171, %c0_172], %124 {strides = array<i32>} : memref<72x128xf32, #tpu.memory_space<vmem>>, vector<8x128xf32>,
    %c3 = arith.constant 3 : index
    %c0_173 = arith.constant 0 : index
    %c0_174 = arith.constant 0 : index
    %126 = vector.load %arg2[%c3, %c0_173, %c0_174] : memref<4x8x72xbf16, #tpu.memory_space<vmem>>, vector<1x8x72xbf16>
    %127 = vector.shape_cast %126 : vector<1x8x72xbf16> to vector<8x72xbf16>
    %c0_175 = arith.constant 0 : index
    %c0_176 = arith.constant 0 : index
    %128 = vector.load %arg8[%c0_175, %c0_176] : memref<72x128xf32, #tpu.memory_space<vmem>>, vector<72x128xf32>
    %129 = arith.truncf %128 : vector<72x128xf32> to vector<72x128xbf16>
    %cst_177 = arith.constant dense<0.000000e+00> : vector<8x128xf32>
    %130 = tpu.matmul %127, %129, %cst_177 {dimension_numbers = #tpu.dot_dimension_numbers<[1], [0], [0], [1], [0, 0, 1, 1], [], []>} : vector<8x72xbf16>, vector<72x128xbf16>, vector<8x128xf32> -> vector<8x128xf32>
    %c3_178 = arith.constant 3 : index
    %c0_179 = arith.constant 0 : index
    %c0_180 = arith.constant 0 : index
    %131 = vector.load %arg3[%c3_178, %c0_179, %c0_180] : memref<4x8x1xf32, #tpu.memory_space<vmem>>, vector<1x8x1xf32>
    %132 = vector.shape_cast %131 : vector<1x8x1xf32> to vector<8x1xf32>
    %133 = vector.broadcast %132 : vector<8x1xf32> to vector<8x128xf32>
    %134 = arith.addf %130, %133 : vector<8x128xf32>
    %135 = arith.addf %72, %134 : vector<8x128xf32>
    %c0_181 = arith.constant 0 : index
    %c0_182 = arith.constant 0 : index
    %c0_183 = arith.constant 0 : index
    %136 = vector.load %arg6[%c0_181, %c0_182, %c0_183] : memref<1x8x128xf32, #tpu.memory_space<vmem>>, vector<1x8x128xf32>
    %137 = vector.shape_cast %136 : vector<1x8x128xf32> to vector<8x128xf32>
    %138 = vector.shape_cast %135 : vector<8x128xf32> to vector<1x8x128xf32>
    tpu.vector_store %arg6[%c0_181, %c0_182, %c0_183], %138 {strides = array<i32>} : memref<1x8x128xf32, #tpu.memory_space<vmem>>, vector<1x8x128xf32>,
    return
  }
  func.func @transform_0(%arg0: i32) -> (i32, i32, i32) {
    %c0_i32 = arith.constant 0 : i32
    %c0_i32_0 = arith.constant 0 : i32
    %c0_i32_1 = arith.constant 0 : i32
    return %arg0, %c0_i32, %c0_i32_0 : i32, i32, i32
  }
  func.func @transform_1(%arg0: i32) -> (i32, i32, i32) {
    %c0_i32 = arith.constant 0 : i32
    %c0_i32_0 = arith.constant 0 : i32
    %c0_i32_1 = arith.constant 0 : i32
    %c0_i32_2 = arith.constant 0 : i32
    return %c0_i32, %c0_i32_0, %c0_i32_1 : i32, i32, i32
  }
  func.func @transform_2(%arg0: i32) -> (i32, i32, i32) {
    %c0_i32 = arith.constant 0 : i32
    %c0_i32_0 = arith.constant 0 : i32
    %c0_i32_1 = arith.constant 0 : i32
    %c0_i32_2 = arith.constant 0 : i32
    return %c0_i32, %c0_i32_0, %c0_i32_1 : i32, i32, i32
  }
  func.func @transform_3(%arg0: i32) -> (i32, i32) {
    %c0_i32 = arith.constant 0 : i32
    %c0_i32_0 = arith.constant 0 : i32
    %c0_i32_1 = arith.constant 0 : i32
    return %c0_i32, %c0_i32_0 : i32, i32
  }
  func.func @transform_4(%arg0: i32) -> (i32, i32, i32) {
    %c0_i32 = arith.constant 0 : i32
    %c0_i32_0 = arith.constant 0 : i32
    %c0_i32_1 = arith.constant 0 : i32
    return %arg0, %c0_i32, %c0_i32_0 : i32, i32, i32
  }
  func.func @transform_5(%arg0: i32) -> (i32, i32, i32) {
    %c0_i32 = arith.constant 0 : i32
    %c0_i32_0 = arith.constant 0 : i32
    %c0_i32_1 = arith.constant 0 : i32
    return %arg0, %c0_i32, %c0_i32_0 : i32, i32, i32
  }
}

module attributes {stable_mosaic.version = 11 : i64} {
  func.func @kernel(%arg0: i32, %arg1: memref<1x8x128xf32, #tpu.memory_space<vmem>>, %arg2: memref<10x8x72xbf16, #tpu.memory_space<vmem>>, %arg3: memref<10x8x1xf32, #tpu.memory_space<vmem>>, %arg4: memref<1x128xf32, #tpu.memory_space<vmem>>, %arg5: memref<1x8x128xf32, #tpu.memory_space<vmem>>, %arg6: memref<1x8x128xf32, #tpu.memory_space<vmem>>, %arg7: memref<8x384xf32, #tpu.memory_space<vmem>>, %arg8: memref<72x128xf32, #tpu.memory_space<vmem>>) attributes {dimension_semantics = [#tpu.dimension_semantics<parallel>], iteration_bounds = array<i64: 2>, scalar_prefetch = 0 : i64, scratch_operands = 2 : i64, tpu.core_type = #tpu.core_type<tc>, window_params = [{transform_indices = @transform_0, window_bounds = array<i64: 1, 8, 128>}, {pipeline_mode = #tpu.pipeline_mode<synchronous>, transform_indices = @transform_1, window_bounds = array<i64: 10, 8, 72>}, {pipeline_mode = #tpu.pipeline_mode<synchronous>, transform_indices = @transform_2, window_bounds = array<i64: 10, 8, 1>}, {pipeline_mode = #tpu.pipeline_mode<synchronous>, transform_indices = @transform_3, window_bounds = array<i64: 1, 128>}, {transform_indices = @transform_4, window_bounds = array<i64: 1, 8, 128>}, {transform_indices = @transform_5, window_bounds = array<i64: 1, 8, 128>}]} {
    %c0 = arith.constant 0 : index
    %c0_0 = arith.constant 0 : index
    %0 = vector.load %arg4[%c0, %c0_0] : memref<1x128xf32, #tpu.memory_space<vmem>>, vector<1x128xf32>
    %cst = arith.constant 0.000000e+00 : f32
    %1 = vector.broadcast %cst : f32 to vector<8x128xf32>
    %c0_1 = arith.constant 0 : index
    %c0_2 = arith.constant 0 : index
    %2 = vector.load %arg7[%c0_1, %c0_2] : memref<8x384xf32, #tpu.memory_space<vmem>>, vector<8x128xf32>
    tpu.vector_store %arg7[%c0_1, %c0_2], %1 {strides = array<i32>} : memref<8x384xf32, #tpu.memory_space<vmem>>, vector<8x128xf32>,
    %cst_3 = arith.constant 0.000000e+00 : f32
    %3 = vector.broadcast %cst_3 : f32 to vector<8x128xf32>
    %c0_4 = arith.constant 0 : index
    %c256 = arith.constant 256 : index
    %4 = vector.load %arg7[%c0_4, %c256] : memref<8x384xf32, #tpu.memory_space<vmem>>, vector<8x128xf32>
    tpu.vector_store %arg7[%c0_4, %c256], %3 {strides = array<i32>} : memref<8x384xf32, #tpu.memory_space<vmem>>, vector<8x128xf32>,
    %c0_5 = arith.constant 0 : index
    %c0_6 = arith.constant 0 : index
    %c0_7 = arith.constant 0 : index
    %5 = vector.load %arg1[%c0_5, %c0_6, %c0_7] : memref<1x8x128xf32, #tpu.memory_space<vmem>>, vector<1x8x128xf32>
    %6 = vector.shape_cast %5 : vector<1x8x128xf32> to vector<8x128xf32>
    %7 = vector.broadcast %0 : vector<1x128xf32> to vector<8x128xf32>
    %8 = arith.mulf %6, %7 : vector<8x128xf32>
    %c0_8 = arith.constant 0 : index
    %c128 = arith.constant 128 : index
    %9 = vector.load %arg7[%c0_8, %c128] : memref<8x384xf32, #tpu.memory_space<vmem>>, vector<8x128xf32>
    tpu.vector_store %arg7[%c0_8, %c128], %8 {strides = array<i32>} : memref<8x384xf32, #tpu.memory_space<vmem>>, vector<8x128xf32>,
    %c0_9 = arith.constant 0 : index
    %c117 = arith.constant 117 : index
    %10 = vector.load %arg7[%c0_9, %c117] : memref<8x384xf32, #tpu.memory_space<vmem>>, vector<8x128xf32>
    %c0_10 = arith.constant 0 : index
    %c0_11 = arith.constant 0 : index
    %11 = vector.load %arg8[%c0_10, %c0_11] : memref<72x128xf32, #tpu.memory_space<vmem>>, vector<8x128xf32>
    tpu.vector_store %arg8[%c0_10, %c0_11], %10 {strides = array<i32>} : memref<72x128xf32, #tpu.memory_space<vmem>>, vector<8x128xf32>,
    %c0_12 = arith.constant 0 : index
    %c118 = arith.constant 118 : index
    %12 = vector.load %arg7[%c0_12, %c118] : memref<8x384xf32, #tpu.memory_space<vmem>>, vector<8x128xf32>
    %c8 = arith.constant 8 : index
    %c0_13 = arith.constant 0 : index
    %13 = vector.load %arg8[%c8, %c0_13] : memref<72x128xf32, #tpu.memory_space<vmem>>, vector<8x128xf32>
    tpu.vector_store %arg8[%c8, %c0_13], %12 {strides = array<i32>} : memref<72x128xf32, #tpu.memory_space<vmem>>, vector<8x128xf32>,
    %c0_14 = arith.constant 0 : index
    %c119 = arith.constant 119 : index
    %14 = vector.load %arg7[%c0_14, %c119] : memref<8x384xf32, #tpu.memory_space<vmem>>, vector<8x128xf32>
    %c16 = arith.constant 16 : index
    %c0_15 = arith.constant 0 : index
    %15 = vector.load %arg8[%c16, %c0_15] : memref<72x128xf32, #tpu.memory_space<vmem>>, vector<8x128xf32>
    tpu.vector_store %arg8[%c16, %c0_15], %14 {strides = array<i32>} : memref<72x128xf32, #tpu.memory_space<vmem>>, vector<8x128xf32>,
    %c0_16 = arith.constant 0 : index
    %c127 = arith.constant 127 : index
    %16 = vector.load %arg7[%c0_16, %c127] : memref<8x384xf32, #tpu.memory_space<vmem>>, vector<8x128xf32>
    %c24 = arith.constant 24 : index
    %c0_17 = arith.constant 0 : index
    %17 = vector.load %arg8[%c24, %c0_17] : memref<72x128xf32, #tpu.memory_space<vmem>>, vector<8x128xf32>
    tpu.vector_store %arg8[%c24, %c0_17], %16 {strides = array<i32>} : memref<72x128xf32, #tpu.memory_space<vmem>>, vector<8x128xf32>,
    %c0_18 = arith.constant 0 : index
    %c128_19 = arith.constant 128 : index
    %18 = vector.load %arg7[%c0_18, %c128_19] : memref<8x384xf32, #tpu.memory_space<vmem>>, vector<8x128xf32>
    %c32 = arith.constant 32 : index
    %c0_20 = arith.constant 0 : index
    %19 = vector.load %arg8[%c32, %c0_20] : memref<72x128xf32, #tpu.memory_space<vmem>>, vector<8x128xf32>
    tpu.vector_store %arg8[%c32, %c0_20], %18 {strides = array<i32>} : memref<72x128xf32, #tpu.memory_space<vmem>>, vector<8x128xf32>,
    %c0_21 = arith.constant 0 : index
    %c129 = arith.constant 129 : index
    %20 = vector.load %arg7[%c0_21, %c129] : memref<8x384xf32, #tpu.memory_space<vmem>>, vector<8x128xf32>
    %c40 = arith.constant 40 : index
    %c0_22 = arith.constant 0 : index
    %21 = vector.load %arg8[%c40, %c0_22] : memref<72x128xf32, #tpu.memory_space<vmem>>, vector<8x128xf32>
    tpu.vector_store %arg8[%c40, %c0_22], %20 {strides = array<i32>} : memref<72x128xf32, #tpu.memory_space<vmem>>, vector<8x128xf32>,
    %c0_23 = arith.constant 0 : index
    %c137 = arith.constant 137 : index
    %22 = vector.load %arg7[%c0_23, %c137] : memref<8x384xf32, #tpu.memory_space<vmem>>, vector<8x128xf32>
    %c48 = arith.constant 48 : index
    %c0_24 = arith.constant 0 : index
    %23 = vector.load %arg8[%c48, %c0_24] : memref<72x128xf32, #tpu.memory_space<vmem>>, vector<8x128xf32>
    tpu.vector_store %arg8[%c48, %c0_24], %22 {strides = array<i32>} : memref<72x128xf32, #tpu.memory_space<vmem>>, vector<8x128xf32>,
    %c0_25 = arith.constant 0 : index
    %c138 = arith.constant 138 : index
    %24 = vector.load %arg7[%c0_25, %c138] : memref<8x384xf32, #tpu.memory_space<vmem>>, vector<8x128xf32>
    %c56 = arith.constant 56 : index
    %c0_26 = arith.constant 0 : index
    %25 = vector.load %arg8[%c56, %c0_26] : memref<72x128xf32, #tpu.memory_space<vmem>>, vector<8x128xf32>
    tpu.vector_store %arg8[%c56, %c0_26], %24 {strides = array<i32>} : memref<72x128xf32, #tpu.memory_space<vmem>>, vector<8x128xf32>,
    %c0_27 = arith.constant 0 : index
    %c139 = arith.constant 139 : index
    %26 = vector.load %arg7[%c0_27, %c139] : memref<8x384xf32, #tpu.memory_space<vmem>>, vector<8x128xf32>
    %c64 = arith.constant 64 : index
    %c0_28 = arith.constant 0 : index
    %27 = vector.load %arg8[%c64, %c0_28] : memref<72x128xf32, #tpu.memory_space<vmem>>, vector<8x128xf32>
    tpu.vector_store %arg8[%c64, %c0_28], %26 {strides = array<i32>} : memref<72x128xf32, #tpu.memory_space<vmem>>, vector<8x128xf32>,
    %c0_29 = arith.constant 0 : index
    %c0_30 = arith.constant 0 : index
    %c0_31 = arith.constant 0 : index
    %28 = vector.load %arg2[%c0_29, %c0_30, %c0_31] : memref<10x8x72xbf16, #tpu.memory_space<vmem>>, vector<1x8x72xbf16>
    %29 = vector.shape_cast %28 : vector<1x8x72xbf16> to vector<8x72xbf16>
    %c0_32 = arith.constant 0 : index
    %c0_33 = arith.constant 0 : index
    %30 = vector.load %arg8[%c0_32, %c0_33] : memref<72x128xf32, #tpu.memory_space<vmem>>, vector<72x128xf32>
    %31 = arith.truncf %30 : vector<72x128xf32> to vector<72x128xbf16>
    %cst_34 = arith.constant dense<0.000000e+00> : vector<8x128xf32>
    %32 = tpu.matmul %29, %31, %cst_34 {dimension_numbers = #tpu.dot_dimension_numbers<[1], [0], [0], [1], [0, 0, 1, 1], [], []>} : vector<8x72xbf16>, vector<72x128xbf16>, vector<8x128xf32> -> vector<8x128xf32>
    %c0_35 = arith.constant 0 : index
    %c0_36 = arith.constant 0 : index
    %c0_37 = arith.constant 0 : index
    %33 = vector.load %arg3[%c0_35, %c0_36, %c0_37] : memref<10x8x1xf32, #tpu.memory_space<vmem>>, vector<1x8x1xf32>
    %34 = vector.shape_cast %33 : vector<1x8x1xf32> to vector<8x1xf32>
    %35 = vector.broadcast %34 : vector<8x1xf32> to vector<8x128xf32>
    %36 = arith.addf %32, %35 : vector<8x128xf32>
    %cst_38 = arith.constant 0.000000e+00 : f32
    %37 = vector.broadcast %cst_38 : f32 to vector<8x128xf32>
    %38 = arith.maximumf %36, %37 : vector<8x128xf32>
    %39 = vector.broadcast %0 : vector<1x128xf32> to vector<8x128xf32>
    %40 = arith.mulf %38, %39 : vector<8x128xf32>
    %c0_39 = arith.constant 0 : index
    %c128_40 = arith.constant 128 : index
    %41 = vector.load %arg7[%c0_39, %c128_40] : memref<8x384xf32, #tpu.memory_space<vmem>>, vector<8x128xf32>
    tpu.vector_store %arg7[%c0_39, %c128_40], %40 {strides = array<i32>} : memref<8x384xf32, #tpu.memory_space<vmem>>, vector<8x128xf32>,
    %c0_41 = arith.constant 0 : index
    %c117_42 = arith.constant 117 : index
    %42 = vector.load %arg7[%c0_41, %c117_42] : memref<8x384xf32, #tpu.memory_space<vmem>>, vector<8x128xf32>
    %c0_43 = arith.constant 0 : index
    %c0_44 = arith.constant 0 : index
    %43 = vector.load %arg8[%c0_43, %c0_44] : memref<72x128xf32, #tpu.memory_space<vmem>>, vector<8x128xf32>
    tpu.vector_store %arg8[%c0_43, %c0_44], %42 {strides = array<i32>} : memref<72x128xf32, #tpu.memory_space<vmem>>, vector<8x128xf32>,
    %c0_45 = arith.constant 0 : index
    %c118_46 = arith.constant 118 : index
    %44 = vector.load %arg7[%c0_45, %c118_46] : memref<8x384xf32, #tpu.memory_space<vmem>>, vector<8x128xf32>
    %c8_47 = arith.constant 8 : index
    %c0_48 = arith.constant 0 : index
    %45 = vector.load %arg8[%c8_47, %c0_48] : memref<72x128xf32, #tpu.memory_space<vmem>>, vector<8x128xf32>
    tpu.vector_store %arg8[%c8_47, %c0_48], %44 {strides = array<i32>} : memref<72x128xf32, #tpu.memory_space<vmem>>, vector<8x128xf32>,
    %c0_49 = arith.constant 0 : index
    %c119_50 = arith.constant 119 : index
    %46 = vector.load %arg7[%c0_49, %c119_50] : memref<8x384xf32, #tpu.memory_space<vmem>>, vector<8x128xf32>
    %c16_51 = arith.constant 16 : index
    %c0_52 = arith.constant 0 : index
    %47 = vector.load %arg8[%c16_51, %c0_52] : memref<72x128xf32, #tpu.memory_space<vmem>>, vector<8x128xf32>
    tpu.vector_store %arg8[%c16_51, %c0_52], %46 {strides = array<i32>} : memref<72x128xf32, #tpu.memory_space<vmem>>, vector<8x128xf32>,
    %c0_53 = arith.constant 0 : index
    %c127_54 = arith.constant 127 : index
    %48 = vector.load %arg7[%c0_53, %c127_54] : memref<8x384xf32, #tpu.memory_space<vmem>>, vector<8x128xf32>
    %c24_55 = arith.constant 24 : index
    %c0_56 = arith.constant 0 : index
    %49 = vector.load %arg8[%c24_55, %c0_56] : memref<72x128xf32, #tpu.memory_space<vmem>>, vector<8x128xf32>
    tpu.vector_store %arg8[%c24_55, %c0_56], %48 {strides = array<i32>} : memref<72x128xf32, #tpu.memory_space<vmem>>, vector<8x128xf32>,
    %c0_57 = arith.constant 0 : index
    %c128_58 = arith.constant 128 : index
    %50 = vector.load %arg7[%c0_57, %c128_58] : memref<8x384xf32, #tpu.memory_space<vmem>>, vector<8x128xf32>
    %c32_59 = arith.constant 32 : index
    %c0_60 = arith.constant 0 : index
    %51 = vector.load %arg8[%c32_59, %c0_60] : memref<72x128xf32, #tpu.memory_space<vmem>>, vector<8x128xf32>
    tpu.vector_store %arg8[%c32_59, %c0_60], %50 {strides = array<i32>} : memref<72x128xf32, #tpu.memory_space<vmem>>, vector<8x128xf32>,
    %c0_61 = arith.constant 0 : index
    %c129_62 = arith.constant 129 : index
    %52 = vector.load %arg7[%c0_61, %c129_62] : memref<8x384xf32, #tpu.memory_space<vmem>>, vector<8x128xf32>
    %c40_63 = arith.constant 40 : index
    %c0_64 = arith.constant 0 : index
    %53 = vector.load %arg8[%c40_63, %c0_64] : memref<72x128xf32, #tpu.memory_space<vmem>>, vector<8x128xf32>
    tpu.vector_store %arg8[%c40_63, %c0_64], %52 {strides = array<i32>} : memref<72x128xf32, #tpu.memory_space<vmem>>, vector<8x128xf32>,
    %c0_65 = arith.constant 0 : index
    %c137_66 = arith.constant 137 : index
    %54 = vector.load %arg7[%c0_65, %c137_66] : memref<8x384xf32, #tpu.memory_space<vmem>>, vector<8x128xf32>
    %c48_67 = arith.constant 48 : index
    %c0_68 = arith.constant 0 : index
    %55 = vector.load %arg8[%c48_67, %c0_68] : memref<72x128xf32, #tpu.memory_space<vmem>>, vector<8x128xf32>
    tpu.vector_store %arg8[%c48_67, %c0_68], %54 {strides = array<i32>} : memref<72x128xf32, #tpu.memory_space<vmem>>, vector<8x128xf32>,
    %c0_69 = arith.constant 0 : index
    %c138_70 = arith.constant 138 : index
    %56 = vector.load %arg7[%c0_69, %c138_70] : memref<8x384xf32, #tpu.memory_space<vmem>>, vector<8x128xf32>
    %c56_71 = arith.constant 56 : index
    %c0_72 = arith.constant 0 : index
    %57 = vector.load %arg8[%c56_71, %c0_72] : memref<72x128xf32, #tpu.memory_space<vmem>>, vector<8x128xf32>
    tpu.vector_store %arg8[%c56_71, %c0_72], %56 {strides = array<i32>} : memref<72x128xf32, #tpu.memory_space<vmem>>, vector<8x128xf32>,
    %c0_73 = arith.constant 0 : index
    %c139_74 = arith.constant 139 : index
    %58 = vector.load %arg7[%c0_73, %c139_74] : memref<8x384xf32, #tpu.memory_space<vmem>>, vector<8x128xf32>
    %c64_75 = arith.constant 64 : index
    %c0_76 = arith.constant 0 : index
    %59 = vector.load %arg8[%c64_75, %c0_76] : memref<72x128xf32, #tpu.memory_space<vmem>>, vector<8x128xf32>
    tpu.vector_store %arg8[%c64_75, %c0_76], %58 {strides = array<i32>} : memref<72x128xf32, #tpu.memory_space<vmem>>, vector<8x128xf32>,
    %c1 = arith.constant 1 : index
    %c0_77 = arith.constant 0 : index
    %c0_78 = arith.constant 0 : index
    %60 = vector.load %arg2[%c1, %c0_77, %c0_78] : memref<10x8x72xbf16, #tpu.memory_space<vmem>>, vector<1x8x72xbf16>
    %61 = vector.shape_cast %60 : vector<1x8x72xbf16> to vector<8x72xbf16>
    %c0_79 = arith.constant 0 : index
    %c0_80 = arith.constant 0 : index
    %62 = vector.load %arg8[%c0_79, %c0_80] : memref<72x128xf32, #tpu.memory_space<vmem>>, vector<72x128xf32>
    %63 = arith.truncf %62 : vector<72x128xf32> to vector<72x128xbf16>
    %cst_81 = arith.constant dense<0.000000e+00> : vector<8x128xf32>
    %64 = tpu.matmul %61, %63, %cst_81 {dimension_numbers = #tpu.dot_dimension_numbers<[1], [0], [0], [1], [0, 0, 1, 1], [], []>} : vector<8x72xbf16>, vector<72x128xbf16>, vector<8x128xf32> -> vector<8x128xf32>
    %c1_82 = arith.constant 1 : index
    %c0_83 = arith.constant 0 : index
    %c0_84 = arith.constant 0 : index
    %65 = vector.load %arg3[%c1_82, %c0_83, %c0_84] : memref<10x8x1xf32, #tpu.memory_space<vmem>>, vector<1x8x1xf32>
    %66 = vector.shape_cast %65 : vector<1x8x1xf32> to vector<8x1xf32>
    %67 = vector.broadcast %66 : vector<8x1xf32> to vector<8x128xf32>
    %68 = arith.addf %64, %67 : vector<8x128xf32>
    %69 = arith.addf %6, %68 : vector<8x128xf32>
    %70 = vector.broadcast %0 : vector<1x128xf32> to vector<8x128xf32>
    %71 = arith.mulf %69, %70 : vector<8x128xf32>
    %c0_85 = arith.constant 0 : index
    %c128_86 = arith.constant 128 : index
    %72 = vector.load %arg7[%c0_85, %c128_86] : memref<8x384xf32, #tpu.memory_space<vmem>>, vector<8x128xf32>
    tpu.vector_store %arg7[%c0_85, %c128_86], %71 {strides = array<i32>} : memref<8x384xf32, #tpu.memory_space<vmem>>, vector<8x128xf32>,
    %c0_87 = arith.constant 0 : index
    %c117_88 = arith.constant 117 : index
    %73 = vector.load %arg7[%c0_87, %c117_88] : memref<8x384xf32, #tpu.memory_space<vmem>>, vector<8x128xf32>
    %c0_89 = arith.constant 0 : index
    %c0_90 = arith.constant 0 : index
    %74 = vector.load %arg8[%c0_89, %c0_90] : memref<72x128xf32, #tpu.memory_space<vmem>>, vector<8x128xf32>
    tpu.vector_store %arg8[%c0_89, %c0_90], %73 {strides = array<i32>} : memref<72x128xf32, #tpu.memory_space<vmem>>, vector<8x128xf32>,
    %c0_91 = arith.constant 0 : index
    %c118_92 = arith.constant 118 : index
    %75 = vector.load %arg7[%c0_91, %c118_92] : memref<8x384xf32, #tpu.memory_space<vmem>>, vector<8x128xf32>
    %c8_93 = arith.constant 8 : index
    %c0_94 = arith.constant 0 : index
    %76 = vector.load %arg8[%c8_93, %c0_94] : memref<72x128xf32, #tpu.memory_space<vmem>>, vector<8x128xf32>
    tpu.vector_store %arg8[%c8_93, %c0_94], %75 {strides = array<i32>} : memref<72x128xf32, #tpu.memory_space<vmem>>, vector<8x128xf32>,
    %c0_95 = arith.constant 0 : index
    %c119_96 = arith.constant 119 : index
    %77 = vector.load %arg7[%c0_95, %c119_96] : memref<8x384xf32, #tpu.memory_space<vmem>>, vector<8x128xf32>
    %c16_97 = arith.constant 16 : index
    %c0_98 = arith.constant 0 : index
    %78 = vector.load %arg8[%c16_97, %c0_98] : memref<72x128xf32, #tpu.memory_space<vmem>>, vector<8x128xf32>
    tpu.vector_store %arg8[%c16_97, %c0_98], %77 {strides = array<i32>} : memref<72x128xf32, #tpu.memory_space<vmem>>, vector<8x128xf32>,
    %c0_99 = arith.constant 0 : index
    %c127_100 = arith.constant 127 : index
    %79 = vector.load %arg7[%c0_99, %c127_100] : memref<8x384xf32, #tpu.memory_space<vmem>>, vector<8x128xf32>
    %c24_101 = arith.constant 24 : index
    %c0_102 = arith.constant 0 : index
    %80 = vector.load %arg8[%c24_101, %c0_102] : memref<72x128xf32, #tpu.memory_space<vmem>>, vector<8x128xf32>
    tpu.vector_store %arg8[%c24_101, %c0_102], %79 {strides = array<i32>} : memref<72x128xf32, #tpu.memory_space<vmem>>, vector<8x128xf32>,
    %c0_103 = arith.constant 0 : index
    %c128_104 = arith.constant 128 : index
    %81 = vector.load %arg7[%c0_103, %c128_104] : memref<8x384xf32, #tpu.memory_space<vmem>>, vector<8x128xf32>
    %c32_105 = arith.constant 32 : index
    %c0_106 = arith.constant 0 : index
    %82 = vector.load %arg8[%c32_105, %c0_106] : memref<72x128xf32, #tpu.memory_space<vmem>>, vector<8x128xf32>
    tpu.vector_store %arg8[%c32_105, %c0_106], %81 {strides = array<i32>} : memref<72x128xf32, #tpu.memory_space<vmem>>, vector<8x128xf32>,
    %c0_107 = arith.constant 0 : index
    %c129_108 = arith.constant 129 : index
    %83 = vector.load %arg7[%c0_107, %c129_108] : memref<8x384xf32, #tpu.memory_space<vmem>>, vector<8x128xf32>
    %c40_109 = arith.constant 40 : index
    %c0_110 = arith.constant 0 : index
    %84 = vector.load %arg8[%c40_109, %c0_110] : memref<72x128xf32, #tpu.memory_space<vmem>>, vector<8x128xf32>
    tpu.vector_store %arg8[%c40_109, %c0_110], %83 {strides = array<i32>} : memref<72x128xf32, #tpu.memory_space<vmem>>, vector<8x128xf32>,
    %c0_111 = arith.constant 0 : index
    %c137_112 = arith.constant 137 : index
    %85 = vector.load %arg7[%c0_111, %c137_112] : memref<8x384xf32, #tpu.memory_space<vmem>>, vector<8x128xf32>
    %c48_113 = arith.constant 48 : index
    %c0_114 = arith.constant 0 : index
    %86 = vector.load %arg8[%c48_113, %c0_114] : memref<72x128xf32, #tpu.memory_space<vmem>>, vector<8x128xf32>
    tpu.vector_store %arg8[%c48_113, %c0_114], %85 {strides = array<i32>} : memref<72x128xf32, #tpu.memory_space<vmem>>, vector<8x128xf32>,
    %c0_115 = arith.constant 0 : index
    %c138_116 = arith.constant 138 : index
    %87 = vector.load %arg7[%c0_115, %c138_116] : memref<8x384xf32, #tpu.memory_space<vmem>>, vector<8x128xf32>
    %c56_117 = arith.constant 56 : index
    %c0_118 = arith.constant 0 : index
    %88 = vector.load %arg8[%c56_117, %c0_118] : memref<72x128xf32, #tpu.memory_space<vmem>>, vector<8x128xf32>
    tpu.vector_store %arg8[%c56_117, %c0_118], %87 {strides = array<i32>} : memref<72x128xf32, #tpu.memory_space<vmem>>, vector<8x128xf32>,
    %c0_119 = arith.constant 0 : index
    %c139_120 = arith.constant 139 : index
    %89 = vector.load %arg7[%c0_119, %c139_120] : memref<8x384xf32, #tpu.memory_space<vmem>>, vector<8x128xf32>
    %c64_121 = arith.constant 64 : index
    %c0_122 = arith.constant 0 : index
    %90 = vector.load %arg8[%c64_121, %c0_122] : memref<72x128xf32, #tpu.memory_space<vmem>>, vector<8x128xf32>
    tpu.vector_store %arg8[%c64_121, %c0_122], %89 {strides = array<i32>} : memref<72x128xf32, #tpu.memory_space<vmem>>, vector<8x128xf32>,
    %c2 = arith.constant 2 : index
    %c0_123 = arith.constant 0 : index
    %c0_124 = arith.constant 0 : index
    %91 = vector.load %arg2[%c2, %c0_123, %c0_124] : memref<10x8x72xbf16, #tpu.memory_space<vmem>>, vector<1x8x72xbf16>
    %92 = vector.shape_cast %91 : vector<1x8x72xbf16> to vector<8x72xbf16>
    %c0_125 = arith.constant 0 : index
    %c0_126 = arith.constant 0 : index
    %93 = vector.load %arg8[%c0_125, %c0_126] : memref<72x128xf32, #tpu.memory_space<vmem>>, vector<72x128xf32>
    %94 = arith.truncf %93 : vector<72x128xf32> to vector<72x128xbf16>
    %cst_127 = arith.constant dense<0.000000e+00> : vector<8x128xf32>
    %95 = tpu.matmul %92, %94, %cst_127 {dimension_numbers = #tpu.dot_dimension_numbers<[1], [0], [0], [1], [0, 0, 1, 1], [], []>} : vector<8x72xbf16>, vector<72x128xbf16>, vector<8x128xf32> -> vector<8x128xf32>
    %c2_128 = arith.constant 2 : index
    %c0_129 = arith.constant 0 : index
    %c0_130 = arith.constant 0 : index
    %96 = vector.load %arg3[%c2_128, %c0_129, %c0_130] : memref<10x8x1xf32, #tpu.memory_space<vmem>>, vector<1x8x1xf32>
    %97 = vector.shape_cast %96 : vector<1x8x1xf32> to vector<8x1xf32>
    %98 = vector.broadcast %97 : vector<8x1xf32> to vector<8x128xf32>
    %99 = arith.addf %95, %98 : vector<8x128xf32>
    %cst_131 = arith.constant 0.000000e+00 : f32
    %100 = vector.broadcast %cst_131 : f32 to vector<8x128xf32>
    %101 = arith.maximumf %99, %100 : vector<8x128xf32>
    %102 = vector.broadcast %0 : vector<1x128xf32> to vector<8x128xf32>
    %103 = arith.mulf %101, %102 : vector<8x128xf32>
    %c0_132 = arith.constant 0 : index
    %c128_133 = arith.constant 128 : index
    %104 = vector.load %arg7[%c0_132, %c128_133] : memref<8x384xf32, #tpu.memory_space<vmem>>, vector<8x128xf32>
    tpu.vector_store %arg7[%c0_132, %c128_133], %103 {strides = array<i32>} : memref<8x384xf32, #tpu.memory_space<vmem>>, vector<8x128xf32>,
    %c0_134 = arith.constant 0 : index
    %c117_135 = arith.constant 117 : index
    %105 = vector.load %arg7[%c0_134, %c117_135] : memref<8x384xf32, #tpu.memory_space<vmem>>, vector<8x128xf32>
    %c0_136 = arith.constant 0 : index
    %c0_137 = arith.constant 0 : index
    %106 = vector.load %arg8[%c0_136, %c0_137] : memref<72x128xf32, #tpu.memory_space<vmem>>, vector<8x128xf32>
    tpu.vector_store %arg8[%c0_136, %c0_137], %105 {strides = array<i32>} : memref<72x128xf32, #tpu.memory_space<vmem>>, vector<8x128xf32>,
    %c0_138 = arith.constant 0 : index
    %c118_139 = arith.constant 118 : index
    %107 = vector.load %arg7[%c0_138, %c118_139] : memref<8x384xf32, #tpu.memory_space<vmem>>, vector<8x128xf32>
    %c8_140 = arith.constant 8 : index
    %c0_141 = arith.constant 0 : index
    %108 = vector.load %arg8[%c8_140, %c0_141] : memref<72x128xf32, #tpu.memory_space<vmem>>, vector<8x128xf32>
    tpu.vector_store %arg8[%c8_140, %c0_141], %107 {strides = array<i32>} : memref<72x128xf32, #tpu.memory_space<vmem>>, vector<8x128xf32>,
    %c0_142 = arith.constant 0 : index
    %c119_143 = arith.constant 119 : index
    %109 = vector.load %arg7[%c0_142, %c119_143] : memref<8x384xf32, #tpu.memory_space<vmem>>, vector<8x128xf32>
    %c16_144 = arith.constant 16 : index
    %c0_145 = arith.constant 0 : index
    %110 = vector.load %arg8[%c16_144, %c0_145] : memref<72x128xf32, #tpu.memory_space<vmem>>, vector<8x128xf32>
    tpu.vector_store %arg8[%c16_144, %c0_145], %109 {strides = array<i32>} : memref<72x128xf32, #tpu.memory_space<vmem>>, vector<8x128xf32>,
    %c0_146 = arith.constant 0 : index
    %c127_147 = arith.constant 127 : index
    %111 = vector.load %arg7[%c0_146, %c127_147] : memref<8x384xf32, #tpu.memory_space<vmem>>, vector<8x128xf32>
    %c24_148 = arith.constant 24 : index
    %c0_149 = arith.constant 0 : index
    %112 = vector.load %arg8[%c24_148, %c0_149] : memref<72x128xf32, #tpu.memory_space<vmem>>, vector<8x128xf32>
    tpu.vector_store %arg8[%c24_148, %c0_149], %111 {strides = array<i32>} : memref<72x128xf32, #tpu.memory_space<vmem>>, vector<8x128xf32>,
    %c0_150 = arith.constant 0 : index
    %c128_151 = arith.constant 128 : index
    %113 = vector.load %arg7[%c0_150, %c128_151] : memref<8x384xf32, #tpu.memory_space<vmem>>, vector<8x128xf32>
    %c32_152 = arith.constant 32 : index
    %c0_153 = arith.constant 0 : index
    %114 = vector.load %arg8[%c32_152, %c0_153] : memref<72x128xf32, #tpu.memory_space<vmem>>, vector<8x128xf32>
    tpu.vector_store %arg8[%c32_152, %c0_153], %113 {strides = array<i32>} : memref<72x128xf32, #tpu.memory_space<vmem>>, vector<8x128xf32>,
    %c0_154 = arith.constant 0 : index
    %c129_155 = arith.constant 129 : index
    %115 = vector.load %arg7[%c0_154, %c129_155] : memref<8x384xf32, #tpu.memory_space<vmem>>, vector<8x128xf32>
    %c40_156 = arith.constant 40 : index
    %c0_157 = arith.constant 0 : index
    %116 = vector.load %arg8[%c40_156, %c0_157] : memref<72x128xf32, #tpu.memory_space<vmem>>, vector<8x128xf32>
    tpu.vector_store %arg8[%c40_156, %c0_157], %115 {strides = array<i32>} : memref<72x128xf32, #tpu.memory_space<vmem>>, vector<8x128xf32>,
    %c0_158 = arith.constant 0 : index
    %c137_159 = arith.constant 137 : index
    %117 = vector.load %arg7[%c0_158, %c137_159] : memref<8x384xf32, #tpu.memory_space<vmem>>, vector<8x128xf32>
    %c48_160 = arith.constant 48 : index
    %c0_161 = arith.constant 0 : index
    %118 = vector.load %arg8[%c48_160, %c0_161] : memref<72x128xf32, #tpu.memory_space<vmem>>, vector<8x128xf32>
    tpu.vector_store %arg8[%c48_160, %c0_161], %117 {strides = array<i32>} : memref<72x128xf32, #tpu.memory_space<vmem>>, vector<8x128xf32>,
    %c0_162 = arith.constant 0 : index
    %c138_163 = arith.constant 138 : index
    %119 = vector.load %arg7[%c0_162, %c138_163] : memref<8x384xf32, #tpu.memory_space<vmem>>, vector<8x128xf32>
    %c56_164 = arith.constant 56 : index
    %c0_165 = arith.constant 0 : index
    %120 = vector.load %arg8[%c56_164, %c0_165] : memref<72x128xf32, #tpu.memory_space<vmem>>, vector<8x128xf32>
    tpu.vector_store %arg8[%c56_164, %c0_165], %119 {strides = array<i32>} : memref<72x128xf32, #tpu.memory_space<vmem>>, vector<8x128xf32>,
    %c0_166 = arith.constant 0 : index
    %c139_167 = arith.constant 139 : index
    %121 = vector.load %arg7[%c0_166, %c139_167] : memref<8x384xf32, #tpu.memory_space<vmem>>, vector<8x128xf32>
    %c64_168 = arith.constant 64 : index
    %c0_169 = arith.constant 0 : index
    %122 = vector.load %arg8[%c64_168, %c0_169] : memref<72x128xf32, #tpu.memory_space<vmem>>, vector<8x128xf32>
    tpu.vector_store %arg8[%c64_168, %c0_169], %121 {strides = array<i32>} : memref<72x128xf32, #tpu.memory_space<vmem>>, vector<8x128xf32>,
    %c3 = arith.constant 3 : index
    %c0_170 = arith.constant 0 : index
    %c0_171 = arith.constant 0 : index
    %123 = vector.load %arg2[%c3, %c0_170, %c0_171] : memref<10x8x72xbf16, #tpu.memory_space<vmem>>, vector<1x8x72xbf16>
    %124 = vector.shape_cast %123 : vector<1x8x72xbf16> to vector<8x72xbf16>
    %c0_172 = arith.constant 0 : index
    %c0_173 = arith.constant 0 : index
    %125 = vector.load %arg8[%c0_172, %c0_173] : memref<72x128xf32, #tpu.memory_space<vmem>>, vector<72x128xf32>
    %126 = arith.truncf %125 : vector<72x128xf32> to vector<72x128xbf16>
    %cst_174 = arith.constant dense<0.000000e+00> : vector<8x128xf32>
    %127 = tpu.matmul %124, %126, %cst_174 {dimension_numbers = #tpu.dot_dimension_numbers<[1], [0], [0], [1], [0, 0, 1, 1], [], []>} : vector<8x72xbf16>, vector<72x128xbf16>, vector<8x128xf32> -> vector<8x128xf32>
    %c3_175 = arith.constant 3 : index
    %c0_176 = arith.constant 0 : index
    %c0_177 = arith.constant 0 : index
    %128 = vector.load %arg3[%c3_175, %c0_176, %c0_177] : memref<10x8x1xf32, #tpu.memory_space<vmem>>, vector<1x8x1xf32>
    %129 = vector.shape_cast %128 : vector<1x8x1xf32> to vector<8x1xf32>
    %130 = vector.broadcast %129 : vector<8x1xf32> to vector<8x128xf32>
    %131 = arith.addf %127, %130 : vector<8x128xf32>
    %132 = arith.addf %69, %131 : vector<8x128xf32>
    %c0_178 = arith.constant 0 : index
    %c0_179 = arith.constant 0 : index
    %c0_180 = arith.constant 0 : index
    %133 = vector.load %arg5[%c0_178, %c0_179, %c0_180] : memref<1x8x128xf32, #tpu.memory_space<vmem>>, vector<1x8x128xf32>
    %134 = vector.shape_cast %133 : vector<1x8x128xf32> to vector<8x128xf32>
    %135 = arith.addf %132, %134 : vector<8x128xf32>
    %136 = vector.broadcast %0 : vector<1x128xf32> to vector<8x128xf32>
    %137 = arith.mulf %135, %136 : vector<8x128xf32>
    %c0_181 = arith.constant 0 : index
    %c128_182 = arith.constant 128 : index
    %138 = vector.load %arg7[%c0_181, %c128_182] : memref<8x384xf32, #tpu.memory_space<vmem>>, vector<8x128xf32>
    tpu.vector_store %arg7[%c0_181, %c128_182], %137 {strides = array<i32>} : memref<8x384xf32, #tpu.memory_space<vmem>>, vector<8x128xf32>,
    %c0_183 = arith.constant 0 : index
    %c117_184 = arith.constant 117 : index
    %139 = vector.load %arg7[%c0_183, %c117_184] : memref<8x384xf32, #tpu.memory_space<vmem>>, vector<8x128xf32>
    %c0_185 = arith.constant 0 : index
    %c0_186 = arith.constant 0 : index
    %140 = vector.load %arg8[%c0_185, %c0_186] : memref<72x128xf32, #tpu.memory_space<vmem>>, vector<8x128xf32>
    tpu.vector_store %arg8[%c0_185, %c0_186], %139 {strides = array<i32>} : memref<72x128xf32, #tpu.memory_space<vmem>>, vector<8x128xf32>,
    %c0_187 = arith.constant 0 : index
    %c118_188 = arith.constant 118 : index
    %141 = vector.load %arg7[%c0_187, %c118_188] : memref<8x384xf32, #tpu.memory_space<vmem>>, vector<8x128xf32>
    %c8_189 = arith.constant 8 : index
    %c0_190 = arith.constant 0 : index
    %142 = vector.load %arg8[%c8_189, %c0_190] : memref<72x128xf32, #tpu.memory_space<vmem>>, vector<8x128xf32>
    tpu.vector_store %arg8[%c8_189, %c0_190], %141 {strides = array<i32>} : memref<72x128xf32, #tpu.memory_space<vmem>>, vector<8x128xf32>,
    %c0_191 = arith.constant 0 : index
    %c119_192 = arith.constant 119 : index
    %143 = vector.load %arg7[%c0_191, %c119_192] : memref<8x384xf32, #tpu.memory_space<vmem>>, vector<8x128xf32>
    %c16_193 = arith.constant 16 : index
    %c0_194 = arith.constant 0 : index
    %144 = vector.load %arg8[%c16_193, %c0_194] : memref<72x128xf32, #tpu.memory_space<vmem>>, vector<8x128xf32>
    tpu.vector_store %arg8[%c16_193, %c0_194], %143 {strides = array<i32>} : memref<72x128xf32, #tpu.memory_space<vmem>>, vector<8x128xf32>,
    %c0_195 = arith.constant 0 : index
    %c127_196 = arith.constant 127 : index
    %145 = vector.load %arg7[%c0_195, %c127_196] : memref<8x384xf32, #tpu.memory_space<vmem>>, vector<8x128xf32>
    %c24_197 = arith.constant 24 : index
    %c0_198 = arith.constant 0 : index
    %146 = vector.load %arg8[%c24_197, %c0_198] : memref<72x128xf32, #tpu.memory_space<vmem>>, vector<8x128xf32>
    tpu.vector_store %arg8[%c24_197, %c0_198], %145 {strides = array<i32>} : memref<72x128xf32, #tpu.memory_space<vmem>>, vector<8x128xf32>,
    %c0_199 = arith.constant 0 : index
    %c128_200 = arith.constant 128 : index
    %147 = vector.load %arg7[%c0_199, %c128_200] : memref<8x384xf32, #tpu.memory_space<vmem>>, vector<8x128xf32>
    %c32_201 = arith.constant 32 : index
    %c0_202 = arith.constant 0 : index
    %148 = vector.load %arg8[%c32_201, %c0_202] : memref<72x128xf32, #tpu.memory_space<vmem>>, vector<8x128xf32>
    tpu.vector_store %arg8[%c32_201, %c0_202], %147 {strides = array<i32>} : memref<72x128xf32, #tpu.memory_space<vmem>>, vector<8x128xf32>,
    %c0_203 = arith.constant 0 : index
    %c129_204 = arith.constant 129 : index
    %149 = vector.load %arg7[%c0_203, %c129_204] : memref<8x384xf32, #tpu.memory_space<vmem>>, vector<8x128xf32>
    %c40_205 = arith.constant 40 : index
    %c0_206 = arith.constant 0 : index
    %150 = vector.load %arg8[%c40_205, %c0_206] : memref<72x128xf32, #tpu.memory_space<vmem>>, vector<8x128xf32>
    tpu.vector_store %arg8[%c40_205, %c0_206], %149 {strides = array<i32>} : memref<72x128xf32, #tpu.memory_space<vmem>>, vector<8x128xf32>,
    %c0_207 = arith.constant 0 : index
    %c137_208 = arith.constant 137 : index
    %151 = vector.load %arg7[%c0_207, %c137_208] : memref<8x384xf32, #tpu.memory_space<vmem>>, vector<8x128xf32>
    %c48_209 = arith.constant 48 : index
    %c0_210 = arith.constant 0 : index
    %152 = vector.load %arg8[%c48_209, %c0_210] : memref<72x128xf32, #tpu.memory_space<vmem>>, vector<8x128xf32>
    tpu.vector_store %arg8[%c48_209, %c0_210], %151 {strides = array<i32>} : memref<72x128xf32, #tpu.memory_space<vmem>>, vector<8x128xf32>,
    %c0_211 = arith.constant 0 : index
    %c138_212 = arith.constant 138 : index
    %153 = vector.load %arg7[%c0_211, %c138_212] : memref<8x384xf32, #tpu.memory_space<vmem>>, vector<8x128xf32>
    %c56_213 = arith.constant 56 : index
    %c0_214 = arith.constant 0 : index
    %154 = vector.load %arg8[%c56_213, %c0_214] : memref<72x128xf32, #tpu.memory_space<vmem>>, vector<8x128xf32>
    tpu.vector_store %arg8[%c56_213, %c0_214], %153 {strides = array<i32>} : memref<72x128xf32, #tpu.memory_space<vmem>>, vector<8x128xf32>,
    %c0_215 = arith.constant 0 : index
    %c139_216 = arith.constant 139 : index
    %155 = vector.load %arg7[%c0_215, %c139_216] : memref<8x384xf32, #tpu.memory_space<vmem>>, vector<8x128xf32>
    %c64_217 = arith.constant 64 : index
    %c0_218 = arith.constant 0 : index
    %156 = vector.load %arg8[%c64_217, %c0_218] : memref<72x128xf32, #tpu.memory_space<vmem>>, vector<8x128xf32>
    tpu.vector_store %arg8[%c64_217, %c0_218], %155 {strides = array<i32>} : memref<72x128xf32, #tpu.memory_space<vmem>>, vector<8x128xf32>,
    %c4 = arith.constant 4 : index
    %c0_219 = arith.constant 0 : index
    %c0_220 = arith.constant 0 : index
    %157 = vector.load %arg2[%c4, %c0_219, %c0_220] : memref<10x8x72xbf16, #tpu.memory_space<vmem>>, vector<1x8x72xbf16>
    %158 = vector.shape_cast %157 : vector<1x8x72xbf16> to vector<8x72xbf16>
    %c0_221 = arith.constant 0 : index
    %c0_222 = arith.constant 0 : index
    %159 = vector.load %arg8[%c0_221, %c0_222] : memref<72x128xf32, #tpu.memory_space<vmem>>, vector<72x128xf32>
    %160 = arith.truncf %159 : vector<72x128xf32> to vector<72x128xbf16>
    %cst_223 = arith.constant dense<0.000000e+00> : vector<8x128xf32>
    %161 = tpu.matmul %158, %160, %cst_223 {dimension_numbers = #tpu.dot_dimension_numbers<[1], [0], [0], [1], [0, 0, 1, 1], [], []>} : vector<8x72xbf16>, vector<72x128xbf16>, vector<8x128xf32> -> vector<8x128xf32>
    %c4_224 = arith.constant 4 : index
    %c0_225 = arith.constant 0 : index
    %c0_226 = arith.constant 0 : index
    %162 = vector.load %arg3[%c4_224, %c0_225, %c0_226] : memref<10x8x1xf32, #tpu.memory_space<vmem>>, vector<1x8x1xf32>
    %163 = vector.shape_cast %162 : vector<1x8x1xf32> to vector<8x1xf32>
    %164 = vector.broadcast %163 : vector<8x1xf32> to vector<8x128xf32>
    %165 = arith.addf %161, %164 : vector<8x128xf32>
    %cst_227 = arith.constant 0.000000e+00 : f32
    %166 = vector.broadcast %cst_227 : f32 to vector<8x128xf32>
    %167 = arith.maximumf %165, %166 : vector<8x128xf32>
    %168 = vector.broadcast %0 : vector<1x128xf32> to vector<8x128xf32>
    %169 = arith.mulf %167, %168 : vector<8x128xf32>
    %c0_228 = arith.constant 0 : index
    %c128_229 = arith.constant 128 : index
    %170 = vector.load %arg7[%c0_228, %c128_229] : memref<8x384xf32, #tpu.memory_space<vmem>>, vector<8x128xf32>
    tpu.vector_store %arg7[%c0_228, %c128_229], %169 {strides = array<i32>} : memref<8x384xf32, #tpu.memory_space<vmem>>, vector<8x128xf32>,
    %c0_230 = arith.constant 0 : index
    %c117_231 = arith.constant 117 : index
    %171 = vector.load %arg7[%c0_230, %c117_231] : memref<8x384xf32, #tpu.memory_space<vmem>>, vector<8x128xf32>
    %c0_232 = arith.constant 0 : index
    %c0_233 = arith.constant 0 : index
    %172 = vector.load %arg8[%c0_232, %c0_233] : memref<72x128xf32, #tpu.memory_space<vmem>>, vector<8x128xf32>
    tpu.vector_store %arg8[%c0_232, %c0_233], %171 {strides = array<i32>} : memref<72x128xf32, #tpu.memory_space<vmem>>, vector<8x128xf32>,
    %c0_234 = arith.constant 0 : index
    %c118_235 = arith.constant 118 : index
    %173 = vector.load %arg7[%c0_234, %c118_235] : memref<8x384xf32, #tpu.memory_space<vmem>>, vector<8x128xf32>
    %c8_236 = arith.constant 8 : index
    %c0_237 = arith.constant 0 : index
    %174 = vector.load %arg8[%c8_236, %c0_237] : memref<72x128xf32, #tpu.memory_space<vmem>>, vector<8x128xf32>
    tpu.vector_store %arg8[%c8_236, %c0_237], %173 {strides = array<i32>} : memref<72x128xf32, #tpu.memory_space<vmem>>, vector<8x128xf32>,
    %c0_238 = arith.constant 0 : index
    %c119_239 = arith.constant 119 : index
    %175 = vector.load %arg7[%c0_238, %c119_239] : memref<8x384xf32, #tpu.memory_space<vmem>>, vector<8x128xf32>
    %c16_240 = arith.constant 16 : index
    %c0_241 = arith.constant 0 : index
    %176 = vector.load %arg8[%c16_240, %c0_241] : memref<72x128xf32, #tpu.memory_space<vmem>>, vector<8x128xf32>
    tpu.vector_store %arg8[%c16_240, %c0_241], %175 {strides = array<i32>} : memref<72x128xf32, #tpu.memory_space<vmem>>, vector<8x128xf32>,
    %c0_242 = arith.constant 0 : index
    %c127_243 = arith.constant 127 : index
    %177 = vector.load %arg7[%c0_242, %c127_243] : memref<8x384xf32, #tpu.memory_space<vmem>>, vector<8x128xf32>
    %c24_244 = arith.constant 24 : index
    %c0_245 = arith.constant 0 : index
    %178 = vector.load %arg8[%c24_244, %c0_245] : memref<72x128xf32, #tpu.memory_space<vmem>>, vector<8x128xf32>
    tpu.vector_store %arg8[%c24_244, %c0_245], %177 {strides = array<i32>} : memref<72x128xf32, #tpu.memory_space<vmem>>, vector<8x128xf32>,
    %c0_246 = arith.constant 0 : index
    %c128_247 = arith.constant 128 : index
    %179 = vector.load %arg7[%c0_246, %c128_247] : memref<8x384xf32, #tpu.memory_space<vmem>>, vector<8x128xf32>
    %c32_248 = arith.constant 32 : index
    %c0_249 = arith.constant 0 : index
    %180 = vector.load %arg8[%c32_248, %c0_249] : memref<72x128xf32, #tpu.memory_space<vmem>>, vector<8x128xf32>
    tpu.vector_store %arg8[%c32_248, %c0_249], %179 {strides = array<i32>} : memref<72x128xf32, #tpu.memory_space<vmem>>, vector<8x128xf32>,
    %c0_250 = arith.constant 0 : index
    %c129_251 = arith.constant 129 : index
    %181 = vector.load %arg7[%c0_250, %c129_251] : memref<8x384xf32, #tpu.memory_space<vmem>>, vector<8x128xf32>
    %c40_252 = arith.constant 40 : index
    %c0_253 = arith.constant 0 : index
    %182 = vector.load %arg8[%c40_252, %c0_253] : memref<72x128xf32, #tpu.memory_space<vmem>>, vector<8x128xf32>
    tpu.vector_store %arg8[%c40_252, %c0_253], %181 {strides = array<i32>} : memref<72x128xf32, #tpu.memory_space<vmem>>, vector<8x128xf32>,
    %c0_254 = arith.constant 0 : index
    %c137_255 = arith.constant 137 : index
    %183 = vector.load %arg7[%c0_254, %c137_255] : memref<8x384xf32, #tpu.memory_space<vmem>>, vector<8x128xf32>
    %c48_256 = arith.constant 48 : index
    %c0_257 = arith.constant 0 : index
    %184 = vector.load %arg8[%c48_256, %c0_257] : memref<72x128xf32, #tpu.memory_space<vmem>>, vector<8x128xf32>
    tpu.vector_store %arg8[%c48_256, %c0_257], %183 {strides = array<i32>} : memref<72x128xf32, #tpu.memory_space<vmem>>, vector<8x128xf32>,
    %c0_258 = arith.constant 0 : index
    %c138_259 = arith.constant 138 : index
    %185 = vector.load %arg7[%c0_258, %c138_259] : memref<8x384xf32, #tpu.memory_space<vmem>>, vector<8x128xf32>
    %c56_260 = arith.constant 56 : index
    %c0_261 = arith.constant 0 : index
    %186 = vector.load %arg8[%c56_260, %c0_261] : memref<72x128xf32, #tpu.memory_space<vmem>>, vector<8x128xf32>
    tpu.vector_store %arg8[%c56_260, %c0_261], %185 {strides = array<i32>} : memref<72x128xf32, #tpu.memory_space<vmem>>, vector<8x128xf32>,
    %c0_262 = arith.constant 0 : index
    %c139_263 = arith.constant 139 : index
    %187 = vector.load %arg7[%c0_262, %c139_263] : memref<8x384xf32, #tpu.memory_space<vmem>>, vector<8x128xf32>
    %c64_264 = arith.constant 64 : index
    %c0_265 = arith.constant 0 : index
    %188 = vector.load %arg8[%c64_264, %c0_265] : memref<72x128xf32, #tpu.memory_space<vmem>>, vector<8x128xf32>
    tpu.vector_store %arg8[%c64_264, %c0_265], %187 {strides = array<i32>} : memref<72x128xf32, #tpu.memory_space<vmem>>, vector<8x128xf32>,
    %c5 = arith.constant 5 : index
    %c0_266 = arith.constant 0 : index
    %c0_267 = arith.constant 0 : index
    %189 = vector.load %arg2[%c5, %c0_266, %c0_267] : memref<10x8x72xbf16, #tpu.memory_space<vmem>>, vector<1x8x72xbf16>
    %190 = vector.shape_cast %189 : vector<1x8x72xbf16> to vector<8x72xbf16>
    %c0_268 = arith.constant 0 : index
    %c0_269 = arith.constant 0 : index
    %191 = vector.load %arg8[%c0_268, %c0_269] : memref<72x128xf32, #tpu.memory_space<vmem>>, vector<72x128xf32>
    %192 = arith.truncf %191 : vector<72x128xf32> to vector<72x128xbf16>
    %cst_270 = arith.constant dense<0.000000e+00> : vector<8x128xf32>
    %193 = tpu.matmul %190, %192, %cst_270 {dimension_numbers = #tpu.dot_dimension_numbers<[1], [0], [0], [1], [0, 0, 1, 1], [], []>} : vector<8x72xbf16>, vector<72x128xbf16>, vector<8x128xf32> -> vector<8x128xf32>
    %c5_271 = arith.constant 5 : index
    %c0_272 = arith.constant 0 : index
    %c0_273 = arith.constant 0 : index
    %194 = vector.load %arg3[%c5_271, %c0_272, %c0_273] : memref<10x8x1xf32, #tpu.memory_space<vmem>>, vector<1x8x1xf32>
    %195 = vector.shape_cast %194 : vector<1x8x1xf32> to vector<8x1xf32>
    %196 = vector.broadcast %195 : vector<8x1xf32> to vector<8x128xf32>
    %197 = arith.addf %193, %196 : vector<8x128xf32>
    %198 = arith.addf %135, %197 : vector<8x128xf32>
    %199 = vector.broadcast %0 : vector<1x128xf32> to vector<8x128xf32>
    %200 = arith.mulf %198, %199 : vector<8x128xf32>
    %c0_274 = arith.constant 0 : index
    %c128_275 = arith.constant 128 : index
    %201 = vector.load %arg7[%c0_274, %c128_275] : memref<8x384xf32, #tpu.memory_space<vmem>>, vector<8x128xf32>
    tpu.vector_store %arg7[%c0_274, %c128_275], %200 {strides = array<i32>} : memref<8x384xf32, #tpu.memory_space<vmem>>, vector<8x128xf32>,
    %c0_276 = arith.constant 0 : index
    %c117_277 = arith.constant 117 : index
    %202 = vector.load %arg7[%c0_276, %c117_277] : memref<8x384xf32, #tpu.memory_space<vmem>>, vector<8x128xf32>
    %c0_278 = arith.constant 0 : index
    %c0_279 = arith.constant 0 : index
    %203 = vector.load %arg8[%c0_278, %c0_279] : memref<72x128xf32, #tpu.memory_space<vmem>>, vector<8x128xf32>
    tpu.vector_store %arg8[%c0_278, %c0_279], %202 {strides = array<i32>} : memref<72x128xf32, #tpu.memory_space<vmem>>, vector<8x128xf32>,
    %c0_280 = arith.constant 0 : index
    %c118_281 = arith.constant 118 : index
    %204 = vector.load %arg7[%c0_280, %c118_281] : memref<8x384xf32, #tpu.memory_space<vmem>>, vector<8x128xf32>
    %c8_282 = arith.constant 8 : index
    %c0_283 = arith.constant 0 : index
    %205 = vector.load %arg8[%c8_282, %c0_283] : memref<72x128xf32, #tpu.memory_space<vmem>>, vector<8x128xf32>
    tpu.vector_store %arg8[%c8_282, %c0_283], %204 {strides = array<i32>} : memref<72x128xf32, #tpu.memory_space<vmem>>, vector<8x128xf32>,
    %c0_284 = arith.constant 0 : index
    %c119_285 = arith.constant 119 : index
    %206 = vector.load %arg7[%c0_284, %c119_285] : memref<8x384xf32, #tpu.memory_space<vmem>>, vector<8x128xf32>
    %c16_286 = arith.constant 16 : index
    %c0_287 = arith.constant 0 : index
    %207 = vector.load %arg8[%c16_286, %c0_287] : memref<72x128xf32, #tpu.memory_space<vmem>>, vector<8x128xf32>
    tpu.vector_store %arg8[%c16_286, %c0_287], %206 {strides = array<i32>} : memref<72x128xf32, #tpu.memory_space<vmem>>, vector<8x128xf32>,
    %c0_288 = arith.constant 0 : index
    %c127_289 = arith.constant 127 : index
    %208 = vector.load %arg7[%c0_288, %c127_289] : memref<8x384xf32, #tpu.memory_space<vmem>>, vector<8x128xf32>
    %c24_290 = arith.constant 24 : index
    %c0_291 = arith.constant 0 : index
    %209 = vector.load %arg8[%c24_290, %c0_291] : memref<72x128xf32, #tpu.memory_space<vmem>>, vector<8x128xf32>
    tpu.vector_store %arg8[%c24_290, %c0_291], %208 {strides = array<i32>} : memref<72x128xf32, #tpu.memory_space<vmem>>, vector<8x128xf32>,
    %c0_292 = arith.constant 0 : index
    %c128_293 = arith.constant 128 : index
    %210 = vector.load %arg7[%c0_292, %c128_293] : memref<8x384xf32, #tpu.memory_space<vmem>>, vector<8x128xf32>
    %c32_294 = arith.constant 32 : index
    %c0_295 = arith.constant 0 : index
    %211 = vector.load %arg8[%c32_294, %c0_295] : memref<72x128xf32, #tpu.memory_space<vmem>>, vector<8x128xf32>
    tpu.vector_store %arg8[%c32_294, %c0_295], %210 {strides = array<i32>} : memref<72x128xf32, #tpu.memory_space<vmem>>, vector<8x128xf32>,
    %c0_296 = arith.constant 0 : index
    %c129_297 = arith.constant 129 : index
    %212 = vector.load %arg7[%c0_296, %c129_297] : memref<8x384xf32, #tpu.memory_space<vmem>>, vector<8x128xf32>
    %c40_298 = arith.constant 40 : index
    %c0_299 = arith.constant 0 : index
    %213 = vector.load %arg8[%c40_298, %c0_299] : memref<72x128xf32, #tpu.memory_space<vmem>>, vector<8x128xf32>
    tpu.vector_store %arg8[%c40_298, %c0_299], %212 {strides = array<i32>} : memref<72x128xf32, #tpu.memory_space<vmem>>, vector<8x128xf32>,
    %c0_300 = arith.constant 0 : index
    %c137_301 = arith.constant 137 : index
    %214 = vector.load %arg7[%c0_300, %c137_301] : memref<8x384xf32, #tpu.memory_space<vmem>>, vector<8x128xf32>
    %c48_302 = arith.constant 48 : index
    %c0_303 = arith.constant 0 : index
    %215 = vector.load %arg8[%c48_302, %c0_303] : memref<72x128xf32, #tpu.memory_space<vmem>>, vector<8x128xf32>
    tpu.vector_store %arg8[%c48_302, %c0_303], %214 {strides = array<i32>} : memref<72x128xf32, #tpu.memory_space<vmem>>, vector<8x128xf32>,
    %c0_304 = arith.constant 0 : index
    %c138_305 = arith.constant 138 : index
    %216 = vector.load %arg7[%c0_304, %c138_305] : memref<8x384xf32, #tpu.memory_space<vmem>>, vector<8x128xf32>
    %c56_306 = arith.constant 56 : index
    %c0_307 = arith.constant 0 : index
    %217 = vector.load %arg8[%c56_306, %c0_307] : memref<72x128xf32, #tpu.memory_space<vmem>>, vector<8x128xf32>
    tpu.vector_store %arg8[%c56_306, %c0_307], %216 {strides = array<i32>} : memref<72x128xf32, #tpu.memory_space<vmem>>, vector<8x128xf32>,
    %c0_308 = arith.constant 0 : index
    %c139_309 = arith.constant 139 : index
    %218 = vector.load %arg7[%c0_308, %c139_309] : memref<8x384xf32, #tpu.memory_space<vmem>>, vector<8x128xf32>
    %c64_310 = arith.constant 64 : index
    %c0_311 = arith.constant 0 : index
    %219 = vector.load %arg8[%c64_310, %c0_311] : memref<72x128xf32, #tpu.memory_space<vmem>>, vector<8x128xf32>
    tpu.vector_store %arg8[%c64_310, %c0_311], %218 {strides = array<i32>} : memref<72x128xf32, #tpu.memory_space<vmem>>, vector<8x128xf32>,
    %c6 = arith.constant 6 : index
    %c0_312 = arith.constant 0 : index
    %c0_313 = arith.constant 0 : index
    %220 = vector.load %arg2[%c6, %c0_312, %c0_313] : memref<10x8x72xbf16, #tpu.memory_space<vmem>>, vector<1x8x72xbf16>
    %221 = vector.shape_cast %220 : vector<1x8x72xbf16> to vector<8x72xbf16>
    %c0_314 = arith.constant 0 : index
    %c0_315 = arith.constant 0 : index
    %222 = vector.load %arg8[%c0_314, %c0_315] : memref<72x128xf32, #tpu.memory_space<vmem>>, vector<72x128xf32>
    %223 = arith.truncf %222 : vector<72x128xf32> to vector<72x128xbf16>
    %cst_316 = arith.constant dense<0.000000e+00> : vector<8x128xf32>
    %224 = tpu.matmul %221, %223, %cst_316 {dimension_numbers = #tpu.dot_dimension_numbers<[1], [0], [0], [1], [0, 0, 1, 1], [], []>} : vector<8x72xbf16>, vector<72x128xbf16>, vector<8x128xf32> -> vector<8x128xf32>
    %c6_317 = arith.constant 6 : index
    %c0_318 = arith.constant 0 : index
    %c0_319 = arith.constant 0 : index
    %225 = vector.load %arg3[%c6_317, %c0_318, %c0_319] : memref<10x8x1xf32, #tpu.memory_space<vmem>>, vector<1x8x1xf32>
    %226 = vector.shape_cast %225 : vector<1x8x1xf32> to vector<8x1xf32>
    %227 = vector.broadcast %226 : vector<8x1xf32> to vector<8x128xf32>
    %228 = arith.addf %224, %227 : vector<8x128xf32>
    %cst_320 = arith.constant 0.000000e+00 : f32
    %229 = vector.broadcast %cst_320 : f32 to vector<8x128xf32>
    %230 = arith.maximumf %228, %229 : vector<8x128xf32>
    %231 = vector.broadcast %0 : vector<1x128xf32> to vector<8x128xf32>
    %232 = arith.mulf %230, %231 : vector<8x128xf32>
    %c0_321 = arith.constant 0 : index
    %c128_322 = arith.constant 128 : index
    %233 = vector.load %arg7[%c0_321, %c128_322] : memref<8x384xf32, #tpu.memory_space<vmem>>, vector<8x128xf32>
    tpu.vector_store %arg7[%c0_321, %c128_322], %232 {strides = array<i32>} : memref<8x384xf32, #tpu.memory_space<vmem>>, vector<8x128xf32>,
    %c0_323 = arith.constant 0 : index
    %c117_324 = arith.constant 117 : index
    %234 = vector.load %arg7[%c0_323, %c117_324] : memref<8x384xf32, #tpu.memory_space<vmem>>, vector<8x128xf32>
    %c0_325 = arith.constant 0 : index
    %c0_326 = arith.constant 0 : index
    %235 = vector.load %arg8[%c0_325, %c0_326] : memref<72x128xf32, #tpu.memory_space<vmem>>, vector<8x128xf32>
    tpu.vector_store %arg8[%c0_325, %c0_326], %234 {strides = array<i32>} : memref<72x128xf32, #tpu.memory_space<vmem>>, vector<8x128xf32>,
    %c0_327 = arith.constant 0 : index
    %c118_328 = arith.constant 118 : index
    %236 = vector.load %arg7[%c0_327, %c118_328] : memref<8x384xf32, #tpu.memory_space<vmem>>, vector<8x128xf32>
    %c8_329 = arith.constant 8 : index
    %c0_330 = arith.constant 0 : index
    %237 = vector.load %arg8[%c8_329, %c0_330] : memref<72x128xf32, #tpu.memory_space<vmem>>, vector<8x128xf32>
    tpu.vector_store %arg8[%c8_329, %c0_330], %236 {strides = array<i32>} : memref<72x128xf32, #tpu.memory_space<vmem>>, vector<8x128xf32>,
    %c0_331 = arith.constant 0 : index
    %c119_332 = arith.constant 119 : index
    %238 = vector.load %arg7[%c0_331, %c119_332] : memref<8x384xf32, #tpu.memory_space<vmem>>, vector<8x128xf32>
    %c16_333 = arith.constant 16 : index
    %c0_334 = arith.constant 0 : index
    %239 = vector.load %arg8[%c16_333, %c0_334] : memref<72x128xf32, #tpu.memory_space<vmem>>, vector<8x128xf32>
    tpu.vector_store %arg8[%c16_333, %c0_334], %238 {strides = array<i32>} : memref<72x128xf32, #tpu.memory_space<vmem>>, vector<8x128xf32>,
    %c0_335 = arith.constant 0 : index
    %c127_336 = arith.constant 127 : index
    %240 = vector.load %arg7[%c0_335, %c127_336] : memref<8x384xf32, #tpu.memory_space<vmem>>, vector<8x128xf32>
    %c24_337 = arith.constant 24 : index
    %c0_338 = arith.constant 0 : index
    %241 = vector.load %arg8[%c24_337, %c0_338] : memref<72x128xf32, #tpu.memory_space<vmem>>, vector<8x128xf32>
    tpu.vector_store %arg8[%c24_337, %c0_338], %240 {strides = array<i32>} : memref<72x128xf32, #tpu.memory_space<vmem>>, vector<8x128xf32>,
    %c0_339 = arith.constant 0 : index
    %c128_340 = arith.constant 128 : index
    %242 = vector.load %arg7[%c0_339, %c128_340] : memref<8x384xf32, #tpu.memory_space<vmem>>, vector<8x128xf32>
    %c32_341 = arith.constant 32 : index
    %c0_342 = arith.constant 0 : index
    %243 = vector.load %arg8[%c32_341, %c0_342] : memref<72x128xf32, #tpu.memory_space<vmem>>, vector<8x128xf32>
    tpu.vector_store %arg8[%c32_341, %c0_342], %242 {strides = array<i32>} : memref<72x128xf32, #tpu.memory_space<vmem>>, vector<8x128xf32>,
    %c0_343 = arith.constant 0 : index
    %c129_344 = arith.constant 129 : index
    %244 = vector.load %arg7[%c0_343, %c129_344] : memref<8x384xf32, #tpu.memory_space<vmem>>, vector<8x128xf32>
    %c40_345 = arith.constant 40 : index
    %c0_346 = arith.constant 0 : index
    %245 = vector.load %arg8[%c40_345, %c0_346] : memref<72x128xf32, #tpu.memory_space<vmem>>, vector<8x128xf32>
    tpu.vector_store %arg8[%c40_345, %c0_346], %244 {strides = array<i32>} : memref<72x128xf32, #tpu.memory_space<vmem>>, vector<8x128xf32>,
    %c0_347 = arith.constant 0 : index
    %c137_348 = arith.constant 137 : index
    %246 = vector.load %arg7[%c0_347, %c137_348] : memref<8x384xf32, #tpu.memory_space<vmem>>, vector<8x128xf32>
    %c48_349 = arith.constant 48 : index
    %c0_350 = arith.constant 0 : index
    %247 = vector.load %arg8[%c48_349, %c0_350] : memref<72x128xf32, #tpu.memory_space<vmem>>, vector<8x128xf32>
    tpu.vector_store %arg8[%c48_349, %c0_350], %246 {strides = array<i32>} : memref<72x128xf32, #tpu.memory_space<vmem>>, vector<8x128xf32>,
    %c0_351 = arith.constant 0 : index
    %c138_352 = arith.constant 138 : index
    %248 = vector.load %arg7[%c0_351, %c138_352] : memref<8x384xf32, #tpu.memory_space<vmem>>, vector<8x128xf32>
    %c56_353 = arith.constant 56 : index
    %c0_354 = arith.constant 0 : index
    %249 = vector.load %arg8[%c56_353, %c0_354] : memref<72x128xf32, #tpu.memory_space<vmem>>, vector<8x128xf32>
    tpu.vector_store %arg8[%c56_353, %c0_354], %248 {strides = array<i32>} : memref<72x128xf32, #tpu.memory_space<vmem>>, vector<8x128xf32>,
    %c0_355 = arith.constant 0 : index
    %c139_356 = arith.constant 139 : index
    %250 = vector.load %arg7[%c0_355, %c139_356] : memref<8x384xf32, #tpu.memory_space<vmem>>, vector<8x128xf32>
    %c64_357 = arith.constant 64 : index
    %c0_358 = arith.constant 0 : index
    %251 = vector.load %arg8[%c64_357, %c0_358] : memref<72x128xf32, #tpu.memory_space<vmem>>, vector<8x128xf32>
    tpu.vector_store %arg8[%c64_357, %c0_358], %250 {strides = array<i32>} : memref<72x128xf32, #tpu.memory_space<vmem>>, vector<8x128xf32>,
    %c7 = arith.constant 7 : index
    %c0_359 = arith.constant 0 : index
    %c0_360 = arith.constant 0 : index
    %252 = vector.load %arg2[%c7, %c0_359, %c0_360] : memref<10x8x72xbf16, #tpu.memory_space<vmem>>, vector<1x8x72xbf16>
    %253 = vector.shape_cast %252 : vector<1x8x72xbf16> to vector<8x72xbf16>
    %c0_361 = arith.constant 0 : index
    %c0_362 = arith.constant 0 : index
    %254 = vector.load %arg8[%c0_361, %c0_362] : memref<72x128xf32, #tpu.memory_space<vmem>>, vector<72x128xf32>
    %255 = arith.truncf %254 : vector<72x128xf32> to vector<72x128xbf16>
    %cst_363 = arith.constant dense<0.000000e+00> : vector<8x128xf32>
    %256 = tpu.matmul %253, %255, %cst_363 {dimension_numbers = #tpu.dot_dimension_numbers<[1], [0], [0], [1], [0, 0, 1, 1], [], []>} : vector<8x72xbf16>, vector<72x128xbf16>, vector<8x128xf32> -> vector<8x128xf32>
    %c7_364 = arith.constant 7 : index
    %c0_365 = arith.constant 0 : index
    %c0_366 = arith.constant 0 : index
    %257 = vector.load %arg3[%c7_364, %c0_365, %c0_366] : memref<10x8x1xf32, #tpu.memory_space<vmem>>, vector<1x8x1xf32>
    %258 = vector.shape_cast %257 : vector<1x8x1xf32> to vector<8x1xf32>
    %259 = vector.broadcast %258 : vector<8x1xf32> to vector<8x128xf32>
    %260 = arith.addf %256, %259 : vector<8x128xf32>
    %261 = arith.addf %198, %260 : vector<8x128xf32>
    %262 = vector.broadcast %0 : vector<1x128xf32> to vector<8x128xf32>
    %263 = arith.mulf %261, %262 : vector<8x128xf32>
    %c0_367 = arith.constant 0 : index
    %c128_368 = arith.constant 128 : index
    %264 = vector.load %arg7[%c0_367, %c128_368] : memref<8x384xf32, #tpu.memory_space<vmem>>, vector<8x128xf32>
    tpu.vector_store %arg7[%c0_367, %c128_368], %263 {strides = array<i32>} : memref<8x384xf32, #tpu.memory_space<vmem>>, vector<8x128xf32>,
    %c0_369 = arith.constant 0 : index
    %c117_370 = arith.constant 117 : index
    %265 = vector.load %arg7[%c0_369, %c117_370] : memref<8x384xf32, #tpu.memory_space<vmem>>, vector<8x128xf32>
    %c0_371 = arith.constant 0 : index
    %c0_372 = arith.constant 0 : index
    %266 = vector.load %arg8[%c0_371, %c0_372] : memref<72x128xf32, #tpu.memory_space<vmem>>, vector<8x128xf32>
    tpu.vector_store %arg8[%c0_371, %c0_372], %265 {strides = array<i32>} : memref<72x128xf32, #tpu.memory_space<vmem>>, vector<8x128xf32>,
    %c0_373 = arith.constant 0 : index
    %c118_374 = arith.constant 118 : index
    %267 = vector.load %arg7[%c0_373, %c118_374] : memref<8x384xf32, #tpu.memory_space<vmem>>, vector<8x128xf32>
    %c8_375 = arith.constant 8 : index
    %c0_376 = arith.constant 0 : index
    %268 = vector.load %arg8[%c8_375, %c0_376] : memref<72x128xf32, #tpu.memory_space<vmem>>, vector<8x128xf32>
    tpu.vector_store %arg8[%c8_375, %c0_376], %267 {strides = array<i32>} : memref<72x128xf32, #tpu.memory_space<vmem>>, vector<8x128xf32>,
    %c0_377 = arith.constant 0 : index
    %c119_378 = arith.constant 119 : index
    %269 = vector.load %arg7[%c0_377, %c119_378] : memref<8x384xf32, #tpu.memory_space<vmem>>, vector<8x128xf32>
    %c16_379 = arith.constant 16 : index
    %c0_380 = arith.constant 0 : index
    %270 = vector.load %arg8[%c16_379, %c0_380] : memref<72x128xf32, #tpu.memory_space<vmem>>, vector<8x128xf32>
    tpu.vector_store %arg8[%c16_379, %c0_380], %269 {strides = array<i32>} : memref<72x128xf32, #tpu.memory_space<vmem>>, vector<8x128xf32>,
    %c0_381 = arith.constant 0 : index
    %c127_382 = arith.constant 127 : index
    %271 = vector.load %arg7[%c0_381, %c127_382] : memref<8x384xf32, #tpu.memory_space<vmem>>, vector<8x128xf32>
    %c24_383 = arith.constant 24 : index
    %c0_384 = arith.constant 0 : index
    %272 = vector.load %arg8[%c24_383, %c0_384] : memref<72x128xf32, #tpu.memory_space<vmem>>, vector<8x128xf32>
    tpu.vector_store %arg8[%c24_383, %c0_384], %271 {strides = array<i32>} : memref<72x128xf32, #tpu.memory_space<vmem>>, vector<8x128xf32>,
    %c0_385 = arith.constant 0 : index
    %c128_386 = arith.constant 128 : index
    %273 = vector.load %arg7[%c0_385, %c128_386] : memref<8x384xf32, #tpu.memory_space<vmem>>, vector<8x128xf32>
    %c32_387 = arith.constant 32 : index
    %c0_388 = arith.constant 0 : index
    %274 = vector.load %arg8[%c32_387, %c0_388] : memref<72x128xf32, #tpu.memory_space<vmem>>, vector<8x128xf32>
    tpu.vector_store %arg8[%c32_387, %c0_388], %273 {strides = array<i32>} : memref<72x128xf32, #tpu.memory_space<vmem>>, vector<8x128xf32>,
    %c0_389 = arith.constant 0 : index
    %c129_390 = arith.constant 129 : index
    %275 = vector.load %arg7[%c0_389, %c129_390] : memref<8x384xf32, #tpu.memory_space<vmem>>, vector<8x128xf32>
    %c40_391 = arith.constant 40 : index
    %c0_392 = arith.constant 0 : index
    %276 = vector.load %arg8[%c40_391, %c0_392] : memref<72x128xf32, #tpu.memory_space<vmem>>, vector<8x128xf32>
    tpu.vector_store %arg8[%c40_391, %c0_392], %275 {strides = array<i32>} : memref<72x128xf32, #tpu.memory_space<vmem>>, vector<8x128xf32>,
    %c0_393 = arith.constant 0 : index
    %c137_394 = arith.constant 137 : index
    %277 = vector.load %arg7[%c0_393, %c137_394] : memref<8x384xf32, #tpu.memory_space<vmem>>, vector<8x128xf32>
    %c48_395 = arith.constant 48 : index
    %c0_396 = arith.constant 0 : index
    %278 = vector.load %arg8[%c48_395, %c0_396] : memref<72x128xf32, #tpu.memory_space<vmem>>, vector<8x128xf32>
    tpu.vector_store %arg8[%c48_395, %c0_396], %277 {strides = array<i32>} : memref<72x128xf32, #tpu.memory_space<vmem>>, vector<8x128xf32>,
    %c0_397 = arith.constant 0 : index
    %c138_398 = arith.constant 138 : index
    %279 = vector.load %arg7[%c0_397, %c138_398] : memref<8x384xf32, #tpu.memory_space<vmem>>, vector<8x128xf32>
    %c56_399 = arith.constant 56 : index
    %c0_400 = arith.constant 0 : index
    %280 = vector.load %arg8[%c56_399, %c0_400] : memref<72x128xf32, #tpu.memory_space<vmem>>, vector<8x128xf32>
    tpu.vector_store %arg8[%c56_399, %c0_400], %279 {strides = array<i32>} : memref<72x128xf32, #tpu.memory_space<vmem>>, vector<8x128xf32>,
    %c0_401 = arith.constant 0 : index
    %c139_402 = arith.constant 139 : index
    %281 = vector.load %arg7[%c0_401, %c139_402] : memref<8x384xf32, #tpu.memory_space<vmem>>, vector<8x128xf32>
    %c64_403 = arith.constant 64 : index
    %c0_404 = arith.constant 0 : index
    %282 = vector.load %arg8[%c64_403, %c0_404] : memref<72x128xf32, #tpu.memory_space<vmem>>, vector<8x128xf32>
    tpu.vector_store %arg8[%c64_403, %c0_404], %281 {strides = array<i32>} : memref<72x128xf32, #tpu.memory_space<vmem>>, vector<8x128xf32>,
    %c8_405 = arith.constant 8 : index
    %c0_406 = arith.constant 0 : index
    %c0_407 = arith.constant 0 : index
    %283 = vector.load %arg2[%c8_405, %c0_406, %c0_407] : memref<10x8x72xbf16, #tpu.memory_space<vmem>>, vector<1x8x72xbf16>
    %284 = vector.shape_cast %283 : vector<1x8x72xbf16> to vector<8x72xbf16>
    %c0_408 = arith.constant 0 : index
    %c0_409 = arith.constant 0 : index
    %285 = vector.load %arg8[%c0_408, %c0_409] : memref<72x128xf32, #tpu.memory_space<vmem>>, vector<72x128xf32>
    %286 = arith.truncf %285 : vector<72x128xf32> to vector<72x128xbf16>
    %cst_410 = arith.constant dense<0.000000e+00> : vector<8x128xf32>
    %287 = tpu.matmul %284, %286, %cst_410 {dimension_numbers = #tpu.dot_dimension_numbers<[1], [0], [0], [1], [0, 0, 1, 1], [], []>} : vector<8x72xbf16>, vector<72x128xbf16>, vector<8x128xf32> -> vector<8x128xf32>
    %c8_411 = arith.constant 8 : index
    %c0_412 = arith.constant 0 : index
    %c0_413 = arith.constant 0 : index
    %288 = vector.load %arg3[%c8_411, %c0_412, %c0_413] : memref<10x8x1xf32, #tpu.memory_space<vmem>>, vector<1x8x1xf32>
    %289 = vector.shape_cast %288 : vector<1x8x1xf32> to vector<8x1xf32>
    %290 = vector.broadcast %289 : vector<8x1xf32> to vector<8x128xf32>
    %291 = arith.addf %287, %290 : vector<8x128xf32>
    %cst_414 = arith.constant 0.000000e+00 : f32
    %292 = vector.broadcast %cst_414 : f32 to vector<8x128xf32>
    %293 = arith.maximumf %291, %292 : vector<8x128xf32>
    %294 = vector.broadcast %0 : vector<1x128xf32> to vector<8x128xf32>
    %295 = arith.mulf %293, %294 : vector<8x128xf32>
    %c0_415 = arith.constant 0 : index
    %c128_416 = arith.constant 128 : index
    %296 = vector.load %arg7[%c0_415, %c128_416] : memref<8x384xf32, #tpu.memory_space<vmem>>, vector<8x128xf32>
    tpu.vector_store %arg7[%c0_415, %c128_416], %295 {strides = array<i32>} : memref<8x384xf32, #tpu.memory_space<vmem>>, vector<8x128xf32>,
    %c0_417 = arith.constant 0 : index
    %c117_418 = arith.constant 117 : index
    %297 = vector.load %arg7[%c0_417, %c117_418] : memref<8x384xf32, #tpu.memory_space<vmem>>, vector<8x128xf32>
    %c0_419 = arith.constant 0 : index
    %c0_420 = arith.constant 0 : index
    %298 = vector.load %arg8[%c0_419, %c0_420] : memref<72x128xf32, #tpu.memory_space<vmem>>, vector<8x128xf32>
    tpu.vector_store %arg8[%c0_419, %c0_420], %297 {strides = array<i32>} : memref<72x128xf32, #tpu.memory_space<vmem>>, vector<8x128xf32>,
    %c0_421 = arith.constant 0 : index
    %c118_422 = arith.constant 118 : index
    %299 = vector.load %arg7[%c0_421, %c118_422] : memref<8x384xf32, #tpu.memory_space<vmem>>, vector<8x128xf32>
    %c8_423 = arith.constant 8 : index
    %c0_424 = arith.constant 0 : index
    %300 = vector.load %arg8[%c8_423, %c0_424] : memref<72x128xf32, #tpu.memory_space<vmem>>, vector<8x128xf32>
    tpu.vector_store %arg8[%c8_423, %c0_424], %299 {strides = array<i32>} : memref<72x128xf32, #tpu.memory_space<vmem>>, vector<8x128xf32>,
    %c0_425 = arith.constant 0 : index
    %c119_426 = arith.constant 119 : index
    %301 = vector.load %arg7[%c0_425, %c119_426] : memref<8x384xf32, #tpu.memory_space<vmem>>, vector<8x128xf32>
    %c16_427 = arith.constant 16 : index
    %c0_428 = arith.constant 0 : index
    %302 = vector.load %arg8[%c16_427, %c0_428] : memref<72x128xf32, #tpu.memory_space<vmem>>, vector<8x128xf32>
    tpu.vector_store %arg8[%c16_427, %c0_428], %301 {strides = array<i32>} : memref<72x128xf32, #tpu.memory_space<vmem>>, vector<8x128xf32>,
    %c0_429 = arith.constant 0 : index
    %c127_430 = arith.constant 127 : index
    %303 = vector.load %arg7[%c0_429, %c127_430] : memref<8x384xf32, #tpu.memory_space<vmem>>, vector<8x128xf32>
    %c24_431 = arith.constant 24 : index
    %c0_432 = arith.constant 0 : index
    %304 = vector.load %arg8[%c24_431, %c0_432] : memref<72x128xf32, #tpu.memory_space<vmem>>, vector<8x128xf32>
    tpu.vector_store %arg8[%c24_431, %c0_432], %303 {strides = array<i32>} : memref<72x128xf32, #tpu.memory_space<vmem>>, vector<8x128xf32>,
    %c0_433 = arith.constant 0 : index
    %c128_434 = arith.constant 128 : index
    %305 = vector.load %arg7[%c0_433, %c128_434] : memref<8x384xf32, #tpu.memory_space<vmem>>, vector<8x128xf32>
    %c32_435 = arith.constant 32 : index
    %c0_436 = arith.constant 0 : index
    %306 = vector.load %arg8[%c32_435, %c0_436] : memref<72x128xf32, #tpu.memory_space<vmem>>, vector<8x128xf32>
    tpu.vector_store %arg8[%c32_435, %c0_436], %305 {strides = array<i32>} : memref<72x128xf32, #tpu.memory_space<vmem>>, vector<8x128xf32>,
    %c0_437 = arith.constant 0 : index
    %c129_438 = arith.constant 129 : index
    %307 = vector.load %arg7[%c0_437, %c129_438] : memref<8x384xf32, #tpu.memory_space<vmem>>, vector<8x128xf32>
    %c40_439 = arith.constant 40 : index
    %c0_440 = arith.constant 0 : index
    %308 = vector.load %arg8[%c40_439, %c0_440] : memref<72x128xf32, #tpu.memory_space<vmem>>, vector<8x128xf32>
    tpu.vector_store %arg8[%c40_439, %c0_440], %307 {strides = array<i32>} : memref<72x128xf32, #tpu.memory_space<vmem>>, vector<8x128xf32>,
    %c0_441 = arith.constant 0 : index
    %c137_442 = arith.constant 137 : index
    %309 = vector.load %arg7[%c0_441, %c137_442] : memref<8x384xf32, #tpu.memory_space<vmem>>, vector<8x128xf32>
    %c48_443 = arith.constant 48 : index
    %c0_444 = arith.constant 0 : index
    %310 = vector.load %arg8[%c48_443, %c0_444] : memref<72x128xf32, #tpu.memory_space<vmem>>, vector<8x128xf32>
    tpu.vector_store %arg8[%c48_443, %c0_444], %309 {strides = array<i32>} : memref<72x128xf32, #tpu.memory_space<vmem>>, vector<8x128xf32>,
    %c0_445 = arith.constant 0 : index
    %c138_446 = arith.constant 138 : index
    %311 = vector.load %arg7[%c0_445, %c138_446] : memref<8x384xf32, #tpu.memory_space<vmem>>, vector<8x128xf32>
    %c56_447 = arith.constant 56 : index
    %c0_448 = arith.constant 0 : index
    %312 = vector.load %arg8[%c56_447, %c0_448] : memref<72x128xf32, #tpu.memory_space<vmem>>, vector<8x128xf32>
    tpu.vector_store %arg8[%c56_447, %c0_448], %311 {strides = array<i32>} : memref<72x128xf32, #tpu.memory_space<vmem>>, vector<8x128xf32>,
    %c0_449 = arith.constant 0 : index
    %c139_450 = arith.constant 139 : index
    %313 = vector.load %arg7[%c0_449, %c139_450] : memref<8x384xf32, #tpu.memory_space<vmem>>, vector<8x128xf32>
    %c64_451 = arith.constant 64 : index
    %c0_452 = arith.constant 0 : index
    %314 = vector.load %arg8[%c64_451, %c0_452] : memref<72x128xf32, #tpu.memory_space<vmem>>, vector<8x128xf32>
    tpu.vector_store %arg8[%c64_451, %c0_452], %313 {strides = array<i32>} : memref<72x128xf32, #tpu.memory_space<vmem>>, vector<8x128xf32>,
    %c9 = arith.constant 9 : index
    %c0_453 = arith.constant 0 : index
    %c0_454 = arith.constant 0 : index
    %315 = vector.load %arg2[%c9, %c0_453, %c0_454] : memref<10x8x72xbf16, #tpu.memory_space<vmem>>, vector<1x8x72xbf16>
    %316 = vector.shape_cast %315 : vector<1x8x72xbf16> to vector<8x72xbf16>
    %c0_455 = arith.constant 0 : index
    %c0_456 = arith.constant 0 : index
    %317 = vector.load %arg8[%c0_455, %c0_456] : memref<72x128xf32, #tpu.memory_space<vmem>>, vector<72x128xf32>
    %318 = arith.truncf %317 : vector<72x128xf32> to vector<72x128xbf16>
    %cst_457 = arith.constant dense<0.000000e+00> : vector<8x128xf32>
    %319 = tpu.matmul %316, %318, %cst_457 {dimension_numbers = #tpu.dot_dimension_numbers<[1], [0], [0], [1], [0, 0, 1, 1], [], []>} : vector<8x72xbf16>, vector<72x128xbf16>, vector<8x128xf32> -> vector<8x128xf32>
    %c9_458 = arith.constant 9 : index
    %c0_459 = arith.constant 0 : index
    %c0_460 = arith.constant 0 : index
    %320 = vector.load %arg3[%c9_458, %c0_459, %c0_460] : memref<10x8x1xf32, #tpu.memory_space<vmem>>, vector<1x8x1xf32>
    %321 = vector.shape_cast %320 : vector<1x8x1xf32> to vector<8x1xf32>
    %322 = vector.broadcast %321 : vector<8x1xf32> to vector<8x128xf32>
    %323 = arith.addf %319, %322 : vector<8x128xf32>
    %324 = arith.addf %261, %323 : vector<8x128xf32>
    %c0_461 = arith.constant 0 : index
    %c0_462 = arith.constant 0 : index
    %c0_463 = arith.constant 0 : index
    %325 = vector.load %arg6[%c0_461, %c0_462, %c0_463] : memref<1x8x128xf32, #tpu.memory_space<vmem>>, vector<1x8x128xf32>
    %326 = vector.shape_cast %325 : vector<1x8x128xf32> to vector<8x128xf32>
    %327 = vector.shape_cast %324 : vector<8x128xf32> to vector<1x8x128xf32>
    tpu.vector_store %arg6[%c0_461, %c0_462, %c0_463], %327 {strides = array<i32>} : memref<1x8x128xf32, #tpu.memory_space<vmem>>, vector<1x8x128xf32>,
    return
  }
  func.func @transform_0(%arg0: i32) -> (i32, i32, i32) {
    %c0_i32 = arith.constant 0 : i32
    %c0_i32_0 = arith.constant 0 : i32
    %c0_i32_1 = arith.constant 0 : i32
    return %arg0, %c0_i32, %c0_i32_0 : i32, i32, i32
  }
  func.func @transform_1(%arg0: i32) -> (i32, i32, i32) {
    %c0_i32 = arith.constant 0 : i32
    %c0_i32_0 = arith.constant 0 : i32
    %c0_i32_1 = arith.constant 0 : i32
    %c0_i32_2 = arith.constant 0 : i32
    return %c0_i32, %c0_i32_0, %c0_i32_1 : i32, i32, i32
  }
  func.func @transform_2(%arg0: i32) -> (i32, i32, i32) {
    %c0_i32 = arith.constant 0 : i32
    %c0_i32_0 = arith.constant 0 : i32
    %c0_i32_1 = arith.constant 0 : i32
    %c0_i32_2 = arith.constant 0 : i32
    return %c0_i32, %c0_i32_0, %c0_i32_1 : i32, i32, i32
  }
  func.func @transform_3(%arg0: i32) -> (i32, i32) {
    %c0_i32 = arith.constant 0 : i32
    %c0_i32_0 = arith.constant 0 : i32
    %c0_i32_1 = arith.constant 0 : i32
    return %c0_i32, %c0_i32_0 : i32, i32
  }
  func.func @transform_4(%arg0: i32) -> (i32, i32, i32) {
    %c0_i32 = arith.constant 0 : i32
    %c0_i32_0 = arith.constant 0 : i32
    %c0_i32_1 = arith.constant 0 : i32
    return %arg0, %c0_i32, %c0_i32_0 : i32, i32, i32
  }
  func.func @transform_5(%arg0: i32) -> (i32, i32, i32) {
    %c0_i32 = arith.constant 0 : i32
    %c0_i32_0 = arith.constant 0 : i32
    %c0_i32_1 = arith.constant 0 : i32
    return %arg0, %c0_i32, %c0_i32_0 : i32, i32, i32
  }
}

</mosaic_0001>

<llo_original>
// kernel: predeblur_forward.7
$region0: #{predeblur_forward.7}
  #allocation0 [shape = 'u32[]', space=smem, size = 0x4, offset = 0x4, fixed_abs, tag = 'smem constant byte address 0x4 - core index']
  #allocation1 [shape = 'u32[72,128]{1,0:T(1,128)}', space=vmem, size = 0x9000, scoped, tag = 'internal scratch']
  #allocation2 [shape = 'f32[8,1536]{1,0:T(8,128)}', space=vmem, size = 0xc000, scoped, tag = 'scratch operand']
  #allocation3 [shape = 'f32[72,1280]{1,0:T(8,128)}', space=vmem, size = 0x5a000, scoped, tag = 'scratch operand']
  %s0 = inlined_call_operand.vmem [shape: f32[2,8,1280], index: 0, kind: input, shape index: {}]
  %s1 = inlined_call_operand.vmem [shape: bf16[2,8,72], index: 1, kind: input, shape index: {}]
  %s2 = inlined_call_operand.vmem [shape: f32[2,8,1], index: 2, kind: input, shape index: {}]
  %s3 = inlined_call_operand.vmem [shape: f32[1,1280], index: 3, kind: input, shape index: {}]
  %s4 = inlined_call_operand.vmem [shape: f32[2,8,1280], index: 4, kind: output, shape index: {}]
  %s5 = sld [smem:[#allocation0]]
  $region49: #{predeblur_forward.7} parent=0
    _
  %s7 = ssub.s32 1, %s5
  %s8 = scalar_select 0, %s7, %s5
  loop: start=0, step=1, limit=4
  $region2: #{predeblur_forward.7} parent=0 // loop_pre_header
    _
  $region3: #{predeblur_forward.7} parent=0 // loop_header
    %s10 = sphi 0, %s14
    %p11 = scmp.ge.s32.totalorder %s10, 4
    %s20 = sphi 0, %s22
    %s23 = sphi 0, %s20
    %s24 = sphi 0, %s23
    %s40 = sphi 0, %s24
    %s44 = sphi 0, %s44
    %s46 = sphi 0, %s44
    %s47 = sphi 0, %s46
    %s61 = sphi 0, %s47
    %s65 = sphi 0, %s65
    %s67 = sphi 0, %s65
    %s68 = sphi 0, %s67
    %s82 = sphi 0, %s68
    %s86 = sphi 0, %s86
    %s88 = sphi 0, %s86
    %s89 = sphi 0, %s88
    %s103 = sphi 0, %s89
    %s109 = sphi 0, %s111
    %s112 = sphi 0, %s109
    %s113 = sphi 0, %s112
    %s129 = sphi 0, %s113
  $region4: #{predeblur_forward.7} parent=0 // loop_header_branch
    %13 = sbr.rel (%p11) target = $region8
  $region5: #{predeblur_forward.7} parent=0 // loop_body
    %s15 = ssub.s32 %s10, 1
    %s16 = ssub.s32 %s10, 2
    %s17 = sadd.s32 %s10, 1
    %s18 = ssub.s32 %s10, %s17
    %p19 = scmp.eq.s32.totalorder %s18, 0
    %s21 = sadd.s32 %s20, 1
    %s22 = scalar_select %p19, %s20, %s21
    %p25 = pneg %p19
    %p26 = scmp.eq.s32.totalorder %s10, 1
    %p27 = por %p25, %p26
    %p28 = scmp.ne.s32.totalorder %s20, %s23
    %p29 = scmp.eq.s32.totalorder %s10, 0
    %p30 = por %p28, %p29
    %p31 = scmp.ne.s32.totalorder %s20, %s23
    %p32 = scmp.eq.s32.totalorder %s15, 1
    %p33 = por %p31, %p32
    %p34 = scmp.ne.s32.totalorder %s23, %s24
    %p35 = scmp.eq.s32.totalorder %s15, 0
    %p36 = por %p34, %p35
    %p37 = scmp.ne.s32.totalorder %s23, %s24
    %p38 = scmp.eq.s32.totalorder %s16, 1
    %p39 = por %p37, %p38
    %p41 = scmp.ne.s32.totalorder %s24, %s40
    %p42 = scmp.eq.s32.totalorder %s16, 0
    %p43 = por %p41, %p42
    %s45 = sadd.s32 %s44, 1
    %p48 = scmp.eq.s32.totalorder %s10, 1
    %p49 = scmp.ne.s32.totalorder %s44, %s46
    %p50 = scmp.eq.s32.totalorder %s10, 0
    %p51 = por %p49, %p50
    %p52 = scmp.ne.s32.totalorder %s44, %s46
    %p53 = scmp.eq.s32.totalorder %s15, 1
    %p54 = por %p52, %p53
    %p55 = scmp.ne.s32.totalorder %s46, %s47
    %p56 = scmp.eq.s32.totalorder %s15, 0
    %p57 = por %p55, %p56
    %p58 = scmp.ne.s32.totalorder %s46, %s47
    %p59 = scmp.eq.s32.totalorder %s16, 1
    %p60 = por %p58, %p59
    %p62 = scmp.ne.s32.totalorder %s47, %s61
    %p63 = scmp.eq.s32.totalorder %s16, 0
    %p64 = por %p62, %p63
    %s66 = sadd.s32 %s65, 1
    %p69 = scmp.eq.s32.totalorder %s10, 1
    %p70 = scmp.ne.s32.totalorder %s65, %s67
    %p71 = scmp.eq.s32.totalorder %s10, 0
    %p72 = por %p70, %p71
    %p73 = scmp.ne.s32.totalorder %s65, %s67
    %p74 = scmp.eq.s32.totalorder %s15, 1
    %p75 = por %p73, %p74
    %p76 = scmp.ne.s32.totalorder %s67, %s68
    %p77 = scmp.eq.s32.totalorder %s15, 0
    %p78 = por %p76, %p77
    %p79 = scmp.ne.s32.totalorder %s67, %s68
    %p80 = scmp.eq.s32.totalorder %s16, 1
    %p81 = por %p79, %p80
    %p83 = scmp.ne.s32.totalorder %s68, %s82
    %p84 = scmp.eq.s32.totalorder %s16, 0
    %p85 = por %p83, %p84
    %s87 = sadd.s32 %s86, 1
    %p90 = scmp.eq.s32.totalorder %s10, 1
    %p91 = scmp.ne.s32.totalorder %s86, %s88
    %p92 = scmp.eq.s32.totalorder %s10, 0
    %p93 = por %p91, %p92
    %p94 = scmp.ne.s32.totalorder %s86, %s88
    %p95 = scmp.eq.s32.totalorder %s15, 1
    %p96 = por %p94, %p95
    %p97 = scmp.ne.s32.totalorder %s88, %s89
    %p98 = scmp.eq.s32.totalorder %s15, 0
    %p99 = por %p97, %p98
    %p100 = scmp.ne.s32.totalorder %s88, %s89
    %p101 = scmp.eq.s32.totalorder %s16, 1
    %p102 = por %p100, %p101
    %p104 = scmp.ne.s32.totalorder %s89, %s103
    %p105 = scmp.eq.s32.totalorder %s16, 0
    %p106 = por %p104, %p105
    %s107 = ssub.s32 %s10, %s17
    %p108 = scmp.eq.s32.totalorder %s107, 0
    %s110 = sadd.s32 %s109, 1
    %s111 = scalar_select %p108, %s109, %s110
    %p114 = pneg %p108
    %p115 = scmp.eq.s32.totalorder %s10, 1
    %p116 = por %p114, %p115
    %p117 = scmp.ne.s32.totalorder %s109, %s112
    %p118 = scmp.eq.s32.totalorder %s10, 0
    %p119 = por %p117, %p118
    %p120 = scmp.ne.s32.totalorder %s109, %s112
    %p121 = scmp.eq.s32.totalorder %s15, 1
    %p122 = por %p120, %p121
    %p123 = scmp.ne.s32.totalorder %s112, %s113
    %p124 = scmp.eq.s32.totalorder %s15, 0
    %p125 = por %p123, %p124
    %p126 = scmp.ne.s32.totalorder %s112, %s113
    %p127 = scmp.eq.s32.totalorder %s16, 1
    %p128 = por %p126, %p127
    %p130 = scmp.ne.s32.totalorder %s113, %s129
    %p131 = scmp.eq.s32.totalorder %s16, 0
    %p132 = por %p130, %p131
    %p133 = scmp.le.s32.totalorder 1, %s10
    %p134 = scmp.lt.s32.totalorder %s10, 3
    %p135 = pnand %p133, %p134
    %p136 = pneg %p135
    // Predicated region
    $region9: #{predeblur_forward.7} parent=5 // pred_check
      _
    $region10: #{predeblur_forward.7} parent=5 // pred_check_branch
      %138 = sbr.rel (%p135) target = $region12
    $region11: #{predeblur_forward.7} parent=5 // pred_region
      %s139 = ssub.s32 %s10, 1
      // Predicated region
      $region13: #{predeblur_forward.7} parent=11 // pred_check
        %p140 = pneg %p57
      $region14: #{predeblur_forward.7} parent=11 // pred_check_branch
        %142 = sbr.rel (%p140) target = $region16
      $region15: #{predeblur_forward.7} parent=11 // pred_region
        _
      $region16: #{predeblur_forward.7} parent=11 // pred_fallthru
        _
      // Predicated region
      $region17: #{predeblur_forward.7} parent=11 // pred_check
        %p143 = pneg %p78
      $region18: #{predeblur_forward.7} parent=11 // pred_check_branch
        %145 = sbr.rel (%p143) target = $region20
      $region19: #{predeblur_forward.7} parent=11 // pred_region
        _
      $region20: #{predeblur_forward.7} parent=11 // pred_fallthru
        _
      // Predicated region
      $region21: #{predeblur_forward.7} parent=11 // pred_check
        %p146 = pneg %p99
      $region22: #{predeblur_forward.7} parent=11 // pred_check_branch
        %148 = sbr.rel (%p146) target = $region24
      $region23: #{predeblur_forward.7} parent=11 // pred_region
        _
      $region24: #{predeblur_forward.7} parent=11 // pred_fallthru
        _
    $region12: #{predeblur_forward.7} parent=5 // pred_fallthru
      _
    %p149 = scmp.lt.s32.totalorder %s10, 2
    // Predicated region
    $region25: #{predeblur_forward.7} parent=5 // pred_check
      %p150 = pneg %p149
    $region26: #{predeblur_forward.7} parent=5 // pred_check_branch
      %152 = sbr.rel (%p150) target = $region28
    $region27: #{predeblur_forward.7} parent=5 // pred_region
      // Predicated region
      $region29: #{predeblur_forward.7} parent=27 // pred_check
        %p153 = pneg %p30
      $region30: #{predeblur_forward.7} parent=27 // pred_check_branch
        %155 = sbr.rel (%p153) target = $region32
      $region31: #{predeblur_forward.7} parent=27 // pred_region
        %p156 = scmp.lt.s32.totalorder %s10, 1
        %s157 = scalar_select %p156, %s10, 1
        %s158 = smul.addr %s157, 10
        %s159 = smul.addr %s158, 8
        %s160 = scalar_lea.vmem %s0, %s159
      $region32: #{predeblur_forward.7} parent=27 // pred_fallthru
        _
    $region28: #{predeblur_forward.7} parent=5 // pred_fallthru
      _
    %p161 = scmp.le.s32.totalorder 1, %s10
    %p162 = scmp.lt.s32.totalorder %s10, 3
    %p163 = pnand %p161, %p162
    %p164 = pneg %p163
    // Predicated region
    $region33: #{predeblur_forward.7} parent=5 // pred_check
      _
    $region34: #{predeblur_forward.7} parent=5 // pred_check_branch
      %166 = sbr.rel (%p163) target = $region36
    $region35: #{predeblur_forward.7} parent=5 // pred_region
      %s167 = ssub.s32 %s10, 1
      %p168 = scmp.lt.s32.totalorder %s15, 1
      %s169 = scalar_select %p168, %s15, 1
      %s170 = smul.addr %s169, 10
      %s171 = smul.addr %s170, 8
      %s172 = scalar_lea.vmem %s0, %s171
      %p173 = pneg %p36
      %p174 = pneg %p33
      %p175 = pneg %p57
      %p176 = pneg %p54
      %p177 = pneg %p78
      %p178 = pneg %p75
      %p179 = pneg %p99
      %p180 = pneg %p96
      %p181 = pneg %p125
      %p182 = pneg %p122
      %p183 = scmp.lt.s32.totalorder %s15, 1
      %s184 = scalar_select %p183, %s15, 1
      %s185 = smul.addr %s184, 10
      %s186 = smul.addr %s185, 8
      %s187 = scalar_lea.vmem %s4, %s186
      %p188 = scmp.lt.s32.totalorder %s15, 1
      %s189 = scalar_select %p188, %s15, 1
      %s190 = smul.addr %s189, 10
      %s191 = smul.addr %s190, 8
      %s192 = scalar_lea.vmem %s0, %s191
      %p193 = scmp.lt.s32.totalorder %s15, 1
      %s194 = scalar_select %p193, %s15, 1
      %s195 = smul.addr %s194, 10
      %s196 = smul.addr %s195, 8
      %s197 = scalar_lea.vmem %s4, %s196
      %v199 = vld [vmem:[%s3] sm:$0xff]
      %v200 = vld [vmem:[%s3 + $0x8] sm:$0x3]
      %201 = vst [vmem:[#allocation2] sm:$0xff] 0.0
      %202 = vst [vmem:[#allocation2 + $0x58] sm:$0xff] 0.0
      %v203 = vld [vmem:[%s192] sm:$0xff]
      %v204 = vld [vmem:[%s192 + $0x8] sm:$0xff]
      %v205 = vld [vmem:[%s192 + $0x10] sm:$0xff]
      %v206 = vld [vmem:[%s192 + $0x18] sm:$0xff]
      %v207 = vld [vmem:[%s192 + $0x20] sm:$0xff]
      %v208 = vld [vmem:[%s192 + $0x28] sm:$0xff]
      %v209 = vld [vmem:[%s192 + $0x30] sm:$0xff]
      %v210 = vld [vmem:[%s192 + $0x38] sm:$0xff]
      %v211 = vld [vmem:[%s192 + $0x40] sm:$0xff]
      %v212 = vld [vmem:[%s192 + $0x48] sm:$0xff]
      %v215 = vperm.slane %v199, 0
      %v216 = vperm.slane %v199, 1
      %v217 = vperm.slane %v199, 2
      %v218 = vperm.slane %v199, 3
      %v219 = vperm.slane %v199, 4
      %v220 = vperm.slane %v199, 5
      %v221 = vperm.slane %v199, 6
      %v222 = vperm.slane %v199, 7
      %v223 = vperm.slane %v200, 0
      %v224 = vperm.slane %v200, 1
      %v235 = vmul.f32 %v203, %v215
      %v236 = vmul.f32 %v204, %v216
      %v237 = vmul.f32 %v205, %v217
      %v238 = vmul.f32 %v206, %v218
      %v239 = vmul.f32 %v207, %v219
      %v240 = vmul.f32 %v208, %v220
      %v241 = vmul.f32 %v209, %v221
      %v242 = vmul.f32 %v210, %v222
      %v243 = vmul.f32 %v211, %v223
      %v244 = vmul.f32 %v212, %v224
      %245 = vst [vmem:[#allocation2 + $0x8] sm:$0xff] %v235
      %246 = vst [vmem:[#allocation2 + $0x10] sm:$0xff] %v236
      %247 = vst [vmem:[#allocation2 + $0x18] sm:$0xff] %v237
      %248 = vst [vmem:[#allocation2 + $0x20] sm:$0xff] %v238
      %249 = vst [vmem:[#allocation2 + $0x28] sm:$0xff] %v239
      %250 = vst [vmem:[#allocation2 + $0x30] sm:$0xff] %v240
      %251 = vst [vmem:[#allocation2 + $0x38] sm:$0xff] %v241
      %252 = vst [vmem:[#allocation2 + $0x40] sm:$0xff] %v242
      %253 = vst [vmem:[#allocation2 + $0x48] sm:$0xff] %v243
      %254 = vst [vmem:[#allocation2 + $0x50] sm:$0xff] %v244
      %v255 = vld [vmem:[#allocation2] sm:$0xff]
      %v256 = vld [vmem:[#allocation2 + $0x8] sm:$0xff]
      %v257 = vld [vmem:[#allocation2 + $0x10] sm:$0xff]
      %v258 = vld [vmem:[#allocation2 + $0x18] sm:$0xff]
      %v259 = vld [vmem:[#allocation2 + $0x20] sm:$0xff]
      %v260 = vld [vmem:[#allocation2 + $0x28] sm:$0xff]
      %v261 = vld [vmem:[#allocation2 + $0x30] sm:$0xff]
      %v262 = vld [vmem:[#allocation2 + $0x38] sm:$0xff]
      %v263 = vld [vmem:[#allocation2 + $0x40] sm:$0xff]
      %v264 = vld [vmem:[#allocation2 + $0x48] sm:$0xff]
      %v265 = vld [vmem:[#allocation2 + $0x50] sm:$0xff]
      %277 = vrot.lane.b32.xlu0 %v255, 35
      %v278 = vpop.permute.xlu0 %277
      %279 = vrot.lane.b32.xlu0 %v256, 35
      %v280 = vpop.permute.xlu0 %279
      %281 = vrot.lane.b32.xlu0 %v257, 35
      %v282 = vpop.permute.xlu0 %281
      %283 = vrot.lane.b32.xlu0 %v258, 35
      %v284 = vpop.permute.xlu0 %283
      %285 = vrot.lane.b32.xlu0 %v259, 35
      %v286 = vpop.permute.xlu0 %285
      %287 = vrot.lane.b32.xlu0 %v260, 35
      %v288 = vpop.permute.xlu0 %287
      %289 = vrot.lane.b32.xlu0 %v261, 35
      %v290 = vpop.permute.xlu0 %289
      %291 = vrot.lane.b32.xlu0 %v262, 35
      %v292 = vpop.permute.xlu0 %291
      %293 = vrot.lane.b32.xlu0 %v263, 35
      %v294 = vpop.permute.xlu0 %293
      %295 = vrot.lane.b32.xlu0 %v264, 35
      %v296 = vpop.permute.xlu0 %295
      %297 = vrot.lane.b32.xlu0 %v265, 35
      %v298 = vpop.permute.xlu0 %297
      %vm299 = vcmask 285696
      %v300 = vsel %vm299, %v278, %v280
      %v301 = vsel %vm299, %v280, %v282
      %v302 = vsel %vm299, %v282, %v284
      %v303 = vsel %vm299, %v284, %v286
      %v304 = vsel %vm299, %v286, %v288
      %v305 = vsel %vm299, %v288, %v290
      %v306 = vsel %vm299, %v290, %v292
      %v307 = vsel %vm299, %v292, %v294
      %v308 = vsel %vm299, %v294, %v296
      %v309 = vsel %vm299, %v296, %v298
      %320 = vst [vmem:[#allocation3] sm:$0xff] %v300
      %321 = vst [vmem:[#allocation3 + $0x8] sm:$0xff] %v301
      %322 = vst [vmem:[#allocation3 + $0x10] sm:$0xff] %v302
      %323 = vst [vmem:[#allocation3 + $0x18] sm:$0xff] %v303
      %324 = vst [vmem:[#allocation3 + $0x20] sm:$0xff] %v304
      %325 = vst [vmem:[#allocation3 + $0x28] sm:$0xff] %v305
      %326 = vst [vmem:[#allocation3 + $0x30] sm:$0xff] %v306
      %327 = vst [vmem:[#allocation3 + $0x38] sm:$0xff] %v307
      %328 = vst [vmem:[#allocation3 + $0x40] sm:$0xff] %v308
      %329 = vst [vmem:[#allocation3 + $0x48] sm:$0xff] %v309
      %v330 = vld [vmem:[#allocation2] sm:$0xff]
      %v331 = vld [vmem:[#allocation2 + $0x8] sm:$0xff]
      %v332 = vld [vmem:[#allocation2 + $0x10] sm:$0xff]
      %v333 = vld [vmem:[#allocation2 + $0x18] sm:$0xff]
      %v334 = vld [vmem:[#allocation2 + $0x20] sm:$0xff]
      %v335 = vld [vmem:[#allocation2 + $0x28] sm:$0xff]
      %v336 = vld [vmem:[#allocation2 + $0x30] sm:$0xff]
      %v337 = vld [vmem:[#allocation2 + $0x38] sm:$0xff]
      %v338 = vld [vmem:[#allocation2 + $0x40] sm:$0xff]
      %v339 = vld [vmem:[#allocation2 + $0x48] sm:$0xff]
      %v340 = vld [vmem:[#allocation2 + $0x50] sm:$0xff]
      %352 = vrot.lane.b32.xlu0 %v330, 34
      %v353 = vpop.permute.xlu0 %352
      %354 = vrot.lane.b32.xlu0 %v331, 34
      %v355 = vpop.permute.xlu0 %354
      %356 = vrot.lane.b32.xlu0 %v332, 34
      %v357 = vpop.permute.xlu0 %356
      %358 = vrot.lane.b32.xlu0 %v333, 34
      %v359 = vpop.permute.xlu0 %358
      %360 = vrot.lane.b32.xlu0 %v334, 34
      %v361 = vpop.permute.xlu0 %360
      %362 = vrot.lane.b32.xlu0 %v335, 34
      %v363 = vpop.permute.xlu0 %362
      %364 = vrot.lane.b32.xlu0 %v336, 34
      %v365 = vpop.permute.xlu0 %364
      %366 = vrot.lane.b32.xlu0 %v337, 34
      %v367 = vpop.permute.xlu0 %366
      %368 = vrot.lane.b32.xlu0 %v338, 34
      %v369 = vpop.permute.xlu0 %368
      %370 = vrot.lane.b32.xlu0 %v339, 34
      %v371 = vpop.permute.xlu0 %370
      %372 = vrot.lane.b32.xlu0 %v340, 34
      %v373 = vpop.permute.xlu0 %372
      %vm374 = vcmask 277504
      %v375 = vsel %vm374, %v353, %v355
      %v376 = vsel %vm374, %v355, %v357
      %v377 = vsel %vm374, %v357, %v359
      %v378 = vsel %vm374, %v359, %v361
      %v379 = vsel %vm374, %v361, %v363
      %v380 = vsel %vm374, %v363, %v365
      %v381 = vsel %vm374, %v365, %v367
      %v382 = vsel %vm374, %v367, %v369
      %v383 = vsel %vm374, %v369, %v371
      %v384 = vsel %vm374, %v371, %v373
      %395 = vst [vmem:[#allocation3 + $0x50] sm:$0xff] %v375
      %396 = vst [vmem:[#allocation3 + $0x58] sm:$0xff] %v376
      %397 = vst [vmem:[#allocation3 + $0x60] sm:$0xff] %v377
      %398 = vst [vmem:[#allocation3 + $0x68] sm:$0xff] %v378
      %399 = vst [vmem:[#allocation3 + $0x70] sm:$0xff] %v379
      %400 = vst [vmem:[#allocation3 + $0x78] sm:$0xff] %v380
      %401 = vst [vmem:[#allocation3 + $0x80] sm:$0xff] %v381
      %402 = vst [vmem:[#allocation3 + $0x88] sm:$0xff] %v382
      %403 = vst [vmem:[#allocation3 + $0x90] sm:$0xff] %v383
      %404 = vst [vmem:[#allocation3 + $0x98] sm:$0xff] %v384
      %v405 = vld [vmem:[#allocation2] sm:$0xff]
      %v406 = vld [vmem:[#allocation2 + $0x8] sm:$0xff]
      %v407 = vld [vmem:[#allocation2 + $0x10] sm:$0xff]
      %v408 = vld [vmem:[#allocation2 + $0x18] sm:$0xff]
      %v409 = vld [vmem:[#allocation2 + $0x20] sm:$0xff]
      %v410 = vld [vmem:[#allocation2 + $0x28] sm:$0xff]
      %v411 = vld [vmem:[#allocation2 + $0x30] sm:$0xff]
      %v412 = vld [vmem:[#allocation2 + $0x38] sm:$0xff]
      %v413 = vld [vmem:[#allocation2 + $0x40] sm:$0xff]
      %v414 = vld [vmem:[#allocation2 + $0x48] sm:$0xff]
      %v415 = vld [vmem:[#allocation2 + $0x50] sm:$0xff]
      %427 = vrot.lane.b32.xlu0 %v405, 33
      %v428 = vpop.permute.xlu0 %427
      %429 = vrot.lane.b32.xlu0 %v406, 33
      %v430 = vpop.permute.xlu0 %429
      %431 = vrot.lane.b32.xlu0 %v407, 33
      %v432 = vpop.permute.xlu0 %431
      %433 = vrot.lane.b32.xlu0 %v408, 33
      %v434 = vpop.permute.xlu0 %433
      %435 = vrot.lane.b32.xlu0 %v409, 33
      %v436 = vpop.permute.xlu0 %435
      %437 = vrot.lane.b32.xlu0 %v410, 33
      %v438 = vpop.permute.xlu0 %437
      %439 = vrot.lane.b32.xlu0 %v411, 33
      %v440 = vpop.permute.xlu0 %439
      %441 = vrot.lane.b32.xlu0 %v412, 33
      %v442 = vpop.permute.xlu0 %441
      %443 = vrot.lane.b32.xlu0 %v413, 33
      %v444 = vpop.permute.xlu0 %443
      %445 = vrot.lane.b32.xlu0 %v414, 33
      %v446 = vpop.permute.xlu0 %445
      %447 = vrot.lane.b32.xlu0 %v415, 33
      %v448 = vpop.permute.xlu0 %447
      %vm449 = vcmask 269312
      %v450 = vsel %vm449, %v428, %v430
      %v451 = vsel %vm449, %v430, %v432
      %v452 = vsel %vm449, %v432, %v434
      %v453 = vsel %vm449, %v434, %v436
      %v454 = vsel %vm449, %v436, %v438
      %v455 = vsel %vm449, %v438, %v440
      %v456 = vsel %vm449, %v440, %v442
      %v457 = vsel %vm449, %v442, %v444
      %v458 = vsel %vm449, %v444, %v446
      %v459 = vsel %vm449, %v446, %v448
      %470 = vst [vmem:[#allocation3 + $0xa0] sm:$0xff] %v450
      %471 = vst [vmem:[#allocation3 + $0xa8] sm:$0xff] %v451
      %472 = vst [vmem:[#allocation3 + $0xb0] sm:$0xff] %v452
      %473 = vst [vmem:[#allocation3 + $0xb8] sm:$0xff] %v453
      %474 = vst [vmem:[#allocation3 + $0xc0] sm:$0xff] %v454
      %475 = vst [vmem:[#allocation3 + $0xc8] sm:$0xff] %v455
      %476 = vst [vmem:[#allocation3 + $0xd0] sm:$0xff] %v456
      %477 = vst [vmem:[#allocation3 + $0xd8] sm:$0xff] %v457
      %478 = vst [vmem:[#allocation3 + $0xe0] sm:$0xff] %v458
      %479 = vst [vmem:[#allocation3 + $0xe8] sm:$0xff] %v459
      %v480 = vld [vmem:[#allocation2] sm:$0xff]
      %v481 = vld [vmem:[#allocation2 + $0x8] sm:$0xff]
      %v482 = vld [vmem:[#allocation2 + $0x10] sm:$0xff]
      %v483 = vld [vmem:[#allocation2 + $0x18] sm:$0xff]
      %v484 = vld [vmem:[#allocation2 + $0x20] sm:$0xff]
      %v485 = vld [vmem:[#allocation2 + $0x28] sm:$0xff]
      %v486 = vld [vmem:[#allocation2 + $0x30] sm:$0xff]
      %v487 = vld [vmem:[#allocation2 + $0x38] sm:$0xff]
      %v488 = vld [vmem:[#allocation2 + $0x40] sm:$0xff]
      %v489 = vld [vmem:[#allocation2 + $0x48] sm:$0xff]
      %v490 = vld [vmem:[#allocation2 + $0x50] sm:$0xff]
      %502 = vrot.lane.b32.xlu0 %v480, 1
      %v503 = vpop.permute.xlu0 %502
      %504 = vrot.lane.b32.xlu0 %v481, 1
      %v505 = vpop.permute.xlu0 %504
      %506 = vrot.lane.b32.xlu0 %v482, 1
      %v507 = vpop.permute.xlu0 %506
      %508 = vrot.lane.b32.xlu0 %v483, 1
      %v509 = vpop.permute.xlu0 %508
      %510 = vrot.lane.b32.xlu0 %v484, 1
      %v511 = vpop.permute.xlu0 %510
      %512 = vrot.lane.b32.xlu0 %v485, 1
      %v513 = vpop.permute.xlu0 %512
      %514 = vrot.lane.b32.xlu0 %v486, 1
      %v515 = vpop.permute.xlu0 %514
      %516 = vrot.lane.b32.xlu0 %v487, 1
      %v517 = vpop.permute.xlu0 %516
      %518 = vrot.lane.b32.xlu0 %v488, 1
      %v519 = vpop.permute.xlu0 %518
      %520 = vrot.lane.b32.xlu0 %v489, 1
      %v521 = vpop.permute.xlu0 %520
      %522 = vrot.lane.b32.xlu0 %v490, 1
      %v523 = vpop.permute.xlu0 %522
      %vm524 = vcmask 7168
      %v525 = vsel %vm524, %v503, %v505
      %v526 = vsel %vm524, %v505, %v507
      %v527 = vsel %vm524, %v507, %v509
      %v528 = vsel %vm524, %v509, %v511
      %v529 = vsel %vm524, %v511, %v513
      %v530 = vsel %vm524, %v513, %v515
      %v531 = vsel %vm524, %v515, %v517
      %v532 = vsel %vm524, %v517, %v519
      %v533 = vsel %vm524, %v519, %v521
      %v534 = vsel %vm524, %v521, %v523
      %545 = vst [vmem:[#allocation3 + $0xf0] sm:$0xff] %v525
      %546 = vst [vmem:[#allocation3 + $0xf8] sm:$0xff] %v526
      %547 = vst [vmem:[#allocation3 + $0x100] sm:$0xff] %v527
      %548 = vst [vmem:[#allocation3 + $0x108] sm:$0xff] %v528
      %549 = vst [vmem:[#allocation3 + $0x110] sm:$0xff] %v529
      %550 = vst [vmem:[#allocation3 + $0x118] sm:$0xff] %v530
      %551 = vst [vmem:[#allocation3 + $0x120] sm:$0xff] %v531
      %552 = vst [vmem:[#allocation3 + $0x128] sm:$0xff] %v532
      %553 = vst [vmem:[#allocation3 + $0x130] sm:$0xff] %v533
      %554 = vst [vmem:[#allocation3 + $0x138] sm:$0xff] %v534
      %v555 = vld [vmem:[#allocation2 + $0x8] sm:$0xff]
      %v556 = vld [vmem:[#allocation2 + $0x10] sm:$0xff]
      %v557 = vld [vmem:[#allocation2 + $0x18] sm:$0xff]
      %v558 = vld [vmem:[#allocation2 + $0x20] sm:$0xff]
      %v559 = vld [vmem:[#allocation2 + $0x28] sm:$0xff]
      %v560 = vld [vmem:[#allocation2 + $0x30] sm:$0xff]
      %v561 = vld [vmem:[#allocation2 + $0x38] sm:$0xff]
      %v562 = vld [vmem:[#allocation2 + $0x40] sm:$0xff]
      %v563 = vld [vmem:[#allocation2 + $0x48] sm:$0xff]
      %v564 = vld [vmem:[#allocation2 + $0x50] sm:$0xff]
      %565 = vst [vmem:[#allocation3 + $0x140] sm:$0xff] %v555
      %566 = vst [vmem:[#allocation3 + $0x148] sm:$0xff] %v556
      %567 = vst [vmem:[#allocation3 + $0x150] sm:$0xff] %v557
      %568 = vst [vmem:[#allocation3 + $0x158] sm:$0xff] %v558
      %569 = vst [vmem:[#allocation3 + $0x160] sm:$0xff] %v559
      %570 = vst [vmem:[#allocation3 + $0x168] sm:$0xff] %v560
      %571 = vst [vmem:[#allocation3 + $0x170] sm:$0xff] %v561
      %572 = vst [vmem:[#allocation3 + $0x178] sm:$0xff] %v562
      %573 = vst [vmem:[#allocation3 + $0x180] sm:$0xff] %v563
      %574 = vst [vmem:[#allocation3 + $0x188] sm:$0xff] %v564
      %v575 = vld [vmem:[#allocation2 + $0x8] sm:$0xff]
      %v576 = vld [vmem:[#allocation2 + $0x10] sm:$0xff]
      %v577 = vld [vmem:[#allocation2 + $0x18] sm:$0xff]
      %v578 = vld [vmem:[#allocation2 + $0x20] sm:$0xff]
      %v579 = vld [vmem:[#allocation2 + $0x28] sm:$0xff]
      %v580 = vld [vmem:[#allocation2 + $0x30] sm:$0xff]
      %v581 = vld [vmem:[#allocation2 + $0x38] sm:$0xff]
      %v582 = vld [vmem:[#allocation2 + $0x40] sm:$0xff]
      %v583 = vld [vmem:[#allocation2 + $0x48] sm:$0xff]
      %v584 = vld [vmem:[#allocation2 + $0x50] sm:$0xff]
      %v585 = vld [vmem:[#allocation2 + $0x58] sm:$0xff]
      %597 = vrot.lane.b32.xlu0 %v575, 127
      %v598 = vpop.permute.xlu0 %597
      %599 = vrot.lane.b32.xlu0 %v576, 127
      %v600 = vpop.permute.xlu0 %599
      %601 = vrot.lane.b32.xlu0 %v577, 127
      %v602 = vpop.permute.xlu0 %601
      %603 = vrot.lane.b32.xlu0 %v578, 127
      %v604 = vpop.permute.xlu0 %603
      %605 = vrot.lane.b32.xlu0 %v579, 127
      %v606 = vpop.permute.xlu0 %605
      %607 = vrot.lane.b32.xlu0 %v580, 127
      %v608 = vpop.permute.xlu0 %607
      %609 = vrot.lane.b32.xlu0 %v581, 127
      %v610 = vpop.permute.xlu0 %609
      %611 = vrot.lane.b32.xlu0 %v582, 127
      %v612 = vpop.permute.xlu0 %611
      %613 = vrot.lane.b32.xlu0 %v583, 127
      %v614 = vpop.permute.xlu0 %613
      %615 = vrot.lane.b32.xlu0 %v584, 127
      %v616 = vpop.permute.xlu0 %615
      %617 = vrot.lane.b32.xlu0 %v585, 127
      %v618 = vpop.permute.xlu0 %617
      %vm619 = vcmask 1039360
      %v620 = vsel %vm619, %v598, %v600
      %v621 = vsel %vm619, %v600, %v602
      %v622 = vsel %vm619, %v602, %v604
      %v623 = vsel %vm619, %v604, %v606
      %v624 = vsel %vm619, %v606, %v608
      %v625 = vsel %vm619, %v608, %v610
      %v626 = vsel %vm619, %v610, %v612
      %v627 = vsel %vm619, %v612, %v614
      %v628 = vsel %vm619, %v614, %v616
      %v629 = vsel %vm619, %v616, %v618
      %640 = vst [vmem:[#allocation3 + $0x190] sm:$0xff] %v620
      %641 = vst [vmem:[#allocation3 + $0x198] sm:$0xff] %v621
      %642 = vst [vmem:[#allocation3 + $0x1a0] sm:$0xff] %v622
      %643 = vst [vmem:[#allocation3 + $0x1a8] sm:$0xff] %v623
      %644 = vst [vmem:[#allocation3 + $0x1b0] sm:$0xff] %v624
      %645 = vst [vmem:[#allocation3 + $0x1b8] sm:$0xff] %v625
      %646 = vst [vmem:[#allocation3 + $0x1c0] sm:$0xff] %v626
      %647 = vst [vmem:[#allocation3 + $0x1c8] sm:$0xff] %v627
      %648 = vst [vmem:[#allocation3 + $0x1d0] sm:$0xff] %v628
      %649 = vst [vmem:[#allocation3 + $0x1d8] sm:$0xff] %v629
      %v650 = vld [vmem:[#allocation2 + $0x8] sm:$0xff]
      %v651 = vld [vmem:[#allocation2 + $0x10] sm:$0xff]
      %v652 = vld [vmem:[#allocation2 + $0x18] sm:$0xff]
      %v653 = vld [vmem:[#allocation2 + $0x20] sm:$0xff]
      %v654 = vld [vmem:[#allocation2 + $0x28] sm:$0xff]
      %v655 = vld [vmem:[#allocation2 + $0x30] sm:$0xff]
      %v656 = vld [vmem:[#allocation2 + $0x38] sm:$0xff]
      %v657 = vld [vmem:[#allocation2 + $0x40] sm:$0xff]
      %v658 = vld [vmem:[#allocation2 + $0x48] sm:$0xff]
      %v659 = vld [vmem:[#allocation2 + $0x50] sm:$0xff]
      %v660 = vld [vmem:[#allocation2 + $0x58] sm:$0xff]
      %672 = vrot.lane.b32.xlu0 %v650, 95
      %v673 = vpop.permute.xlu0 %672
      %674 = vrot.lane.b32.xlu0 %v651, 95
      %v675 = vpop.permute.xlu0 %674
      %676 = vrot.lane.b32.xlu0 %v652, 95
      %v677 = vpop.permute.xlu0 %676
      %678 = vrot.lane.b32.xlu0 %v653, 95
      %v679 = vpop.permute.xlu0 %678
      %680 = vrot.lane.b32.xlu0 %v654, 95
      %v681 = vpop.permute.xlu0 %680
      %682 = vrot.lane.b32.xlu0 %v655, 95
      %v683 = vpop.permute.xlu0 %682
      %684 = vrot.lane.b32.xlu0 %v656, 95
      %v685 = vpop.permute.xlu0 %684
      %686 = vrot.lane.b32.xlu0 %v657, 95
      %v687 = vpop.permute.xlu0 %686
      %688 = vrot.lane.b32.xlu0 %v658, 95
      %v689 = vpop.permute.xlu0 %688
      %690 = vrot.lane.b32.xlu0 %v659, 95
      %v691 = vpop.permute.xlu0 %690
      %692 = vrot.lane.b32.xlu0 %v660, 95
      %v693 = vpop.permute.xlu0 %692
      %vm694 = vcmask 777216
      %v695 = vsel %vm694, %v673, %v675
      %v696 = vsel %vm694, %v675, %v677
      %v697 = vsel %vm694, %v677, %v679
      %v698 = vsel %vm694, %v679, %v681
      %v699 = vsel %vm694, %v681, %v683
      %v700 = vsel %vm694, %v683, %v685
      %v701 = vsel %vm694, %v685, %v687
      %v702 = vsel %vm694, %v687, %v689
      %v703 = vsel %vm694, %v689, %v691
      %v704 = vsel %vm694, %v691, %v693
      %715 = vst [vmem:[#allocation3 + $0x1e0] sm:$0xff] %v695
      %716 = vst [vmem:[#allocation3 + $0x1e8] sm:$0xff] %v696
      %717 = vst [vmem:[#allocation3 + $0x1f0] sm:$0xff] %v697
      %718 = vst [vmem:[#allocation3 + $0x1f8] sm:$0xff] %v698
      %719 = vst [vmem:[#allocation3 + $0x200] sm:$0xff] %v699
      %720 = vst [vmem:[#allocation3 + $0x208] sm:$0xff] %v700
      %721 = vst [vmem:[#allocation3 + $0x210] sm:$0xff] %v701
      %722 = vst [vmem:[#allocation3 + $0x218] sm:$0xff] %v702
      %723 = vst [vmem:[#allocation3 + $0x220] sm:$0xff] %v703
      %724 = vst [vmem:[#allocation3 + $0x228] sm:$0xff] %v704
      %v725 = vld [vmem:[#allocation2 + $0x8] sm:$0xff]
      %v726 = vld [vmem:[#allocation2 + $0x10] sm:$0xff]
      %v727 = vld [vmem:[#allocation2 + $0x18] sm:$0xff]
      %v728 = vld [vmem:[#allocation2 + $0x20] sm:$0xff]
      %v729 = vld [vmem:[#allocation2 + $0x28] sm:$0xff]
      %v730 = vld [vmem:[#allocation2 + $0x30] sm:$0xff]
      %v731 = vld [vmem:[#allocation2 + $0x38] sm:$0xff]
      %v732 = vld [vmem:[#allocation2 + $0x40] sm:$0xff]
      %v733 = vld [vmem:[#allocation2 + $0x48] sm:$0xff]
      %v734 = vld [vmem:[#allocation2 + $0x50] sm:$0xff]
      %v735 = vld [vmem:[#allocation2 + $0x58] sm:$0xff]
      %747 = vrot.lane.b32.xlu0 %v725, 94
      %v748 = vpop.permute.xlu0 %747
      %749 = vrot.lane.b32.xlu0 %v726, 94
      %v750 = vpop.permute.xlu0 %749
      %751 = vrot.lane.b32.xlu0 %v727, 94
      %v752 = vpop.permute.xlu0 %751
      %753 = vrot.lane.b32.xlu0 %v728, 94
      %v754 = vpop.permute.xlu0 %753
      %755 = vrot.lane.b32.xlu0 %v729, 94
      %v756 = vpop.permute.xlu0 %755
      %757 = vrot.lane.b32.xlu0 %v730, 94
      %v758 = vpop.permute.xlu0 %757
      %759 = vrot.lane.b32.xlu0 %v731, 94
      %v760 = vpop.permute.xlu0 %759
      %761 = vrot.lane.b32.xlu0 %v732, 94
      %v762 = vpop.permute.xlu0 %761
      %763 = vrot.lane.b32.xlu0 %v733, 94
      %v764 = vpop.permute.xlu0 %763
      %765 = vrot.lane.b32.xlu0 %v734, 94
      %v766 = vpop.permute.xlu0 %765
      %767 = vrot.lane.b32.xlu0 %v735, 94
      %v768 = vpop.permute.xlu0 %767
      %vm769 = vcmask 769024
      %v770 = vsel %vm769, %v748, %v750
      %v771 = vsel %vm769, %v750, %v752
      %v772 = vsel %vm769, %v752, %v754
      %v773 = vsel %vm769, %v754, %v756
      %v774 = vsel %vm769, %v756, %v758
      %v775 = vsel %vm769, %v758, %v760
      %v776 = vsel %vm769, %v760, %v762
      %v777 = vsel %vm769, %v762, %v764
      %v778 = vsel %vm769, %v764, %v766
      %v779 = vsel %vm769, %v766, %v768
      %790 = vst [vmem:[#allocation3 + $0x230] sm:$0xff] %v770
      %791 = vst [vmem:[#allocation3 + $0x238] sm:$0xff] %v771
      %792 = vst [vmem:[#allocation3 + $0x240] sm:$0xff] %v772
      %793 = vst [vmem:[#allocation3 + $0x248] sm:$0xff] %v773
      %794 = vst [vmem:[#allocation3 + $0x250] sm:$0xff] %v774
      %795 = vst [vmem:[#allocation3 + $0x258] sm:$0xff] %v775
      %796 = vst [vmem:[#allocation3 + $0x260] sm:$0xff] %v776
      %797 = vst [vmem:[#allocation3 + $0x268] sm:$0xff] %v777
      %798 = vst [vmem:[#allocation3 + $0x270] sm:$0xff] %v778
      %799 = vst [vmem:[#allocation3 + $0x278] sm:$0xff] %v779
      %v800 = vld [vmem:[#allocation2 + $0x8] sm:$0xff]
      %v801 = vld [vmem:[#allocation2 + $0x10] sm:$0xff]
      %v802 = vld [vmem:[#allocation2 + $0x18] sm:$0xff]
      %v803 = vld [vmem:[#allocation2 + $0x20] sm:$0xff]
      %v804 = vld [vmem:[#allocation2 + $0x28] sm:$0xff]
      %v805 = vld [vmem:[#allocation2 + $0x30] sm:$0xff]
      %v806 = vld [vmem:[#allocation2 + $0x38] sm:$0xff]
      %v807 = vld [vmem:[#allocation2 + $0x40] sm:$0xff]
      %v808 = vld [vmem:[#allocation2 + $0x48] sm:$0xff]
      %v809 = vld [vmem:[#allocation2 + $0x50] sm:$0xff]
      %v810 = vld [vmem:[#allocation2 + $0x58] sm:$0xff]
      %822 = vrot.lane.b32.xlu0 %v800, 93
      %v823 = vpop.permute.xlu0 %822
      %824 = vrot.lane.b32.xlu0 %v801, 93
      %v825 = vpop.permute.xlu0 %824
      %826 = vrot.lane.b32.xlu0 %v802, 93
      %v827 = vpop.permute.xlu0 %826
      %828 = vrot.lane.b32.xlu0 %v803, 93
      %v829 = vpop.permute.xlu0 %828
      %830 = vrot.lane.b32.xlu0 %v804, 93
      %v831 = vpop.permute.xlu0 %830
      %832 = vrot.lane.b32.xlu0 %v805, 93
      %v833 = vpop.permute.xlu0 %832
      %834 = vrot.lane.b32.xlu0 %v806, 93
      %v835 = vpop.permute.xlu0 %834
      %836 = vrot.lane.b32.xlu0 %v807, 93
      %v837 = vpop.permute.xlu0 %836
      %838 = vrot.lane.b32.xlu0 %v808, 93
      %v839 = vpop.permute.xlu0 %838
      %840 = vrot.lane.b32.xlu0 %v809, 93
      %v841 = vpop.permute.xlu0 %840
      %842 = vrot.lane.b32.xlu0 %v810, 93
      %v843 = vpop.permute.xlu0 %842
      %vm844 = vcmask 760832
      %v845 = vsel %vm844, %v823, %v825
      %v846 = vsel %vm844, %v825, %v827
      %v847 = vsel %vm844, %v827, %v829
      %v848 = vsel %vm844, %v829, %v831
      %v849 = vsel %vm844, %v831, %v833
      %v850 = vsel %vm844, %v833, %v835
      %v851 = vsel %vm844, %v835, %v837
      %v852 = vsel %vm844, %v837, %v839
      %v853 = vsel %vm844, %v839, %v841
      %v854 = vsel %vm844, %v841, %v843
      %865 = vst [vmem:[#allocation3 + $0x280] sm:$0xff] %v845
      %866 = vst [vmem:[#allocation3 + $0x288] sm:$0xff] %v846
      %867 = vst [vmem:[#allocation3 + $0x290] sm:$0xff] %v847
      %868 = vst [vmem:[#allocation3 + $0x298] sm:$0xff] %v848
      %869 = vst [vmem:[#allocation3 + $0x2a0] sm:$0xff] %v849
      %870 = vst [vmem:[#allocation3 + $0x2a8] sm:$0xff] %v850
      %871 = vst [vmem:[#allocation3 + $0x2b0] sm:$0xff] %v851
      %872 = vst [vmem:[#allocation3 + $0x2b8] sm:$0xff] %v852
      %873 = vst [vmem:[#allocation3 + $0x2c0] sm:$0xff] %v853
      %874 = vst [vmem:[#allocation3 + $0x2c8] sm:$0xff] %v854
      %v875 = vld [vmem:[%s1] sm:$0xf]
      %v876 = vld [vmem:[#allocation3] sm:$0xff]
      %v877 = vld [vmem:[#allocation3 + $0x8] sm:$0xff]
      %v878 = vld [vmem:[#allocation3 + $0x10] sm:$0xff]
      %v879 = vld [vmem:[#allocation3 + $0x18] sm:$0xff]
      %v880 = vld [vmem:[#allocation3 + $0x20] sm:$0xff]
      %v881 = vld [vmem:[#allocation3 + $0x28] sm:$0xff]
      %v882 = vld [vmem:[#allocation3 + $0x30] sm:$0xff]
      %v883 = vld [vmem:[#allocation3 + $0x38] sm:$0xff]
      %v884 = vld [vmem:[#allocation3 + $0x40] sm:$0xff]
      %v885 = vld [vmem:[#allocation3 + $0x48] sm:$0xff]
      %v886 = vld [vmem:[#allocation3 + $0x50] sm:$0xff]
      %v887 = vld [vmem:[#allocation3 + $0x58] sm:$0xff]
      %v888 = vld [vmem:[#allocation3 + $0x60] sm:$0xff]
      %v889 = vld [vmem:[#allocation3 + $0x68] sm:$0xff]
      %v890 = vld [vmem:[#allocation3 + $0x70] sm:$0xff]
      %v891 = vld [vmem:[#allocation3 + $0x78] sm:$0xff]
      %v892 = vld [vmem:[#allocation3 + $0x80] sm:$0xff]
      %v893 = vld [vmem:[#allocation3 + $0x88] sm:$0xff]
      %v894 = vld [vmem:[#allocation3 + $0x90] sm:$0xff]
      %v895 = vld [vmem:[#allocation3 + $0x98] sm:$0xff]
      %v896 = vld [vmem:[#allocation3 + $0xa0] sm:$0xff]
      %v897 = vld [vmem:[#allocation3 + $0xa8] sm:$0xff]
      %v898 = vld [vmem:[#allocation3 + $0xb0] sm:$0xff]
      %v899 = vld [vmem:[#allocation3 + $0xb8] sm:$0xff]
      %v900 = vld [vmem:[#allocation3 + $0xc0] sm:$0xff]
      %v901 = vld [vmem:[#allocation3 + $0xc8] sm:$0xff]
      %v902 = vld [vmem:[#allocation3 + $0xd0] sm:$0xff]
      %v903 = vld [vmem:[#allocation3 + $0xd8] sm:$0xff]
      %v904 = vld [vmem:[#allocation3 + $0xe0] sm:$0xff]
      %v905 = vld [vmem:[#allocation3 + $0xe8] sm:$0xff]
      %v906 = vld [vmem:[#allocation3 + $0xf0] sm:$0xff]
      %v907 = vld [vmem:[#allocation3 + $0xf8] sm:$0xff]
      %v908 = vld [vmem:[#allocation3 + $0x100] sm:$0xff]
      %v909 = vld [vmem:[#allocation3 + $0x108] sm:$0xff]
      %v910 = vld [vmem:[#allocation3 + $0x110] sm:$0xff]
      %v911 = vld [vmem:[#allocation3 + $0x118] sm:$0xff]
      %v912 = vld [vmem:[#allocation3 + $0x120] sm:$0xff]
      %v913 = vld [vmem:[#allocation3 + $0x128] sm:$0xff]
      %v914 = vld [vmem:[#allocation3 + $0x130] sm:$0xff]
      %v915 = vld [vmem:[#allocation3 + $0x138] sm:$0xff]
      %v916 = vld [vmem:[#allocation3 + $0x140] sm:$0xff]
      %v917 = vld [vmem:[#allocation3 + $0x148] sm:$0xff]
      %v918 = vld [vmem:[#allocation3 + $0x150] sm:$0xff]
      %v919 = vld [vmem:[#allocation3 + $0x158] sm:$0xff]
      %v920 = vld [vmem:[#allocation3 + $0x160] sm:$0xff]
      %v921 = vld [vmem:[#allocation3 + $0x168] sm:$0xff]
      %v922 = vld [vmem:[#allocation3 + $0x170] sm:$0xff]
      %v923 = vld [vmem:[#allocation3 + $0x178] sm:$0xff]
      %v924 = vld [vmem:[#allocation3 + $0x180] sm:$0xff]
      %v925 = vld [vmem:[#allocation3 + $0x188] sm:$0xff]
      %v926 = vld [vmem:[#allocation3 + $0x190] sm:$0xff]
      %v927 = vld [vmem:[#allocation3 + $0x198] sm:$0xff]
      %v928 = vld [vmem:[#allocation3 + $0x1a0] sm:$0xff]
      %v929 = vld [vmem:[#allocation3 + $0x1a8] sm:$0xff]
      %v930 = vld [vmem:[#allocation3 + $0x1b0] sm:$0xff]
      %v931 = vld [vmem:[#allocation3 + $0x1b8] sm:$0xff]
      %v932 = vld [vmem:[#allocation3 + $0x1c0] sm:$0xff]
      %v933 = vld [vmem:[#allocation3 + $0x1c8] sm:$0xff]
      %v934 = vld [vmem:[#allocation3 + $0x1d0] sm:$0xff]
      %v935 = vld [vmem:[#allocation3 + $0x1d8] sm:$0xff]
      %v936 = vld [vmem:[#allocation3 + $0x1e0] sm:$0xff]
      %v937 = vld [vmem:[#allocation3 + $0x1e8] sm:$0xff]
      %v938 = vld [vmem:[#allocation3 + $0x1f0] sm:$0xff]
      %v939 = vld [vmem:[#allocation3 + $0x1f8] sm:$0xff]
      %v940 = vld [vmem:[#allocation3 + $0x200] sm:$0xff]
      %v941 = vld [vmem:[#allocation3 + $0x208] sm:$0xff]
      %v942 = vld [vmem:[#allocation3 + $0x210] sm:$0xff]
      %v943 = vld [vmem:[#allocation3 + $0x218] sm:$0xff]
      %v944 = vld [vmem:[#allocation3 + $0x220] sm:$0xff]
      %v945 = vld [vmem:[#allocation3 + $0x228] sm:$0xff]
      %v946 = vld [vmem:[#allocation3 + $0x230] sm:$0xff]
      %v947 = vld [vmem:[#allocation3 + $0x238] sm:$0xff]
      %v948 = vld [vmem:[#allocation3 + $0x240] sm:$0xff]
      %v949 = vld [vmem:[#allocation3 + $0x248] sm:$0xff]
      %v950 = vld [vmem:[#allocation3 + $0x250] sm:$0xff]
      %v951 = vld [vmem:[#allocation3 + $0x258] sm:$0xff]
      %v952 = vld [vmem:[#allocation3 + $0x260] sm:$0xff]
      %v953 = vld [vmem:[#allocation3 + $0x268] sm:$0xff]
      %v954 = vld [vmem:[#allocation3 + $0x270] sm:$0xff]
      %v955 = vld [vmem:[#allocation3 + $0x278] sm:$0xff]
      %v956 = vld [vmem:[#allocation3 + $0x280] sm:$0xff]
      %v957 = vld [vmem:[#allocation3 + $0x288] sm:$0xff]
      %v958 = vld [vmem:[#allocation3 + $0x290] sm:$0xff]
      %v959 = vld [vmem:[#allocation3 + $0x298] sm:$0xff]
      %v960 = vld [vmem:[#allocation3 + $0x2a0] sm:$0xff]
      %v961 = vld [vmem:[#allocation3 + $0x2a8] sm:$0xff]
      %v962 = vld [vmem:[#allocation3 + $0x2b0] sm:$0xff]
      %v963 = vld [vmem:[#allocation3 + $0x2b8] sm:$0xff]
      %v964 = vld [vmem:[#allocation3 + $0x2c0] sm:$0xff]
      %v965 = vld [vmem:[#allocation3 + $0x2c8] sm:$0xff]
      %v966 = vpack.c.bf16 %v886, %v876
      %v967 = vpack.c.bf16 %v887, %v877
      %v968 = vpack.c.bf16 %v888, %v878
      %v969 = vpack.c.bf16 %v889, %v879
      %v970 = vpack.c.bf16 %v890, %v880
      %v971 = vpack.c.bf16 %v891, %v881
      %v972 = vpack.c.bf16 %v892, %v882
      %v973 = vpack.c.bf16 %v893, %v883
      %v974 = vpack.c.bf16 %v894, %v884
      %v975 = vpack.c.bf16 %v895, %v885
      %v976 = vpack.c.bf16 %v906, %v896
      %v977 = vpack.c.bf16 %v907, %v897
      %v978 = vpack.c.bf16 %v908, %v898
      %v979 = vpack.c.bf16 %v909, %v899
      %v980 = vpack.c.bf16 %v910, %v900
      %v981 = vpack.c.bf16 %v911, %v901
      %v982 = vpack.c.bf16 %v912, %v902
      %v983 = vpack.c.bf16 %v913, %v903
      %v984 = vpack.c.bf16 %v914, %v904
      %v985 = vpack.c.bf16 %v915, %v905
      %v986 = vpack.c.bf16 %v926, %v916
      %v987 = vpack.c.bf16 %v927, %v917
      %v988 = vpack.c.bf16 %v928, %v918
      %v989 = vpack.c.bf16 %v929, %v919
      %v990 = vpack.c.bf16 %v930, %v920
      %v991 = vpack.c.bf16 %v931, %v921
      %v992 = vpack.c.bf16 %v932, %v922
      %v993 = vpack.c.bf16 %v933, %v923
      %v994 = vpack.c.bf16 %v934, %v924
      %v995 = vpack.c.bf16 %v935, %v925
      %v996 = vpack.c.bf16 %v946, %v936
      %v997 = vpack.c.bf16 %v947, %v937
      %v998 = vpack.c.bf16 %v948, %v938
      %v999 = vpack.c.bf16 %v949, %v939
      %v1000 = vpack.c.bf16 %v950, %v940
      %v1001 = vpack.c.bf16 %v951, %v941
      %v1002 = vpack.c.bf16 %v952, %v942
      %v1003 = vpack.c.bf16 %v953, %v943
      %v1004 = vpack.c.bf16 %v954, %v944
      %v1005 = vpack.c.bf16 %v955, %v945
      %v1006 = vpack.c.bf16 %v956, %v956
      %v1007 = vpack.c.bf16 %v957, %v957
      %v1008 = vpack.c.bf16 %v958, %v958
      %v1009 = vpack.c.bf16 %v959, %v959
      %v1010 = vpack.c.bf16 %v960, %v960
      %v1011 = vpack.c.bf16 %v961, %v961
      %v1012 = vpack.c.bf16 %v962, %v962
      %v1013 = vpack.c.bf16 %v963, %v963
      %v1014 = vpack.c.bf16 %v964, %v964
      %v1015 = vpack.c.bf16 %v965, %v965
      %v1016 = vld [vmem:[%s2] sm:$0xff]
      %1018 = vset.pattern.permute.xlu0 0
      %1019 = vperm.xlu0 %1018, %v1016
      %v1020 = vpop.permute.xlu0 %1019
      %vm1022 = vcmask 588800
      %v1024 = vsel %vm1022, %v875, 0
      %vm1026 = vcmask 1043456
      %v1028 = vsel %vm1026, %v1006, 0
      %v1031 = vsel %vm1026, %v1007, 0
      %v1034 = vsel %vm1026, %v1008, 0
      %v1037 = vsel %vm1026, %v1009, 0
      %v1040 = vsel %vm1026, %v1010, 0
      %v1043 = vsel %vm1026, %v1011, 0
      %v1046 = vsel %vm1026, %v1012, 0
      %v1049 = vsel %vm1026, %v1013, 0
      %v1052 = vsel %vm1026, %v1014, 0
      %v1055 = vsel %vm1026, %v1015, 0
      %1057 = vmatpush.bf16.msra.mxu0 0
      %1058 = vmatpush.bf16.msra.mxu0 0
      %1059 = vmatpush.bf16.msra.mxu0 0
      %1060 = vmatpush.bf16.msra.mxu0 %v1028
      %1061 = vmatpush.bf16.msra.mxu0 %v996
      %1062 = vmatpush.bf16.msra.mxu0 %v986
      %1063 = vmatpush.bf16.msra.mxu0 %v976
      %1064 = vmatpush.bf16.msra.mxu0 %v966
      %1065 = vmatmul.bf16.gmra.mxu0 %v1024
      %v1066 = vpop.f32.mrf.mxu0
      %v1067 = vadd.f32 %v1020, %v1066
      %v1068 = vpop.f32.mrf.mxu0
      %1069 = vdwg.mxu0
      %1070 = vmatpush.bf16.msra.mxu0 0
      %1071 = vmatpush.bf16.msra.mxu0 0
      %1072 = vmatpush.bf16.msra.mxu0 0
      %1073 = vmatpush.bf16.msra.mxu0 %v1031
      %1074 = vmatpush.bf16.msra.mxu0 %v997
      %1075 = vmatpush.bf16.msra.mxu0 %v987
      %1076 = vmatpush.bf16.msra.mxu0 %v977
      %1077 = vmatpush.bf16.msra.mxu0 %v967
      %1078 = vmatmul.bf16.gmra.mxu0 %v1024
      %v1079 = vpop.f32.mrf.mxu0
      %v1080 = vadd.f32 %v1020, %v1079
      %v1081 = vpop.f32.mrf.mxu0
      %1082 = vdwg.mxu0
      %1083 = vmatpush.bf16.msra.mxu0 0
      %1084 = vmatpush.bf16.msra.mxu0 0
      %1085 = vmatpush.bf16.msra.mxu0 0
      %1086 = vmatpush.bf16.msra.mxu0 %v1034
      %1087 = vmatpush.bf16.msra.mxu0 %v998
      %1088 = vmatpush.bf16.msra.mxu0 %v988
      %1089 = vmatpush.bf16.msra.mxu0 %v978
      %1090 = vmatpush.bf16.msra.mxu0 %v968
      %1091 = vmatmul.bf16.gmra.mxu0 %v1024
      %v1092 = vpop.f32.mrf.mxu0
      %v1093 = vadd.f32 %v1020, %v1092
      %v1094 = vpop.f32.mrf.mxu0
      %1095 = vdwg.mxu0
      %1096 = vmatpush.bf16.msra.mxu0 0
      %1097 = vmatpush.bf16.msra.mxu0 0
      %1098 = vmatpush.bf16.msra.mxu0 0
      %1099 = vmatpush.bf16.msra.mxu0 %v1037
      %1100 = vmatpush.bf16.msra.mxu0 %v999
      %1101 = vmatpush.bf16.msra.mxu0 %v989
      %1102 = vmatpush.bf16.msra.mxu0 %v979
      %1103 = vmatpush.bf16.msra.mxu0 %v969
      %1104 = vmatmul.bf16.gmra.mxu0 %v1024
      %v1105 = vpop.f32.mrf.mxu0
      %v1106 = vadd.f32 %v1020, %v1105
      %v1107 = vpop.f32.mrf.mxu0
      %1108 = vdwg.mxu0
      %1109 = vmatpush.bf16.msra.mxu0 0
      %1110 = vmatpush.bf16.msra.mxu0 0
      %1111 = vmatpush.bf16.msra.mxu0 0
      %1112 = vmatpush.bf16.msra.mxu0 %v1040
      %1113 = vmatpush.bf16.msra.mxu0 %v1000
      %1114 = vmatpush.bf16.msra.mxu0 %v990
      %1115 = vmatpush.bf16.msra.mxu0 %v980
      %1116 = vmatpush.bf16.msra.mxu0 %v970
      %1117 = vmatmul.bf16.gmra.mxu0 %v1024
      %v1118 = vpop.f32.mrf.mxu0
      %v1119 = vadd.f32 %v1020, %v1118
      %v1120 = vpop.f32.mrf.mxu0
      %1121 = vdwg.mxu0
      %1122 = vmatpush.bf16.msra.mxu0 0
      %1123 = vmatpush.bf16.msra.mxu0 0
      %1124 = vmatpush.bf16.msra.mxu0 0
      %1125 = vmatpush.bf16.msra.mxu0 %v1043
      %1126 = vmatpush.bf16.msra.mxu0 %v1001
      %1127 = vmatpush.bf16.msra.mxu0 %v991
      %1128 = vmatpush.bf16.msra.mxu0 %v981
      %1129 = vmatpush.bf16.msra.mxu0 %v971
      %1130 = vmatmul.bf16.gmra.mxu0 %v1024
      %v1131 = vpop.f32.mrf.mxu0
      %v1132 = vadd.f32 %v1020, %v1131
      %v1133 = vpop.f32.mrf.mxu0
      %1134 = vdwg.mxu0
      %1135 = vmatpush.bf16.msra.mxu0 0
      %1136 = vmatpush.bf16.msra.mxu0 0
      %1137 = vmatpush.bf16.msra.mxu0 0
      %1138 = vmatpush.bf16.msra.mxu0 %v1046
      %1139 = vmatpush.bf16.msra.mxu0 %v1002
      %1140 = vmatpush.bf16.msra.mxu0 %v992
      %1141 = vmatpush.bf16.msra.mxu0 %v982
      %1142 = vmatpush.bf16.msra.mxu0 %v972
      %1143 = vmatmul.bf16.gmra.mxu0 %v1024
      %v1144 = vpop.f32.mrf.mxu0
      %v1145 = vadd.f32 %v1020, %v1144
      %v1146 = vpop.f32.mrf.mxu0
      %1147 = vdwg.mxu0
      %1148 = vmatpush.bf16.msra.mxu0 0
      %1149 = vmatpush.bf16.msra.mxu0 0
      %1150 = vmatpush.bf16.msra.mxu0 0
      %1151 = vmatpush.bf16.msra.mxu0 %v1049
      %1152 = vmatpush.bf16.msra.mxu0 %v1003
      %1153 = vmatpush.bf16.msra.mxu0 %v993
      %1154 = vmatpush.bf16.msra.mxu0 %v983
      %1155 = vmatpush.bf16.msra.mxu0 %v973
      %1156 = vmatmul.bf16.gmra.mxu0 %v1024
      %v1157 = vpop.f32.mrf.mxu0
      %v1158 = vadd.f32 %v1020, %v1157
      %v1159 = vpop.f32.mrf.mxu0
      %1160 = vdwg.mxu0
      %1161 = vmatpush.bf16.msra.mxu0 0
      %1162 = vmatpush.bf16.msra.mxu0 0
      %1163 = vmatpush.bf16.msra.mxu0 0
      %1164 = vmatpush.bf16.msra.mxu0 %v1052
      %1165 = vmatpush.bf16.msra.mxu0 %v1004
      %1166 = vmatpush.bf16.msra.mxu0 %v994
      %1167 = vmatpush.bf16.msra.mxu0 %v984
      %1168 = vmatpush.bf16.msra.mxu0 %v974
      %1169 = vmatmul.bf16.gmra.mxu0 %v1024
      %v1170 = vpop.f32.mrf.mxu0
      %v1171 = vadd.f32 %v1020, %v1170
      %v1172 = vpop.f32.mrf.mxu0
      %1173 = vdwg.mxu0
      %1174 = vmatpush.bf16.msra.mxu0 0
      %1175 = vmatpush.bf16.msra.mxu0 0
      %1176 = vmatpush.bf16.msra.mxu0 0
      %1177 = vmatpush.bf16.msra.mxu0 %v1055
      %1178 = vmatpush.bf16.msra.mxu0 %v1005
      %1179 = vmatpush.bf16.msra.mxu0 %v995
      %1180 = vmatpush.bf16.msra.mxu0 %v985
      %1181 = vmatpush.bf16.msra.mxu0 %v975
      %1182 = vmatmul.bf16.gmra.mxu0 %v1024
      %v1183 = vpop.f32.mrf.mxu0
      %v1184 = vadd.f32 %v1020, %v1183
      %v1185 = vpop.f32.mrf.mxu0
      %1186 = vdwg.mxu0
      %vm1187 = vcmp.ge.f32.partialorder %v1067, 0.0
      %vm1188 = vcmp.ge.f32.partialorder %v1080, 0.0
      %vm1189 = vcmp.ge.f32.partialorder %v1093, 0.0
      %vm1190 = vcmp.ge.f32.partialorder %v1106, 0.0
      %vm1191 = vcmp.ge.f32.partialorder %v1119, 0.0
      %vm1192 = vcmp.ge.f32.partialorder %v1132, 0.0
      %vm1193 = vcmp.ge.f32.partialorder %v1145, 0.0
      %vm1194 = vcmp.ge.f32.partialorder %v1158, 0.0
      %vm1195 = vcmp.ge.f32.partialorder %v1171, 0.0
      %vm1196 = vcmp.ge.f32.partialorder %v1184, 0.0
      %v1197 = vmul.f32 %v1067, 0.1
      %v1198 = vmul.f32 %v1080, 0.1
      %v1199 = vmul.f32 %v1093, 0.1
      %v1200 = vmul.f32 %v1106, 0.1
      %v1201 = vmul.f32 %v1119, 0.1
      %v1202 = vmul.f32 %v1132, 0.1
      %v1203 = vmul.f32 %v1145, 0.1
      %v1204 = vmul.f32 %v1158, 0.1
      %v1205 = vmul.f32 %v1171, 0.1
      %v1206 = vmul.f32 %v1184, 0.1
      %v1207 = vsel %vm1187, %v1067, %v1197
      %v1208 = vsel %vm1188, %v1080, %v1198
      %v1209 = vsel %vm1189, %v1093, %v1199
      %v1210 = vsel %vm1190, %v1106, %v1200
      %v1211 = vsel %vm1191, %v1119, %v1201
      %v1212 = vsel %vm1192, %v1132, %v1202
      %v1213 = vsel %vm1193, %v1145, %v1203
      %v1214 = vsel %vm1194, %v1158, %v1204
      %v1215 = vsel %vm1195, %v1171, %v1205
      %v1216 = vsel %vm1196, %v1184, %v1206
      %v1217 = vmul.f32 %v1207, %v215
      %v1218 = vmul.f32 %v1208, %v216
      %v1219 = vmul.f32 %v1209, %v217
      %v1220 = vmul.f32 %v1210, %v218
      %v1221 = vmul.f32 %v1211, %v219
      %v1222 = vmul.f32 %v1212, %v220
      %v1223 = vmul.f32 %v1213, %v221
      %v1224 = vmul.f32 %v1214, %v222
      %v1225 = vmul.f32 %v1215, %v223
      %v1226 = vmul.f32 %v1216, %v224
      %1227 = vst [vmem:[#allocation2 + $0x8] sm:$0xff] %v1217
      %1228 = vst [vmem:[#allocation2 + $0x10] sm:$0xff] %v1218
      %1229 = vst [vmem:[#allocation2 + $0x18] sm:$0xff] %v1219
      %1230 = vst [vmem:[#allocation2 + $0x20] sm:$0xff] %v1220
      %1231 = vst [vmem:[#allocation2 + $0x28] sm:$0xff] %v1221
      %1232 = vst [vmem:[#allocation2 + $0x30] sm:$0xff] %v1222
      %1233 = vst [vmem:[#allocation2 + $0x38] sm:$0xff] %v1223
      %1234 = vst [vmem:[#allocation2 + $0x40] sm:$0xff] %v1224
      %1235 = vst [vmem:[#allocation2 + $0x48] sm:$0xff] %v1225
      %1236 = vst [vmem:[#allocation2 + $0x50] sm:$0xff] %v1226
      %v1237 = vld [vmem:[#allocation2] sm:$0xff]
      %v1238 = vld [vmem:[#allocation2 + $0x8] sm:$0xff]
      %v1239 = vld [vmem:[#allocation2 + $0x10] sm:$0xff]
      %v1240 = vld [vmem:[#allocation2 + $0x18] sm:$0xff]
      %v1241 = vld [vmem:[#allocation2 + $0x20] sm:$0xff]
      %v1242 = vld [vmem:[#allocation2 + $0x28] sm:$0xff]
      %v1243 = vld [vmem:[#allocation2 + $0x30] sm:$0xff]
      %v1244 = vld [vmem:[#allocation2 + $0x38] sm:$0xff]
      %v1245 = vld [vmem:[#allocation2 + $0x40] sm:$0xff]
      %v1246 = vld [vmem:[#allocation2 + $0x48] sm:$0xff]
      %v1247 = vld [vmem:[#allocation2 + $0x50] sm:$0xff]
      %1259 = vrot.lane.b32.xlu0 %v1237, 35
      %v1260 = vpop.permute.xlu0 %1259
      %1261 = vrot.lane.b32.xlu0 %v1238, 35
      %v1262 = vpop.permute.xlu0 %1261
      %1263 = vrot.lane.b32.xlu0 %v1239, 35
      %v1264 = vpop.permute.xlu0 %1263
      %1265 = vrot.lane.b32.xlu0 %v1240, 35
      %v1266 = vpop.permute.xlu0 %1265
      %1267 = vrot.lane.b32.xlu0 %v1241, 35
      %v1268 = vpop.permute.xlu0 %1267
      %1269 = vrot.lane.b32.xlu0 %v1242, 35
      %v1270 = vpop.permute.xlu0 %1269
      %1271 = vrot.lane.b32.xlu0 %v1243, 35
      %v1272 = vpop.permute.xlu0 %1271
      %1273 = vrot.lane.b32.xlu0 %v1244, 35
      %v1274 = vpop.permute.xlu0 %1273
      %1275 = vrot.lane.b32.xlu0 %v1245, 35
      %v1276 = vpop.permute.xlu0 %1275
      %1277 = vrot.lane.b32.xlu0 %v1246, 35
      %v1278 = vpop.permute.xlu0 %1277
      %1279 = vrot.lane.b32.xlu0 %v1247, 35
      %v1280 = vpop.permute.xlu0 %1279
      %v1281 = vsel %vm299, %v1260, %v1262
      %v1282 = vsel %vm299, %v1262, %v1264
      %v1283 = vsel %vm299, %v1264, %v1266
      %v1284 = vsel %vm299, %v1266, %v1268
      %v1285 = vsel %vm299, %v1268, %v1270
      %v1286 = vsel %vm299, %v1270, %v1272
      %v1287 = vsel %vm299, %v1272, %v1274
      %v1288 = vsel %vm299, %v1274, %v1276
      %v1289 = vsel %vm299, %v1276, %v1278
      %v1290 = vsel %vm299, %v1278, %v1280
      %1301 = vst [vmem:[#allocation3] sm:$0xff] %v1281
      %1302 = vst [vmem:[#allocation3 + $0x8] sm:$0xff] %v1282
      %1303 = vst [vmem:[#allocation3 + $0x10] sm:$0xff] %v1283
      %1304 = vst [vmem:[#allocation3 + $0x18] sm:$0xff] %v1284
      %1305 = vst [vmem:[#allocation3 + $0x20] sm:$0xff] %v1285
      %1306 = vst [vmem:[#allocation3 + $0x28] sm:$0xff] %v1286
      %1307 = vst [vmem:[#allocation3 + $0x30] sm:$0xff] %v1287
      %1308 = vst [vmem:[#allocation3 + $0x38] sm:$0xff] %v1288
      %1309 = vst [vmem:[#allocation3 + $0x40] sm:$0xff] %v1289
      %1310 = vst [vmem:[#allocation3 + $0x48] sm:$0xff] %v1290
      %v1311 = vld [vmem:[#allocation2] sm:$0xff]
      %v1312 = vld [vmem:[#allocation2 + $0x8] sm:$0xff]
      %v1313 = vld [vmem:[#allocation2 + $0x10] sm:$0xff]
      %v1314 = vld [vmem:[#allocation2 + $0x18] sm:$0xff]
      %v1315 = vld [vmem:[#allocation2 + $0x20] sm:$0xff]
      %v1316 = vld [vmem:[#allocation2 + $0x28] sm:$0xff]
      %v1317 = vld [vmem:[#allocation2 + $0x30] sm:$0xff]
      %v1318 = vld [vmem:[#allocation2 + $0x38] sm:$0xff]
      %v1319 = vld [vmem:[#allocation2 + $0x40] sm:$0xff]
      %v1320 = vld [vmem:[#allocation2 + $0x48] sm:$0xff]
      %v1321 = vld [vmem:[#allocation2 + $0x50] sm:$0xff]
      %1333 = vrot.lane.b32.xlu0 %v1311, 34
      %v1334 = vpop.permute.xlu0 %1333
      %1335 = vrot.lane.b32.xlu0 %v1312, 34
      %v1336 = vpop.permute.xlu0 %1335
      %1337 = vrot.lane.b32.xlu0 %v1313, 34
      %v1338 = vpop.permute.xlu0 %1337
      %1339 = vrot.lane.b32.xlu0 %v1314, 34
      %v1340 = vpop.permute.xlu0 %1339
      %1341 = vrot.lane.b32.xlu0 %v1315, 34
      %v1342 = vpop.permute.xlu0 %1341
      %1343 = vrot.lane.b32.xlu0 %v1316, 34
      %v1344 = vpop.permute.xlu0 %1343
      %1345 = vrot.lane.b32.xlu0 %v1317, 34
      %v1346 = vpop.permute.xlu0 %1345
      %1347 = vrot.lane.b32.xlu0 %v1318, 34
      %v1348 = vpop.permute.xlu0 %1347
      %1349 = vrot.lane.b32.xlu0 %v1319, 34
      %v1350 = vpop.permute.xlu0 %1349
      %1351 = vrot.lane.b32.xlu0 %v1320, 34
      %v1352 = vpop.permute.xlu0 %1351
      %1353 = vrot.lane.b32.xlu0 %v1321, 34
      %v1354 = vpop.permute.xlu0 %1353
      %v1355 = vsel %vm374, %v1334, %v1336
      %v1356 = vsel %vm374, %v1336, %v1338
      %v1357 = vsel %vm374, %v1338, %v1340
      %v1358 = vsel %vm374, %v1340, %v1342
      %v1359 = vsel %vm374, %v1342, %v1344
      %v1360 = vsel %vm374, %v1344, %v1346
      %v1361 = vsel %vm374, %v1346, %v1348
      %v1362 = vsel %vm374, %v1348, %v1350
      %v1363 = vsel %vm374, %v1350, %v1352
      %v1364 = vsel %vm374, %v1352, %v1354
      %1375 = vst [vmem:[#allocation3 + $0x50] sm:$0xff] %v1355
      %1376 = vst [vmem:[#allocation3 + $0x58] sm:$0xff] %v1356
      %1377 = vst [vmem:[#allocation3 + $0x60] sm:$0xff] %v1357
      %1378 = vst [vmem:[#allocation3 + $0x68] sm:$0xff] %v1358
      %1379 = vst [vmem:[#allocation3 + $0x70] sm:$0xff] %v1359
      %1380 = vst [vmem:[#allocation3 + $0x78] sm:$0xff] %v1360
      %1381 = vst [vmem:[#allocation3 + $0x80] sm:$0xff] %v1361
      %1382 = vst [vmem:[#allocation3 + $0x88] sm:$0xff] %v1362
      %1383 = vst [vmem:[#allocation3 + $0x90] sm:$0xff] %v1363
      %1384 = vst [vmem:[#allocation3 + $0x98] sm:$0xff] %v1364
      %v1385 = vld [vmem:[#allocation2] sm:$0xff]
      %v1386 = vld [vmem:[#allocation2 + $0x8] sm:$0xff]
      %v1387 = vld [vmem:[#allocation2 + $0x10] sm:$0xff]
      %v1388 = vld [vmem:[#allocation2 + $0x18] sm:$0xff]
      %v1389 = vld [vmem:[#allocation2 + $0x20] sm:$0xff]
      %v1390 = vld [vmem:[#allocation2 + $0x28] sm:$0xff]
      %v1391 = vld [vmem:[#allocation2 + $0x30] sm:$0xff]
      %v1392 = vld [vmem:[#allocation2 + $0x38] sm:$0xff]
      %v1393 = vld [vmem:[#allocation2 + $0x40] sm:$0xff]
      %v1394 = vld [vmem:[#allocation2 + $0x48] sm:$0xff]
      %v1395 = vld [vmem:[#allocation2 + $0x50] sm:$0xff]
      %1407 = vrot.lane.b32.xlu0 %v1385, 33
      %v1408 = vpop.permute.xlu0 %1407
      %1409 = vrot.lane.b32.xlu0 %v1386, 33
      %v1410 = vpop.permute.xlu0 %1409
      %1411 = vrot.lane.b32.xlu0 %v1387, 33
      %v1412 = vpop.permute.xlu0 %1411
      %1413 = vrot.lane.b32.xlu0 %v1388, 33
      %v1414 = vpop.permute.xlu0 %1413
      %1415 = vrot.lane.b32.xlu0 %v1389, 33
      %v1416 = vpop.permute.xlu0 %1415
      %1417 = vrot.lane.b32.xlu0 %v1390, 33
      %v1418 = vpop.permute.xlu0 %1417
      %1419 = vrot.lane.b32.xlu0 %v1391, 33
      %v1420 = vpop.permute.xlu0 %1419
      %1421 = vrot.lane.b32.xlu0 %v1392, 33
      %v1422 = vpop.permute.xlu0 %1421
      %1423 = vrot.lane.b32.xlu0 %v1393, 33
      %v1424 = vpop.permute.xlu0 %1423
      %1425 = vrot.lane.b32.xlu0 %v1394, 33
      %v1426 = vpop.permute.xlu0 %1425
      %1427 = vrot.lane.b32.xlu0 %v1395, 33
      %v1428 = vpop.permute.xlu0 %1427
      %v1429 = vsel %vm449, %v1408, %v1410
      %v1430 = vsel %vm449, %v1410, %v1412
      %v1431 = vsel %vm449, %v1412, %v1414
      %v1432 = vsel %vm449, %v1414, %v1416
      %v1433 = vsel %vm449, %v1416, %v1418
      %v1434 = vsel %vm449, %v1418, %v1420
      %v1435 = vsel %vm449, %v1420, %v1422
      %v1436 = vsel %vm449, %v1422, %v1424
      %v1437 = vsel %vm449, %v1424, %v1426
      %v1438 = vsel %vm449, %v1426, %v1428
      %1449 = vst [vmem:[#allocation3 + $0xa0] sm:$0xff] %v1429
      %1450 = vst [vmem:[#allocation3 + $0xa8] sm:$0xff] %v1430
      %1451 = vst [vmem:[#allocation3 + $0xb0] sm:$0xff] %v1431
      %1452 = vst [vmem:[#allocation3 + $0xb8] sm:$0xff] %v1432
      %1453 = vst [vmem:[#allocation3 + $0xc0] sm:$0xff] %v1433
      %1454 = vst [vmem:[#allocation3 + $0xc8] sm:$0xff] %v1434
      %1455 = vst [vmem:[#allocation3 + $0xd0] sm:$0xff] %v1435
      %1456 = vst [vmem:[#allocation3 + $0xd8] sm:$0xff] %v1436
      %1457 = vst [vmem:[#allocation3 + $0xe0] sm:$0xff] %v1437
      %1458 = vst [vmem:[#allocation3 + $0xe8] sm:$0xff] %v1438
      %v1459 = vld [vmem:[#allocation2] sm:$0xff]
      %v1460 = vld [vmem:[#allocation2 + $0x8] sm:$0xff]
      %v1461 = vld [vmem:[#allocation2 + $0x10] sm:$0xff]
      %v1462 = vld [vmem:[#allocation2 + $0x18] sm:$0xff]
      %v1463 = vld [vmem:[#allocation2 + $0x20] sm:$0xff]
      %v1464 = vld [vmem:[#allocation2 + $0x28] sm:$0xff]
      %v1465 = vld [vmem:[#allocation2 + $0x30] sm:$0xff]
      %v1466 = vld [vmem:[#allocation2 + $0x38] sm:$0xff]
      %v1467 = vld [vmem:[#allocation2 + $0x40] sm:$0xff]
      %v1468 = vld [vmem:[#allocation2 + $0x48] sm:$0xff]
      %v1469 = vld [vmem:[#allocation2 + $0x50] sm:$0xff]
      %1481 = vrot.lane.b32.xlu0 %v1459, 1
      %v1482 = vpop.permute.xlu0 %1481
      %1483 = vrot.lane.b32.xlu0 %v1460, 1
      %v1484 = vpop.permute.xlu0 %1483
      %1485 = vrot.lane.b32.xlu0 %v1461, 1
      %v1486 = vpop.permute.xlu0 %1485
      %1487 = vrot.lane.b32.xlu0 %v1462, 1
      %v1488 = vpop.permute.xlu0 %1487
      %1489 = vrot.lane.b32.xlu0 %v1463, 1
      %v1490 = vpop.permute.xlu0 %1489
      %1491 = vrot.lane.b32.xlu0 %v1464, 1
      %v1492 = vpop.permute.xlu0 %1491
      %1493 = vrot.lane.b32.xlu0 %v1465, 1
      %v1494 = vpop.permute.xlu0 %1493
      %1495 = vrot.lane.b32.xlu0 %v1466, 1
      %v1496 = vpop.permute.xlu0 %1495
      %1497 = vrot.lane.b32.xlu0 %v1467, 1
      %v1498 = vpop.permute.xlu0 %1497
      %1499 = vrot.lane.b32.xlu0 %v1468, 1
      %v1500 = vpop.permute.xlu0 %1499
      %1501 = vrot.lane.b32.xlu0 %v1469, 1
      %v1502 = vpop.permute.xlu0 %1501
      %v1503 = vsel %vm524, %v1482, %v1484
      %v1504 = vsel %vm524, %v1484, %v1486
      %v1505 = vsel %vm524, %v1486, %v1488
      %v1506 = vsel %vm524, %v1488, %v1490
      %v1507 = vsel %vm524, %v1490, %v1492
      %v1508 = vsel %vm524, %v1492, %v1494
      %v1509 = vsel %vm524, %v1494, %v1496
      %v1510 = vsel %vm524, %v1496, %v1498
      %v1511 = vsel %vm524, %v1498, %v1500
      %v1512 = vsel %vm524, %v1500, %v1502
      %1523 = vst [vmem:[#allocation3 + $0xf0] sm:$0xff] %v1503
      %1524 = vst [vmem:[#allocation3 + $0xf8] sm:$0xff] %v1504
      %1525 = vst [vmem:[#allocation3 + $0x100] sm:$0xff] %v1505
      %1526 = vst [vmem:[#allocation3 + $0x108] sm:$0xff] %v1506
      %1527 = vst [vmem:[#allocation3 + $0x110] sm:$0xff] %v1507
      %1528 = vst [vmem:[#allocation3 + $0x118] sm:$0xff] %v1508
      %1529 = vst [vmem:[#allocation3 + $0x120] sm:$0xff] %v1509
      %1530 = vst [vmem:[#allocation3 + $0x128] sm:$0xff] %v1510
      %1531 = vst [vmem:[#allocation3 + $0x130] sm:$0xff] %v1511
      %1532 = vst [vmem:[#allocation3 + $0x138] sm:$0xff] %v1512
      %v1533 = vld [vmem:[#allocation2 + $0x8] sm:$0xff]
      %v1534 = vld [vmem:[#allocation2 + $0x10] sm:$0xff]
      %v1535 = vld [vmem:[#allocation2 + $0x18] sm:$0xff]
      %v1536 = vld [vmem:[#allocation2 + $0x20] sm:$0xff]
      %v1537 = vld [vmem:[#allocation2 + $0x28] sm:$0xff]
      %v1538 = vld [vmem:[#allocation2 + $0x30] sm:$0xff]
      %v1539 = vld [vmem:[#allocation2 + $0x38] sm:$0xff]
      %v1540 = vld [vmem:[#allocation2 + $0x40] sm:$0xff]
      %v1541 = vld [vmem:[#allocation2 + $0x48] sm:$0xff]
      %v1542 = vld [vmem:[#allocation2 + $0x50] sm:$0xff]
      %1543 = vst [vmem:[#allocation3 + $0x140] sm:$0xff] %v1533
      %1544 = vst [vmem:[#allocation3 + $0x148] sm:$0xff] %v1534
      %1545 = vst [vmem:[#allocation3 + $0x150] sm:$0xff] %v1535
      %1546 = vst [vmem:[#allocation3 + $0x158] sm:$0xff] %v1536
      %1547 = vst [vmem:[#allocation3 + $0x160] sm:$0xff] %v1537
      %1548 = vst [vmem:[#allocation3 + $0x168] sm:$0xff] %v1538
      %1549 = vst [vmem:[#allocation3 + $0x170] sm:$0xff] %v1539
      %1550 = vst [vmem:[#allocation3 + $0x178] sm:$0xff] %v1540
      %1551 = vst [vmem:[#allocation3 + $0x180] sm:$0xff] %v1541
      %1552 = vst [vmem:[#allocation3 + $0x188] sm:$0xff] %v1542
      %v1553 = vld [vmem:[#allocation2 + $0x8] sm:$0xff]
      %v1554 = vld [vmem:[#allocation2 + $0x10] sm:$0xff]
      %v1555 = vld [vmem:[#allocation2 + $0x18] sm:$0xff]
      %v1556 = vld [vmem:[#allocation2 + $0x20] sm:$0xff]
      %v1557 = vld [vmem:[#allocation2 + $0x28] sm:$0xff]
      %v1558 = vld [vmem:[#allocation2 + $0x30] sm:$0xff]
      %v1559 = vld [vmem:[#allocation2 + $0x38] sm:$0xff]
      %v1560 = vld [vmem:[#allocation2 + $0x40] sm:$0xff]
      %v1561 = vld [vmem:[#allocation2 + $0x48] sm:$0xff]
      %v1562 = vld [vmem:[#allocation2 + $0x50] sm:$0xff]
      %v1563 = vld [vmem:[#allocation2 + $0x58] sm:$0xff]
      %1575 = vrot.lane.b32.xlu0 %v1553, 127
      %v1576 = vpop.permute.xlu0 %1575
      %1577 = vrot.lane.b32.xlu0 %v1554, 127
      %v1578 = vpop.permute.xlu0 %1577
      %1579 = vrot.lane.b32.xlu0 %v1555, 127
      %v1580 = vpop.permute.xlu0 %1579
      %1581 = vrot.lane.b32.xlu0 %v1556, 127
      %v1582 = vpop.permute.xlu0 %1581
      %1583 = vrot.lane.b32.xlu0 %v1557, 127
      %v1584 = vpop.permute.xlu0 %1583
      %1585 = vrot.lane.b32.xlu0 %v1558, 127
      %v1586 = vpop.permute.xlu0 %1585
      %1587 = vrot.lane.b32.xlu0 %v1559, 127
      %v1588 = vpop.permute.xlu0 %1587
      %1589 = vrot.lane.b32.xlu0 %v1560, 127
      %v1590 = vpop.permute.xlu0 %1589
      %1591 = vrot.lane.b32.xlu0 %v1561, 127
      %v1592 = vpop.permute.xlu0 %1591
      %1593 = vrot.lane.b32.xlu0 %v1562, 127
      %v1594 = vpop.permute.xlu0 %1593
      %1595 = vrot.lane.b32.xlu0 %v1563, 127
      %v1596 = vpop.permute.xlu0 %1595
      %v1597 = vsel %vm619, %v1576, %v1578
      %v1598 = vsel %vm619, %v1578, %v1580
      %v1599 = vsel %vm619, %v1580, %v1582
      %v1600 = vsel %vm619, %v1582, %v1584
      %v1601 = vsel %vm619, %v1584, %v1586
      %v1602 = vsel %vm619, %v1586, %v1588
      %v1603 = vsel %vm619, %v1588, %v1590
      %v1604 = vsel %vm619, %v1590, %v1592
      %v1605 = vsel %vm619, %v1592, %v1594
      %v1606 = vsel %vm619, %v1594, %v1596
      %1617 = vst [vmem:[#allocation3 + $0x190] sm:$0xff] %v1597
      %1618 = vst [vmem:[#allocation3 + $0x198] sm:$0xff] %v1598
      %1619 = vst [vmem:[#allocation3 + $0x1a0] sm:$0xff] %v1599
      %1620 = vst [vmem:[#allocation3 + $0x1a8] sm:$0xff] %v1600
      %1621 = vst [vmem:[#allocation3 + $0x1b0] sm:$0xff] %v1601
      %1622 = vst [vmem:[#allocation3 + $0x1b8] sm:$0xff] %v1602
      %1623 = vst [vmem:[#allocation3 + $0x1c0] sm:$0xff] %v1603
      %1624 = vst [vmem:[#allocation3 + $0x1c8] sm:$0xff] %v1604
      %1625 = vst [vmem:[#allocation3 + $0x1d0] sm:$0xff] %v1605
      %1626 = vst [vmem:[#allocation3 + $0x1d8] sm:$0xff] %v1606
      %v1627 = vld [vmem:[#allocation2 + $0x8] sm:$0xff]
      %v1628 = vld [vmem:[#allocation2 + $0x10] sm:$0xff]
      %v1629 = vld [vmem:[#allocation2 + $0x18] sm:$0xff]
      %v1630 = vld [vmem:[#allocation2 + $0x20] sm:$0xff]
      %v1631 = vld [vmem:[#allocation2 + $0x28] sm:$0xff]
      %v1632 = vld [vmem:[#allocation2 + $0x30] sm:$0xff]
      %v1633 = vld [vmem:[#allocation2 + $0x38] sm:$0xff]
      %v1634 = vld [vmem:[#allocation2 + $0x40] sm:$0xff]
      %v1635 = vld [vmem:[#allocation2 + $0x48] sm:$0xff]
      %v1636 = vld [vmem:[#allocation2 + $0x50] sm:$0xff]
      %v1637 = vld [vmem:[#allocation2 + $0x58] sm:$0xff]
      %1649 = vrot.lane.b32.xlu0 %v1627, 95
      %v1650 = vpop.permute.xlu0 %1649
      %1651 = vrot.lane.b32.xlu0 %v1628, 95
      %v1652 = vpop.permute.xlu0 %1651
      %1653 = vrot.lane.b32.xlu0 %v1629, 95
      %v1654 = vpop.permute.xlu0 %1653
      %1655 = vrot.lane.b32.xlu0 %v1630, 95
      %v1656 = vpop.permute.xlu0 %1655
      %1657 = vrot.lane.b32.xlu0 %v1631, 95
      %v1658 = vpop.permute.xlu0 %1657
      %1659 = vrot.lane.b32.xlu0 %v1632, 95
      %v1660 = vpop.permute.xlu0 %1659
      %1661 = vrot.lane.b32.xlu0 %v1633, 95
      %v1662 = vpop.permute.xlu0 %1661
      %1663 = vrot.lane.b32.xlu0 %v1634, 95
      %v1664 = vpop.permute.xlu0 %1663
      %1665 = vrot.lane.b32.xlu0 %v1635, 95
      %v1666 = vpop.permute.xlu0 %1665
      %1667 = vrot.lane.b32.xlu0 %v1636, 95
      %v1668 = vpop.permute.xlu0 %1667
      %1669 = vrot.lane.b32.xlu0 %v1637, 95
      %v1670 = vpop.permute.xlu0 %1669
      %v1671 = vsel %vm694, %v1650, %v1652
      %v1672 = vsel %vm694, %v1652, %v1654
      %v1673 = vsel %vm694, %v1654, %v1656
      %v1674 = vsel %vm694, %v1656, %v1658
      %v1675 = vsel %vm694, %v1658, %v1660
      %v1676 = vsel %vm694, %v1660, %v1662
      %v1677 = vsel %vm694, %v1662, %v1664
      %v1678 = vsel %vm694, %v1664, %v1666
      %v1679 = vsel %vm694, %v1666, %v1668
      %v1680 = vsel %vm694, %v1668, %v1670
      %1691 = vst [vmem:[#allocation3 + $0x1e0] sm:$0xff] %v1671
      %1692 = vst [vmem:[#allocation3 + $0x1e8] sm:$0xff] %v1672
      %1693 = vst [vmem:[#allocation3 + $0x1f0] sm:$0xff] %v1673
      %1694 = vst [vmem:[#allocation3 + $0x1f8] sm:$0xff] %v1674
      %1695 = vst [vmem:[#allocation3 + $0x200] sm:$0xff] %v1675
      %1696 = vst [vmem:[#allocation3 + $0x208] sm:$0xff] %v1676
      %1697 = vst [vmem:[#allocation3 + $0x210] sm:$0xff] %v1677
      %1698 = vst [vmem:[#allocation3 + $0x218] sm:$0xff] %v1678
      %1699 = vst [vmem:[#allocation3 + $0x220] sm:$0xff] %v1679
      %1700 = vst [vmem:[#allocation3 + $0x228] sm:$0xff] %v1680
      %v1701 = vld [vmem:[#allocation2 + $0x8] sm:$0xff]
      %v1702 = vld [vmem:[#allocation2 + $0x10] sm:$0xff]
      %v1703 = vld [vmem:[#allocation2 + $0x18] sm:$0xff]
      %v1704 = vld [vmem:[#allocation2 + $0x20] sm:$0xff]
      %v1705 = vld [vmem:[#allocation2 + $0x28] sm:$0xff]
      %v1706 = vld [vmem:[#allocation2 + $0x30] sm:$0xff]
      %v1707 = vld [vmem:[#allocation2 + $0x38] sm:$0xff]
      %v1708 = vld [vmem:[#allocation2 + $0x40] sm:$0xff]
      %v1709 = vld [vmem:[#allocation2 + $0x48] sm:$0xff]
      %v1710 = vld [vmem:[#allocation2 + $0x50] sm:$0xff]
      %v1711 = vld [vmem:[#allocation2 + $0x58] sm:$0xff]
      %1723 = vrot.lane.b32.xlu0 %v1701, 94
      %v1724 = vpop.permute.xlu0 %1723
      %1725 = vrot.lane.b32.xlu0 %v1702, 94
      %v1726 = vpop.permute.xlu0 %1725
      %1727 = vrot.lane.b32.xlu0 %v1703, 94
      %v1728 = vpop.permute.xlu0 %1727
      %1729 = vrot.lane.b32.xlu0 %v1704, 94
      %v1730 = vpop.permute.xlu0 %1729
      %1731 = vrot.lane.b32.xlu0 %v1705, 94
      %v1732 = vpop.permute.xlu0 %1731
      %1733 = vrot.lane.b32.xlu0 %v1706, 94
      %v1734 = vpop.permute.xlu0 %1733
      %1735 = vrot.lane.b32.xlu0 %v1707, 94
      %v1736 = vpop.permute.xlu0 %1735
      %1737 = vrot.lane.b32.xlu0 %v1708, 94
      %v1738 = vpop.permute.xlu0 %1737
      %1739 = vrot.lane.b32.xlu0 %v1709, 94
      %v1740 = vpop.permute.xlu0 %1739
      %1741 = vrot.lane.b32.xlu0 %v1710, 94
      %v1742 = vpop.permute.xlu0 %1741
      %1743 = vrot.lane.b32.xlu0 %v1711, 94
      %v1744 = vpop.permute.xlu0 %1743
      %v1745 = vsel %vm769, %v1724, %v1726
      %v1746 = vsel %vm769, %v1726, %v1728
      %v1747 = vsel %vm769, %v1728, %v1730
      %v1748 = vsel %vm769, %v1730, %v1732
      %v1749 = vsel %vm769, %v1732, %v1734
      %v1750 = vsel %vm769, %v1734, %v1736
      %v1751 = vsel %vm769, %v1736, %v1738
      %v1752 = vsel %vm769, %v1738, %v1740
      %v1753 = vsel %vm769, %v1740, %v1742
      %v1754 = vsel %vm769, %v1742, %v1744
      %1765 = vst [vmem:[#allocation3 + $0x230] sm:$0xff] %v1745
      %1766 = vst [vmem:[#allocation3 + $0x238] sm:$0xff] %v1746
      %1767 = vst [vmem:[#allocation3 + $0x240] sm:$0xff] %v1747
      %1768 = vst [vmem:[#allocation3 + $0x248] sm:$0xff] %v1748
      %1769 = vst [vmem:[#allocation3 + $0x250] sm:$0xff] %v1749
      %1770 = vst [vmem:[#allocation3 + $0x258] sm:$0xff] %v1750
      %1771 = vst [vmem:[#allocation3 + $0x260] sm:$0xff] %v1751
      %1772 = vst [vmem:[#allocation3 + $0x268] sm:$0xff] %v1752
      %1773 = vst [vmem:[#allocation3 + $0x270] sm:$0xff] %v1753
      %1774 = vst [vmem:[#allocation3 + $0x278] sm:$0xff] %v1754
      %v1775 = vld [vmem:[#allocation2 + $0x8] sm:$0xff]
      %v1776 = vld [vmem:[#allocation2 + $0x10] sm:$0xff]
      %v1777 = vld [vmem:[#allocation2 + $0x18] sm:$0xff]
      %v1778 = vld [vmem:[#allocation2 + $0x20] sm:$0xff]
      %v1779 = vld [vmem:[#allocation2 + $0x28] sm:$0xff]
      %v1780 = vld [vmem:[#allocation2 + $0x30] sm:$0xff]
      %v1781 = vld [vmem:[#allocation2 + $0x38] sm:$0xff]
      %v1782 = vld [vmem:[#allocation2 + $0x40] sm:$0xff]
      %v1783 = vld [vmem:[#allocation2 + $0x48] sm:$0xff]
      %v1784 = vld [vmem:[#allocation2 + $0x50] sm:$0xff]
      %v1785 = vld [vmem:[#allocation2 + $0x58] sm:$0xff]
      %1797 = vrot.lane.b32.xlu0 %v1775, 93
      %v1798 = vpop.permute.xlu0 %1797
      %1799 = vrot.lane.b32.xlu0 %v1776, 93
      %v1800 = vpop.permute.xlu0 %1799
      %1801 = vrot.lane.b32.xlu0 %v1777, 93
      %v1802 = vpop.permute.xlu0 %1801
      %1803 = vrot.lane.b32.xlu0 %v1778, 93
      %v1804 = vpop.permute.xlu0 %1803
      %1805 = vrot.lane.b32.xlu0 %v1779, 93
      %v1806 = vpop.permute.xlu0 %1805
      %1807 = vrot.lane.b32.xlu0 %v1780, 93
      %v1808 = vpop.permute.xlu0 %1807
      %1809 = vrot.lane.b32.xlu0 %v1781, 93
      %v1810 = vpop.permute.xlu0 %1809
      %1811 = vrot.lane.b32.xlu0 %v1782, 93
      %v1812 = vpop.permute.xlu0 %1811
      %1813 = vrot.lane.b32.xlu0 %v1783, 93
      %v1814 = vpop.permute.xlu0 %1813
      %1815 = vrot.lane.b32.xlu0 %v1784, 93
      %v1816 = vpop.permute.xlu0 %1815
      %1817 = vrot.lane.b32.xlu0 %v1785, 93
      %v1818 = vpop.permute.xlu0 %1817
      %v1819 = vsel %vm844, %v1798, %v1800
      %v1820 = vsel %vm844, %v1800, %v1802
      %v1821 = vsel %vm844, %v1802, %v1804
      %v1822 = vsel %vm844, %v1804, %v1806
      %v1823 = vsel %vm844, %v1806, %v1808
      %v1824 = vsel %vm844, %v1808, %v1810
      %v1825 = vsel %vm844, %v1810, %v1812
      %v1826 = vsel %vm844, %v1812, %v1814
      %v1827 = vsel %vm844, %v1814, %v1816
      %v1828 = vsel %vm844, %v1816, %v1818
      %1839 = vst [vmem:[#allocation3 + $0x280] sm:$0xff] %v1819
      %1840 = vst [vmem:[#allocation3 + $0x288] sm:$0xff] %v1820
      %1841 = vst [vmem:[#allocation3 + $0x290] sm:$0xff] %v1821
      %1842 = vst [vmem:[#allocation3 + $0x298] sm:$0xff] %v1822
      %1843 = vst [vmem:[#allocation3 + $0x2a0] sm:$0xff] %v1823
      %1844 = vst [vmem:[#allocation3 + $0x2a8] sm:$0xff] %v1824
      %1845 = vst [vmem:[#allocation3 + $0x2b0] sm:$0xff] %v1825
      %1846 = vst [vmem:[#allocation3 + $0x2b8] sm:$0xff] %v1826
      %1847 = vst [vmem:[#allocation3 + $0x2c0] sm:$0xff] %v1827
      %1848 = vst [vmem:[#allocation3 + $0x2c8] sm:$0xff] %v1828
      %s1849 = scalar_lea.vmem %s1, 4
      %v1850 = vld [vmem:[%s1849] sm:$0xf]
      %v1851 = vld [vmem:[#allocation3] sm:$0xff]
      %v1852 = vld [vmem:[#allocation3 + $0x8] sm:$0xff]
      %v1853 = vld [vmem:[#allocation3 + $0x10] sm:$0xff]
      %v1854 = vld [vmem:[#allocation3 + $0x18] sm:$0xff]
      %v1855 = vld [vmem:[#allocation3 + $0x20] sm:$0xff]
      %v1856 = vld [vmem:[#allocation3 + $0x28] sm:$0xff]
      %v1857 = vld [vmem:[#allocation3 + $0x30] sm:$0xff]
      %v1858 = vld [vmem:[#allocation3 + $0x38] sm:$0xff]
      %v1859 = vld [vmem:[#allocation3 + $0x40] sm:$0xff]
      %v1860 = vld [vmem:[#allocation3 + $0x48] sm:$0xff]
      %v1861 = vld [vmem:[#allocation3 + $0x50] sm:$0xff]
      %v1862 = vld [vmem:[#allocation3 + $0x58] sm:$0xff]
      %v1863 = vld [vmem:[#allocation3 + $0x60] sm:$0xff]
      %v1864 = vld [vmem:[#allocation3 + $0x68] sm:$0xff]
      %v1865 = vld [vmem:[#allocation3 + $0x70] sm:$0xff]
      %v1866 = vld [vmem:[#allocation3 + $0x78] sm:$0xff]
      %v1867 = vld [vmem:[#allocation3 + $0x80] sm:$0xff]
      %v1868 = vld [vmem:[#allocation3 + $0x88] sm:$0xff]
      %v1869 = vld [vmem:[#allocation3 + $0x90] sm:$0xff]
      %v1870 = vld [vmem:[#allocation3 + $0x98] sm:$0xff]
      %v1871 = vld [vmem:[#allocation3 + $0xa0] sm:$0xff]
      %v1872 = vld [vmem:[#allocation3 + $0xa8] sm:$0xff]
      %v1873 = vld [vmem:[#allocation3 + $0xb0] sm:$0xff]
      %v1874 = vld [vmem:[#allocation3 + $0xb8] sm:$0xff]
      %v1875 = vld [vmem:[#allocation3 + $0xc0] sm:$0xff]
      %v1876 = vld [vmem:[#allocation3 + $0xc8] sm:$0xff]
      %v1877 = vld [vmem:[#allocation3 + $0xd0] sm:$0xff]
      %v1878 = vld [vmem:[#allocation3 + $0xd8] sm:$0xff]
      %v1879 = vld [vmem:[#allocation3 + $0xe0] sm:$0xff]
      %v1880 = vld [vmem:[#allocation3 + $0xe8] sm:$0xff]
      %v1881 = vld [vmem:[#allocation3 + $0xf0] sm:$0xff]
      %v1882 = vld [vmem:[#allocation3 + $0xf8] sm:$0xff]
      %v1883 = vld [vmem:[#allocation3 + $0x100] sm:$0xff]
      %v1884 = vld [vmem:[#allocation3 + $0x108] sm:$0xff]
      %v1885 = vld [vmem:[#allocation3 + $0x110] sm:$0xff]
      %v1886 = vld [vmem:[#allocation3 + $0x118] sm:$0xff]
      %v1887 = vld [vmem:[#allocation3 + $0x120] sm:$0xff]
      %v1888 = vld [vmem:[#allocation3 + $0x128] sm:$0xff]
      %v1889 = vld [vmem:[#allocation3 + $0x130] sm:$0xff]
      %v1890 = vld [vmem:[#allocation3 + $0x138] sm:$0xff]
      %v1891 = vld [vmem:[#allocation3 + $0x140] sm:$0xff]
      %v1892 = vld [vmem:[#allocation3 + $0x148] sm:$0xff]
      %v1893 = vld [vmem:[#allocation3 + $0x150] sm:$0xff]
      %v1894 = vld [vmem:[#allocation3 + $0x158] sm:$0xff]
      %v1895 = vld [vmem:[#allocation3 + $0x160] sm:$0xff]
      %v1896 = vld [vmem:[#allocation3 + $0x168] sm:$0xff]
      %v1897 = vld [vmem:[#allocation3 + $0x170] sm:$0xff]
      %v1898 = vld [vmem:[#allocation3 + $0x178] sm:$0xff]
      %v1899 = vld [vmem:[#allocation3 + $0x180] sm:$0xff]
      %v1900 = vld [vmem:[#allocation3 + $0x188] sm:$0xff]
      %v1901 = vld [vmem:[#allocation3 + $0x190] sm:$0xff]
      %v1902 = vld [vmem:[#allocation3 + $0x198] sm:$0xff]
      %v1903 = vld [vmem:[#allocation3 + $0x1a0] sm:$0xff]
      %v1904 = vld [vmem:[#allocation3 + $0x1a8] sm:$0xff]
      %v1905 = vld [vmem:[#allocation3 + $0x1b0] sm:$0xff]
      %v1906 = vld [vmem:[#allocation3 + $0x1b8] sm:$0xff]
      %v1907 = vld [vmem:[#allocation3 + $0x1c0] sm:$0xff]
      %v1908 = vld [vmem:[#allocation3 + $0x1c8] sm:$0xff]
      %v1909 = vld [vmem:[#allocation3 + $0x1d0] sm:$0xff]
      %v1910 = vld [vmem:[#allocation3 + $0x1d8] sm:$0xff]
      %v1911 = vld [vmem:[#allocation3 + $0x1e0] sm:$0xff]
      %v1912 = vld [vmem:[#allocation3 + $0x1e8] sm:$0xff]
      %v1913 = vld [vmem:[#allocation3 + $0x1f0] sm:$0xff]
      %v1914 = vld [vmem:[#allocation3 + $0x1f8] sm:$0xff]
      %v1915 = vld [vmem:[#allocation3 + $0x200] sm:$0xff]
      %v1916 = vld [vmem:[#allocation3 + $0x208] sm:$0xff]
      %v1917 = vld [vmem:[#allocation3 + $0x210] sm:$0xff]
      %v1918 = vld [vmem:[#allocation3 + $0x218] sm:$0xff]
      %v1919 = vld [vmem:[#allocation3 + $0x220] sm:$0xff]
      %v1920 = vld [vmem:[#allocation3 + $0x228] sm:$0xff]
      %v1921 = vld [vmem:[#allocation3 + $0x230] sm:$0xff]
      %v1922 = vld [vmem:[#allocation3 + $0x238] sm:$0xff]
      %v1923 = vld [vmem:[#allocation3 + $0x240] sm:$0xff]
      %v1924 = vld [vmem:[#allocation3 + $0x248] sm:$0xff]
      %v1925 = vld [vmem:[#allocation3 + $0x250] sm:$0xff]
      %v1926 = vld [vmem:[#allocation3 + $0x258] sm:$0xff]
      %v1927 = vld [vmem:[#allocation3 + $0x260] sm:$0xff]
      %v1928 = vld [vmem:[#allocation3 + $0x268] sm:$0xff]
      %v1929 = vld [vmem:[#allocation3 + $0x270] sm:$0xff]
      %v1930 = vld [vmem:[#allocation3 + $0x278] sm:$0xff]
      %v1931 = vld [vmem:[#allocation3 + $0x280] sm:$0xff]
      %v1932 = vld [vmem:[#allocation3 + $0x288] sm:$0xff]
      %v1933 = vld [vmem:[#allocation3 + $0x290] sm:$0xff]
      %v1934 = vld [vmem:[#allocation3 + $0x298] sm:$0xff]
      %v1935 = vld [vmem:[#allocation3 + $0x2a0] sm:$0xff]
      %v1936 = vld [vmem:[#allocation3 + $0x2a8] sm:$0xff]
      %v1937 = vld [vmem:[#allocation3 + $0x2b0] sm:$0xff]
      %v1938 = vld [vmem:[#allocation3 + $0x2b8] sm:$0xff]
      %v1939 = vld [vmem:[#allocation3 + $0x2c0] sm:$0xff]
      %v1940 = vld [vmem:[#allocation3 + $0x2c8] sm:$0xff]
      %v1941 = vpack.c.bf16 %v1861, %v1851
      %v1942 = vpack.c.bf16 %v1862, %v1852
      %v1943 = vpack.c.bf16 %v1863, %v1853
      %v1944 = vpack.c.bf16 %v1864, %v1854
      %v1945 = vpack.c.bf16 %v1865, %v1855
      %v1946 = vpack.c.bf16 %v1866, %v1856
      %v1947 = vpack.c.bf16 %v1867, %v1857
      %v1948 = vpack.c.bf16 %v1868, %v1858
      %v1949 = vpack.c.bf16 %v1869, %v1859
      %v1950 = vpack.c.bf16 %v1870, %v1860
      %v1951 = vpack.c.bf16 %v1881, %v1871
      %v1952 = vpack.c.bf16 %v1882, %v1872
      %v1953 = vpack.c.bf16 %v1883, %v1873
      %v1954 = vpack.c.bf16 %v1884, %v1874
      %v1955 = vpack.c.bf16 %v1885, %v1875
      %v1956 = vpack.c.bf16 %v1886, %v1876
      %v1957 = vpack.c.bf16 %v1887, %v1877
      %v1958 = vpack.c.bf16 %v1888, %v1878
      %v1959 = vpack.c.bf16 %v1889, %v1879
      %v1960 = vpack.c.bf16 %v1890, %v1880
      %v1961 = vpack.c.bf16 %v1901, %v1891
      %v1962 = vpack.c.bf16 %v1902, %v1892
      %v1963 = vpack.c.bf16 %v1903, %v1893
      %v1964 = vpack.c.bf16 %v1904, %v1894
      %v1965 = vpack.c.bf16 %v1905, %v1895
      %v1966 = vpack.c.bf16 %v1906, %v1896
      %v1967 = vpack.c.bf16 %v1907, %v1897
      %v1968 = vpack.c.bf16 %v1908, %v1898
      %v1969 = vpack.c.bf16 %v1909, %v1899
      %v1970 = vpack.c.bf16 %v1910, %v1900
      %v1971 = vpack.c.bf16 %v1921, %v1911
      %v1972 = vpack.c.bf16 %v1922, %v1912
      %v1973 = vpack.c.bf16 %v1923, %v1913
      %v1974 = vpack.c.bf16 %v1924, %v1914
      %v1975 = vpack.c.bf16 %v1925, %v1915
      %v1976 = vpack.c.bf16 %v1926, %v1916
      %v1977 = vpack.c.bf16 %v1927, %v1917
      %v1978 = vpack.c.bf16 %v1928, %v1918
      %v1979 = vpack.c.bf16 %v1929, %v1919
      %v1980 = vpack.c.bf16 %v1930, %v1920
      %v1981 = vpack.c.bf16 %v1931, %v1931
      %v1982 = vpack.c.bf16 %v1932, %v1932
      %v1983 = vpack.c.bf16 %v1933, %v1933
      %v1984 = vpack.c.bf16 %v1934, %v1934
      %v1985 = vpack.c.bf16 %v1935, %v1935
      %v1986 = vpack.c.bf16 %v1936, %v1936
      %v1987 = vpack.c.bf16 %v1937, %v1937
      %v1988 = vpack.c.bf16 %v1938, %v1938
      %v1989 = vpack.c.bf16 %v1939, %v1939
      %v1990 = vpack.c.bf16 %v1940, %v1940
      %s1991 = scalar_lea.vmem %s2, 8
      %v1992 = vld [vmem:[%s1991] sm:$0xff]
      %1994 = vset.pattern.permute.xlu0 0
      %1995 = vperm.xlu0 %1994, %v1992
      %v1996 = vpop.permute.xlu0 %1995
      %v1999 = vsel %vm1022, %v1850, 0
      %v2002 = vsel %vm1026, %v1981, 0
      %v2005 = vsel %vm1026, %v1982, 0
      %v2008 = vsel %vm1026, %v1983, 0
      %v2011 = vsel %vm1026, %v1984, 0
      %v2014 = vsel %vm1026, %v1985, 0
      %v2017 = vsel %vm1026, %v1986, 0
      %v2020 = vsel %vm1026, %v1987, 0
      %v2023 = vsel %vm1026, %v1988, 0
      %v2026 = vsel %vm1026, %v1989, 0
      %v2029 = vsel %vm1026, %v1990, 0
      %2031 = vmatpush.bf16.msra.mxu0 0
      %2032 = vmatpush.bf16.msra.mxu0 0
      %2033 = vmatpush.bf16.msra.mxu0 0
      %2034 = vmatpush.bf16.msra.mxu0 %v2002
      %2035 = vmatpush.bf16.msra.mxu0 %v1971
      %2036 = vmatpush.bf16.msra.mxu0 %v1961
      %2037 = vmatpush.bf16.msra.mxu0 %v1951
      %2038 = vmatpush.bf16.msra.mxu0 %v1941
      %2039 = vmatmul.bf16.gmra.mxu0 %v1999
      %v2040 = vpop.f32.mrf.mxu0
      %v2041 = vadd.f32 %v1996, %v2040
      %v2042 = vpop.f32.mrf.mxu0
      %2043 = vdwg.mxu0
      %2044 = vmatpush.bf16.msra.mxu0 0
      %2045 = vmatpush.bf16.msra.mxu0 0
      %2046 = vmatpush.bf16.msra.mxu0 0
      %2047 = vmatpush.bf16.msra.mxu0 %v2005
      %2048 = vmatpush.bf16.msra.mxu0 %v1972
      %2049 = vmatpush.bf16.msra.mxu0 %v1962
      %2050 = vmatpush.bf16.msra.mxu0 %v1952
      %2051 = vmatpush.bf16.msra.mxu0 %v1942
      %2052 = vmatmul.bf16.gmra.mxu0 %v1999
      %v2053 = vpop.f32.mrf.mxu0
      %v2054 = vadd.f32 %v1996, %v2053
      %v2055 = vpop.f32.mrf.mxu0
      %2056 = vdwg.mxu0
      %2057 = vmatpush.bf16.msra.mxu0 0
      %2058 = vmatpush.bf16.msra.mxu0 0
      %2059 = vmatpush.bf16.msra.mxu0 0
      %2060 = vmatpush.bf16.msra.mxu0 %v2008
      %2061 = vmatpush.bf16.msra.mxu0 %v1973
      %2062 = vmatpush.bf16.msra.mxu0 %v1963
      %2063 = vmatpush.bf16.msra.mxu0 %v1953
      %2064 = vmatpush.bf16.msra.mxu0 %v1943
      %2065 = vmatmul.bf16.gmra.mxu0 %v1999
      %v2066 = vpop.f32.mrf.mxu0
      %v2067 = vadd.f32 %v1996, %v2066
      %v2068 = vpop.f32.mrf.mxu0
      %2069 = vdwg.mxu0
      %2070 = vmatpush.bf16.msra.mxu0 0
      %2071 = vmatpush.bf16.msra.mxu0 0
      %2072 = vmatpush.bf16.msra.mxu0 0
      %2073 = vmatpush.bf16.msra.mxu0 %v2011
      %2074 = vmatpush.bf16.msra.mxu0 %v1974
      %2075 = vmatpush.bf16.msra.mxu0 %v1964
      %2076 = vmatpush.bf16.msra.mxu0 %v1954
      %2077 = vmatpush.bf16.msra.mxu0 %v1944
      %2078 = vmatmul.bf16.gmra.mxu0 %v1999
      %v2079 = vpop.f32.mrf.mxu0
      %v2080 = vadd.f32 %v1996, %v2079
      %v2081 = vpop.f32.mrf.mxu0
      %2082 = vdwg.mxu0
      %2083 = vmatpush.bf16.msra.mxu0 0
      %2084 = vmatpush.bf16.msra.mxu0 0
      %2085 = vmatpush.bf16.msra.mxu0 0
      %2086 = vmatpush.bf16.msra.mxu0 %v2014
      %2087 = vmatpush.bf16.msra.mxu0 %v1975
      %2088 = vmatpush.bf16.msra.mxu0 %v1965
      %2089 = vmatpush.bf16.msra.mxu0 %v1955
      %2090 = vmatpush.bf16.msra.mxu0 %v1945
      %2091 = vmatmul.bf16.gmra.mxu0 %v1999
      %v2092 = vpop.f32.mrf.mxu0
      %v2093 = vadd.f32 %v1996, %v2092
      %v2094 = vpop.f32.mrf.mxu0
      %2095 = vdwg.mxu0
      %2096 = vmatpush.bf16.msra.mxu0 0
      %2097 = vmatpush.bf16.msra.mxu0 0
      %2098 = vmatpush.bf16.msra.mxu0 0
      %2099 = vmatpush.bf16.msra.mxu0 %v2017
      %2100 = vmatpush.bf16.msra.mxu0 %v1976
      %2101 = vmatpush.bf16.msra.mxu0 %v1966
      %2102 = vmatpush.bf16.msra.mxu0 %v1956
      %2103 = vmatpush.bf16.msra.mxu0 %v1946
      %2104 = vmatmul.bf16.gmra.mxu0 %v1999
      %v2105 = vpop.f32.mrf.mxu0
      %v2106 = vadd.f32 %v1996, %v2105
      %v2107 = vpop.f32.mrf.mxu0
      %2108 = vdwg.mxu0
      %2109 = vmatpush.bf16.msra.mxu0 0
      %2110 = vmatpush.bf16.msra.mxu0 0
      %2111 = vmatpush.bf16.msra.mxu0 0
      %2112 = vmatpush.bf16.msra.mxu0 %v2020
      %2113 = vmatpush.bf16.msra.mxu0 %v1977
      %2114 = vmatpush.bf16.msra.mxu0 %v1967
      %2115 = vmatpush.bf16.msra.mxu0 %v1957
      %2116 = vmatpush.bf16.msra.mxu0 %v1947
      %2117 = vmatmul.bf16.gmra.mxu0 %v1999
      %v2118 = vpop.f32.mrf.mxu0
      %v2119 = vadd.f32 %v1996, %v2118
      %v2120 = vpop.f32.mrf.mxu0
      %2121 = vdwg.mxu0
      %2122 = vmatpush.bf16.msra.mxu0 0
      %2123 = vmatpush.bf16.msra.mxu0 0
      %2124 = vmatpush.bf16.msra.mxu0 0
      %2125 = vmatpush.bf16.msra.mxu0 %v2023
      %2126 = vmatpush.bf16.msra.mxu0 %v1978
      %2127 = vmatpush.bf16.msra.mxu0 %v1968
      %2128 = vmatpush.bf16.msra.mxu0 %v1958
      %2129 = vmatpush.bf16.msra.mxu0 %v1948
      %2130 = vmatmul.bf16.gmra.mxu0 %v1999
      %v2131 = vpop.f32.mrf.mxu0
      %v2132 = vadd.f32 %v1996, %v2131
      %v2133 = vpop.f32.mrf.mxu0
      %2134 = vdwg.mxu0
      %2135 = vmatpush.bf16.msra.mxu0 0
      %2136 = vmatpush.bf16.msra.mxu0 0
      %2137 = vmatpush.bf16.msra.mxu0 0
      %2138 = vmatpush.bf16.msra.mxu0 %v2026
      %2139 = vmatpush.bf16.msra.mxu0 %v1979
      %2140 = vmatpush.bf16.msra.mxu0 %v1969
      %2141 = vmatpush.bf16.msra.mxu0 %v1959
      %2142 = vmatpush.bf16.msra.mxu0 %v1949
      %2143 = vmatmul.bf16.gmra.mxu0 %v1999
      %v2144 = vpop.f32.mrf.mxu0
      %v2145 = vadd.f32 %v1996, %v2144
      %v2146 = vpop.f32.mrf.mxu0
      %2147 = vdwg.mxu0
      %2148 = vmatpush.bf16.msra.mxu0 0
      %2149 = vmatpush.bf16.msra.mxu0 0
      %2150 = vmatpush.bf16.msra.mxu0 0
      %2151 = vmatpush.bf16.msra.mxu0 %v2029
      %2152 = vmatpush.bf16.msra.mxu0 %v1980
      %2153 = vmatpush.bf16.msra.mxu0 %v1970
      %2154 = vmatpush.bf16.msra.mxu0 %v1960
      %2155 = vmatpush.bf16.msra.mxu0 %v1950
      %2156 = vmatmul.bf16.gmra.mxu0 %v1999
      %v2157 = vpop.f32.mrf.mxu0
      %v2158 = vadd.f32 %v1996, %v2157
      %v2159 = vpop.f32.mrf.mxu0
      %2160 = vdwg.mxu0
      %vm2161 = vcmp.ge.f32.partialorder %v2041, 0.0
      %vm2162 = vcmp.ge.f32.partialorder %v2054, 0.0
      %vm2163 = vcmp.ge.f32.partialorder %v2067, 0.0
      %vm2164 = vcmp.ge.f32.partialorder %v2080, 0.0
      %vm2165 = vcmp.ge.f32.partialorder %v2093, 0.0
      %vm2166 = vcmp.ge.f32.partialorder %v2106, 0.0
      %vm2167 = vcmp.ge.f32.partialorder %v2119, 0.0
      %vm2168 = vcmp.ge.f32.partialorder %v2132, 0.0
      %vm2169 = vcmp.ge.f32.partialorder %v2145, 0.0
      %vm2170 = vcmp.ge.f32.partialorder %v2158, 0.0
      %v2171 = vmul.f32 %v2041, 0.1
      %v2172 = vmul.f32 %v2054, 0.1
      %v2173 = vmul.f32 %v2067, 0.1
      %v2174 = vmul.f32 %v2080, 0.1
      %v2175 = vmul.f32 %v2093, 0.1
      %v2176 = vmul.f32 %v2106, 0.1
      %v2177 = vmul.f32 %v2119, 0.1
      %v2178 = vmul.f32 %v2132, 0.1
      %v2179 = vmul.f32 %v2145, 0.1
      %v2180 = vmul.f32 %v2158, 0.1
      %v2181 = vsel %vm2161, %v2041, %v2171
      %v2182 = vsel %vm2162, %v2054, %v2172
      %v2183 = vsel %vm2163, %v2067, %v2173
      %v2184 = vsel %vm2164, %v2080, %v2174
      %v2185 = vsel %vm2165, %v2093, %v2175
      %v2186 = vsel %vm2166, %v2106, %v2176
      %v2187 = vsel %vm2167, %v2119, %v2177
      %v2188 = vsel %vm2168, %v2132, %v2178
      %v2189 = vsel %vm2169, %v2145, %v2179
      %v2190 = vsel %vm2170, %v2158, %v2180
      %2191 = vst [vmem:[%s197] sm:$0xff] %v2181
      %2192 = vst [vmem:[%s197 + $0x8] sm:$0xff] %v2182
      %2193 = vst [vmem:[%s197 + $0x10] sm:$0xff] %v2183
      %2194 = vst [vmem:[%s197 + $0x18] sm:$0xff] %v2184
      %2195 = vst [vmem:[%s197 + $0x20] sm:$0xff] %v2185
      %2196 = vst [vmem:[%s197 + $0x28] sm:$0xff] %v2186
      %2197 = vst [vmem:[%s197 + $0x30] sm:$0xff] %v2187
      %2198 = vst [vmem:[%s197 + $0x38] sm:$0xff] %v2188
      %2199 = vst [vmem:[%s197 + $0x40] sm:$0xff] %v2189
      %2200 = vst [vmem:[%s197 + $0x48] sm:$0xff] %v2190
      %p2201 = scmp.lt.s32.totalorder %s15, 1
      %s2202 = scalar_select %p2201, %s15, 1
      %s2203 = smul.addr %s2202, 10
      %s2204 = smul.addr %s2203, 8
      %s2205 = scalar_lea.vmem %s4, %s2204
      // Predicated region
      $region37: #{predeblur_forward.7} parent=35 // pred_check
        %p2206 = pneg %p122
      $region38: #{predeblur_forward.7} parent=35 // pred_check_branch
        %2208 = sbr.rel (%p2206) target = $region40
      $region39: #{predeblur_forward.7} parent=35 // pred_region
        _
      $region40: #{predeblur_forward.7} parent=35 // pred_fallthru
        _
    $region36: #{predeblur_forward.7} parent=5 // pred_fallthru
      _
    %p2209 = scmp.le.s32.totalorder 2, %s10
    // Predicated region
    $region41: #{predeblur_forward.7} parent=5 // pred_check
      %p2210 = pneg %p2209
    $region42: #{predeblur_forward.7} parent=5 // pred_check_branch
      %2212 = sbr.rel (%p2210) target = $region44
    $region43: #{predeblur_forward.7} parent=5 // pred_region
      %s2213 = ssub.s32 %s10, 2
      // Predicated region
      $region45: #{predeblur_forward.7} parent=43 // pred_check
        %p2214 = pneg %p128
      $region46: #{predeblur_forward.7} parent=43 // pred_check_branch
        %2216 = sbr.rel (%p2214) target = $region48
      $region47: #{predeblur_forward.7} parent=43 // pred_region
        %p2217 = scmp.lt.s32.totalorder %s16, 1
        %s2218 = scalar_select %p2217, %s16, 1
        %s2219 = smul.addr %s2218, 10
        %s2220 = smul.addr %s2219, 8
        %s2221 = scalar_lea.vmem %s4, %s2220
      $region48: #{predeblur_forward.7} parent=43 // pred_fallthru
        _
    $region44: #{predeblur_forward.7} parent=5 // pred_fallthru
      _
  $region6: #{predeblur_forward.7} parent=0 // loop_footer
    %s14 = sadd.s32 1, %s10
  $region7: #{predeblur_forward.7} parent=0 // loop_footer_branch
    %9 = sbr.rel target = $region3
  $region8: #{predeblur_forward.7} parent=0 // loop_exit
    _

// kernel: predeblur_forward.8
$region0: #{predeblur_forward.8}
  #allocation0 [shape = 'u32[]', space=smem, size = 0x4, offset = 0x4, fixed_abs, tag = 'smem constant byte address 0x4 - core index']
  #allocation1 [shape = 'u32[72,128]{1,0:T(1,128)}', space=vmem, size = 0x9000, scoped, tag = 'internal scratch']
  #allocation2 [shape = 'f32[8,640]{1,0:T(8,128)}', space=vmem, size = 0x5000, scoped, tag = 'scratch operand']
  #allocation3 [shape = 'f32[72,384]{1,0:T(8,128)}', space=vmem, size = 0x1b000, scoped, tag = 'scratch operand']
  %s0 = inlined_call_operand.vmem [shape: f32[2,8,384], index: 0, kind: input, shape index: {}]
  %s1 = inlined_call_operand.vmem [shape: bf16[1,8,72], index: 1, kind: input, shape index: {}]
  %s2 = inlined_call_operand.vmem [shape: f32[1,8,1], index: 2, kind: input, shape index: {}]
  %s3 = inlined_call_operand.vmem [shape: f32[1,384], index: 3, kind: input, shape index: {}]
  %s4 = inlined_call_operand.vmem [shape: f32[2,8,384], index: 4, kind: output, shape index: {}]
  %s5 = sld [smem:[#allocation0]]
  $region49: #{predeblur_forward.8} parent=0
    _
  %s7 = ssub.s32 1, %s5
  %s8 = scalar_select 0, %s7, %s5
  loop: start=0, step=1, limit=4
  $region2: #{predeblur_forward.8} parent=0 // loop_pre_header
    _
  $region3: #{predeblur_forward.8} parent=0 // loop_header
    %s10 = sphi 0, %s14
    %p11 = scmp.ge.s32.totalorder %s10, 4
    %s20 = sphi 0, %s22
    %s23 = sphi 0, %s20
    %s24 = sphi 0, %s23
    %s40 = sphi 0, %s24
    %s44 = sphi 0, %s44
    %s46 = sphi 0, %s44
    %s47 = sphi 0, %s46
    %s61 = sphi 0, %s47
    %s65 = sphi 0, %s65
    %s67 = sphi 0, %s65
    %s68 = sphi 0, %s67
    %s82 = sphi 0, %s68
    %s86 = sphi 0, %s86
    %s88 = sphi 0, %s86
    %s89 = sphi 0, %s88
    %s103 = sphi 0, %s89
    %s109 = sphi 0, %s111
    %s112 = sphi 0, %s109
    %s113 = sphi 0, %s112
    %s129 = sphi 0, %s113
  $region4: #{predeblur_forward.8} parent=0 // loop_header_branch
    %13 = sbr.rel (%p11) target = $region8
  $region5: #{predeblur_forward.8} parent=0 // loop_body
    %s15 = ssub.s32 %s10, 1
    %s16 = ssub.s32 %s10, 2
    %s17 = sadd.s32 %s10, 1
    %s18 = ssub.s32 %s10, %s17
    %p19 = scmp.eq.s32.totalorder %s18, 0
    %s21 = sadd.s32 %s20, 1
    %s22 = scalar_select %p19, %s20, %s21
    %p25 = pneg %p19
    %p26 = scmp.eq.s32.totalorder %s10, 1
    %p27 = por %p25, %p26
    %p28 = scmp.ne.s32.totalorder %s20, %s23
    %p29 = scmp.eq.s32.totalorder %s10, 0
    %p30 = por %p28, %p29
    %p31 = scmp.ne.s32.totalorder %s20, %s23
    %p32 = scmp.eq.s32.totalorder %s15, 1
    %p33 = por %p31, %p32
    %p34 = scmp.ne.s32.totalorder %s23, %s24
    %p35 = scmp.eq.s32.totalorder %s15, 0
    %p36 = por %p34, %p35
    %p37 = scmp.ne.s32.totalorder %s23, %s24
    %p38 = scmp.eq.s32.totalorder %s16, 1
    %p39 = por %p37, %p38
    %p41 = scmp.ne.s32.totalorder %s24, %s40
    %p42 = scmp.eq.s32.totalorder %s16, 0
    %p43 = por %p41, %p42
    %s45 = sadd.s32 %s44, 1
    %p48 = scmp.eq.s32.totalorder %s10, 1
    %p49 = scmp.ne.s32.totalorder %s44, %s46
    %p50 = scmp.eq.s32.totalorder %s10, 0
    %p51 = por %p49, %p50
    %p52 = scmp.ne.s32.totalorder %s44, %s46
    %p53 = scmp.eq.s32.totalorder %s15, 1
    %p54 = por %p52, %p53
    %p55 = scmp.ne.s32.totalorder %s46, %s47
    %p56 = scmp.eq.s32.totalorder %s15, 0
    %p57 = por %p55, %p56
    %p58 = scmp.ne.s32.totalorder %s46, %s47
    %p59 = scmp.eq.s32.totalorder %s16, 1
    %p60 = por %p58, %p59
    %p62 = scmp.ne.s32.totalorder %s47, %s61
    %p63 = scmp.eq.s32.totalorder %s16, 0
    %p64 = por %p62, %p63
    %s66 = sadd.s32 %s65, 1
    %p69 = scmp.eq.s32.totalorder %s10, 1
    %p70 = scmp.ne.s32.totalorder %s65, %s67
    %p71 = scmp.eq.s32.totalorder %s10, 0
    %p72 = por %p70, %p71
    %p73 = scmp.ne.s32.totalorder %s65, %s67
    %p74 = scmp.eq.s32.totalorder %s15, 1
    %p75 = por %p73, %p74
    %p76 = scmp.ne.s32.totalorder %s67, %s68
    %p77 = scmp.eq.s32.totalorder %s15, 0
    %p78 = por %p76, %p77
    %p79 = scmp.ne.s32.totalorder %s67, %s68
    %p80 = scmp.eq.s32.totalorder %s16, 1
    %p81 = por %p79, %p80
    %p83 = scmp.ne.s32.totalorder %s68, %s82
    %p84 = scmp.eq.s32.totalorder %s16, 0
    %p85 = por %p83, %p84
    %s87 = sadd.s32 %s86, 1
    %p90 = scmp.eq.s32.totalorder %s10, 1
    %p91 = scmp.ne.s32.totalorder %s86, %s88
    %p92 = scmp.eq.s32.totalorder %s10, 0
    %p93 = por %p91, %p92
    %p94 = scmp.ne.s32.totalorder %s86, %s88
    %p95 = scmp.eq.s32.totalorder %s15, 1
    %p96 = por %p94, %p95
    %p97 = scmp.ne.s32.totalorder %s88, %s89
    %p98 = scmp.eq.s32.totalorder %s15, 0
    %p99 = por %p97, %p98
    %p100 = scmp.ne.s32.totalorder %s88, %s89
    %p101 = scmp.eq.s32.totalorder %s16, 1
    %p102 = por %p100, %p101
    %p104 = scmp.ne.s32.totalorder %s89, %s103
    %p105 = scmp.eq.s32.totalorder %s16, 0
    %p106 = por %p104, %p105
    %s107 = ssub.s32 %s10, %s17
    %p108 = scmp.eq.s32.totalorder %s107, 0
    %s110 = sadd.s32 %s109, 1
    %s111 = scalar_select %p108, %s109, %s110
    %p114 = pneg %p108
    %p115 = scmp.eq.s32.totalorder %s10, 1
    %p116 = por %p114, %p115
    %p117 = scmp.ne.s32.totalorder %s109, %s112
    %p118 = scmp.eq.s32.totalorder %s10, 0
    %p119 = por %p117, %p118
    %p120 = scmp.ne.s32.totalorder %s109, %s112
    %p121 = scmp.eq.s32.totalorder %s15, 1
    %p122 = por %p120, %p121
    %p123 = scmp.ne.s32.totalorder %s112, %s113
    %p124 = scmp.eq.s32.totalorder %s15, 0
    %p125 = por %p123, %p124
    %p126 = scmp.ne.s32.totalorder %s112, %s113
    %p127 = scmp.eq.s32.totalorder %s16, 1
    %p128 = por %p126, %p127
    %p130 = scmp.ne.s32.totalorder %s113, %s129
    %p131 = scmp.eq.s32.totalorder %s16, 0
    %p132 = por %p130, %p131
    %p133 = scmp.le.s32.totalorder 1, %s10
    %p134 = scmp.lt.s32.totalorder %s10, 3
    %p135 = pnand %p133, %p134
    %p136 = pneg %p135
    // Predicated region
    $region9: #{predeblur_forward.8} parent=5 // pred_check
      _
    $region10: #{predeblur_forward.8} parent=5 // pred_check_branch
      %138 = sbr.rel (%p135) target = $region12
    $region11: #{predeblur_forward.8} parent=5 // pred_region
      %s139 = ssub.s32 %s10, 1
      // Predicated region
      $region13: #{predeblur_forward.8} parent=11 // pred_check
        %p140 = pneg %p57
      $region14: #{predeblur_forward.8} parent=11 // pred_check_branch
        %142 = sbr.rel (%p140) target = $region16
      $region15: #{predeblur_forward.8} parent=11 // pred_region
        _
      $region16: #{predeblur_forward.8} parent=11 // pred_fallthru
        _
      // Predicated region
      $region17: #{predeblur_forward.8} parent=11 // pred_check
        %p143 = pneg %p78
      $region18: #{predeblur_forward.8} parent=11 // pred_check_branch
        %145 = sbr.rel (%p143) target = $region20
      $region19: #{predeblur_forward.8} parent=11 // pred_region
        _
      $region20: #{predeblur_forward.8} parent=11 // pred_fallthru
        _
      // Predicated region
      $region21: #{predeblur_forward.8} parent=11 // pred_check
        %p146 = pneg %p99
      $region22: #{predeblur_forward.8} parent=11 // pred_check_branch
        %148 = sbr.rel (%p146) target = $region24
      $region23: #{predeblur_forward.8} parent=11 // pred_region
        _
      $region24: #{predeblur_forward.8} parent=11 // pred_fallthru
        _
    $region12: #{predeblur_forward.8} parent=5 // pred_fallthru
      _
    %p149 = scmp.lt.s32.totalorder %s10, 2
    // Predicated region
    $region25: #{predeblur_forward.8} parent=5 // pred_check
      %p150 = pneg %p149
    $region26: #{predeblur_forward.8} parent=5 // pred_check_branch
      %152 = sbr.rel (%p150) target = $region28
    $region27: #{predeblur_forward.8} parent=5 // pred_region
      // Predicated region
      $region29: #{predeblur_forward.8} parent=27 // pred_check
        %p153 = pneg %p30
      $region30: #{predeblur_forward.8} parent=27 // pred_check_branch
        %155 = sbr.rel (%p153) target = $region32
      $region31: #{predeblur_forward.8} parent=27 // pred_region
        %p156 = scmp.lt.s32.totalorder %s10, 1
        %s157 = scalar_select %p156, %s10, 1
        %s158 = smul.addr %s157, 3
        %s159 = smul.addr %s158, 8
        %s160 = scalar_lea.vmem %s0, %s159
      $region32: #{predeblur_forward.8} parent=27 // pred_fallthru
        _
    $region28: #{predeblur_forward.8} parent=5 // pred_fallthru
      _
    %p161 = scmp.le.s32.totalorder 1, %s10
    %p162 = scmp.lt.s32.totalorder %s10, 3
    %p163 = pnand %p161, %p162
    %p164 = pneg %p163
    // Predicated region
    $region33: #{predeblur_forward.8} parent=5 // pred_check
      _
    $region34: #{predeblur_forward.8} parent=5 // pred_check_branch
      %166 = sbr.rel (%p163) target = $region36
    $region35: #{predeblur_forward.8} parent=5 // pred_region
      %s167 = ssub.s32 %s10, 1
      %p168 = scmp.lt.s32.totalorder %s15, 1
      %s169 = scalar_select %p168, %s15, 1
      %s170 = smul.addr %s169, 3
      %s171 = smul.addr %s170, 8
      %s172 = scalar_lea.vmem %s0, %s171
      %p173 = pneg %p36
      %p174 = pneg %p33
      %p175 = pneg %p57
      %p176 = pneg %p54
      %p177 = pneg %p78
      %p178 = pneg %p75
      %p179 = pneg %p99
      %p180 = pneg %p96
      %p181 = pneg %p125
      %p182 = pneg %p122
      %p183 = scmp.lt.s32.totalorder %s15, 1
      %s184 = scalar_select %p183, %s15, 1
      %s185 = smul.addr %s184, 3
      %s186 = smul.addr %s185, 8
      %s187 = scalar_lea.vmem %s4, %s186
      %p188 = scmp.lt.s32.totalorder %s15, 1
      %s189 = scalar_select %p188, %s15, 1
      %s190 = smul.addr %s189, 3
      %s191 = smul.addr %s190, 8
      %s192 = scalar_lea.vmem %s0, %s191
      %p193 = scmp.lt.s32.totalorder %s15, 1
      %s194 = scalar_select %p193, %s15, 1
      %s195 = smul.addr %s194, 3
      %s196 = smul.addr %s195, 8
      %s197 = scalar_lea.vmem %s4, %s196
      %v199 = vld [vmem:[%s3] sm:$0x7]
      %200 = vst [vmem:[#allocation2] sm:$0xff] 0.0
      %201 = vst [vmem:[#allocation2 + $0x20] sm:$0xff] 0.0
      %v202 = vld [vmem:[%s192] sm:$0xff]
      %v203 = vld [vmem:[%s192 + $0x8] sm:$0xff]
      %v204 = vld [vmem:[%s192 + $0x10] sm:$0xff]
      %v206 = vperm.slane %v199, 0
      %v207 = vperm.slane %v199, 1
      %v208 = vperm.slane %v199, 2
      %v212 = vmul.f32 %v202, %v206
      %v213 = vmul.f32 %v203, %v207
      %v214 = vmul.f32 %v204, %v208
      %215 = vst [vmem:[#allocation2 + $0x8] sm:$0xff] %v212
      %216 = vst [vmem:[#allocation2 + $0x10] sm:$0xff] %v213
      %217 = vst [vmem:[#allocation2 + $0x18] sm:$0xff] %v214
      %v218 = vld [vmem:[#allocation2] sm:$0xff]
      %v219 = vld [vmem:[#allocation2 + $0x8] sm:$0xff]
      %v220 = vld [vmem:[#allocation2 + $0x10] sm:$0xff]
      %v221 = vld [vmem:[#allocation2 + $0x18] sm:$0xff]
      %226 = vrot.lane.b32.xlu0 %v218, 19
      %v227 = vpop.permute.xlu0 %226
      %228 = vrot.lane.b32.xlu0 %v219, 19
      %v229 = vpop.permute.xlu0 %228
      %230 = vrot.lane.b32.xlu0 %v220, 19
      %v231 = vpop.permute.xlu0 %230
      %232 = vrot.lane.b32.xlu0 %v221, 19
      %v233 = vpop.permute.xlu0 %232
      %vm234 = vcmask 154624
      %v235 = vsel %vm234, %v227, %v229
      %v236 = vsel %vm234, %v229, %v231
      %v237 = vsel %vm234, %v231, %v233
      %241 = vst [vmem:[#allocation3] sm:$0xff] %v235
      %242 = vst [vmem:[#allocation3 + $0x8] sm:$0xff] %v236
      %243 = vst [vmem:[#allocation3 + $0x10] sm:$0xff] %v237
      %v244 = vld [vmem:[#allocation2] sm:$0xff]
      %v245 = vld [vmem:[#allocation2 + $0x8] sm:$0xff]
      %v246 = vld [vmem:[#allocation2 + $0x10] sm:$0xff]
      %v247 = vld [vmem:[#allocation2 + $0x18] sm:$0xff]
      %252 = vrot.lane.b32.xlu0 %v244, 18
      %v253 = vpop.permute.xlu0 %252
      %254 = vrot.lane.b32.xlu0 %v245, 18
      %v255 = vpop.permute.xlu0 %254
      %256 = vrot.lane.b32.xlu0 %v246, 18
      %v257 = vpop.permute.xlu0 %256
      %258 = vrot.lane.b32.xlu0 %v247, 18
      %v259 = vpop.permute.xlu0 %258
      %vm260 = vcmask 146432
      %v261 = vsel %vm260, %v253, %v255
      %v262 = vsel %vm260, %v255, %v257
      %v263 = vsel %vm260, %v257, %v259
      %267 = vst [vmem:[#allocation3 + $0x18] sm:$0xff] %v261
      %268 = vst [vmem:[#allocation3 + $0x20] sm:$0xff] %v262
      %269 = vst [vmem:[#allocation3 + $0x28] sm:$0xff] %v263
      %v270 = vld [vmem:[#allocation2] sm:$0xff]
      %v271 = vld [vmem:[#allocation2 + $0x8] sm:$0xff]
      %v272 = vld [vmem:[#allocation2 + $0x10] sm:$0xff]
      %v273 = vld [vmem:[#allocation2 + $0x18] sm:$0xff]
      %278 = vrot.lane.b32.xlu0 %v270, 17
      %v279 = vpop.permute.xlu0 %278
      %280 = vrot.lane.b32.xlu0 %v271, 17
      %v281 = vpop.permute.xlu0 %280
      %282 = vrot.lane.b32.xlu0 %v272, 17
      %v283 = vpop.permute.xlu0 %282
      %284 = vrot.lane.b32.xlu0 %v273, 17
      %v285 = vpop.permute.xlu0 %284
      %vm286 = vcmask 138240
      %v287 = vsel %vm286, %v279, %v281
      %v288 = vsel %vm286, %v281, %v283
      %v289 = vsel %vm286, %v283, %v285
      %293 = vst [vmem:[#allocation3 + $0x30] sm:$0xff] %v287
      %294 = vst [vmem:[#allocation3 + $0x38] sm:$0xff] %v288
      %295 = vst [vmem:[#allocation3 + $0x40] sm:$0xff] %v289
      %v296 = vld [vmem:[#allocation2] sm:$0xff]
      %v297 = vld [vmem:[#allocation2 + $0x8] sm:$0xff]
      %v298 = vld [vmem:[#allocation2 + $0x10] sm:$0xff]
      %v299 = vld [vmem:[#allocation2 + $0x18] sm:$0xff]
      %304 = vrot.lane.b32.xlu0 %v296, 1
      %v305 = vpop.permute.xlu0 %304
      %306 = vrot.lane.b32.xlu0 %v297, 1
      %v307 = vpop.permute.xlu0 %306
      %308 = vrot.lane.b32.xlu0 %v298, 1
      %v309 = vpop.permute.xlu0 %308
      %310 = vrot.lane.b32.xlu0 %v299, 1
      %v311 = vpop.permute.xlu0 %310
      %vm312 = vcmask 7168
      %v313 = vsel %vm312, %v305, %v307
      %v314 = vsel %vm312, %v307, %v309
      %v315 = vsel %vm312, %v309, %v311
      %319 = vst [vmem:[#allocation3 + $0x48] sm:$0xff] %v313
      %320 = vst [vmem:[#allocation3 + $0x50] sm:$0xff] %v314
      %321 = vst [vmem:[#allocation3 + $0x58] sm:$0xff] %v315
      %v322 = vld [vmem:[#allocation2 + $0x8] sm:$0xff]
      %v323 = vld [vmem:[#allocation2 + $0x10] sm:$0xff]
      %v324 = vld [vmem:[#allocation2 + $0x18] sm:$0xff]
      %325 = vst [vmem:[#allocation3 + $0x60] sm:$0xff] %v322
      %326 = vst [vmem:[#allocation3 + $0x68] sm:$0xff] %v323
      %327 = vst [vmem:[#allocation3 + $0x70] sm:$0xff] %v324
      %v328 = vld [vmem:[#allocation2 + $0x8] sm:$0xff]
      %v329 = vld [vmem:[#allocation2 + $0x10] sm:$0xff]
      %v330 = vld [vmem:[#allocation2 + $0x18] sm:$0xff]
      %v331 = vld [vmem:[#allocation2 + $0x20] sm:$0xff]
      %336 = vrot.lane.b32.xlu0 %v328, 127
      %v337 = vpop.permute.xlu0 %336
      %338 = vrot.lane.b32.xlu0 %v329, 127
      %v339 = vpop.permute.xlu0 %338
      %340 = vrot.lane.b32.xlu0 %v330, 127
      %v341 = vpop.permute.xlu0 %340
      %342 = vrot.lane.b32.xlu0 %v331, 127
      %v343 = vpop.permute.xlu0 %342
      %vm344 = vcmask 1039360
      %v345 = vsel %vm344, %v337, %v339
      %v346 = vsel %vm344, %v339, %v341
      %v347 = vsel %vm344, %v341, %v343
      %351 = vst [vmem:[#allocation3 + $0x78] sm:$0xff] %v345
      %352 = vst [vmem:[#allocation3 + $0x80] sm:$0xff] %v346
      %353 = vst [vmem:[#allocation3 + $0x88] sm:$0xff] %v347
      %v354 = vld [vmem:[#allocation2 + $0x8] sm:$0xff]
      %v355 = vld [vmem:[#allocation2 + $0x10] sm:$0xff]
      %v356 = vld [vmem:[#allocation2 + $0x18] sm:$0xff]
      %v357 = vld [vmem:[#allocation2 + $0x20] sm:$0xff]
      %362 = vrot.lane.b32.xlu0 %v354, 111
      %v363 = vpop.permute.xlu0 %362
      %364 = vrot.lane.b32.xlu0 %v355, 111
      %v365 = vpop.permute.xlu0 %364
      %366 = vrot.lane.b32.xlu0 %v356, 111
      %v367 = vpop.permute.xlu0 %366
      %368 = vrot.lane.b32.xlu0 %v357, 111
      %v369 = vpop.permute.xlu0 %368
      %vm370 = vcmask 908288
      %v371 = vsel %vm370, %v363, %v365
      %v372 = vsel %vm370, %v365, %v367
      %v373 = vsel %vm370, %v367, %v369
      %377 = vst [vmem:[#allocation3 + $0x90] sm:$0xff] %v371
      %378 = vst [vmem:[#allocation3 + $0x98] sm:$0xff] %v372
      %379 = vst [vmem:[#allocation3 + $0xa0] sm:$0xff] %v373
      %v380 = vld [vmem:[#allocation2 + $0x8] sm:$0xff]
      %v381 = vld [vmem:[#allocation2 + $0x10] sm:$0xff]
      %v382 = vld [vmem:[#allocation2 + $0x18] sm:$0xff]
      %v383 = vld [vmem:[#allocation2 + $0x20] sm:$0xff]
      %388 = vrot.lane.b32.xlu0 %v380, 110
      %v389 = vpop.permute.xlu0 %388
      %390 = vrot.lane.b32.xlu0 %v381, 110
      %v391 = vpop.permute.xlu0 %390
      %392 = vrot.lane.b32.xlu0 %v382, 110
      %v393 = vpop.permute.xlu0 %392
      %394 = vrot.lane.b32.xlu0 %v383, 110
      %v395 = vpop.permute.xlu0 %394
      %vm396 = vcmask 900096
      %v397 = vsel %vm396, %v389, %v391
      %v398 = vsel %vm396, %v391, %v393
      %v399 = vsel %vm396, %v393, %v395
      %403 = vst [vmem:[#allocation3 + $0xa8] sm:$0xff] %v397
      %404 = vst [vmem:[#allocation3 + $0xb0] sm:$0xff] %v398
      %405 = vst [vmem:[#allocation3 + $0xb8] sm:$0xff] %v399
      %v406 = vld [vmem:[#allocation2 + $0x8] sm:$0xff]
      %v407 = vld [vmem:[#allocation2 + $0x10] sm:$0xff]
      %v408 = vld [vmem:[#allocation2 + $0x18] sm:$0xff]
      %v409 = vld [vmem:[#allocation2 + $0x20] sm:$0xff]
      %414 = vrot.lane.b32.xlu0 %v406, 109
      %v415 = vpop.permute.xlu0 %414
      %416 = vrot.lane.b32.xlu0 %v407, 109
      %v417 = vpop.permute.xlu0 %416
      %418 = vrot.lane.b32.xlu0 %v408, 109
      %v419 = vpop.permute.xlu0 %418
      %420 = vrot.lane.b32.xlu0 %v409, 109
      %v421 = vpop.permute.xlu0 %420
      %vm422 = vcmask 891904
      %v423 = vsel %vm422, %v415, %v417
      %v424 = vsel %vm422, %v417, %v419
      %v425 = vsel %vm422, %v419, %v421
      %429 = vst [vmem:[#allocation3 + $0xc0] sm:$0xff] %v423
      %430 = vst [vmem:[#allocation3 + $0xc8] sm:$0xff] %v424
      %431 = vst [vmem:[#allocation3 + $0xd0] sm:$0xff] %v425
      %v432 = vld [vmem:[%s1] sm:$0xf]
      %v433 = vld [vmem:[#allocation3] sm:$0xff]
      %v434 = vld [vmem:[#allocation3 + $0x8] sm:$0xff]
      %v435 = vld [vmem:[#allocation3 + $0x10] sm:$0xff]
      %v436 = vld [vmem:[#allocation3 + $0x18] sm:$0xff]
      %v437 = vld [vmem:[#allocation3 + $0x20] sm:$0xff]
      %v438 = vld [vmem:[#allocation3 + $0x28] sm:$0xff]
      %v439 = vld [vmem:[#allocation3 + $0x30] sm:$0xff]
      %v440 = vld [vmem:[#allocation3 + $0x38] sm:$0xff]
      %v441 = vld [vmem:[#allocation3 + $0x40] sm:$0xff]
      %v442 = vld [vmem:[#allocation3 + $0x48] sm:$0xff]
      %v443 = vld [vmem:[#allocation3 + $0x50] sm:$0xff]
      %v444 = vld [vmem:[#allocation3 + $0x58] sm:$0xff]
      %v445 = vld [vmem:[#allocation3 + $0x60] sm:$0xff]
      %v446 = vld [vmem:[#allocation3 + $0x68] sm:$0xff]
      %v447 = vld [vmem:[#allocation3 + $0x70] sm:$0xff]
      %v448 = vld [vmem:[#allocation3 + $0x78] sm:$0xff]
      %v449 = vld [vmem:[#allocation3 + $0x80] sm:$0xff]
      %v450 = vld [vmem:[#allocation3 + $0x88] sm:$0xff]
      %v451 = vld [vmem:[#allocation3 + $0x90] sm:$0xff]
      %v452 = vld [vmem:[#allocation3 + $0x98] sm:$0xff]
      %v453 = vld [vmem:[#allocation3 + $0xa0] sm:$0xff]
      %v454 = vld [vmem:[#allocation3 + $0xa8] sm:$0xff]
      %v455 = vld [vmem:[#allocation3 + $0xb0] sm:$0xff]
      %v456 = vld [vmem:[#allocation3 + $0xb8] sm:$0xff]
      %v457 = vld [vmem:[#allocation3 + $0xc0] sm:$0xff]
      %v458 = vld [vmem:[#allocation3 + $0xc8] sm:$0xff]
      %v459 = vld [vmem:[#allocation3 + $0xd0] sm:$0xff]
      %v460 = vpack.c.bf16 %v436, %v433
      %v461 = vpack.c.bf16 %v437, %v434
      %v462 = vpack.c.bf16 %v438, %v435
      %v463 = vpack.c.bf16 %v442, %v439
      %v464 = vpack.c.bf16 %v443, %v440
      %v465 = vpack.c.bf16 %v444, %v441
      %v466 = vpack.c.bf16 %v448, %v445
      %v467 = vpack.c.bf16 %v449, %v446
      %v468 = vpack.c.bf16 %v450, %v447
      %v469 = vpack.c.bf16 %v454, %v451
      %v470 = vpack.c.bf16 %v455, %v452
      %v471 = vpack.c.bf16 %v456, %v453
      %v472 = vpack.c.bf16 %v457, %v457
      %v473 = vpack.c.bf16 %v458, %v458
      %v474 = vpack.c.bf16 %v459, %v459
      %v475 = vld [vmem:[%s2] sm:$0xff]
      %477 = vset.pattern.permute.xlu0 0
      %478 = vperm.xlu0 %477, %v475
      %v479 = vpop.permute.xlu0 %478
      %vm481 = vcmask 588800
      %v483 = vsel %vm481, %v432, 0
      %vm485 = vcmask 1043456
      %v487 = vsel %vm485, %v472, 0
      %v490 = vsel %vm485, %v473, 0
      %v493 = vsel %vm485, %v474, 0
      %495 = vmatpush.bf16.msra.mxu0 0
      %496 = vmatpush.bf16.msra.mxu0 0
      %497 = vmatpush.bf16.msra.mxu0 0
      %498 = vmatpush.bf16.msra.mxu0 %v487
      %499 = vmatpush.bf16.msra.mxu0 %v469
      %500 = vmatpush.bf16.msra.mxu0 %v466
      %501 = vmatpush.bf16.msra.mxu0 %v463
      %502 = vmatpush.bf16.msra.mxu0 %v460
      %503 = vmatmul.bf16.gmra.mxu0 %v483
      %v504 = vpop.f32.mrf.mxu0
      %v505 = vadd.f32 %v479, %v504
      %v506 = vpop.f32.mrf.mxu0
      %507 = vdwg.mxu0
      %508 = vmatpush.bf16.msra.mxu0 0
      %509 = vmatpush.bf16.msra.mxu0 0
      %510 = vmatpush.bf16.msra.mxu0 0
      %511 = vmatpush.bf16.msra.mxu0 %v490
      %512 = vmatpush.bf16.msra.mxu0 %v470
      %513 = vmatpush.bf16.msra.mxu0 %v467
      %514 = vmatpush.bf16.msra.mxu0 %v464
      %515 = vmatpush.bf16.msra.mxu0 %v461
      %516 = vmatmul.bf16.gmra.mxu0 %v483
      %v517 = vpop.f32.mrf.mxu0
      %v518 = vadd.f32 %v479, %v517
      %v519 = vpop.f32.mrf.mxu0
      %520 = vdwg.mxu0
      %521 = vmatpush.bf16.msra.mxu0 0
      %522 = vmatpush.bf16.msra.mxu0 0
      %523 = vmatpush.bf16.msra.mxu0 0
      %524 = vmatpush.bf16.msra.mxu0 %v493
      %525 = vmatpush.bf16.msra.mxu0 %v471
      %526 = vmatpush.bf16.msra.mxu0 %v468
      %527 = vmatpush.bf16.msra.mxu0 %v465
      %528 = vmatpush.bf16.msra.mxu0 %v462
      %529 = vmatmul.bf16.gmra.mxu0 %v483
      %v530 = vpop.f32.mrf.mxu0
      %v531 = vadd.f32 %v479, %v530
      %v532 = vpop.f32.mrf.mxu0
      %533 = vdwg.mxu0
      %vm534 = vcmp.ge.f32.partialorder %v505, 0.0
      %vm535 = vcmp.ge.f32.partialorder %v518, 0.0
      %vm536 = vcmp.ge.f32.partialorder %v531, 0.0
      %v537 = vmul.f32 %v505, 0.1
      %v538 = vmul.f32 %v518, 0.1
      %v539 = vmul.f32 %v531, 0.1
      %v540 = vsel %vm534, %v505, %v537
      %v541 = vsel %vm535, %v518, %v538
      %v542 = vsel %vm536, %v531, %v539
      %543 = vst [vmem:[%s197] sm:$0xff] %v540
      %544 = vst [vmem:[%s197 + $0x8] sm:$0xff] %v541
      %545 = vst [vmem:[%s197 + $0x10] sm:$0xff] %v542
      %p546 = scmp.lt.s32.totalorder %s15, 1
      %s547 = scalar_select %p546, %s15, 1
      %s548 = smul.addr %s547, 3
      %s549 = smul.addr %s548, 8
      %s550 = scalar_lea.vmem %s4, %s549
      // Predicated region
      $region37: #{predeblur_forward.8} parent=35 // pred_check
        %p551 = pneg %p122
      $region38: #{predeblur_forward.8} parent=35 // pred_check_branch
        %553 = sbr.rel (%p551) target = $region40
      $region39: #{predeblur_forward.8} parent=35 // pred_region
        _
      $region40: #{predeblur_forward.8} parent=35 // pred_fallthru
        _
    $region36: #{predeblur_forward.8} parent=5 // pred_fallthru
      _
    %p554 = scmp.le.s32.totalorder 2, %s10
    // Predicated region
    $region41: #{predeblur_forward.8} parent=5 // pred_check
      %p555 = pneg %p554
    $region42: #{predeblur_forward.8} parent=5 // pred_check_branch
      %557 = sbr.rel (%p555) target = $region44
    $region43: #{predeblur_forward.8} parent=5 // pred_region
      %s558 = ssub.s32 %s10, 2
      // Predicated region
      $region45: #{predeblur_forward.8} parent=43 // pred_check
        %p559 = pneg %p128
      $region46: #{predeblur_forward.8} parent=43 // pred_check_branch
        %561 = sbr.rel (%p559) target = $region48
      $region47: #{predeblur_forward.8} parent=43 // pred_region
        %p562 = scmp.lt.s32.totalorder %s16, 1
        %s563 = scalar_select %p562, %s16, 1
        %s564 = smul.addr %s563, 3
        %s565 = smul.addr %s564, 8
        %s566 = scalar_lea.vmem %s4, %s565
      $region48: #{predeblur_forward.8} parent=43 // pred_fallthru
        _
    $region44: #{predeblur_forward.8} parent=5 // pred_fallthru
      _
  $region6: #{predeblur_forward.8} parent=0 // loop_footer
    %s14 = sadd.s32 1, %s10
  $region7: #{predeblur_forward.8} parent=0 // loop_footer_branch
    %9 = sbr.rel target = $region3
  $region8: #{predeblur_forward.8} parent=0 // loop_exit
    _

// kernel: predeblur_forward.9
$region0: #{predeblur_forward.9}
  #allocation0 [shape = 'u32[]', space=smem, size = 0x4, offset = 0x4, fixed_abs, tag = 'smem constant byte address 0x4 - core index']
  #allocation1 [shape = 'u32[72,128]{1,0:T(1,128)}', space=vmem, size = 0x9000, scoped, tag = 'internal scratch']
  #allocation2 [shape = 'f32[8,384]{1,0:T(8,128)}', space=vmem, size = 0x3000, scoped, tag = 'scratch operand']
  #allocation3 [shape = 'f32[72,128]{1,0:T(8,128)}', space=vmem, size = 0x9000, scoped, tag = 'scratch operand']
  %s0 = inlined_call_operand.vmem [shape: f32[2,8,128], index: 0, kind: input, shape index: {}]
  %s1 = inlined_call_operand.vmem [shape: bf16[1,8,72], index: 1, kind: input, shape index: {}]
  %s2 = inlined_call_operand.vmem [shape: f32[1,8,1], index: 2, kind: input, shape index: {}]
  %s3 = inlined_call_operand.vmem [shape: f32[1,128], index: 3, kind: input, shape index: {}]
  %s4 = inlined_call_operand.vmem [shape: f32[2,8,128], index: 4, kind: output, shape index: {}]
  %s5 = sld [smem:[#allocation0]]
  $region49: #{predeblur_forward.9} parent=0
    _
  %s7 = ssub.s32 1, %s5
  %s8 = scalar_select 0, %s7, %s5
  loop: start=0, step=1, limit=4
  $region2: #{predeblur_forward.9} parent=0 // loop_pre_header
    _
  $region3: #{predeblur_forward.9} parent=0 // loop_header
    %s10 = sphi 0, %s14
    %p11 = scmp.ge.s32.totalorder %s10, 4
    %s20 = sphi 0, %s22
    %s23 = sphi 0, %s20
    %s24 = sphi 0, %s23
    %s40 = sphi 0, %s24
    %s44 = sphi 0, %s44
    %s46 = sphi 0, %s44
    %s47 = sphi 0, %s46
    %s61 = sphi 0, %s47
    %s65 = sphi 0, %s65
    %s67 = sphi 0, %s65
    %s68 = sphi 0, %s67
    %s82 = sphi 0, %s68
    %s86 = sphi 0, %s86
    %s88 = sphi 0, %s86
    %s89 = sphi 0, %s88
    %s103 = sphi 0, %s89
    %s109 = sphi 0, %s111
    %s112 = sphi 0, %s109
    %s113 = sphi 0, %s112
    %s129 = sphi 0, %s113
  $region4: #{predeblur_forward.9} parent=0 // loop_header_branch
    %13 = sbr.rel (%p11) target = $region8
  $region5: #{predeblur_forward.9} parent=0 // loop_body
    %s15 = ssub.s32 %s10, 1
    %s16 = ssub.s32 %s10, 2
    %s17 = sadd.s32 %s10, 1
    %s18 = ssub.s32 %s10, %s17
    %p19 = scmp.eq.s32.totalorder %s18, 0
    %s21 = sadd.s32 %s20, 1
    %s22 = scalar_select %p19, %s20, %s21
    %p25 = pneg %p19
    %p26 = scmp.eq.s32.totalorder %s10, 1
    %p27 = por %p25, %p26
    %p28 = scmp.ne.s32.totalorder %s20, %s23
    %p29 = scmp.eq.s32.totalorder %s10, 0
    %p30 = por %p28, %p29
    %p31 = scmp.ne.s32.totalorder %s20, %s23
    %p32 = scmp.eq.s32.totalorder %s15, 1
    %p33 = por %p31, %p32
    %p34 = scmp.ne.s32.totalorder %s23, %s24
    %p35 = scmp.eq.s32.totalorder %s15, 0
    %p36 = por %p34, %p35
    %p37 = scmp.ne.s32.totalorder %s23, %s24
    %p38 = scmp.eq.s32.totalorder %s16, 1
    %p39 = por %p37, %p38
    %p41 = scmp.ne.s32.totalorder %s24, %s40
    %p42 = scmp.eq.s32.totalorder %s16, 0
    %p43 = por %p41, %p42
    %s45 = sadd.s32 %s44, 1
    %p48 = scmp.eq.s32.totalorder %s10, 1
    %p49 = scmp.ne.s32.totalorder %s44, %s46
    %p50 = scmp.eq.s32.totalorder %s10, 0
    %p51 = por %p49, %p50
    %p52 = scmp.ne.s32.totalorder %s44, %s46
    %p53 = scmp.eq.s32.totalorder %s15, 1
    %p54 = por %p52, %p53
    %p55 = scmp.ne.s32.totalorder %s46, %s47
    %p56 = scmp.eq.s32.totalorder %s15, 0
    %p57 = por %p55, %p56
    %p58 = scmp.ne.s32.totalorder %s46, %s47
    %p59 = scmp.eq.s32.totalorder %s16, 1
    %p60 = por %p58, %p59
    %p62 = scmp.ne.s32.totalorder %s47, %s61
    %p63 = scmp.eq.s32.totalorder %s16, 0
    %p64 = por %p62, %p63
    %s66 = sadd.s32 %s65, 1
    %p69 = scmp.eq.s32.totalorder %s10, 1
    %p70 = scmp.ne.s32.totalorder %s65, %s67
    %p71 = scmp.eq.s32.totalorder %s10, 0
    %p72 = por %p70, %p71
    %p73 = scmp.ne.s32.totalorder %s65, %s67
    %p74 = scmp.eq.s32.totalorder %s15, 1
    %p75 = por %p73, %p74
    %p76 = scmp.ne.s32.totalorder %s67, %s68
    %p77 = scmp.eq.s32.totalorder %s15, 0
    %p78 = por %p76, %p77
    %p79 = scmp.ne.s32.totalorder %s67, %s68
    %p80 = scmp.eq.s32.totalorder %s16, 1
    %p81 = por %p79, %p80
    %p83 = scmp.ne.s32.totalorder %s68, %s82
    %p84 = scmp.eq.s32.totalorder %s16, 0
    %p85 = por %p83, %p84
    %s87 = sadd.s32 %s86, 1
    %p90 = scmp.eq.s32.totalorder %s10, 1
    %p91 = scmp.ne.s32.totalorder %s86, %s88
    %p92 = scmp.eq.s32.totalorder %s10, 0
    %p93 = por %p91, %p92
    %p94 = scmp.ne.s32.totalorder %s86, %s88
    %p95 = scmp.eq.s32.totalorder %s15, 1
    %p96 = por %p94, %p95
    %p97 = scmp.ne.s32.totalorder %s88, %s89
    %p98 = scmp.eq.s32.totalorder %s15, 0
    %p99 = por %p97, %p98
    %p100 = scmp.ne.s32.totalorder %s88, %s89
    %p101 = scmp.eq.s32.totalorder %s16, 1
    %p102 = por %p100, %p101
    %p104 = scmp.ne.s32.totalorder %s89, %s103
    %p105 = scmp.eq.s32.totalorder %s16, 0
    %p106 = por %p104, %p105
    %s107 = ssub.s32 %s10, %s17
    %p108 = scmp.eq.s32.totalorder %s107, 0
    %s110 = sadd.s32 %s109, 1
    %s111 = scalar_select %p108, %s109, %s110
    %p114 = pneg %p108
    %p115 = scmp.eq.s32.totalorder %s10, 1
    %p116 = por %p114, %p115
    %p117 = scmp.ne.s32.totalorder %s109, %s112
    %p118 = scmp.eq.s32.totalorder %s10, 0
    %p119 = por %p117, %p118
    %p120 = scmp.ne.s32.totalorder %s109, %s112
    %p121 = scmp.eq.s32.totalorder %s15, 1
    %p122 = por %p120, %p121
    %p123 = scmp.ne.s32.totalorder %s112, %s113
    %p124 = scmp.eq.s32.totalorder %s15, 0
    %p125 = por %p123, %p124
    %p126 = scmp.ne.s32.totalorder %s112, %s113
    %p127 = scmp.eq.s32.totalorder %s16, 1
    %p128 = por %p126, %p127
    %p130 = scmp.ne.s32.totalorder %s113, %s129
    %p131 = scmp.eq.s32.totalorder %s16, 0
    %p132 = por %p130, %p131
    %p133 = scmp.le.s32.totalorder 1, %s10
    %p134 = scmp.lt.s32.totalorder %s10, 3
    %p135 = pnand %p133, %p134
    %p136 = pneg %p135
    // Predicated region
    $region9: #{predeblur_forward.9} parent=5 // pred_check
      _
    $region10: #{predeblur_forward.9} parent=5 // pred_check_branch
      %138 = sbr.rel (%p135) target = $region12
    $region11: #{predeblur_forward.9} parent=5 // pred_region
      %s139 = ssub.s32 %s10, 1
      // Predicated region
      $region13: #{predeblur_forward.9} parent=11 // pred_check
        %p140 = pneg %p57
      $region14: #{predeblur_forward.9} parent=11 // pred_check_branch
        %142 = sbr.rel (%p140) target = $region16
      $region15: #{predeblur_forward.9} parent=11 // pred_region
        _
      $region16: #{predeblur_forward.9} parent=11 // pred_fallthru
        _
      // Predicated region
      $region17: #{predeblur_forward.9} parent=11 // pred_check
        %p143 = pneg %p78
      $region18: #{predeblur_forward.9} parent=11 // pred_check_branch
        %145 = sbr.rel (%p143) target = $region20
      $region19: #{predeblur_forward.9} parent=11 // pred_region
        _
      $region20: #{predeblur_forward.9} parent=11 // pred_fallthru
        _
      // Predicated region
      $region21: #{predeblur_forward.9} parent=11 // pred_check
        %p146 = pneg %p99
      $region22: #{predeblur_forward.9} parent=11 // pred_check_branch
        %148 = sbr.rel (%p146) target = $region24
      $region23: #{predeblur_forward.9} parent=11 // pred_region
        _
      $region24: #{predeblur_forward.9} parent=11 // pred_fallthru
        _
    $region12: #{predeblur_forward.9} parent=5 // pred_fallthru
      _
    %p149 = scmp.lt.s32.totalorder %s10, 2
    // Predicated region
    $region25: #{predeblur_forward.9} parent=5 // pred_check
      %p150 = pneg %p149
    $region26: #{predeblur_forward.9} parent=5 // pred_check_branch
      %152 = sbr.rel (%p150) target = $region28
    $region27: #{predeblur_forward.9} parent=5 // pred_region
      // Predicated region
      $region29: #{predeblur_forward.9} parent=27 // pred_check
        %p153 = pneg %p30
      $region30: #{predeblur_forward.9} parent=27 // pred_check_branch
        %155 = sbr.rel (%p153) target = $region32
      $region31: #{predeblur_forward.9} parent=27 // pred_region
        %p156 = scmp.lt.s32.totalorder %s10, 1
        %s157 = scalar_select %p156, %s10, 1
        %s158 = smul.addr %s157, 8
        %s159 = scalar_lea.vmem %s0, %s158
      $region32: #{predeblur_forward.9} parent=27 // pred_fallthru
        _
    $region28: #{predeblur_forward.9} parent=5 // pred_fallthru
      _
    %p160 = scmp.le.s32.totalorder 1, %s10
    %p161 = scmp.lt.s32.totalorder %s10, 3
    %p162 = pnand %p160, %p161
    %p163 = pneg %p162
    // Predicated region
    $region33: #{predeblur_forward.9} parent=5 // pred_check
      _
    $region34: #{predeblur_forward.9} parent=5 // pred_check_branch
      %165 = sbr.rel (%p162) target = $region36
    $region35: #{predeblur_forward.9} parent=5 // pred_region
      %s166 = ssub.s32 %s10, 1
      %p167 = scmp.lt.s32.totalorder %s15, 1
      %s168 = scalar_select %p167, %s15, 1
      %s169 = smul.addr %s168, 8
      %s170 = scalar_lea.vmem %s0, %s169
      %p171 = pneg %p36
      %p172 = pneg %p33
      %p173 = pneg %p57
      %p174 = pneg %p54
      %p175 = pneg %p78
      %p176 = pneg %p75
      %p177 = pneg %p99
      %p178 = pneg %p96
      %p179 = pneg %p125
      %p180 = pneg %p122
      %p181 = scmp.lt.s32.totalorder %s15, 1
      %s182 = scalar_select %p181, %s15, 1
      %s183 = smul.addr %s182, 8
      %s184 = scalar_lea.vmem %s4, %s183
      %p185 = scmp.lt.s32.totalorder %s15, 1
      %s186 = scalar_select %p185, %s15, 1
      %s187 = smul.addr %s186, 8
      %s188 = scalar_lea.vmem %s0, %s187
      %p189 = scmp.lt.s32.totalorder %s15, 1
      %s190 = scalar_select %p189, %s15, 1
      %s191 = smul.addr %s190, 8
      %s192 = scalar_lea.vmem %s4, %s191
      %v194 = vld [vmem:[%s3] sm:$0x1]
      %195 = vst [vmem:[#allocation2] sm:$0xff] 0.0
      %196 = vst [vmem:[#allocation2 + $0x10] sm:$0xff] 0.0
      %v197 = vld [vmem:[%s188] sm:$0xff]
      %v199 = vperm.slane %v194, 0
      %v201 = vmul.f32 %v197, %v199
      %202 = vst [vmem:[#allocation2 + $0x8] sm:$0xff] %v201
      %v203 = vld [vmem:[#allocation2] sm:$0xff]
      %v204 = vld [vmem:[#allocation2 + $0x8] sm:$0xff]
      %207 = vrot.lane.b32.xlu0 %v203, 11
      %v208 = vpop.permute.xlu0 %207
      %209 = vrot.lane.b32.xlu0 %v204, 11
      %v210 = vpop.permute.xlu0 %209
      %vm211 = vcmask 89088
      %v212 = vsel %vm211, %v208, %v210
      %214 = vst [vmem:[#allocation3] sm:$0xff] %v212
      %v215 = vld [vmem:[#allocation2] sm:$0xff]
      %v216 = vld [vmem:[#allocation2 + $0x8] sm:$0xff]
      %219 = vrot.lane.b32.xlu0 %v215, 10
      %v220 = vpop.permute.xlu0 %219
      %221 = vrot.lane.b32.xlu0 %v216, 10
      %v222 = vpop.permute.xlu0 %221
      %vm223 = vcmask 80896
      %v224 = vsel %vm223, %v220, %v222
      %226 = vst [vmem:[#allocation3 + $0x8] sm:$0xff] %v224
      %v227 = vld [vmem:[#allocation2] sm:$0xff]
      %v228 = vld [vmem:[#allocation2 + $0x8] sm:$0xff]
      %231 = vrot.lane.b32.xlu0 %v227, 9
      %v232 = vpop.permute.xlu0 %231
      %233 = vrot.lane.b32.xlu0 %v228, 9
      %v234 = vpop.permute.xlu0 %233
      %vm235 = vcmask 72704
      %v236 = vsel %vm235, %v232, %v234
      %238 = vst [vmem:[#allocation3 + $0x10] sm:$0xff] %v236
      %v239 = vld [vmem:[#allocation2] sm:$0xff]
      %v240 = vld [vmem:[#allocation2 + $0x8] sm:$0xff]
      %243 = vrot.lane.b32.xlu0 %v239, 1
      %v244 = vpop.permute.xlu0 %243
      %245 = vrot.lane.b32.xlu0 %v240, 1
      %v246 = vpop.permute.xlu0 %245
      %vm247 = vcmask 7168
      %v248 = vsel %vm247, %v244, %v246
      %250 = vst [vmem:[#allocation3 + $0x18] sm:$0xff] %v248
      %v251 = vld [vmem:[#allocation2 + $0x8] sm:$0xff]
      %252 = vst [vmem:[#allocation3 + $0x20] sm:$0xff] %v251
      %v253 = vld [vmem:[#allocation2 + $0x8] sm:$0xff]
      %v254 = vld [vmem:[#allocation2 + $0x10] sm:$0xff]
      %257 = vrot.lane.b32.xlu0 %v253, 127
      %v258 = vpop.permute.xlu0 %257
      %259 = vrot.lane.b32.xlu0 %v254, 127
      %v260 = vpop.permute.xlu0 %259
      %vm261 = vcmask 1039360
      %v262 = vsel %vm261, %v258, %v260
      %264 = vst [vmem:[#allocation3 + $0x28] sm:$0xff] %v262
      %v265 = vld [vmem:[#allocation2 + $0x8] sm:$0xff]
      %v266 = vld [vmem:[#allocation2 + $0x10] sm:$0xff]
      %269 = vrot.lane.b32.xlu0 %v265, 119
      %v270 = vpop.permute.xlu0 %269
      %271 = vrot.lane.b32.xlu0 %v266, 119
      %v272 = vpop.permute.xlu0 %271
      %vm273 = vcmask 973824
      %v274 = vsel %vm273, %v270, %v272
      %276 = vst [vmem:[#allocation3 + $0x30] sm:$0xff] %v274
      %v277 = vld [vmem:[#allocation2 + $0x8] sm:$0xff]
      %v278 = vld [vmem:[#allocation2 + $0x10] sm:$0xff]
      %281 = vrot.lane.b32.xlu0 %v277, 118
      %v282 = vpop.permute.xlu0 %281
      %283 = vrot.lane.b32.xlu0 %v278, 118
      %v284 = vpop.permute.xlu0 %283
      %vm285 = vcmask 965632
      %v286 = vsel %vm285, %v282, %v284
      %288 = vst [vmem:[#allocation3 + $0x38] sm:$0xff] %v286
      %v289 = vld [vmem:[#allocation2 + $0x8] sm:$0xff]
      %v290 = vld [vmem:[#allocation2 + $0x10] sm:$0xff]
      %293 = vrot.lane.b32.xlu0 %v289, 117
      %v294 = vpop.permute.xlu0 %293
      %295 = vrot.lane.b32.xlu0 %v290, 117
      %v296 = vpop.permute.xlu0 %295
      %vm297 = vcmask 957440
      %v298 = vsel %vm297, %v294, %v296
      %300 = vst [vmem:[#allocation3 + $0x40] sm:$0xff] %v298
      %v301 = vld [vmem:[%s1] sm:$0xf]
      %v302 = vld [vmem:[#allocation3] sm:$0xff]
      %v303 = vld [vmem:[#allocation3 + $0x8] sm:$0xff]
      %v304 = vld [vmem:[#allocation3 + $0x10] sm:$0xff]
      %v305 = vld [vmem:[#allocation3 + $0x18] sm:$0xff]
      %v306 = vld [vmem:[#allocation3 + $0x20] sm:$0xff]
      %v307 = vld [vmem:[#allocation3 + $0x28] sm:$0xff]
      %v308 = vld [vmem:[#allocation3 + $0x30] sm:$0xff]
      %v309 = vld [vmem:[#allocation3 + $0x38] sm:$0xff]
      %v310 = vld [vmem:[#allocation3 + $0x40] sm:$0xff]
      %v311 = vpack.c.bf16 %v303, %v302
      %v312 = vpack.c.bf16 %v305, %v304
      %v313 = vpack.c.bf16 %v307, %v306
      %v314 = vpack.c.bf16 %v309, %v308
      %v315 = vpack.c.bf16 %v310, %v310
      %v316 = vld [vmem:[%s2] sm:$0xff]
      %318 = vset.pattern.permute.xlu0 0
      %319 = vperm.xlu0 %318, %v316
      %v320 = vpop.permute.xlu0 %319
      %vm322 = vcmask 588800
      %v324 = vsel %vm322, %v301, 0
      %vm326 = vcmask 1043456
      %v328 = vsel %vm326, %v315, 0
      %330 = vmatpush.bf16.msra.mxu0 0
      %331 = vmatpush.bf16.msra.mxu0 0
      %332 = vmatpush.bf16.msra.mxu0 0
      %333 = vmatpush.bf16.msra.mxu0 %v328
      %334 = vmatpush.bf16.msra.mxu0 %v314
      %335 = vmatpush.bf16.msra.mxu0 %v313
      %336 = vmatpush.bf16.msra.mxu0 %v312
      %337 = vmatpush.bf16.msra.mxu0 %v311
      %338 = vmatmul.bf16.gmra.mxu0 %v324
      %v339 = vpop.f32.mrf.mxu0
      %v340 = vadd.f32 %v320, %v339
      %v341 = vpop.f32.mrf.mxu0
      %342 = vdwg.mxu0
      %vm343 = vcmp.ge.f32.partialorder %v340, 0.0
      %v344 = vmul.f32 %v340, 0.1
      %v345 = vsel %vm343, %v340, %v344
      %346 = vst [vmem:[%s192] sm:$0xff] %v345
      %p347 = scmp.lt.s32.totalorder %s15, 1
      %s348 = scalar_select %p347, %s15, 1
      %s349 = smul.addr %s348, 8
      %s350 = scalar_lea.vmem %s4, %s349
      // Predicated region
      $region37: #{predeblur_forward.9} parent=35 // pred_check
        %p351 = pneg %p122
      $region38: #{predeblur_forward.9} parent=35 // pred_check_branch
        %353 = sbr.rel (%p351) target = $region40
      $region39: #{predeblur_forward.9} parent=35 // pred_region
        _
      $region40: #{predeblur_forward.9} parent=35 // pred_fallthru
        _
    $region36: #{predeblur_forward.9} parent=5 // pred_fallthru
      _
    %p354 = scmp.le.s32.totalorder 2, %s10
    // Predicated region
    $region41: #{predeblur_forward.9} parent=5 // pred_check
      %p355 = pneg %p354
    $region42: #{predeblur_forward.9} parent=5 // pred_check_branch
      %357 = sbr.rel (%p355) target = $region44
    $region43: #{predeblur_forward.9} parent=5 // pred_region
      %s358 = ssub.s32 %s10, 2
      // Predicated region
      $region45: #{predeblur_forward.9} parent=43 // pred_check
        %p359 = pneg %p128
      $region46: #{predeblur_forward.9} parent=43 // pred_check_branch
        %361 = sbr.rel (%p359) target = $region48
      $region47: #{predeblur_forward.9} parent=43 // pred_region
        %p362 = scmp.lt.s32.totalorder %s16, 1
        %s363 = scalar_select %p362, %s16, 1
        %s364 = smul.addr %s363, 8
        %s365 = scalar_lea.vmem %s4, %s364
      $region48: #{predeblur_forward.9} parent=43 // pred_fallthru
        _
    $region44: #{predeblur_forward.9} parent=5 // pred_fallthru
      _
  $region6: #{predeblur_forward.9} parent=0 // loop_footer
    %s14 = sadd.s32 1, %s10
  $region7: #{predeblur_forward.9} parent=0 // loop_footer_branch
    %9 = sbr.rel target = $region3
  $region8: #{predeblur_forward.9} parent=0 // loop_exit
    _

// kernel: predeblur_forward.10
$region0: #{predeblur_forward.10}
  #allocation0 [shape = 'u32[]', space=smem, size = 0x4, offset = 0x4, fixed_abs, tag = 'smem constant byte address 0x4 - core index']
  #allocation1 [shape = 'u32[72,128]{1,0:T(1,128)}', space=vmem, size = 0x9000, scoped, tag = 'internal scratch']
  #allocation2 [shape = 'f32[8,384]{1,0:T(8,128)}', space=vmem, size = 0x3000, scoped, tag = 'scratch operand']
  #allocation3 [shape = 'f32[72,128]{1,0:T(8,128)}', space=vmem, size = 0x9000, scoped, tag = 'scratch operand']
  %s0 = inlined_call_operand.vmem [shape: f32[2,8,128], index: 0, kind: input, shape index: {}]
  %s1 = inlined_call_operand.vmem [shape: bf16[1,8,72], index: 1, kind: input, shape index: {}]
  %s2 = inlined_call_operand.vmem [shape: f32[1,8,1], index: 2, kind: input, shape index: {}]
  %s3 = inlined_call_operand.vmem [shape: f32[1,128], index: 3, kind: input, shape index: {}]
  %s4 = inlined_call_operand.vmem [shape: f32[2,8,128], index: 4, kind: output, shape index: {}]
  %s5 = sld [smem:[#allocation0]]
  $region49: #{predeblur_forward.10} parent=0
    _
  %s7 = ssub.s32 1, %s5
  %s8 = scalar_select 0, %s7, %s5
  loop: start=0, step=1, limit=4
  $region2: #{predeblur_forward.10} parent=0 // loop_pre_header
    _
  $region3: #{predeblur_forward.10} parent=0 // loop_header
    %s10 = sphi 0, %s14
    %p11 = scmp.ge.s32.totalorder %s10, 4
    %s20 = sphi 0, %s22
    %s23 = sphi 0, %s20
    %s24 = sphi 0, %s23
    %s40 = sphi 0, %s24
    %s44 = sphi 0, %s44
    %s46 = sphi 0, %s44
    %s47 = sphi 0, %s46
    %s61 = sphi 0, %s47
    %s65 = sphi 0, %s65
    %s67 = sphi 0, %s65
    %s68 = sphi 0, %s67
    %s82 = sphi 0, %s68
    %s86 = sphi 0, %s86
    %s88 = sphi 0, %s86
    %s89 = sphi 0, %s88
    %s103 = sphi 0, %s89
    %s109 = sphi 0, %s111
    %s112 = sphi 0, %s109
    %s113 = sphi 0, %s112
    %s129 = sphi 0, %s113
  $region4: #{predeblur_forward.10} parent=0 // loop_header_branch
    %13 = sbr.rel (%p11) target = $region8
  $region5: #{predeblur_forward.10} parent=0 // loop_body
    %s15 = ssub.s32 %s10, 1
    %s16 = ssub.s32 %s10, 2
    %s17 = sadd.s32 %s10, 1
    %s18 = ssub.s32 %s10, %s17
    %p19 = scmp.eq.s32.totalorder %s18, 0
    %s21 = sadd.s32 %s20, 1
    %s22 = scalar_select %p19, %s20, %s21
    %p25 = pneg %p19
    %p26 = scmp.eq.s32.totalorder %s10, 1
    %p27 = por %p25, %p26
    %p28 = scmp.ne.s32.totalorder %s20, %s23
    %p29 = scmp.eq.s32.totalorder %s10, 0
    %p30 = por %p28, %p29
    %p31 = scmp.ne.s32.totalorder %s20, %s23
    %p32 = scmp.eq.s32.totalorder %s15, 1
    %p33 = por %p31, %p32
    %p34 = scmp.ne.s32.totalorder %s23, %s24
    %p35 = scmp.eq.s32.totalorder %s15, 0
    %p36 = por %p34, %p35
    %p37 = scmp.ne.s32.totalorder %s23, %s24
    %p38 = scmp.eq.s32.totalorder %s16, 1
    %p39 = por %p37, %p38
    %p41 = scmp.ne.s32.totalorder %s24, %s40
    %p42 = scmp.eq.s32.totalorder %s16, 0
    %p43 = por %p41, %p42
    %s45 = sadd.s32 %s44, 1
    %p48 = scmp.eq.s32.totalorder %s10, 1
    %p49 = scmp.ne.s32.totalorder %s44, %s46
    %p50 = scmp.eq.s32.totalorder %s10, 0
    %p51 = por %p49, %p50
    %p52 = scmp.ne.s32.totalorder %s44, %s46
    %p53 = scmp.eq.s32.totalorder %s15, 1
    %p54 = por %p52, %p53
    %p55 = scmp.ne.s32.totalorder %s46, %s47
    %p56 = scmp.eq.s32.totalorder %s15, 0
    %p57 = por %p55, %p56
    %p58 = scmp.ne.s32.totalorder %s46, %s47
    %p59 = scmp.eq.s32.totalorder %s16, 1
    %p60 = por %p58, %p59
    %p62 = scmp.ne.s32.totalorder %s47, %s61
    %p63 = scmp.eq.s32.totalorder %s16, 0
    %p64 = por %p62, %p63
    %s66 = sadd.s32 %s65, 1
    %p69 = scmp.eq.s32.totalorder %s10, 1
    %p70 = scmp.ne.s32.totalorder %s65, %s67
    %p71 = scmp.eq.s32.totalorder %s10, 0
    %p72 = por %p70, %p71
    %p73 = scmp.ne.s32.totalorder %s65, %s67
    %p74 = scmp.eq.s32.totalorder %s15, 1
    %p75 = por %p73, %p74
    %p76 = scmp.ne.s32.totalorder %s67, %s68
    %p77 = scmp.eq.s32.totalorder %s15, 0
    %p78 = por %p76, %p77
    %p79 = scmp.ne.s32.totalorder %s67, %s68
    %p80 = scmp.eq.s32.totalorder %s16, 1
    %p81 = por %p79, %p80
    %p83 = scmp.ne.s32.totalorder %s68, %s82
    %p84 = scmp.eq.s32.totalorder %s16, 0
    %p85 = por %p83, %p84
    %s87 = sadd.s32 %s86, 1
    %p90 = scmp.eq.s32.totalorder %s10, 1
    %p91 = scmp.ne.s32.totalorder %s86, %s88
    %p92 = scmp.eq.s32.totalorder %s10, 0
    %p93 = por %p91, %p92
    %p94 = scmp.ne.s32.totalorder %s86, %s88
    %p95 = scmp.eq.s32.totalorder %s15, 1
    %p96 = por %p94, %p95
    %p97 = scmp.ne.s32.totalorder %s88, %s89
    %p98 = scmp.eq.s32.totalorder %s15, 0
    %p99 = por %p97, %p98
    %p100 = scmp.ne.s32.totalorder %s88, %s89
    %p101 = scmp.eq.s32.totalorder %s16, 1
    %p102 = por %p100, %p101
    %p104 = scmp.ne.s32.totalorder %s89, %s103
    %p105 = scmp.eq.s32.totalorder %s16, 0
    %p106 = por %p104, %p105
    %s107 = ssub.s32 %s10, %s17
    %p108 = scmp.eq.s32.totalorder %s107, 0
    %s110 = sadd.s32 %s109, 1
    %s111 = scalar_select %p108, %s109, %s110
    %p114 = pneg %p108
    %p115 = scmp.eq.s32.totalorder %s10, 1
    %p116 = por %p114, %p115
    %p117 = scmp.ne.s32.totalorder %s109, %s112
    %p118 = scmp.eq.s32.totalorder %s10, 0
    %p119 = por %p117, %p118
    %p120 = scmp.ne.s32.totalorder %s109, %s112
    %p121 = scmp.eq.s32.totalorder %s15, 1
    %p122 = por %p120, %p121
    %p123 = scmp.ne.s32.totalorder %s112, %s113
    %p124 = scmp.eq.s32.totalorder %s15, 0
    %p125 = por %p123, %p124
    %p126 = scmp.ne.s32.totalorder %s112, %s113
    %p127 = scmp.eq.s32.totalorder %s16, 1
    %p128 = por %p126, %p127
    %p130 = scmp.ne.s32.totalorder %s113, %s129
    %p131 = scmp.eq.s32.totalorder %s16, 0
    %p132 = por %p130, %p131
    %p133 = scmp.le.s32.totalorder 1, %s10
    %p134 = scmp.lt.s32.totalorder %s10, 3
    %p135 = pnand %p133, %p134
    %p136 = pneg %p135
    // Predicated region
    $region9: #{predeblur_forward.10} parent=5 // pred_check
      _
    $region10: #{predeblur_forward.10} parent=5 // pred_check_branch
      %138 = sbr.rel (%p135) target = $region12
    $region11: #{predeblur_forward.10} parent=5 // pred_region
      %s139 = ssub.s32 %s10, 1
      // Predicated region
      $region13: #{predeblur_forward.10} parent=11 // pred_check
        %p140 = pneg %p57
      $region14: #{predeblur_forward.10} parent=11 // pred_check_branch
        %142 = sbr.rel (%p140) target = $region16
      $region15: #{predeblur_forward.10} parent=11 // pred_region
        _
      $region16: #{predeblur_forward.10} parent=11 // pred_fallthru
        _
      // Predicated region
      $region17: #{predeblur_forward.10} parent=11 // pred_check
        %p143 = pneg %p78
      $region18: #{predeblur_forward.10} parent=11 // pred_check_branch
        %145 = sbr.rel (%p143) target = $region20
      $region19: #{predeblur_forward.10} parent=11 // pred_region
        _
      $region20: #{predeblur_forward.10} parent=11 // pred_fallthru
        _
      // Predicated region
      $region21: #{predeblur_forward.10} parent=11 // pred_check
        %p146 = pneg %p99
      $region22: #{predeblur_forward.10} parent=11 // pred_check_branch
        %148 = sbr.rel (%p146) target = $region24
      $region23: #{predeblur_forward.10} parent=11 // pred_region
        _
      $region24: #{predeblur_forward.10} parent=11 // pred_fallthru
        _
    $region12: #{predeblur_forward.10} parent=5 // pred_fallthru
      _
    %p149 = scmp.lt.s32.totalorder %s10, 2
    // Predicated region
    $region25: #{predeblur_forward.10} parent=5 // pred_check
      %p150 = pneg %p149
    $region26: #{predeblur_forward.10} parent=5 // pred_check_branch
      %152 = sbr.rel (%p150) target = $region28
    $region27: #{predeblur_forward.10} parent=5 // pred_region
      // Predicated region
      $region29: #{predeblur_forward.10} parent=27 // pred_check
        %p153 = pneg %p30
      $region30: #{predeblur_forward.10} parent=27 // pred_check_branch
        %155 = sbr.rel (%p153) target = $region32
      $region31: #{predeblur_forward.10} parent=27 // pred_region
        %p156 = scmp.lt.s32.totalorder %s10, 1
        %s157 = scalar_select %p156, %s10, 1
        %s158 = smul.addr %s157, 8
        %s159 = scalar_lea.vmem %s0, %s158
      $region32: #{predeblur_forward.10} parent=27 // pred_fallthru
        _
    $region28: #{predeblur_forward.10} parent=5 // pred_fallthru
      _
    %p160 = scmp.le.s32.totalorder 1, %s10
    %p161 = scmp.lt.s32.totalorder %s10, 3
    %p162 = pnand %p160, %p161
    %p163 = pneg %p162
    // Predicated region
    $region33: #{predeblur_forward.10} parent=5 // pred_check
      _
    $region34: #{predeblur_forward.10} parent=5 // pred_check_branch
      %165 = sbr.rel (%p162) target = $region36
    $region35: #{predeblur_forward.10} parent=5 // pred_region
      %s166 = ssub.s32 %s10, 1
      %p167 = scmp.lt.s32.totalorder %s15, 1
      %s168 = scalar_select %p167, %s15, 1
      %s169 = smul.addr %s168, 8
      %s170 = scalar_lea.vmem %s0, %s169
      %p171 = pneg %p36
      %p172 = pneg %p33
      %p173 = pneg %p57
      %p174 = pneg %p54
      %p175 = pneg %p78
      %p176 = pneg %p75
      %p177 = pneg %p99
      %p178 = pneg %p96
      %p179 = pneg %p125
      %p180 = pneg %p122
      %p181 = scmp.lt.s32.totalorder %s15, 1
      %s182 = scalar_select %p181, %s15, 1
      %s183 = smul.addr %s182, 8
      %s184 = scalar_lea.vmem %s4, %s183
      %p185 = scmp.lt.s32.totalorder %s15, 1
      %s186 = scalar_select %p185, %s15, 1
      %s187 = smul.addr %s186, 8
      %s188 = scalar_lea.vmem %s0, %s187
      %p189 = scmp.lt.s32.totalorder %s15, 1
      %s190 = scalar_select %p189, %s15, 1
      %s191 = smul.addr %s190, 8
      %s192 = scalar_lea.vmem %s4, %s191
      %v194 = vld [vmem:[%s3] sm:$0x1]
      %195 = vst [vmem:[#allocation2] sm:$0xff] 0.0
      %196 = vst [vmem:[#allocation2 + $0x10] sm:$0xff] 0.0
      %v197 = vld [vmem:[%s188] sm:$0xff]
      %v199 = vperm.slane %v194, 0
      %v201 = vmul.f32 %v197, %v199
      %202 = vst [vmem:[#allocation2 + $0x8] sm:$0xff] %v201
      %v203 = vld [vmem:[#allocation2] sm:$0xff]
      %v204 = vld [vmem:[#allocation2 + $0x8] sm:$0xff]
      %207 = vrot.lane.b32.xlu0 %v203, 7
      %v208 = vpop.permute.xlu0 %207
      %209 = vrot.lane.b32.xlu0 %v204, 7
      %v210 = vpop.permute.xlu0 %209
      %vm211 = vcmask 56320
      %v212 = vsel %vm211, %v208, %v210
      %214 = vst [vmem:[#allocation3] sm:$0xff] %v212
      %v215 = vld [vmem:[#allocation2] sm:$0xff]
      %v216 = vld [vmem:[#allocation2 + $0x8] sm:$0xff]
      %219 = vrot.lane.b32.xlu0 %v215, 6
      %v220 = vpop.permute.xlu0 %219
      %221 = vrot.lane.b32.xlu0 %v216, 6
      %v222 = vpop.permute.xlu0 %221
      %vm223 = vcmask 48128
      %v224 = vsel %vm223, %v220, %v222
      %226 = vst [vmem:[#allocation3 + $0x8] sm:$0xff] %v224
      %v227 = vld [vmem:[#allocation2] sm:$0xff]
      %v228 = vld [vmem:[#allocation2 + $0x8] sm:$0xff]
      %231 = vrot.lane.b32.xlu0 %v227, 5
      %v232 = vpop.permute.xlu0 %231
      %233 = vrot.lane.b32.xlu0 %v228, 5
      %v234 = vpop.permute.xlu0 %233
      %vm235 = vcmask 39936
      %v236 = vsel %vm235, %v232, %v234
      %238 = vst [vmem:[#allocation3 + $0x10] sm:$0xff] %v236
      %v239 = vld [vmem:[#allocation2] sm:$0xff]
      %v240 = vld [vmem:[#allocation2 + $0x8] sm:$0xff]
      %243 = vrot.lane.b32.xlu0 %v239, 1
      %v244 = vpop.permute.xlu0 %243
      %245 = vrot.lane.b32.xlu0 %v240, 1
      %v246 = vpop.permute.xlu0 %245
      %vm247 = vcmask 7168
      %v248 = vsel %vm247, %v244, %v246
      %250 = vst [vmem:[#allocation3 + $0x18] sm:$0xff] %v248
      %v251 = vld [vmem:[#allocation2 + $0x8] sm:$0xff]
      %252 = vst [vmem:[#allocation3 + $0x20] sm:$0xff] %v251
      %v253 = vld [vmem:[#allocation2 + $0x8] sm:$0xff]
      %v254 = vld [vmem:[#allocation2 + $0x10] sm:$0xff]
      %257 = vrot.lane.b32.xlu0 %v253, 127
      %v258 = vpop.permute.xlu0 %257
      %259 = vrot.lane.b32.xlu0 %v254, 127
      %v260 = vpop.permute.xlu0 %259
      %vm261 = vcmask 1039360
      %v262 = vsel %vm261, %v258, %v260
      %264 = vst [vmem:[#allocation3 + $0x28] sm:$0xff] %v262
      %v265 = vld [vmem:[#allocation2 + $0x8] sm:$0xff]
      %v266 = vld [vmem:[#allocation2 + $0x10] sm:$0xff]
      %269 = vrot.lane.b32.xlu0 %v265, 123
      %v270 = vpop.permute.xlu0 %269
      %271 = vrot.lane.b32.xlu0 %v266, 123
      %v272 = vpop.permute.xlu0 %271
      %vm273 = vcmask 1006592
      %v274 = vsel %vm273, %v270, %v272
      %276 = vst [vmem:[#allocation3 + $0x30] sm:$0xff] %v274
      %v277 = vld [vmem:[#allocation2 + $0x8] sm:$0xff]
      %v278 = vld [vmem:[#allocation2 + $0x10] sm:$0xff]
      %281 = vrot.lane.b32.xlu0 %v277, 122
      %v282 = vpop.permute.xlu0 %281
      %283 = vrot.lane.b32.xlu0 %v278, 122
      %v284 = vpop.permute.xlu0 %283
      %vm285 = vcmask 998400
      %v286 = vsel %vm285, %v282, %v284
      %288 = vst [vmem:[#allocation3 + $0x38] sm:$0xff] %v286
      %v289 = vld [vmem:[#allocation2 + $0x8] sm:$0xff]
      %v290 = vld [vmem:[#allocation2 + $0x10] sm:$0xff]
      %293 = vrot.lane.b32.xlu0 %v289, 121
      %v294 = vpop.permute.xlu0 %293
      %295 = vrot.lane.b32.xlu0 %v290, 121
      %v296 = vpop.permute.xlu0 %295
      %vm297 = vcmask 990208
      %v298 = vsel %vm297, %v294, %v296
      %300 = vst [vmem:[#allocation3 + $0x40] sm:$0xff] %v298
      %v301 = vld [vmem:[%s1] sm:$0xf]
      %v302 = vld [vmem:[#allocation3] sm:$0xff]
      %v303 = vld [vmem:[#allocation3 + $0x8] sm:$0xff]
      %v304 = vld [vmem:[#allocation3 + $0x10] sm:$0xff]
      %v305 = vld [vmem:[#allocation3 + $0x18] sm:$0xff]
      %v306 = vld [vmem:[#allocation3 + $0x20] sm:$0xff]
      %v307 = vld [vmem:[#allocation3 + $0x28] sm:$0xff]
      %v308 = vld [vmem:[#allocation3 + $0x30] sm:$0xff]
      %v309 = vld [vmem:[#allocation3 + $0x38] sm:$0xff]
      %v310 = vld [vmem:[#allocation3 + $0x40] sm:$0xff]
      %v311 = vpack.c.bf16 %v303, %v302
      %v312 = vpack.c.bf16 %v305, %v304
      %v313 = vpack.c.bf16 %v307, %v306
      %v314 = vpack.c.bf16 %v309, %v308
      %v315 = vpack.c.bf16 %v310, %v310
      %v316 = vld [vmem:[%s2] sm:$0xff]
      %318 = vset.pattern.permute.xlu0 0
      %319 = vperm.xlu0 %318, %v316
      %v320 = vpop.permute.xlu0 %319
      %vm322 = vcmask 588800
      %v324 = vsel %vm322, %v301, 0
      %vm326 = vcmask 1043456
      %v328 = vsel %vm326, %v315, 0
      %330 = vmatpush.bf16.msra.mxu0 0
      %331 = vmatpush.bf16.msra.mxu0 0
      %332 = vmatpush.bf16.msra.mxu0 0
      %333 = vmatpush.bf16.msra.mxu0 %v328
      %334 = vmatpush.bf16.msra.mxu0 %v314
      %335 = vmatpush.bf16.msra.mxu0 %v313
      %336 = vmatpush.bf16.msra.mxu0 %v312
      %337 = vmatpush.bf16.msra.mxu0 %v311
      %338 = vmatmul.bf16.gmra.mxu0 %v324
      %v339 = vpop.f32.mrf.mxu0
      %v340 = vadd.f32 %v320, %v339
      %v341 = vpop.f32.mrf.mxu0
      %342 = vdwg.mxu0
      %vm343 = vcmp.ge.f32.partialorder %v340, 0.0
      %v344 = vmul.f32 %v340, 0.1
      %v345 = vsel %vm343, %v340, %v344
      %346 = vst [vmem:[%s192] sm:$0xff] %v345
      %p347 = scmp.lt.s32.totalorder %s15, 1
      %s348 = scalar_select %p347, %s15, 1
      %s349 = smul.addr %s348, 8
      %s350 = scalar_lea.vmem %s4, %s349
      // Predicated region
      $region37: #{predeblur_forward.10} parent=35 // pred_check
        %p351 = pneg %p122
      $region38: #{predeblur_forward.10} parent=35 // pred_check_branch
        %353 = sbr.rel (%p351) target = $region40
      $region39: #{predeblur_forward.10} parent=35 // pred_region
        _
      $region40: #{predeblur_forward.10} parent=35 // pred_fallthru
        _
    $region36: #{predeblur_forward.10} parent=5 // pred_fallthru
      _
    %p354 = scmp.le.s32.totalorder 2, %s10
    // Predicated region
    $region41: #{predeblur_forward.10} parent=5 // pred_check
      %p355 = pneg %p354
    $region42: #{predeblur_forward.10} parent=5 // pred_check_branch
      %357 = sbr.rel (%p355) target = $region44
    $region43: #{predeblur_forward.10} parent=5 // pred_region
      %s358 = ssub.s32 %s10, 2
      // Predicated region
      $region45: #{predeblur_forward.10} parent=43 // pred_check
        %p359 = pneg %p128
      $region46: #{predeblur_forward.10} parent=43 // pred_check_branch
        %361 = sbr.rel (%p359) target = $region48
      $region47: #{predeblur_forward.10} parent=43 // pred_region
        %p362 = scmp.lt.s32.totalorder %s16, 1
        %s363 = scalar_select %p362, %s16, 1
        %s364 = smul.addr %s363, 8
        %s365 = scalar_lea.vmem %s4, %s364
      $region48: #{predeblur_forward.10} parent=43 // pred_fallthru
        _
    $region44: #{predeblur_forward.10} parent=5 // pred_fallthru
      _
  $region6: #{predeblur_forward.10} parent=0 // loop_footer
    %s14 = sadd.s32 1, %s10
  $region7: #{predeblur_forward.10} parent=0 // loop_footer_branch
    %9 = sbr.rel target = $region3
  $region8: #{predeblur_forward.10} parent=0 // loop_exit
    _

// kernel: predeblur_forward.11
$region0: #{predeblur_forward.11}
  #allocation0 [shape = 'u32[]', space=smem, size = 0x4, offset = 0x4, fixed_abs, tag = 'smem constant byte address 0x4 - core index']
  #allocation1 [shape = 'u32[72,128]{1,0:T(1,128)}', space=vmem, size = 0x9000, scoped, tag = 'internal scratch']
  #allocation2 [shape = 'f32[8,384]{1,0:T(8,128)}', space=vmem, size = 0x3000, scoped, tag = 'scratch operand']
  #allocation3 [shape = 'f32[72,128]{1,0:T(8,128)}', space=vmem, size = 0x9000, scoped, tag = 'scratch operand']
  %s0 = inlined_call_operand.vmem [shape: f32[2,8,128], index: 0, kind: input, shape index: {}]
  %s1 = inlined_call_operand.vmem [shape: bf16[2,8,72], index: 1, kind: input, shape index: {}]
  %s2 = inlined_call_operand.vmem [shape: f32[2,8,1], index: 2, kind: input, shape index: {}]
  %s3 = inlined_call_operand.vmem [shape: f32[1,128], index: 3, kind: input, shape index: {}]
  %s4 = inlined_call_operand.vmem [shape: f32[2,8,128], index: 4, kind: output, shape index: {}]
  %s5 = sld [smem:[#allocation0]]
  $region49: #{predeblur_forward.11} parent=0
    _
  %s7 = ssub.s32 1, %s5
  %s8 = scalar_select 0, %s7, %s5
  loop: start=0, step=1, limit=4
  $region2: #{predeblur_forward.11} parent=0 // loop_pre_header
    _
  $region3: #{predeblur_forward.11} parent=0 // loop_header
    %s10 = sphi 0, %s14
    %p11 = scmp.ge.s32.totalorder %s10, 4
    %s20 = sphi 0, %s22
    %s23 = sphi 0, %s20
    %s24 = sphi 0, %s23
    %s40 = sphi 0, %s24
    %s44 = sphi 0, %s44
    %s46 = sphi 0, %s44
    %s47 = sphi 0, %s46
    %s61 = sphi 0, %s47
    %s65 = sphi 0, %s65
    %s67 = sphi 0, %s65
    %s68 = sphi 0, %s67
    %s82 = sphi 0, %s68
    %s86 = sphi 0, %s86
    %s88 = sphi 0, %s86
    %s89 = sphi 0, %s88
    %s103 = sphi 0, %s89
    %s109 = sphi 0, %s111
    %s112 = sphi 0, %s109
    %s113 = sphi 0, %s112
    %s129 = sphi 0, %s113
  $region4: #{predeblur_forward.11} parent=0 // loop_header_branch
    %13 = sbr.rel (%p11) target = $region8
  $region5: #{predeblur_forward.11} parent=0 // loop_body
    %s15 = ssub.s32 %s10, 1
    %s16 = ssub.s32 %s10, 2
    %s17 = sadd.s32 %s10, 1
    %s18 = ssub.s32 %s10, %s17
    %p19 = scmp.eq.s32.totalorder %s18, 0
    %s21 = sadd.s32 %s20, 1
    %s22 = scalar_select %p19, %s20, %s21
    %p25 = pneg %p19
    %p26 = scmp.eq.s32.totalorder %s10, 1
    %p27 = por %p25, %p26
    %p28 = scmp.ne.s32.totalorder %s20, %s23
    %p29 = scmp.eq.s32.totalorder %s10, 0
    %p30 = por %p28, %p29
    %p31 = scmp.ne.s32.totalorder %s20, %s23
    %p32 = scmp.eq.s32.totalorder %s15, 1
    %p33 = por %p31, %p32
    %p34 = scmp.ne.s32.totalorder %s23, %s24
    %p35 = scmp.eq.s32.totalorder %s15, 0
    %p36 = por %p34, %p35
    %p37 = scmp.ne.s32.totalorder %s23, %s24
    %p38 = scmp.eq.s32.totalorder %s16, 1
    %p39 = por %p37, %p38
    %p41 = scmp.ne.s32.totalorder %s24, %s40
    %p42 = scmp.eq.s32.totalorder %s16, 0
    %p43 = por %p41, %p42
    %s45 = sadd.s32 %s44, 1
    %p48 = scmp.eq.s32.totalorder %s10, 1
    %p49 = scmp.ne.s32.totalorder %s44, %s46
    %p50 = scmp.eq.s32.totalorder %s10, 0
    %p51 = por %p49, %p50
    %p52 = scmp.ne.s32.totalorder %s44, %s46
    %p53 = scmp.eq.s32.totalorder %s15, 1
    %p54 = por %p52, %p53
    %p55 = scmp.ne.s32.totalorder %s46, %s47
    %p56 = scmp.eq.s32.totalorder %s15, 0
    %p57 = por %p55, %p56
    %p58 = scmp.ne.s32.totalorder %s46, %s47
    %p59 = scmp.eq.s32.totalorder %s16, 1
    %p60 = por %p58, %p59
    %p62 = scmp.ne.s32.totalorder %s47, %s61
    %p63 = scmp.eq.s32.totalorder %s16, 0
    %p64 = por %p62, %p63
    %s66 = sadd.s32 %s65, 1
    %p69 = scmp.eq.s32.totalorder %s10, 1
    %p70 = scmp.ne.s32.totalorder %s65, %s67
    %p71 = scmp.eq.s32.totalorder %s10, 0
    %p72 = por %p70, %p71
    %p73 = scmp.ne.s32.totalorder %s65, %s67
    %p74 = scmp.eq.s32.totalorder %s15, 1
    %p75 = por %p73, %p74
    %p76 = scmp.ne.s32.totalorder %s67, %s68
    %p77 = scmp.eq.s32.totalorder %s15, 0
    %p78 = por %p76, %p77
    %p79 = scmp.ne.s32.totalorder %s67, %s68
    %p80 = scmp.eq.s32.totalorder %s16, 1
    %p81 = por %p79, %p80
    %p83 = scmp.ne.s32.totalorder %s68, %s82
    %p84 = scmp.eq.s32.totalorder %s16, 0
    %p85 = por %p83, %p84
    %s87 = sadd.s32 %s86, 1
    %p90 = scmp.eq.s32.totalorder %s10, 1
    %p91 = scmp.ne.s32.totalorder %s86, %s88
    %p92 = scmp.eq.s32.totalorder %s10, 0
    %p93 = por %p91, %p92
    %p94 = scmp.ne.s32.totalorder %s86, %s88
    %p95 = scmp.eq.s32.totalorder %s15, 1
    %p96 = por %p94, %p95
    %p97 = scmp.ne.s32.totalorder %s88, %s89
    %p98 = scmp.eq.s32.totalorder %s15, 0
    %p99 = por %p97, %p98
    %p100 = scmp.ne.s32.totalorder %s88, %s89
    %p101 = scmp.eq.s32.totalorder %s16, 1
    %p102 = por %p100, %p101
    %p104 = scmp.ne.s32.totalorder %s89, %s103
    %p105 = scmp.eq.s32.totalorder %s16, 0
    %p106 = por %p104, %p105
    %s107 = ssub.s32 %s10, %s17
    %p108 = scmp.eq.s32.totalorder %s107, 0
    %s110 = sadd.s32 %s109, 1
    %s111 = scalar_select %p108, %s109, %s110
    %p114 = pneg %p108
    %p115 = scmp.eq.s32.totalorder %s10, 1
    %p116 = por %p114, %p115
    %p117 = scmp.ne.s32.totalorder %s109, %s112
    %p118 = scmp.eq.s32.totalorder %s10, 0
    %p119 = por %p117, %p118
    %p120 = scmp.ne.s32.totalorder %s109, %s112
    %p121 = scmp.eq.s32.totalorder %s15, 1
    %p122 = por %p120, %p121
    %p123 = scmp.ne.s32.totalorder %s112, %s113
    %p124 = scmp.eq.s32.totalorder %s15, 0
    %p125 = por %p123, %p124
    %p126 = scmp.ne.s32.totalorder %s112, %s113
    %p127 = scmp.eq.s32.totalorder %s16, 1
    %p128 = por %p126, %p127
    %p130 = scmp.ne.s32.totalorder %s113, %s129
    %p131 = scmp.eq.s32.totalorder %s16, 0
    %p132 = por %p130, %p131
    %p133 = scmp.le.s32.totalorder 1, %s10
    %p134 = scmp.lt.s32.totalorder %s10, 3
    %p135 = pnand %p133, %p134
    %p136 = pneg %p135
    // Predicated region
    $region9: #{predeblur_forward.11} parent=5 // pred_check
      _
    $region10: #{predeblur_forward.11} parent=5 // pred_check_branch
      %138 = sbr.rel (%p135) target = $region12
    $region11: #{predeblur_forward.11} parent=5 // pred_region
      %s139 = ssub.s32 %s10, 1
      // Predicated region
      $region13: #{predeblur_forward.11} parent=11 // pred_check
        %p140 = pneg %p57
      $region14: #{predeblur_forward.11} parent=11 // pred_check_branch
        %142 = sbr.rel (%p140) target = $region16
      $region15: #{predeblur_forward.11} parent=11 // pred_region
        _
      $region16: #{predeblur_forward.11} parent=11 // pred_fallthru
        _
      // Predicated region
      $region17: #{predeblur_forward.11} parent=11 // pred_check
        %p143 = pneg %p78
      $region18: #{predeblur_forward.11} parent=11 // pred_check_branch
        %145 = sbr.rel (%p143) target = $region20
      $region19: #{predeblur_forward.11} parent=11 // pred_region
        _
      $region20: #{predeblur_forward.11} parent=11 // pred_fallthru
        _
      // Predicated region
      $region21: #{predeblur_forward.11} parent=11 // pred_check
        %p146 = pneg %p99
      $region22: #{predeblur_forward.11} parent=11 // pred_check_branch
        %148 = sbr.rel (%p146) target = $region24
      $region23: #{predeblur_forward.11} parent=11 // pred_region
        _
      $region24: #{predeblur_forward.11} parent=11 // pred_fallthru
        _
    $region12: #{predeblur_forward.11} parent=5 // pred_fallthru
      _
    %p149 = scmp.lt.s32.totalorder %s10, 2
    // Predicated region
    $region25: #{predeblur_forward.11} parent=5 // pred_check
      %p150 = pneg %p149
    $region26: #{predeblur_forward.11} parent=5 // pred_check_branch
      %152 = sbr.rel (%p150) target = $region28
    $region27: #{predeblur_forward.11} parent=5 // pred_region
      // Predicated region
      $region29: #{predeblur_forward.11} parent=27 // pred_check
        %p153 = pneg %p30
      $region30: #{predeblur_forward.11} parent=27 // pred_check_branch
        %155 = sbr.rel (%p153) target = $region32
      $region31: #{predeblur_forward.11} parent=27 // pred_region
        %p156 = scmp.lt.s32.totalorder %s10, 1
        %s157 = scalar_select %p156, %s10, 1
        %s158 = smul.addr %s157, 8
        %s159 = scalar_lea.vmem %s0, %s158
      $region32: #{predeblur_forward.11} parent=27 // pred_fallthru
        _
    $region28: #{predeblur_forward.11} parent=5 // pred_fallthru
      _
    %p160 = scmp.le.s32.totalorder 1, %s10
    %p161 = scmp.lt.s32.totalorder %s10, 3
    %p162 = pnand %p160, %p161
    %p163 = pneg %p162
    // Predicated region
    $region33: #{predeblur_forward.11} parent=5 // pred_check
      _
    $region34: #{predeblur_forward.11} parent=5 // pred_check_branch
      %165 = sbr.rel (%p162) target = $region36
    $region35: #{predeblur_forward.11} parent=5 // pred_region
      %s166 = ssub.s32 %s10, 1
      %p167 = scmp.lt.s32.totalorder %s15, 1
      %s168 = scalar_select %p167, %s15, 1
      %s169 = smul.addr %s168, 8
      %s170 = scalar_lea.vmem %s0, %s169
      %p171 = pneg %p36
      %p172 = pneg %p33
      %p173 = pneg %p57
      %p174 = pneg %p54
      %p175 = pneg %p78
      %p176 = pneg %p75
      %p177 = pneg %p99
      %p178 = pneg %p96
      %p179 = pneg %p125
      %p180 = pneg %p122
      %p181 = scmp.lt.s32.totalorder %s15, 1
      %s182 = scalar_select %p181, %s15, 1
      %s183 = smul.addr %s182, 8
      %s184 = scalar_lea.vmem %s4, %s183
      %p185 = scmp.lt.s32.totalorder %s15, 1
      %s186 = scalar_select %p185, %s15, 1
      %s187 = smul.addr %s186, 8
      %s188 = scalar_lea.vmem %s0, %s187
      %p189 = scmp.lt.s32.totalorder %s15, 1
      %s190 = scalar_select %p189, %s15, 1
      %s191 = smul.addr %s190, 8
      %s192 = scalar_lea.vmem %s4, %s191
      %v194 = vld [vmem:[%s3] sm:$0x1]
      %195 = vst [vmem:[#allocation2] sm:$0xff] 0.0
      %196 = vst [vmem:[#allocation2 + $0x10] sm:$0xff] 0.0
      %v197 = vld [vmem:[%s188] sm:$0xff]
      %v199 = vperm.slane %v194, 0
      %v201 = vmul.f32 %v197, %v199
      %202 = vst [vmem:[#allocation2 + $0x8] sm:$0xff] %v201
      %v203 = vld [vmem:[#allocation2] sm:$0xff]
      %v204 = vld [vmem:[#allocation2 + $0x8] sm:$0xff]
      %207 = vrot.lane.b32.xlu0 %v203, 5
      %v208 = vpop.permute.xlu0 %207
      %209 = vrot.lane.b32.xlu0 %v204, 5
      %v210 = vpop.permute.xlu0 %209
      %vm211 = vcmask 39936
      %v212 = vsel %vm211, %v208, %v210
      %214 = vst [vmem:[#allocation3] sm:$0xff] %v212
      %v215 = vld [vmem:[#allocation2] sm:$0xff]
      %v216 = vld [vmem:[#allocation2 + $0x8] sm:$0xff]
      %219 = vrot.lane.b32.xlu0 %v215, 4
      %v220 = vpop.permute.xlu0 %219
      %221 = vrot.lane.b32.xlu0 %v216, 4
      %v222 = vpop.permute.xlu0 %221
      %vm223 = vcmask 31744
      %v224 = vsel %vm223, %v220, %v222
      %226 = vst [vmem:[#allocation3 + $0x8] sm:$0xff] %v224
      %v227 = vld [vmem:[#allocation2] sm:$0xff]
      %v228 = vld [vmem:[#allocation2 + $0x8] sm:$0xff]
      %231 = vrot.lane.b32.xlu0 %v227, 3
      %v232 = vpop.permute.xlu0 %231
      %233 = vrot.lane.b32.xlu0 %v228, 3
      %v234 = vpop.permute.xlu0 %233
      %vm235 = vcmask 23552
      %v236 = vsel %vm235, %v232, %v234
      %238 = vst [vmem:[#allocation3 + $0x10] sm:$0xff] %v236
      %v239 = vld [vmem:[#allocation2] sm:$0xff]
      %v240 = vld [vmem:[#allocation2 + $0x8] sm:$0xff]
      %243 = vrot.lane.b32.xlu0 %v239, 1
      %v244 = vpop.permute.xlu0 %243
      %245 = vrot.lane.b32.xlu0 %v240, 1
      %v246 = vpop.permute.xlu0 %245
      %vm247 = vcmask 7168
      %v248 = vsel %vm247, %v244, %v246
      %250 = vst [vmem:[#allocation3 + $0x18] sm:$0xff] %v248
      %v251 = vld [vmem:[#allocation2 + $0x8] sm:$0xff]
      %252 = vst [vmem:[#allocation3 + $0x20] sm:$0xff] %v251
      %v253 = vld [vmem:[#allocation2 + $0x8] sm:$0xff]
      %v254 = vld [vmem:[#allocation2 + $0x10] sm:$0xff]
      %257 = vrot.lane.b32.xlu0 %v253, 127
      %v258 = vpop.permute.xlu0 %257
      %259 = vrot.lane.b32.xlu0 %v254, 127
      %v260 = vpop.permute.xlu0 %259
      %vm261 = vcmask 1039360
      %v262 = vsel %vm261, %v258, %v260
      %264 = vst [vmem:[#allocation3 + $0x28] sm:$0xff] %v262
      %v265 = vld [vmem:[#allocation2 + $0x8] sm:$0xff]
      %v266 = vld [vmem:[#allocation2 + $0x10] sm:$0xff]
      %269 = vrot.lane.b32.xlu0 %v265, 125
      %v270 = vpop.permute.xlu0 %269
      %271 = vrot.lane.b32.xlu0 %v266, 125
      %v272 = vpop.permute.xlu0 %271
      %vm273 = vcmask 1022976
      %v274 = vsel %vm273, %v270, %v272
      %276 = vst [vmem:[#allocation3 + $0x30] sm:$0xff] %v274
      %v277 = vld [vmem:[#allocation2 + $0x8] sm:$0xff]
      %v278 = vld [vmem:[#allocation2 + $0x10] sm:$0xff]
      %281 = vrot.lane.b32.xlu0 %v277, 124
      %v282 = vpop.permute.xlu0 %281
      %283 = vrot.lane.b32.xlu0 %v278, 124
      %v284 = vpop.permute.xlu0 %283
      %vm285 = vcmask 1014784
      %v286 = vsel %vm285, %v282, %v284
      %288 = vst [vmem:[#allocation3 + $0x38] sm:$0xff] %v286
      %v289 = vld [vmem:[#allocation2 + $0x8] sm:$0xff]
      %v290 = vld [vmem:[#allocation2 + $0x10] sm:$0xff]
      %293 = vrot.lane.b32.xlu0 %v289, 123
      %v294 = vpop.permute.xlu0 %293
      %295 = vrot.lane.b32.xlu0 %v290, 123
      %v296 = vpop.permute.xlu0 %295
      %vm297 = vcmask 1006592
      %v298 = vsel %vm297, %v294, %v296
      %300 = vst [vmem:[#allocation3 + $0x40] sm:$0xff] %v298
      %v301 = vld [vmem:[%s1] sm:$0xf]
      %v302 = vld [vmem:[#allocation3] sm:$0xff]
      %v303 = vld [vmem:[#allocation3 + $0x8] sm:$0xff]
      %v304 = vld [vmem:[#allocation3 + $0x10] sm:$0xff]
      %v305 = vld [vmem:[#allocation3 + $0x18] sm:$0xff]
      %v306 = vld [vmem:[#allocation3 + $0x20] sm:$0xff]
      %v307 = vld [vmem:[#allocation3 + $0x28] sm:$0xff]
      %v308 = vld [vmem:[#allocation3 + $0x30] sm:$0xff]
      %v309 = vld [vmem:[#allocation3 + $0x38] sm:$0xff]
      %v310 = vld [vmem:[#allocation3 + $0x40] sm:$0xff]
      %v311 = vpack.c.bf16 %v303, %v302
      %v312 = vpack.c.bf16 %v305, %v304
      %v313 = vpack.c.bf16 %v307, %v306
      %v314 = vpack.c.bf16 %v309, %v308
      %v315 = vpack.c.bf16 %v310, %v310
      %v316 = vld [vmem:[%s2] sm:$0xff]
      %318 = vset.pattern.permute.xlu0 0
      %319 = vperm.xlu0 %318, %v316
      %v320 = vpop.permute.xlu0 %319
      %vm322 = vcmask 588800
      %v324 = vsel %vm322, %v301, 0
      %vm326 = vcmask 1043456
      %v328 = vsel %vm326, %v315, 0
      %330 = vmatpush.bf16.msra.mxu0 0
      %331 = vmatpush.bf16.msra.mxu0 0
      %332 = vmatpush.bf16.msra.mxu0 0
      %333 = vmatpush.bf16.msra.mxu0 %v328
      %334 = vmatpush.bf16.msra.mxu0 %v314
      %335 = vmatpush.bf16.msra.mxu0 %v313
      %336 = vmatpush.bf16.msra.mxu0 %v312
      %337 = vmatpush.bf16.msra.mxu0 %v311
      %338 = vmatmul.bf16.gmra.mxu0 %v324
      %v339 = vpop.f32.mrf.mxu0
      %v340 = vadd.f32 %v320, %v339
      %v341 = vpop.f32.mrf.mxu0
      %342 = vdwg.mxu0
      %v343 = vmax.f32 %v340, 0.0
      %v344 = vmul.f32 %v343, %v199
      %345 = vst [vmem:[#allocation2 + $0x8] sm:$0xff] %v344
      %v346 = vld [vmem:[#allocation2] sm:$0xff]
      %v347 = vld [vmem:[#allocation2 + $0x8] sm:$0xff]
      %350 = vrot.lane.b32.xlu0 %v346, 5
      %v351 = vpop.permute.xlu0 %350
      %352 = vrot.lane.b32.xlu0 %v347, 5
      %v353 = vpop.permute.xlu0 %352
      %v354 = vsel %vm211, %v351, %v353
      %356 = vst [vmem:[#allocation3] sm:$0xff] %v354
      %v357 = vld [vmem:[#allocation2] sm:$0xff]
      %v358 = vld [vmem:[#allocation2 + $0x8] sm:$0xff]
      %361 = vrot.lane.b32.xlu0 %v357, 4
      %v362 = vpop.permute.xlu0 %361
      %363 = vrot.lane.b32.xlu0 %v358, 4
      %v364 = vpop.permute.xlu0 %363
      %v365 = vsel %vm223, %v362, %v364
      %367 = vst [vmem:[#allocation3 + $0x8] sm:$0xff] %v365
      %v368 = vld [vmem:[#allocation2] sm:$0xff]
      %v369 = vld [vmem:[#allocation2 + $0x8] sm:$0xff]
      %372 = vrot.lane.b32.xlu0 %v368, 3
      %v373 = vpop.permute.xlu0 %372
      %374 = vrot.lane.b32.xlu0 %v369, 3
      %v375 = vpop.permute.xlu0 %374
      %v376 = vsel %vm235, %v373, %v375
      %378 = vst [vmem:[#allocation3 + $0x10] sm:$0xff] %v376
      %v379 = vld [vmem:[#allocation2] sm:$0xff]
      %v380 = vld [vmem:[#allocation2 + $0x8] sm:$0xff]
      %383 = vrot.lane.b32.xlu0 %v379, 1
      %v384 = vpop.permute.xlu0 %383
      %385 = vrot.lane.b32.xlu0 %v380, 1
      %v386 = vpop.permute.xlu0 %385
      %v387 = vsel %vm247, %v384, %v386
      %389 = vst [vmem:[#allocation3 + $0x18] sm:$0xff] %v387
      %v390 = vld [vmem:[#allocation2 + $0x8] sm:$0xff]
      %391 = vst [vmem:[#allocation3 + $0x20] sm:$0xff] %v390
      %v392 = vld [vmem:[#allocation2 + $0x8] sm:$0xff]
      %v393 = vld [vmem:[#allocation2 + $0x10] sm:$0xff]
      %396 = vrot.lane.b32.xlu0 %v392, 127
      %v397 = vpop.permute.xlu0 %396
      %398 = vrot.lane.b32.xlu0 %v393, 127
      %v399 = vpop.permute.xlu0 %398
      %v400 = vsel %vm261, %v397, %v399
      %402 = vst [vmem:[#allocation3 + $0x28] sm:$0xff] %v400
      %v403 = vld [vmem:[#allocation2 + $0x8] sm:$0xff]
      %v404 = vld [vmem:[#allocation2 + $0x10] sm:$0xff]
      %407 = vrot.lane.b32.xlu0 %v403, 125
      %v408 = vpop.permute.xlu0 %407
      %409 = vrot.lane.b32.xlu0 %v404, 125
      %v410 = vpop.permute.xlu0 %409
      %v411 = vsel %vm273, %v408, %v410
      %413 = vst [vmem:[#allocation3 + $0x30] sm:$0xff] %v411
      %v414 = vld [vmem:[#allocation2 + $0x8] sm:$0xff]
      %v415 = vld [vmem:[#allocation2 + $0x10] sm:$0xff]
      %418 = vrot.lane.b32.xlu0 %v414, 124
      %v419 = vpop.permute.xlu0 %418
      %420 = vrot.lane.b32.xlu0 %v415, 124
      %v421 = vpop.permute.xlu0 %420
      %v422 = vsel %vm285, %v419, %v421
      %424 = vst [vmem:[#allocation3 + $0x38] sm:$0xff] %v422
      %v425 = vld [vmem:[#allocation2 + $0x8] sm:$0xff]
      %v426 = vld [vmem:[#allocation2 + $0x10] sm:$0xff]
      %429 = vrot.lane.b32.xlu0 %v425, 123
      %v430 = vpop.permute.xlu0 %429
      %431 = vrot.lane.b32.xlu0 %v426, 123
      %v432 = vpop.permute.xlu0 %431
      %v433 = vsel %vm297, %v430, %v432
      %435 = vst [vmem:[#allocation3 + $0x40] sm:$0xff] %v433
      %s436 = scalar_lea.vmem %s1, 4
      %v437 = vld [vmem:[%s436] sm:$0xf]
      %v438 = vld [vmem:[#allocation3] sm:$0xff]
      %v439 = vld [vmem:[#allocation3 + $0x8] sm:$0xff]
      %v440 = vld [vmem:[#allocation3 + $0x10] sm:$0xff]
      %v441 = vld [vmem:[#allocation3 + $0x18] sm:$0xff]
      %v442 = vld [vmem:[#allocation3 + $0x20] sm:$0xff]
      %v443 = vld [vmem:[#allocation3 + $0x28] sm:$0xff]
      %v444 = vld [vmem:[#allocation3 + $0x30] sm:$0xff]
      %v445 = vld [vmem:[#allocation3 + $0x38] sm:$0xff]
      %v446 = vld [vmem:[#allocation3 + $0x40] sm:$0xff]
      %v447 = vpack.c.bf16 %v439, %v438
      %v448 = vpack.c.bf16 %v441, %v440
      %v449 = vpack.c.bf16 %v443, %v442
      %v450 = vpack.c.bf16 %v445, %v444
      %v451 = vpack.c.bf16 %v446, %v446
      %s452 = scalar_lea.vmem %s2, 8
      %v453 = vld [vmem:[%s452] sm:$0xff]
      %455 = vset.pattern.permute.xlu0 0
      %456 = vperm.xlu0 %455, %v453
      %v457 = vpop.permute.xlu0 %456
      %v460 = vsel %vm322, %v437, 0
      %v463 = vsel %vm326, %v451, 0
      %465 = vmatpush.bf16.msra.mxu0 0
      %466 = vmatpush.bf16.msra.mxu0 0
      %467 = vmatpush.bf16.msra.mxu0 0
      %468 = vmatpush.bf16.msra.mxu0 %v463
      %469 = vmatpush.bf16.msra.mxu0 %v450
      %470 = vmatpush.bf16.msra.mxu0 %v449
      %471 = vmatpush.bf16.msra.mxu0 %v448
      %472 = vmatpush.bf16.msra.mxu0 %v447
      %473 = vmatmul.bf16.gmra.mxu0 %v460
      %v474 = vpop.f32.mrf.mxu0
      %v475 = vadd.f32 %v457, %v474
      %v476 = vpop.f32.mrf.mxu0
      %477 = vdwg.mxu0
      %v478 = vadd.f32 %v197, %v475
      %479 = vst [vmem:[%s192] sm:$0xff] %v478
      %p480 = scmp.lt.s32.totalorder %s15, 1
      %s481 = scalar_select %p480, %s15, 1
      %s482 = smul.addr %s481, 8
      %s483 = scalar_lea.vmem %s4, %s482
      // Predicated region
      $region37: #{predeblur_forward.11} parent=35 // pred_check
        %p484 = pneg %p122
      $region38: #{predeblur_forward.11} parent=35 // pred_check_branch
        %486 = sbr.rel (%p484) target = $region40
      $region39: #{predeblur_forward.11} parent=35 // pred_region
        _
      $region40: #{predeblur_forward.11} parent=35 // pred_fallthru
        _
    $region36: #{predeblur_forward.11} parent=5 // pred_fallthru
      _
    %p487 = scmp.le.s32.totalorder 2, %s10
    // Predicated region
    $region41: #{predeblur_forward.11} parent=5 // pred_check
      %p488 = pneg %p487
    $region42: #{predeblur_forward.11} parent=5 // pred_check_branch
      %490 = sbr.rel (%p488) target = $region44
    $region43: #{predeblur_forward.11} parent=5 // pred_region
      %s491 = ssub.s32 %s10, 2
      // Predicated region
      $region45: #{predeblur_forward.11} parent=43 // pred_check
        %p492 = pneg %p128
      $region46: #{predeblur_forward.11} parent=43 // pred_check_branch
        %494 = sbr.rel (%p492) target = $region48
      $region47: #{predeblur_forward.11} parent=43 // pred_region
        %p495 = scmp.lt.s32.totalorder %s16, 1
        %s496 = scalar_select %p495, %s16, 1
        %s497 = smul.addr %s496, 8
        %s498 = scalar_lea.vmem %s4, %s497
      $region48: #{predeblur_forward.11} parent=43 // pred_fallthru
        _
    $region44: #{predeblur_forward.11} parent=5 // pred_fallthru
      _
  $region6: #{predeblur_forward.11} parent=0 // loop_footer
    %s14 = sadd.s32 1, %s10
  $region7: #{predeblur_forward.11} parent=0 // loop_footer_branch
    %9 = sbr.rel target = $region3
  $region8: #{predeblur_forward.11} parent=0 // loop_exit
    _

// kernel: predeblur_forward.12
$region0: #{predeblur_forward.12}
  #allocation0 [shape = 'u32[]', space=smem, size = 0x4, offset = 0x4, fixed_abs, tag = 'smem constant byte address 0x4 - core index']
  #allocation1 [shape = 'u32[72,128]{1,0:T(1,128)}', space=vmem, size = 0x9000, scoped, tag = 'internal scratch']
  #allocation2 [shape = 'f32[8,384]{1,0:T(8,128)}', space=vmem, size = 0x3000, scoped, tag = 'scratch operand']
  #allocation3 [shape = 'f32[72,128]{1,0:T(8,128)}', space=vmem, size = 0x9000, scoped, tag = 'scratch operand']
  %s0 = inlined_call_operand.vmem [shape: f32[2,8,128], index: 0, kind: input, shape index: {}]
  %s1 = inlined_call_operand.vmem [shape: bf16[4,8,72], index: 1, kind: input, shape index: {}]
  %s2 = inlined_call_operand.vmem [shape: f32[4,8,1], index: 2, kind: input, shape index: {}]
  %s3 = inlined_call_operand.vmem [shape: f32[1,128], index: 3, kind: input, shape index: {}]
  %s4 = inlined_call_operand.vmem [shape: f32[2,8,128], index: 4, kind: input, shape index: {}]
  %s5 = inlined_call_operand.vmem [shape: f32[2,8,128], index: 5, kind: output, shape index: {}]
  %s6 = sld [smem:[#allocation0]]
  $region53: #{predeblur_forward.12} parent=0
    _
  %s8 = ssub.s32 1, %s6
  %s9 = scalar_select 0, %s8, %s6
  loop: start=0, step=1, limit=4
  $region2: #{predeblur_forward.12} parent=0 // loop_pre_header
    _
  $region3: #{predeblur_forward.12} parent=0 // loop_header
    %s11 = sphi 0, %s15
    %p12 = scmp.ge.s32.totalorder %s11, 4
    %s21 = sphi 0, %s23
    %s24 = sphi 0, %s21
    %s25 = sphi 0, %s24
    %s41 = sphi 0, %s25
    %s45 = sphi 0, %s45
    %s47 = sphi 0, %s45
    %s48 = sphi 0, %s47
    %s62 = sphi 0, %s48
    %s66 = sphi 0, %s66
    %s68 = sphi 0, %s66
    %s69 = sphi 0, %s68
    %s83 = sphi 0, %s69
    %s87 = sphi 0, %s87
    %s89 = sphi 0, %s87
    %s90 = sphi 0, %s89
    %s104 = sphi 0, %s90
    %s110 = sphi 0, %s112
    %s113 = sphi 0, %s110
    %s114 = sphi 0, %s113
    %s130 = sphi 0, %s114
    %s136 = sphi 0, %s138
    %s139 = sphi 0, %s136
    %s140 = sphi 0, %s139
    %s156 = sphi 0, %s140
  $region4: #{predeblur_forward.12} parent=0 // loop_header_branch
    %14 = sbr.rel (%p12) target = $region8
  $region5: #{predeblur_forward.12} parent=0 // loop_body
    %s16 = ssub.s32 %s11, 1
    %s17 = ssub.s32 %s11, 2
    %s18 = sadd.s32 %s11, 1
    %s19 = ssub.s32 %s11, %s18
    %p20 = scmp.eq.s32.totalorder %s19, 0
    %s22 = sadd.s32 %s21, 1
    %s23 = scalar_select %p20, %s21, %s22
    %p26 = pneg %p20
    %p27 = scmp.eq.s32.totalorder %s11, 1
    %p28 = por %p26, %p27
    %p29 = scmp.ne.s32.totalorder %s21, %s24
    %p30 = scmp.eq.s32.totalorder %s11, 0
    %p31 = por %p29, %p30
    %p32 = scmp.ne.s32.totalorder %s21, %s24
    %p33 = scmp.eq.s32.totalorder %s16, 1
    %p34 = por %p32, %p33
    %p35 = scmp.ne.s32.totalorder %s24, %s25
    %p36 = scmp.eq.s32.totalorder %s16, 0
    %p37 = por %p35, %p36
    %p38 = scmp.ne.s32.totalorder %s24, %s25
    %p39 = scmp.eq.s32.totalorder %s17, 1
    %p40 = por %p38, %p39
    %p42 = scmp.ne.s32.totalorder %s25, %s41
    %p43 = scmp.eq.s32.totalorder %s17, 0
    %p44 = por %p42, %p43
    %s46 = sadd.s32 %s45, 1
    %p49 = scmp.eq.s32.totalorder %s11, 1
    %p50 = scmp.ne.s32.totalorder %s45, %s47
    %p51 = scmp.eq.s32.totalorder %s11, 0
    %p52 = por %p50, %p51
    %p53 = scmp.ne.s32.totalorder %s45, %s47
    %p54 = scmp.eq.s32.totalorder %s16, 1
    %p55 = por %p53, %p54
    %p56 = scmp.ne.s32.totalorder %s47, %s48
    %p57 = scmp.eq.s32.totalorder %s16, 0
    %p58 = por %p56, %p57
    %p59 = scmp.ne.s32.totalorder %s47, %s48
    %p60 = scmp.eq.s32.totalorder %s17, 1
    %p61 = por %p59, %p60
    %p63 = scmp.ne.s32.totalorder %s48, %s62
    %p64 = scmp.eq.s32.totalorder %s17, 0
    %p65 = por %p63, %p64
    %s67 = sadd.s32 %s66, 1
    %p70 = scmp.eq.s32.totalorder %s11, 1
    %p71 = scmp.ne.s32.totalorder %s66, %s68
    %p72 = scmp.eq.s32.totalorder %s11, 0
    %p73 = por %p71, %p72
    %p74 = scmp.ne.s32.totalorder %s66, %s68
    %p75 = scmp.eq.s32.totalorder %s16, 1
    %p76 = por %p74, %p75
    %p77 = scmp.ne.s32.totalorder %s68, %s69
    %p78 = scmp.eq.s32.totalorder %s16, 0
    %p79 = por %p77, %p78
    %p80 = scmp.ne.s32.totalorder %s68, %s69
    %p81 = scmp.eq.s32.totalorder %s17, 1
    %p82 = por %p80, %p81
    %p84 = scmp.ne.s32.totalorder %s69, %s83
    %p85 = scmp.eq.s32.totalorder %s17, 0
    %p86 = por %p84, %p85
    %s88 = sadd.s32 %s87, 1
    %p91 = scmp.eq.s32.totalorder %s11, 1
    %p92 = scmp.ne.s32.totalorder %s87, %s89
    %p93 = scmp.eq.s32.totalorder %s11, 0
    %p94 = por %p92, %p93
    %p95 = scmp.ne.s32.totalorder %s87, %s89
    %p96 = scmp.eq.s32.totalorder %s16, 1
    %p97 = por %p95, %p96
    %p98 = scmp.ne.s32.totalorder %s89, %s90
    %p99 = scmp.eq.s32.totalorder %s16, 0
    %p100 = por %p98, %p99
    %p101 = scmp.ne.s32.totalorder %s89, %s90
    %p102 = scmp.eq.s32.totalorder %s17, 1
    %p103 = por %p101, %p102
    %p105 = scmp.ne.s32.totalorder %s90, %s104
    %p106 = scmp.eq.s32.totalorder %s17, 0
    %p107 = por %p105, %p106
    %s108 = ssub.s32 %s11, %s18
    %p109 = scmp.eq.s32.totalorder %s108, 0
    %s111 = sadd.s32 %s110, 1
    %s112 = scalar_select %p109, %s110, %s111
    %p115 = pneg %p109
    %p116 = scmp.eq.s32.totalorder %s11, 1
    %p117 = por %p115, %p116
    %p118 = scmp.ne.s32.totalorder %s110, %s113
    %p119 = scmp.eq.s32.totalorder %s11, 0
    %p120 = por %p118, %p119
    %p121 = scmp.ne.s32.totalorder %s110, %s113
    %p122 = scmp.eq.s32.totalorder %s16, 1
    %p123 = por %p121, %p122
    %p124 = scmp.ne.s32.totalorder %s113, %s114
    %p125 = scmp.eq.s32.totalorder %s16, 0
    %p126 = por %p124, %p125
    %p127 = scmp.ne.s32.totalorder %s113, %s114
    %p128 = scmp.eq.s32.totalorder %s17, 1
    %p129 = por %p127, %p128
    %p131 = scmp.ne.s32.totalorder %s114, %s130
    %p132 = scmp.eq.s32.totalorder %s17, 0
    %p133 = por %p131, %p132
    %s134 = ssub.s32 %s11, %s18
    %p135 = scmp.eq.s32.totalorder %s134, 0
    %s137 = sadd.s32 %s136, 1
    %s138 = scalar_select %p135, %s136, %s137
    %p141 = pneg %p135
    %p142 = scmp.eq.s32.totalorder %s11, 1
    %p143 = por %p141, %p142
    %p144 = scmp.ne.s32.totalorder %s136, %s139
    %p145 = scmp.eq.s32.totalorder %s11, 0
    %p146 = por %p144, %p145
    %p147 = scmp.ne.s32.totalorder %s136, %s139
    %p148 = scmp.eq.s32.totalorder %s16, 1
    %p149 = por %p147, %p148
    %p150 = scmp.ne.s32.totalorder %s139, %s140
    %p151 = scmp.eq.s32.totalorder %s16, 0
    %p152 = por %p150, %p151
    %p153 = scmp.ne.s32.totalorder %s139, %s140
    %p154 = scmp.eq.s32.totalorder %s17, 1
    %p155 = por %p153, %p154
    %p157 = scmp.ne.s32.totalorder %s140, %s156
    %p158 = scmp.eq.s32.totalorder %s17, 0
    %p159 = por %p157, %p158
    %p160 = scmp.le.s32.totalorder 1, %s11
    %p161 = scmp.lt.s32.totalorder %s11, 3
    %p162 = pnand %p160, %p161
    %p163 = pneg %p162
    // Predicated region
    $region9: #{predeblur_forward.12} parent=5 // pred_check
      _
    $region10: #{predeblur_forward.12} parent=5 // pred_check_branch
      %165 = sbr.rel (%p162) target = $region12
    $region11: #{predeblur_forward.12} parent=5 // pred_region
      %s166 = ssub.s32 %s11, 1
      // Predicated region
      $region13: #{predeblur_forward.12} parent=11 // pred_check
        %p167 = pneg %p58
      $region14: #{predeblur_forward.12} parent=11 // pred_check_branch
        %169 = sbr.rel (%p167) target = $region16
      $region15: #{predeblur_forward.12} parent=11 // pred_region
        _
      $region16: #{predeblur_forward.12} parent=11 // pred_fallthru
        _
      // Predicated region
      $region17: #{predeblur_forward.12} parent=11 // pred_check
        %p170 = pneg %p79
      $region18: #{predeblur_forward.12} parent=11 // pred_check_branch
        %172 = sbr.rel (%p170) target = $region20
      $region19: #{predeblur_forward.12} parent=11 // pred_region
        _
      $region20: #{predeblur_forward.12} parent=11 // pred_fallthru
        _
      // Predicated region
      $region21: #{predeblur_forward.12} parent=11 // pred_check
        %p173 = pneg %p100
      $region22: #{predeblur_forward.12} parent=11 // pred_check_branch
        %175 = sbr.rel (%p173) target = $region24
      $region23: #{predeblur_forward.12} parent=11 // pred_region
        _
      $region24: #{predeblur_forward.12} parent=11 // pred_fallthru
        _
    $region12: #{predeblur_forward.12} parent=5 // pred_fallthru
      _
    %p176 = scmp.lt.s32.totalorder %s11, 2
    // Predicated region
    $region25: #{predeblur_forward.12} parent=5 // pred_check
      %p177 = pneg %p176
    $region26: #{predeblur_forward.12} parent=5 // pred_check_branch
      %179 = sbr.rel (%p177) target = $region28
    $region27: #{predeblur_forward.12} parent=5 // pred_region
      // Predicated region
      $region29: #{predeblur_forward.12} parent=27 // pred_check
        %p180 = pneg %p31
      $region30: #{predeblur_forward.12} parent=27 // pred_check_branch
        %182 = sbr.rel (%p180) target = $region32
      $region31: #{predeblur_forward.12} parent=27 // pred_region
        %p183 = scmp.lt.s32.totalorder %s11, 1
        %s184 = scalar_select %p183, %s11, 1
        %s185 = smul.addr %s184, 8
        %s186 = scalar_lea.vmem %s0, %s185
      $region32: #{predeblur_forward.12} parent=27 // pred_fallthru
        _
      // Predicated region
      $region33: #{predeblur_forward.12} parent=27 // pred_check
        %p187 = pneg %p120
      $region34: #{predeblur_forward.12} parent=27 // pred_check_branch
        %189 = sbr.rel (%p187) target = $region36
      $region35: #{predeblur_forward.12} parent=27 // pred_region
        %p190 = scmp.lt.s32.totalorder %s11, 1
        %s191 = scalar_select %p190, %s11, 1
        %s192 = smul.addr %s191, 8
        %s193 = scalar_lea.vmem %s4, %s192
      $region36: #{predeblur_forward.12} parent=27 // pred_fallthru
        _
    $region28: #{predeblur_forward.12} parent=5 // pred_fallthru
      _
    %p194 = scmp.le.s32.totalorder 1, %s11
    %p195 = scmp.lt.s32.totalorder %s11, 3
    %p196 = pnand %p194, %p195
    %p197 = pneg %p196
    // Predicated region
    $region37: #{predeblur_forward.12} parent=5 // pred_check
      _
    $region38: #{predeblur_forward.12} parent=5 // pred_check_branch
      %199 = sbr.rel (%p196) target = $region40
    $region39: #{predeblur_forward.12} parent=5 // pred_region
      %s200 = ssub.s32 %s11, 1
      %p201 = scmp.lt.s32.totalorder %s16, 1
      %s202 = scalar_select %p201, %s16, 1
      %s203 = smul.addr %s202, 8
      %s204 = scalar_lea.vmem %s0, %s203
      %p205 = pneg %p37
      %p206 = pneg %p34
      %p207 = pneg %p58
      %p208 = pneg %p55
      %p209 = pneg %p79
      %p210 = pneg %p76
      %p211 = pneg %p100
      %p212 = pneg %p97
      %p213 = scmp.lt.s32.totalorder %s16, 1
      %s214 = scalar_select %p213, %s16, 1
      %s215 = smul.addr %s214, 8
      %s216 = scalar_lea.vmem %s4, %s215
      %p217 = pneg %p126
      %p218 = pneg %p123
      %p219 = pneg %p152
      %p220 = pneg %p149
      %p221 = scmp.lt.s32.totalorder %s16, 1
      %s222 = scalar_select %p221, %s16, 1
      %s223 = smul.addr %s222, 8
      %s224 = scalar_lea.vmem %s5, %s223
      %p225 = scmp.lt.s32.totalorder %s16, 1
      %s226 = scalar_select %p225, %s16, 1
      %s227 = smul.addr %s226, 8
      %s228 = scalar_lea.vmem %s0, %s227
      %p229 = scmp.lt.s32.totalorder %s16, 1
      %s230 = scalar_select %p229, %s16, 1
      %s231 = smul.addr %s230, 8
      %s232 = scalar_lea.vmem %s4, %s231
      %p233 = scmp.lt.s32.totalorder %s16, 1
      %s234 = scalar_select %p233, %s16, 1
      %s235 = smul.addr %s234, 8
      %s236 = scalar_lea.vmem %s5, %s235
      %v238 = vld [vmem:[%s3] sm:$0x1]
      %239 = vst [vmem:[#allocation2] sm:$0xff] 0.0
      %240 = vst [vmem:[#allocation2 + $0x10] sm:$0xff] 0.0
      %v241 = vld [vmem:[%s228] sm:$0xff]
      %v243 = vperm.slane %v238, 0
      %v245 = vmul.f32 %v241, %v243
      %246 = vst [vmem:[#allocation2 + $0x8] sm:$0xff] %v245
      %v247 = vld [vmem:[#allocation2] sm:$0xff]
      %v248 = vld [vmem:[#allocation2 + $0x8] sm:$0xff]
      %251 = vrot.lane.b32.xlu0 %v247, 7
      %v252 = vpop.permute.xlu0 %251
      %253 = vrot.lane.b32.xlu0 %v248, 7
      %v254 = vpop.permute.xlu0 %253
      %vm255 = vcmask 56320
      %v256 = vsel %vm255, %v252, %v254
      %258 = vst [vmem:[#allocation3] sm:$0xff] %v256
      %v259 = vld [vmem:[#allocation2] sm:$0xff]
      %v260 = vld [vmem:[#allocation2 + $0x8] sm:$0xff]
      %263 = vrot.lane.b32.xlu0 %v259, 6
      %v264 = vpop.permute.xlu0 %263
      %265 = vrot.lane.b32.xlu0 %v260, 6
      %v266 = vpop.permute.xlu0 %265
      %vm267 = vcmask 48128
      %v268 = vsel %vm267, %v264, %v266
      %270 = vst [vmem:[#allocation3 + $0x8] sm:$0xff] %v268
      %v271 = vld [vmem:[#allocation2] sm:$0xff]
      %v272 = vld [vmem:[#allocation2 + $0x8] sm:$0xff]
      %275 = vrot.lane.b32.xlu0 %v271, 5
      %v276 = vpop.permute.xlu0 %275
      %277 = vrot.lane.b32.xlu0 %v272, 5
      %v278 = vpop.permute.xlu0 %277
      %vm279 = vcmask 39936
      %v280 = vsel %vm279, %v276, %v278
      %282 = vst [vmem:[#allocation3 + $0x10] sm:$0xff] %v280
      %v283 = vld [vmem:[#allocation2] sm:$0xff]
      %v284 = vld [vmem:[#allocation2 + $0x8] sm:$0xff]
      %287 = vrot.lane.b32.xlu0 %v283, 1
      %v288 = vpop.permute.xlu0 %287
      %289 = vrot.lane.b32.xlu0 %v284, 1
      %v290 = vpop.permute.xlu0 %289
      %vm291 = vcmask 7168
      %v292 = vsel %vm291, %v288, %v290
      %294 = vst [vmem:[#allocation3 + $0x18] sm:$0xff] %v292
      %v295 = vld [vmem:[#allocation2 + $0x8] sm:$0xff]
      %296 = vst [vmem:[#allocation3 + $0x20] sm:$0xff] %v295
      %v297 = vld [vmem:[#allocation2 + $0x8] sm:$0xff]
      %v298 = vld [vmem:[#allocation2 + $0x10] sm:$0xff]
      %301 = vrot.lane.b32.xlu0 %v297, 127
      %v302 = vpop.permute.xlu0 %301
      %303 = vrot.lane.b32.xlu0 %v298, 127
      %v304 = vpop.permute.xlu0 %303
      %vm305 = vcmask 1039360
      %v306 = vsel %vm305, %v302, %v304
      %308 = vst [vmem:[#allocation3 + $0x28] sm:$0xff] %v306
      %v309 = vld [vmem:[#allocation2 + $0x8] sm:$0xff]
      %v310 = vld [vmem:[#allocation2 + $0x10] sm:$0xff]
      %313 = vrot.lane.b32.xlu0 %v309, 123
      %v314 = vpop.permute.xlu0 %313
      %315 = vrot.lane.b32.xlu0 %v310, 123
      %v316 = vpop.permute.xlu0 %315
      %vm317 = vcmask 1006592
      %v318 = vsel %vm317, %v314, %v316
      %320 = vst [vmem:[#allocation3 + $0x30] sm:$0xff] %v318
      %v321 = vld [vmem:[#allocation2 + $0x8] sm:$0xff]
      %v322 = vld [vmem:[#allocation2 + $0x10] sm:$0xff]
      %325 = vrot.lane.b32.xlu0 %v321, 122
      %v326 = vpop.permute.xlu0 %325
      %327 = vrot.lane.b32.xlu0 %v322, 122
      %v328 = vpop.permute.xlu0 %327
      %vm329 = vcmask 998400
      %v330 = vsel %vm329, %v326, %v328
      %332 = vst [vmem:[#allocation3 + $0x38] sm:$0xff] %v330
      %v333 = vld [vmem:[#allocation2 + $0x8] sm:$0xff]
      %v334 = vld [vmem:[#allocation2 + $0x10] sm:$0xff]
      %337 = vrot.lane.b32.xlu0 %v333, 121
      %v338 = vpop.permute.xlu0 %337
      %339 = vrot.lane.b32.xlu0 %v334, 121
      %v340 = vpop.permute.xlu0 %339
      %vm341 = vcmask 990208
      %v342 = vsel %vm341, %v338, %v340
      %344 = vst [vmem:[#allocation3 + $0x40] sm:$0xff] %v342
      %v345 = vld [vmem:[%s1] sm:$0xf]
      %v346 = vld [vmem:[#allocation3] sm:$0xff]
      %v347 = vld [vmem:[#allocation3 + $0x8] sm:$0xff]
      %v348 = vld [vmem:[#allocation3 + $0x10] sm:$0xff]
      %v349 = vld [vmem:[#allocation3 + $0x18] sm:$0xff]
      %v350 = vld [vmem:[#allocation3 + $0x20] sm:$0xff]
      %v351 = vld [vmem:[#allocation3 + $0x28] sm:$0xff]
      %v352 = vld [vmem:[#allocation3 + $0x30] sm:$0xff]
      %v353 = vld [vmem:[#allocation3 + $0x38] sm:$0xff]
      %v354 = vld [vmem:[#allocation3 + $0x40] sm:$0xff]
      %v355 = vpack.c.bf16 %v347, %v346
      %v356 = vpack.c.bf16 %v349, %v348
      %v357 = vpack.c.bf16 %v351, %v350
      %v358 = vpack.c.bf16 %v353, %v352
      %v359 = vpack.c.bf16 %v354, %v354
      %v360 = vld [vmem:[%s2] sm:$0xff]
      %362 = vset.pattern.permute.xlu0 0
      %363 = vperm.xlu0 %362, %v360
      %v364 = vpop.permute.xlu0 %363
      %vm366 = vcmask 588800
      %v368 = vsel %vm366, %v345, 0
      %vm370 = vcmask 1043456
      %v372 = vsel %vm370, %v359, 0
      %374 = vmatpush.bf16.msra.mxu0 0
      %375 = vmatpush.bf16.msra.mxu0 0
      %376 = vmatpush.bf16.msra.mxu0 0
      %377 = vmatpush.bf16.msra.mxu0 %v372
      %378 = vmatpush.bf16.msra.mxu0 %v358
      %379 = vmatpush.bf16.msra.mxu0 %v357
      %380 = vmatpush.bf16.msra.mxu0 %v356
      %381 = vmatpush.bf16.msra.mxu0 %v355
      %382 = vmatmul.bf16.gmra.mxu0 %v368
      %v383 = vpop.f32.mrf.mxu0
      %v384 = vadd.f32 %v364, %v383
      %v385 = vpop.f32.mrf.mxu0
      %386 = vdwg.mxu0
      %v387 = vmax.f32 %v384, 0.0
      %v388 = vmul.f32 %v387, %v243
      %389 = vst [vmem:[#allocation2 + $0x8] sm:$0xff] %v388
      %v390 = vld [vmem:[#allocation2] sm:$0xff]
      %v391 = vld [vmem:[#allocation2 + $0x8] sm:$0xff]
      %394 = vrot.lane.b32.xlu0 %v390, 7
      %v395 = vpop.permute.xlu0 %394
      %396 = vrot.lane.b32.xlu0 %v391, 7
      %v397 = vpop.permute.xlu0 %396
      %v398 = vsel %vm255, %v395, %v397
      %400 = vst [vmem:[#allocation3] sm:$0xff] %v398
      %v401 = vld [vmem:[#allocation2] sm:$0xff]
      %v402 = vld [vmem:[#allocation2 + $0x8] sm:$0xff]
      %405 = vrot.lane.b32.xlu0 %v401, 6
      %v406 = vpop.permute.xlu0 %405
      %407 = vrot.lane.b32.xlu0 %v402, 6
      %v408 = vpop.permute.xlu0 %407
      %v409 = vsel %vm267, %v406, %v408
      %411 = vst [vmem:[#allocation3 + $0x8] sm:$0xff] %v409
      %v412 = vld [vmem:[#allocation2] sm:$0xff]
      %v413 = vld [vmem:[#allocation2 + $0x8] sm:$0xff]
      %416 = vrot.lane.b32.xlu0 %v412, 5
      %v417 = vpop.permute.xlu0 %416
      %418 = vrot.lane.b32.xlu0 %v413, 5
      %v419 = vpop.permute.xlu0 %418
      %v420 = vsel %vm279, %v417, %v419
      %422 = vst [vmem:[#allocation3 + $0x10] sm:$0xff] %v420
      %v423 = vld [vmem:[#allocation2] sm:$0xff]
      %v424 = vld [vmem:[#allocation2 + $0x8] sm:$0xff]
      %427 = vrot.lane.b32.xlu0 %v423, 1
      %v428 = vpop.permute.xlu0 %427
      %429 = vrot.lane.b32.xlu0 %v424, 1
      %v430 = vpop.permute.xlu0 %429
      %v431 = vsel %vm291, %v428, %v430
      %433 = vst [vmem:[#allocation3 + $0x18] sm:$0xff] %v431
      %v434 = vld [vmem:[#allocation2 + $0x8] sm:$0xff]
      %435 = vst [vmem:[#allocation3 + $0x20] sm:$0xff] %v434
      %v436 = vld [vmem:[#allocation2 + $0x8] sm:$0xff]
      %v437 = vld [vmem:[#allocation2 + $0x10] sm:$0xff]
      %440 = vrot.lane.b32.xlu0 %v436, 127
      %v441 = vpop.permute.xlu0 %440
      %442 = vrot.lane.b32.xlu0 %v437, 127
      %v443 = vpop.permute.xlu0 %442
      %v444 = vsel %vm305, %v441, %v443
      %446 = vst [vmem:[#allocation3 + $0x28] sm:$0xff] %v444
      %v447 = vld [vmem:[#allocation2 + $0x8] sm:$0xff]
      %v448 = vld [vmem:[#allocation2 + $0x10] sm:$0xff]
      %451 = vrot.lane.b32.xlu0 %v447, 123
      %v452 = vpop.permute.xlu0 %451
      %453 = vrot.lane.b32.xlu0 %v448, 123
      %v454 = vpop.permute.xlu0 %453
      %v455 = vsel %vm317, %v452, %v454
      %457 = vst [vmem:[#allocation3 + $0x30] sm:$0xff] %v455
      %v458 = vld [vmem:[#allocation2 + $0x8] sm:$0xff]
      %v459 = vld [vmem:[#allocation2 + $0x10] sm:$0xff]
      %462 = vrot.lane.b32.xlu0 %v458, 122
      %v463 = vpop.permute.xlu0 %462
      %464 = vrot.lane.b32.xlu0 %v459, 122
      %v465 = vpop.permute.xlu0 %464
      %v466 = vsel %vm329, %v463, %v465
      %468 = vst [vmem:[#allocation3 + $0x38] sm:$0xff] %v466
      %v469 = vld [vmem:[#allocation2 + $0x8] sm:$0xff]
      %v470 = vld [vmem:[#allocation2 + $0x10] sm:$0xff]
      %473 = vrot.lane.b32.xlu0 %v469, 121
      %v474 = vpop.permute.xlu0 %473
      %475 = vrot.lane.b32.xlu0 %v470, 121
      %v476 = vpop.permute.xlu0 %475
      %v477 = vsel %vm341, %v474, %v476
      %479 = vst [vmem:[#allocation3 + $0x40] sm:$0xff] %v477
      %s480 = scalar_lea.vmem %s1, 4
      %v481 = vld [vmem:[%s480] sm:$0xf]
      %v482 = vld [vmem:[#allocation3] sm:$0xff]
      %v483 = vld [vmem:[#allocation3 + $0x8] sm:$0xff]
      %v484 = vld [vmem:[#allocation3 + $0x10] sm:$0xff]
      %v485 = vld [vmem:[#allocation3 + $0x18] sm:$0xff]
      %v486 = vld [vmem:[#allocation3 + $0x20] sm:$0xff]
      %v487 = vld [vmem:[#allocation3 + $0x28] sm:$0xff]
      %v488 = vld [vmem:[#allocation3 + $0x30] sm:$0xff]
      %v489 = vld [vmem:[#allocation3 + $0x38] sm:$0xff]
      %v490 = vld [vmem:[#allocation3 + $0x40] sm:$0xff]
      %v491 = vpack.c.bf16 %v483, %v482
      %v492 = vpack.c.bf16 %v485, %v484
      %v493 = vpack.c.bf16 %v487, %v486
      %v494 = vpack.c.bf16 %v489, %v488
      %v495 = vpack.c.bf16 %v490, %v490
      %s496 = scalar_lea.vmem %s2, 8
      %v497 = vld [vmem:[%s496] sm:$0xff]
      %499 = vset.pattern.permute.xlu0 0
      %500 = vperm.xlu0 %499, %v497
      %v501 = vpop.permute.xlu0 %500
      %v504 = vsel %vm366, %v481, 0
      %v507 = vsel %vm370, %v495, 0
      %509 = vmatpush.bf16.msra.mxu0 0
      %510 = vmatpush.bf16.msra.mxu0 0
      %511 = vmatpush.bf16.msra.mxu0 0
      %512 = vmatpush.bf16.msra.mxu0 %v507
      %513 = vmatpush.bf16.msra.mxu0 %v494
      %514 = vmatpush.bf16.msra.mxu0 %v493
      %515 = vmatpush.bf16.msra.mxu0 %v492
      %516 = vmatpush.bf16.msra.mxu0 %v491
      %517 = vmatmul.bf16.gmra.mxu0 %v504
      %v518 = vpop.f32.mrf.mxu0
      %v519 = vadd.f32 %v501, %v518
      %v520 = vpop.f32.mrf.mxu0
      %521 = vdwg.mxu0
      %v522 = vadd.f32 %v241, %v519
      %v523 = vld [vmem:[%s232] sm:$0xff]
      %v524 = vadd.f32 %v522, %v523
      %v525 = vmul.f32 %v524, %v243
      %526 = vst [vmem:[#allocation2 + $0x8] sm:$0xff] %v525
      %v527 = vld [vmem:[#allocation2] sm:$0xff]
      %v528 = vld [vmem:[#allocation2 + $0x8] sm:$0xff]
      %531 = vrot.lane.b32.xlu0 %v527, 7
      %v532 = vpop.permute.xlu0 %531
      %533 = vrot.lane.b32.xlu0 %v528, 7
      %v534 = vpop.permute.xlu0 %533
      %v535 = vsel %vm255, %v532, %v534
      %537 = vst [vmem:[#allocation3] sm:$0xff] %v535
      %v538 = vld [vmem:[#allocation2] sm:$0xff]
      %v539 = vld [vmem:[#allocation2 + $0x8] sm:$0xff]
      %542 = vrot.lane.b32.xlu0 %v538, 6
      %v543 = vpop.permute.xlu0 %542
      %544 = vrot.lane.b32.xlu0 %v539, 6
      %v545 = vpop.permute.xlu0 %544
      %v546 = vsel %vm267, %v543, %v545
      %548 = vst [vmem:[#allocation3 + $0x8] sm:$0xff] %v546
      %v549 = vld [vmem:[#allocation2] sm:$0xff]
      %v550 = vld [vmem:[#allocation2 + $0x8] sm:$0xff]
      %553 = vrot.lane.b32.xlu0 %v549, 5
      %v554 = vpop.permute.xlu0 %553
      %555 = vrot.lane.b32.xlu0 %v550, 5
      %v556 = vpop.permute.xlu0 %555
      %v557 = vsel %vm279, %v554, %v556
      %559 = vst [vmem:[#allocation3 + $0x10] sm:$0xff] %v557
      %v560 = vld [vmem:[#allocation2] sm:$0xff]
      %v561 = vld [vmem:[#allocation2 + $0x8] sm:$0xff]
      %564 = vrot.lane.b32.xlu0 %v560, 1
      %v565 = vpop.permute.xlu0 %564
      %566 = vrot.lane.b32.xlu0 %v561, 1
      %v567 = vpop.permute.xlu0 %566
      %v568 = vsel %vm291, %v565, %v567
      %570 = vst [vmem:[#allocation3 + $0x18] sm:$0xff] %v568
      %v571 = vld [vmem:[#allocation2 + $0x8] sm:$0xff]
      %572 = vst [vmem:[#allocation3 + $0x20] sm:$0xff] %v571
      %v573 = vld [vmem:[#allocation2 + $0x8] sm:$0xff]
      %v574 = vld [vmem:[#allocation2 + $0x10] sm:$0xff]
      %577 = vrot.lane.b32.xlu0 %v573, 127
      %v578 = vpop.permute.xlu0 %577
      %579 = vrot.lane.b32.xlu0 %v574, 127
      %v580 = vpop.permute.xlu0 %579
      %v581 = vsel %vm305, %v578, %v580
      %583 = vst [vmem:[#allocation3 + $0x28] sm:$0xff] %v581
      %v584 = vld [vmem:[#allocation2 + $0x8] sm:$0xff]
      %v585 = vld [vmem:[#allocation2 + $0x10] sm:$0xff]
      %588 = vrot.lane.b32.xlu0 %v584, 123
      %v589 = vpop.permute.xlu0 %588
      %590 = vrot.lane.b32.xlu0 %v585, 123
      %v591 = vpop.permute.xlu0 %590
      %v592 = vsel %vm317, %v589, %v591
      %594 = vst [vmem:[#allocation3 + $0x30] sm:$0xff] %v592
      %v595 = vld [vmem:[#allocation2 + $0x8] sm:$0xff]
      %v596 = vld [vmem:[#allocation2 + $0x10] sm:$0xff]
      %599 = vrot.lane.b32.xlu0 %v595, 122
      %v600 = vpop.permute.xlu0 %599
      %601 = vrot.lane.b32.xlu0 %v596, 122
      %v602 = vpop.permute.xlu0 %601
      %v603 = vsel %vm329, %v600, %v602
      %605 = vst [vmem:[#allocation3 + $0x38] sm:$0xff] %v603
      %v606 = vld [vmem:[#allocation2 + $0x8] sm:$0xff]
      %v607 = vld [vmem:[#allocation2 + $0x10] sm:$0xff]
      %610 = vrot.lane.b32.xlu0 %v606, 121
      %v611 = vpop.permute.xlu0 %610
      %612 = vrot.lane.b32.xlu0 %v607, 121
      %v613 = vpop.permute.xlu0 %612
      %v614 = vsel %vm341, %v611, %v613
      %616 = vst [vmem:[#allocation3 + $0x40] sm:$0xff] %v614
      %s617 = scalar_lea.vmem %s1, 8
      %v618 = vld [vmem:[%s617] sm:$0xf]
      %v619 = vld [vmem:[#allocation3] sm:$0xff]
      %v620 = vld [vmem:[#allocation3 + $0x8] sm:$0xff]
      %v621 = vld [vmem:[#allocation3 + $0x10] sm:$0xff]
      %v622 = vld [vmem:[#allocation3 + $0x18] sm:$0xff]
      %v623 = vld [vmem:[#allocation3 + $0x20] sm:$0xff]
      %v624 = vld [vmem:[#allocation3 + $0x28] sm:$0xff]
      %v625 = vld [vmem:[#allocation3 + $0x30] sm:$0xff]
      %v626 = vld [vmem:[#allocation3 + $0x38] sm:$0xff]
      %v627 = vld [vmem:[#allocation3 + $0x40] sm:$0xff]
      %v628 = vpack.c.bf16 %v620, %v619
      %v629 = vpack.c.bf16 %v622, %v621
      %v630 = vpack.c.bf16 %v624, %v623
      %v631 = vpack.c.bf16 %v626, %v625
      %v632 = vpack.c.bf16 %v627, %v627
      %s633 = scalar_lea.vmem %s2, 16
      %v634 = vld [vmem:[%s633] sm:$0xff]
      %636 = vset.pattern.permute.xlu0 0
      %637 = vperm.xlu0 %636, %v634
      %v638 = vpop.permute.xlu0 %637
      %v641 = vsel %vm366, %v618, 0
      %v644 = vsel %vm370, %v632, 0
      %646 = vmatpush.bf16.msra.mxu0 0
      %647 = vmatpush.bf16.msra.mxu0 0
      %648 = vmatpush.bf16.msra.mxu0 0
      %649 = vmatpush.bf16.msra.mxu0 %v644
      %650 = vmatpush.bf16.msra.mxu0 %v631
      %651 = vmatpush.bf16.msra.mxu0 %v630
      %652 = vmatpush.bf16.msra.mxu0 %v629
      %653 = vmatpush.bf16.msra.mxu0 %v628
      %654 = vmatmul.bf16.gmra.mxu0 %v641
      %v655 = vpop.f32.mrf.mxu0
      %v656 = vadd.f32 %v638, %v655
      %v657 = vpop.f32.mrf.mxu0
      %658 = vdwg.mxu0
      %v659 = vmax.f32 %v656, 0.0
      %v660 = vmul.f32 %v659, %v243
      %661 = vst [vmem:[#allocation2 + $0x8] sm:$0xff] %v660
      %v662 = vld [vmem:[#allocation2] sm:$0xff]
      %v663 = vld [vmem:[#allocation2 + $0x8] sm:$0xff]
      %666 = vrot.lane.b32.xlu0 %v662, 7
      %v667 = vpop.permute.xlu0 %666
      %668 = vrot.lane.b32.xlu0 %v663, 7
      %v669 = vpop.permute.xlu0 %668
      %v670 = vsel %vm255, %v667, %v669
      %672 = vst [vmem:[#allocation3] sm:$0xff] %v670
      %v673 = vld [vmem:[#allocation2] sm:$0xff]
      %v674 = vld [vmem:[#allocation2 + $0x8] sm:$0xff]
      %677 = vrot.lane.b32.xlu0 %v673, 6
      %v678 = vpop.permute.xlu0 %677
      %679 = vrot.lane.b32.xlu0 %v674, 6
      %v680 = vpop.permute.xlu0 %679
      %v681 = vsel %vm267, %v678, %v680
      %683 = vst [vmem:[#allocation3 + $0x8] sm:$0xff] %v681
      %v684 = vld [vmem:[#allocation2] sm:$0xff]
      %v685 = vld [vmem:[#allocation2 + $0x8] sm:$0xff]
      %688 = vrot.lane.b32.xlu0 %v684, 5
      %v689 = vpop.permute.xlu0 %688
      %690 = vrot.lane.b32.xlu0 %v685, 5
      %v691 = vpop.permute.xlu0 %690
      %v692 = vsel %vm279, %v689, %v691
      %694 = vst [vmem:[#allocation3 + $0x10] sm:$0xff] %v692
      %v695 = vld [vmem:[#allocation2] sm:$0xff]
      %v696 = vld [vmem:[#allocation2 + $0x8] sm:$0xff]
      %699 = vrot.lane.b32.xlu0 %v695, 1
      %v700 = vpop.permute.xlu0 %699
      %701 = vrot.lane.b32.xlu0 %v696, 1
      %v702 = vpop.permute.xlu0 %701
      %v703 = vsel %vm291, %v700, %v702
      %705 = vst [vmem:[#allocation3 + $0x18] sm:$0xff] %v703
      %v706 = vld [vmem:[#allocation2 + $0x8] sm:$0xff]
      %707 = vst [vmem:[#allocation3 + $0x20] sm:$0xff] %v706
      %v708 = vld [vmem:[#allocation2 + $0x8] sm:$0xff]
      %v709 = vld [vmem:[#allocation2 + $0x10] sm:$0xff]
      %712 = vrot.lane.b32.xlu0 %v708, 127
      %v713 = vpop.permute.xlu0 %712
      %714 = vrot.lane.b32.xlu0 %v709, 127
      %v715 = vpop.permute.xlu0 %714
      %v716 = vsel %vm305, %v713, %v715
      %718 = vst [vmem:[#allocation3 + $0x28] sm:$0xff] %v716
      %v719 = vld [vmem:[#allocation2 + $0x8] sm:$0xff]
      %v720 = vld [vmem:[#allocation2 + $0x10] sm:$0xff]
      %723 = vrot.lane.b32.xlu0 %v719, 123
      %v724 = vpop.permute.xlu0 %723
      %725 = vrot.lane.b32.xlu0 %v720, 123
      %v726 = vpop.permute.xlu0 %725
      %v727 = vsel %vm317, %v724, %v726
      %729 = vst [vmem:[#allocation3 + $0x30] sm:$0xff] %v727
      %v730 = vld [vmem:[#allocation2 + $0x8] sm:$0xff]
      %v731 = vld [vmem:[#allocation2 + $0x10] sm:$0xff]
      %734 = vrot.lane.b32.xlu0 %v730, 122
      %v735 = vpop.permute.xlu0 %734
      %736 = vrot.lane.b32.xlu0 %v731, 122
      %v737 = vpop.permute.xlu0 %736
      %v738 = vsel %vm329, %v735, %v737
      %740 = vst [vmem:[#allocation3 + $0x38] sm:$0xff] %v738
      %v741 = vld [vmem:[#allocation2 + $0x8] sm:$0xff]
      %v742 = vld [vmem:[#allocation2 + $0x10] sm:$0xff]
      %745 = vrot.lane.b32.xlu0 %v741, 121
      %v746 = vpop.permute.xlu0 %745
      %747 = vrot.lane.b32.xlu0 %v742, 121
      %v748 = vpop.permute.xlu0 %747
      %v749 = vsel %vm341, %v746, %v748
      %751 = vst [vmem:[#allocation3 + $0x40] sm:$0xff] %v749
      %s752 = scalar_lea.vmem %s1, 12
      %v753 = vld [vmem:[%s752] sm:$0xf]
      %v754 = vld [vmem:[#allocation3] sm:$0xff]
      %v755 = vld [vmem:[#allocation3 + $0x8] sm:$0xff]
      %v756 = vld [vmem:[#allocation3 + $0x10] sm:$0xff]
      %v757 = vld [vmem:[#allocation3 + $0x18] sm:$0xff]
      %v758 = vld [vmem:[#allocation3 + $0x20] sm:$0xff]
      %v759 = vld [vmem:[#allocation3 + $0x28] sm:$0xff]
      %v760 = vld [vmem:[#allocation3 + $0x30] sm:$0xff]
      %v761 = vld [vmem:[#allocation3 + $0x38] sm:$0xff]
      %v762 = vld [vmem:[#allocation3 + $0x40] sm:$0xff]
      %v763 = vpack.c.bf16 %v755, %v754
      %v764 = vpack.c.bf16 %v757, %v756
      %v765 = vpack.c.bf16 %v759, %v758
      %v766 = vpack.c.bf16 %v761, %v760
      %v767 = vpack.c.bf16 %v762, %v762
      %s768 = scalar_lea.vmem %s2, 24
      %v769 = vld [vmem:[%s768] sm:$0xff]
      %771 = vset.pattern.permute.xlu0 0
      %772 = vperm.xlu0 %771, %v769
      %v773 = vpop.permute.xlu0 %772
      %v776 = vsel %vm366, %v753, 0
      %v779 = vsel %vm370, %v767, 0
      %781 = vmatpush.bf16.msra.mxu0 0
      %782 = vmatpush.bf16.msra.mxu0 0
      %783 = vmatpush.bf16.msra.mxu0 0
      %784 = vmatpush.bf16.msra.mxu0 %v779
      %785 = vmatpush.bf16.msra.mxu0 %v766
      %786 = vmatpush.bf16.msra.mxu0 %v765
      %787 = vmatpush.bf16.msra.mxu0 %v764
      %788 = vmatpush.bf16.msra.mxu0 %v763
      %789 = vmatmul.bf16.gmra.mxu0 %v776
      %v790 = vpop.f32.mrf.mxu0
      %v791 = vadd.f32 %v773, %v790
      %v792 = vpop.f32.mrf.mxu0
      %793 = vdwg.mxu0
      %v794 = vadd.f32 %v524, %v791
      %795 = vst [vmem:[%s236] sm:$0xff] %v794
      %p796 = scmp.lt.s32.totalorder %s16, 1
      %s797 = scalar_select %p796, %s16, 1
      %s798 = smul.addr %s797, 8
      %s799 = scalar_lea.vmem %s5, %s798
      // Predicated region
      $region41: #{predeblur_forward.12} parent=39 // pred_check
        %p800 = pneg %p149
      $region42: #{predeblur_forward.12} parent=39 // pred_check_branch
        %802 = sbr.rel (%p800) target = $region44
      $region43: #{predeblur_forward.12} parent=39 // pred_region
        _
      $region44: #{predeblur_forward.12} parent=39 // pred_fallthru
        _
    $region40: #{predeblur_forward.12} parent=5 // pred_fallthru
      _
    %p803 = scmp.le.s32.totalorder 2, %s11
    // Predicated region
    $region45: #{predeblur_forward.12} parent=5 // pred_check
      %p804 = pneg %p803
    $region46: #{predeblur_forward.12} parent=5 // pred_check_branch
      %806 = sbr.rel (%p804) target = $region48
    $region47: #{predeblur_forward.12} parent=5 // pred_region
      %s807 = ssub.s32 %s11, 2
      // Predicated region
      $region49: #{predeblur_forward.12} parent=47 // pred_check
        %p808 = pneg %p155
      $region50: #{predeblur_forward.12} parent=47 // pred_check_branch
        %810 = sbr.rel (%p808) target = $region52
      $region51: #{predeblur_forward.12} parent=47 // pred_region
        %p811 = scmp.lt.s32.totalorder %s17, 1
        %s812 = scalar_select %p811, %s17, 1
        %s813 = smul.addr %s812, 8
        %s814 = scalar_lea.vmem %s5, %s813
      $region52: #{predeblur_forward.12} parent=47 // pred_fallthru
        _
    $region48: #{predeblur_forward.12} parent=5 // pred_fallthru
      _
  $region6: #{predeblur_forward.12} parent=0 // loop_footer
    %s15 = sadd.s32 1, %s11
  $region7: #{predeblur_forward.12} parent=0 // loop_footer_branch
    %10 = sbr.rel target = $region3
  $region8: #{predeblur_forward.12} parent=0 // loop_exit
    _

// kernel: predeblur_forward.13
$region0: #{predeblur_forward.13}
  #allocation0 [shape = 'u32[]', space=smem, size = 0x4, offset = 0x4, fixed_abs, tag = 'smem constant byte address 0x4 - core index']
  #allocation1 [shape = 'u32[72,128]{1,0:T(1,128)}', space=vmem, size = 0x9000, scoped, tag = 'internal scratch']
  #allocation2 [shape = 'f32[8,384]{1,0:T(8,128)}', space=vmem, size = 0x3000, scoped, tag = 'scratch operand']
  #allocation3 [shape = 'f32[72,128]{1,0:T(8,128)}', space=vmem, size = 0x9000, scoped, tag = 'scratch operand']
  %s0 = inlined_call_operand.vmem [shape: f32[2,8,128], index: 0, kind: input, shape index: {}]
  %s1 = inlined_call_operand.vmem [shape: bf16[10,8,72], index: 1, kind: input, shape index: {}]
  %s2 = inlined_call_operand.vmem [shape: f32[10,8,1], index: 2, kind: input, shape index: {}]
  %s3 = inlined_call_operand.vmem [shape: f32[1,128], index: 3, kind: input, shape index: {}]
  %s4 = inlined_call_operand.vmem [shape: f32[2,8,128], index: 4, kind: input, shape index: {}]
  %s5 = inlined_call_operand.vmem [shape: f32[2,8,128], index: 5, kind: output, shape index: {}]
  %s6 = sld [smem:[#allocation0]]
  $region53: #{predeblur_forward.13} parent=0
    _
  %s8 = ssub.s32 1, %s6
  %s9 = scalar_select 0, %s8, %s6
  loop: start=0, step=1, limit=4
  $region2: #{predeblur_forward.13} parent=0 // loop_pre_header
    _
  $region3: #{predeblur_forward.13} parent=0 // loop_header
    %s11 = sphi 0, %s15
    %p12 = scmp.ge.s32.totalorder %s11, 4
    %s21 = sphi 0, %s23
    %s24 = sphi 0, %s21
    %s25 = sphi 0, %s24
    %s41 = sphi 0, %s25
    %s45 = sphi 0, %s45
    %s47 = sphi 0, %s45
    %s48 = sphi 0, %s47
    %s62 = sphi 0, %s48
    %s66 = sphi 0, %s66
    %s68 = sphi 0, %s66
    %s69 = sphi 0, %s68
    %s83 = sphi 0, %s69
    %s87 = sphi 0, %s87
    %s89 = sphi 0, %s87
    %s90 = sphi 0, %s89
    %s104 = sphi 0, %s90
    %s110 = sphi 0, %s112
    %s113 = sphi 0, %s110
    %s114 = sphi 0, %s113
    %s130 = sphi 0, %s114
    %s136 = sphi 0, %s138
    %s139 = sphi 0, %s136
    %s140 = sphi 0, %s139
    %s156 = sphi 0, %s140
  $region4: #{predeblur_forward.13} parent=0 // loop_header_branch
    %14 = sbr.rel (%p12) target = $region8
  $region5: #{predeblur_forward.13} parent=0 // loop_body
    %s16 = ssub.s32 %s11, 1
    %s17 = ssub.s32 %s11, 2
    %s18 = sadd.s32 %s11, 1
    %s19 = ssub.s32 %s11, %s18
    %p20 = scmp.eq.s32.totalorder %s19, 0
    %s22 = sadd.s32 %s21, 1
    %s23 = scalar_select %p20, %s21, %s22
    %p26 = pneg %p20
    %p27 = scmp.eq.s32.totalorder %s11, 1
    %p28 = por %p26, %p27
    %p29 = scmp.ne.s32.totalorder %s21, %s24
    %p30 = scmp.eq.s32.totalorder %s11, 0
    %p31 = por %p29, %p30
    %p32 = scmp.ne.s32.totalorder %s21, %s24
    %p33 = scmp.eq.s32.totalorder %s16, 1
    %p34 = por %p32, %p33
    %p35 = scmp.ne.s32.totalorder %s24, %s25
    %p36 = scmp.eq.s32.totalorder %s16, 0
    %p37 = por %p35, %p36
    %p38 = scmp.ne.s32.totalorder %s24, %s25
    %p39 = scmp.eq.s32.totalorder %s17, 1
    %p40 = por %p38, %p39
    %p42 = scmp.ne.s32.totalorder %s25, %s41
    %p43 = scmp.eq.s32.totalorder %s17, 0
    %p44 = por %p42, %p43
    %s46 = sadd.s32 %s45, 1
    %p49 = scmp.eq.s32.totalorder %s11, 1
    %p50 = scmp.ne.s32.totalorder %s45, %s47
    %p51 = scmp.eq.s32.totalorder %s11, 0
    %p52 = por %p50, %p51
    %p53 = scmp.ne.s32.totalorder %s45, %s47
    %p54 = scmp.eq.s32.totalorder %s16, 1
    %p55 = por %p53, %p54
    %p56 = scmp.ne.s32.totalorder %s47, %s48
    %p57 = scmp.eq.s32.totalorder %s16, 0
    %p58 = por %p56, %p57
    %p59 = scmp.ne.s32.totalorder %s47, %s48
    %p60 = scmp.eq.s32.totalorder %s17, 1
    %p61 = por %p59, %p60
    %p63 = scmp.ne.s32.totalorder %s48, %s62
    %p64 = scmp.eq.s32.totalorder %s17, 0
    %p65 = por %p63, %p64
    %s67 = sadd.s32 %s66, 1
    %p70 = scmp.eq.s32.totalorder %s11, 1
    %p71 = scmp.ne.s32.totalorder %s66, %s68
    %p72 = scmp.eq.s32.totalorder %s11, 0
    %p73 = por %p71, %p72
    %p74 = scmp.ne.s32.totalorder %s66, %s68
    %p75 = scmp.eq.s32.totalorder %s16, 1
    %p76 = por %p74, %p75
    %p77 = scmp.ne.s32.totalorder %s68, %s69
    %p78 = scmp.eq.s32.totalorder %s16, 0
    %p79 = por %p77, %p78
    %p80 = scmp.ne.s32.totalorder %s68, %s69
    %p81 = scmp.eq.s32.totalorder %s17, 1
    %p82 = por %p80, %p81
    %p84 = scmp.ne.s32.totalorder %s69, %s83
    %p85 = scmp.eq.s32.totalorder %s17, 0
    %p86 = por %p84, %p85
    %s88 = sadd.s32 %s87, 1
    %p91 = scmp.eq.s32.totalorder %s11, 1
    %p92 = scmp.ne.s32.totalorder %s87, %s89
    %p93 = scmp.eq.s32.totalorder %s11, 0
    %p94 = por %p92, %p93
    %p95 = scmp.ne.s32.totalorder %s87, %s89
    %p96 = scmp.eq.s32.totalorder %s16, 1
    %p97 = por %p95, %p96
    %p98 = scmp.ne.s32.totalorder %s89, %s90
    %p99 = scmp.eq.s32.totalorder %s16, 0
    %p100 = por %p98, %p99
    %p101 = scmp.ne.s32.totalorder %s89, %s90
    %p102 = scmp.eq.s32.totalorder %s17, 1
    %p103 = por %p101, %p102
    %p105 = scmp.ne.s32.totalorder %s90, %s104
    %p106 = scmp.eq.s32.totalorder %s17, 0
    %p107 = por %p105, %p106
    %s108 = ssub.s32 %s11, %s18
    %p109 = scmp.eq.s32.totalorder %s108, 0
    %s111 = sadd.s32 %s110, 1
    %s112 = scalar_select %p109, %s110, %s111
    %p115 = pneg %p109
    %p116 = scmp.eq.s32.totalorder %s11, 1
    %p117 = por %p115, %p116
    %p118 = scmp.ne.s32.totalorder %s110, %s113
    %p119 = scmp.eq.s32.totalorder %s11, 0
    %p120 = por %p118, %p119
    %p121 = scmp.ne.s32.totalorder %s110, %s113
    %p122 = scmp.eq.s32.totalorder %s16, 1
    %p123 = por %p121, %p122
    %p124 = scmp.ne.s32.totalorder %s113, %s114
    %p125 = scmp.eq.s32.totalorder %s16, 0
    %p126 = por %p124, %p125
    %p127 = scmp.ne.s32.totalorder %s113, %s114
    %p128 = scmp.eq.s32.totalorder %s17, 1
    %p129 = por %p127, %p128
    %p131 = scmp.ne.s32.totalorder %s114, %s130
    %p132 = scmp.eq.s32.totalorder %s17, 0
    %p133 = por %p131, %p132
    %s134 = ssub.s32 %s11, %s18
    %p135 = scmp.eq.s32.totalorder %s134, 0
    %s137 = sadd.s32 %s136, 1
    %s138 = scalar_select %p135, %s136, %s137
    %p141 = pneg %p135
    %p142 = scmp.eq.s32.totalorder %s11, 1
    %p143 = por %p141, %p142
    %p144 = scmp.ne.s32.totalorder %s136, %s139
    %p145 = scmp.eq.s32.totalorder %s11, 0
    %p146 = por %p144, %p145
    %p147 = scmp.ne.s32.totalorder %s136, %s139
    %p148 = scmp.eq.s32.totalorder %s16, 1
    %p149 = por %p147, %p148
    %p150 = scmp.ne.s32.totalorder %s139, %s140
    %p151 = scmp.eq.s32.totalorder %s16, 0
    %p152 = por %p150, %p151
    %p153 = scmp.ne.s32.totalorder %s139, %s140
    %p154 = scmp.eq.s32.totalorder %s17, 1
    %p155 = por %p153, %p154
    %p157 = scmp.ne.s32.totalorder %s140, %s156
    %p158 = scmp.eq.s32.totalorder %s17, 0
    %p159 = por %p157, %p158
    %p160 = scmp.le.s32.totalorder 1, %s11
    %p161 = scmp.lt.s32.totalorder %s11, 3
    %p162 = pnand %p160, %p161
    %p163 = pneg %p162
    // Predicated region
    $region9: #{predeblur_forward.13} parent=5 // pred_check
      _
    $region10: #{predeblur_forward.13} parent=5 // pred_check_branch
      %165 = sbr.rel (%p162) target = $region12
    $region11: #{predeblur_forward.13} parent=5 // pred_region
      %s166 = ssub.s32 %s11, 1
      // Predicated region
      $region13: #{predeblur_forward.13} parent=11 // pred_check
        %p167 = pneg %p58
      $region14: #{predeblur_forward.13} parent=11 // pred_check_branch
        %169 = sbr.rel (%p167) target = $region16
      $region15: #{predeblur_forward.13} parent=11 // pred_region
        _
      $region16: #{predeblur_forward.13} parent=11 // pred_fallthru
        _
      // Predicated region
      $region17: #{predeblur_forward.13} parent=11 // pred_check
        %p170 = pneg %p79
      $region18: #{predeblur_forward.13} parent=11 // pred_check_branch
        %172 = sbr.rel (%p170) target = $region20
      $region19: #{predeblur_forward.13} parent=11 // pred_region
        _
      $region20: #{predeblur_forward.13} parent=11 // pred_fallthru
        _
      // Predicated region
      $region21: #{predeblur_forward.13} parent=11 // pred_check
        %p173 = pneg %p100
      $region22: #{predeblur_forward.13} parent=11 // pred_check_branch
        %175 = sbr.rel (%p173) target = $region24
      $region23: #{predeblur_forward.13} parent=11 // pred_region
        _
      $region24: #{predeblur_forward.13} parent=11 // pred_fallthru
        _
    $region12: #{predeblur_forward.13} parent=5 // pred_fallthru
      _
    %p176 = scmp.lt.s32.totalorder %s11, 2
    // Predicated region
    $region25: #{predeblur_forward.13} parent=5 // pred_check
      %p177 = pneg %p176
    $region26: #{predeblur_forward.13} parent=5 // pred_check_branch
      %179 = sbr.rel (%p177) target = $region28
    $region27: #{predeblur_forward.13} parent=5 // pred_region
      // Predicated region
      $region29: #{predeblur_forward.13} parent=27 // pred_check
        %p180 = pneg %p31
      $region30: #{predeblur_forward.13} parent=27 // pred_check_branch
        %182 = sbr.rel (%p180) target = $region32
      $region31: #{predeblur_forward.13} parent=27 // pred_region
        %p183 = scmp.lt.s32.totalorder %s11, 1
        %s184 = scalar_select %p183, %s11, 1
        %s185 = smul.addr %s184, 8
        %s186 = scalar_lea.vmem %s0, %s185
      $region32: #{predeblur_forward.13} parent=27 // pred_fallthru
        _
      // Predicated region
      $region33: #{predeblur_forward.13} parent=27 // pred_check
        %p187 = pneg %p120
      $region34: #{predeblur_forward.13} parent=27 // pred_check_branch
        %189 = sbr.rel (%p187) target = $region36
      $region35: #{predeblur_forward.13} parent=27 // pred_region
        %p190 = scmp.lt.s32.totalorder %s11, 1
        %s191 = scalar_select %p190, %s11, 1
        %s192 = smul.addr %s191, 8
        %s193 = scalar_lea.vmem %s4, %s192
      $region36: #{predeblur_forward.13} parent=27 // pred_fallthru
        _
    $region28: #{predeblur_forward.13} parent=5 // pred_fallthru
      _
    %p194 = scmp.le.s32.totalorder 1, %s11
    %p195 = scmp.lt.s32.totalorder %s11, 3
    %p196 = pnand %p194, %p195
    %p197 = pneg %p196
    // Predicated region
    $region37: #{predeblur_forward.13} parent=5 // pred_check
      _
    $region38: #{predeblur_forward.13} parent=5 // pred_check_branch
      %199 = sbr.rel (%p196) target = $region40
    $region39: #{predeblur_forward.13} parent=5 // pred_region
      %s200 = ssub.s32 %s11, 1
      %p201 = scmp.lt.s32.totalorder %s16, 1
      %s202 = scalar_select %p201, %s16, 1
      %s203 = smul.addr %s202, 8
      %s204 = scalar_lea.vmem %s0, %s203
      %p205 = pneg %p37
      %p206 = pneg %p34
      %p207 = pneg %p58
      %p208 = pneg %p55
      %p209 = pneg %p79
      %p210 = pneg %p76
      %p211 = pneg %p100
      %p212 = pneg %p97
      %p213 = scmp.lt.s32.totalorder %s16, 1
      %s214 = scalar_select %p213, %s16, 1
      %s215 = smul.addr %s214, 8
      %s216 = scalar_lea.vmem %s4, %s215
      %p217 = pneg %p126
      %p218 = pneg %p123
      %p219 = pneg %p152
      %p220 = pneg %p149
      %p221 = scmp.lt.s32.totalorder %s16, 1
      %s222 = scalar_select %p221, %s16, 1
      %s223 = smul.addr %s222, 8
      %s224 = scalar_lea.vmem %s5, %s223
      %p225 = scmp.lt.s32.totalorder %s16, 1
      %s226 = scalar_select %p225, %s16, 1
      %s227 = smul.addr %s226, 8
      %s228 = scalar_lea.vmem %s0, %s227
      %p229 = scmp.lt.s32.totalorder %s16, 1
      %s230 = scalar_select %p229, %s16, 1
      %s231 = smul.addr %s230, 8
      %s232 = scalar_lea.vmem %s4, %s231
      %p233 = scmp.lt.s32.totalorder %s16, 1
      %s234 = scalar_select %p233, %s16, 1
      %s235 = smul.addr %s234, 8
      %s236 = scalar_lea.vmem %s5, %s235
      %v238 = vld [vmem:[%s3] sm:$0x1]
      %239 = vst [vmem:[#allocation2] sm:$0xff] 0.0
      %240 = vst [vmem:[#allocation2 + $0x10] sm:$0xff] 0.0
      %v241 = vld [vmem:[%s228] sm:$0xff]
      %v243 = vperm.slane %v238, 0
      %v245 = vmul.f32 %v241, %v243
      %246 = vst [vmem:[#allocation2 + $0x8] sm:$0xff] %v245
      %v247 = vld [vmem:[#allocation2] sm:$0xff]
      %v248 = vld [vmem:[#allocation2 + $0x8] sm:$0xff]
      %251 = vrot.lane.b32.xlu0 %v247, 11
      %v252 = vpop.permute.xlu0 %251
      %253 = vrot.lane.b32.xlu0 %v248, 11
      %v254 = vpop.permute.xlu0 %253
      %vm255 = vcmask 89088
      %v256 = vsel %vm255, %v252, %v254
      %258 = vst [vmem:[#allocation3] sm:$0xff] %v256
      %v259 = vld [vmem:[#allocation2] sm:$0xff]
      %v260 = vld [vmem:[#allocation2 + $0x8] sm:$0xff]
      %263 = vrot.lane.b32.xlu0 %v259, 10
      %v264 = vpop.permute.xlu0 %263
      %265 = vrot.lane.b32.xlu0 %v260, 10
      %v266 = vpop.permute.xlu0 %265
      %vm267 = vcmask 80896
      %v268 = vsel %vm267, %v264, %v266
      %270 = vst [vmem:[#allocation3 + $0x8] sm:$0xff] %v268
      %v271 = vld [vmem:[#allocation2] sm:$0xff]
      %v272 = vld [vmem:[#allocation2 + $0x8] sm:$0xff]
      %275 = vrot.lane.b32.xlu0 %v271, 9
      %v276 = vpop.permute.xlu0 %275
      %277 = vrot.lane.b32.xlu0 %v272, 9
      %v278 = vpop.permute.xlu0 %277
      %vm279 = vcmask 72704
      %v280 = vsel %vm279, %v276, %v278
      %282 = vst [vmem:[#allocation3 + $0x10] sm:$0xff] %v280
      %v283 = vld [vmem:[#allocation2] sm:$0xff]
      %v284 = vld [vmem:[#allocation2 + $0x8] sm:$0xff]
      %287 = vrot.lane.b32.xlu0 %v283, 1
      %v288 = vpop.permute.xlu0 %287
      %289 = vrot.lane.b32.xlu0 %v284, 1
      %v290 = vpop.permute.xlu0 %289
      %vm291 = vcmask 7168
      %v292 = vsel %vm291, %v288, %v290
      %294 = vst [vmem:[#allocation3 + $0x18] sm:$0xff] %v292
      %v295 = vld [vmem:[#allocation2 + $0x8] sm:$0xff]
      %296 = vst [vmem:[#allocation3 + $0x20] sm:$0xff] %v295
      %v297 = vld [vmem:[#allocation2 + $0x8] sm:$0xff]
      %v298 = vld [vmem:[#allocation2 + $0x10] sm:$0xff]
      %301 = vrot.lane.b32.xlu0 %v297, 127
      %v302 = vpop.permute.xlu0 %301
      %303 = vrot.lane.b32.xlu0 %v298, 127
      %v304 = vpop.permute.xlu0 %303
      %vm305 = vcmask 1039360
      %v306 = vsel %vm305, %v302, %v304
      %308 = vst [vmem:[#allocation3 + $0x28] sm:$0xff] %v306
      %v309 = vld [vmem:[#allocation2 + $0x8] sm:$0xff]
      %v310 = vld [vmem:[#allocation2 + $0x10] sm:$0xff]
      %313 = vrot.lane.b32.xlu0 %v309, 119
      %v314 = vpop.permute.xlu0 %313
      %315 = vrot.lane.b32.xlu0 %v310, 119
      %v316 = vpop.permute.xlu0 %315
      %vm317 = vcmask 973824
      %v318 = vsel %vm317, %v314, %v316
      %320 = vst [vmem:[#allocation3 + $0x30] sm:$0xff] %v318
      %v321 = vld [vmem:[#allocation2 + $0x8] sm:$0xff]
      %v322 = vld [vmem:[#allocation2 + $0x10] sm:$0xff]
      %325 = vrot.lane.b32.xlu0 %v321, 118
      %v326 = vpop.permute.xlu0 %325
      %327 = vrot.lane.b32.xlu0 %v322, 118
      %v328 = vpop.permute.xlu0 %327
      %vm329 = vcmask 965632
      %v330 = vsel %vm329, %v326, %v328
      %332 = vst [vmem:[#allocation3 + $0x38] sm:$0xff] %v330
      %v333 = vld [vmem:[#allocation2 + $0x8] sm:$0xff]
      %v334 = vld [vmem:[#allocation2 + $0x10] sm:$0xff]
      %337 = vrot.lane.b32.xlu0 %v333, 117
      %v338 = vpop.permute.xlu0 %337
      %339 = vrot.lane.b32.xlu0 %v334, 117
      %v340 = vpop.permute.xlu0 %339
      %vm341 = vcmask 957440
      %v342 = vsel %vm341, %v338, %v340
      %344 = vst [vmem:[#allocation3 + $0x40] sm:$0xff] %v342
      %v345 = vld [vmem:[%s1] sm:$0xf]
      %v346 = vld [vmem:[#allocation3] sm:$0xff]
      %v347 = vld [vmem:[#allocation3 + $0x8] sm:$0xff]
      %v348 = vld [vmem:[#allocation3 + $0x10] sm:$0xff]
      %v349 = vld [vmem:[#allocation3 + $0x18] sm:$0xff]
      %v350 = vld [vmem:[#allocation3 + $0x20] sm:$0xff]
      %v351 = vld [vmem:[#allocation3 + $0x28] sm:$0xff]
      %v352 = vld [vmem:[#allocation3 + $0x30] sm:$0xff]
      %v353 = vld [vmem:[#allocation3 + $0x38] sm:$0xff]
      %v354 = vld [vmem:[#allocation3 + $0x40] sm:$0xff]
      %v355 = vpack.c.bf16 %v347, %v346
      %v356 = vpack.c.bf16 %v349, %v348
      %v357 = vpack.c.bf16 %v351, %v350
      %v358 = vpack.c.bf16 %v353, %v352
      %v359 = vpack.c.bf16 %v354, %v354
      %v360 = vld [vmem:[%s2] sm:$0xff]
      %362 = vset.pattern.permute.xlu0 0
      %363 = vperm.xlu0 %362, %v360
      %v364 = vpop.permute.xlu0 %363
      %vm366 = vcmask 588800
      %v368 = vsel %vm366, %v345, 0
      %vm370 = vcmask 1043456
      %v372 = vsel %vm370, %v359, 0
      %374 = vmatpush.bf16.msra.mxu0 0
      %375 = vmatpush.bf16.msra.mxu0 0
      %376 = vmatpush.bf16.msra.mxu0 0
      %377 = vmatpush.bf16.msra.mxu0 %v372
      %378 = vmatpush.bf16.msra.mxu0 %v358
      %379 = vmatpush.bf16.msra.mxu0 %v357
      %380 = vmatpush.bf16.msra.mxu0 %v356
      %381 = vmatpush.bf16.msra.mxu0 %v355
      %382 = vmatmul.bf16.gmra.mxu0 %v368
      %v383 = vpop.f32.mrf.mxu0
      %v384 = vadd.f32 %v364, %v383
      %v385 = vpop.f32.mrf.mxu0
      %386 = vdwg.mxu0
      %v387 = vmax.f32 %v384, 0.0
      %v388 = vmul.f32 %v387, %v243
      %389 = vst [vmem:[#allocation2 + $0x8] sm:$0xff] %v388
      %v390 = vld [vmem:[#allocation2] sm:$0xff]
      %v391 = vld [vmem:[#allocation2 + $0x8] sm:$0xff]
      %394 = vrot.lane.b32.xlu0 %v390, 11
      %v395 = vpop.permute.xlu0 %394
      %396 = vrot.lane.b32.xlu0 %v391, 11
      %v397 = vpop.permute.xlu0 %396
      %v398 = vsel %vm255, %v395, %v397
      %400 = vst [vmem:[#allocation3] sm:$0xff] %v398
      %v401 = vld [vmem:[#allocation2] sm:$0xff]
      %v402 = vld [vmem:[#allocation2 + $0x8] sm:$0xff]
      %405 = vrot.lane.b32.xlu0 %v401, 10
      %v406 = vpop.permute.xlu0 %405
      %407 = vrot.lane.b32.xlu0 %v402, 10
      %v408 = vpop.permute.xlu0 %407
      %v409 = vsel %vm267, %v406, %v408
      %411 = vst [vmem:[#allocation3 + $0x8] sm:$0xff] %v409
      %v412 = vld [vmem:[#allocation2] sm:$0xff]
      %v413 = vld [vmem:[#allocation2 + $0x8] sm:$0xff]
      %416 = vrot.lane.b32.xlu0 %v412, 9
      %v417 = vpop.permute.xlu0 %416
      %418 = vrot.lane.b32.xlu0 %v413, 9
      %v419 = vpop.permute.xlu0 %418
      %v420 = vsel %vm279, %v417, %v419
      %422 = vst [vmem:[#allocation3 + $0x10] sm:$0xff] %v420
      %v423 = vld [vmem:[#allocation2] sm:$0xff]
      %v424 = vld [vmem:[#allocation2 + $0x8] sm:$0xff]
      %427 = vrot.lane.b32.xlu0 %v423, 1
      %v428 = vpop.permute.xlu0 %427
      %429 = vrot.lane.b32.xlu0 %v424, 1
      %v430 = vpop.permute.xlu0 %429
      %v431 = vsel %vm291, %v428, %v430
      %433 = vst [vmem:[#allocation3 + $0x18] sm:$0xff] %v431
      %v434 = vld [vmem:[#allocation2 + $0x8] sm:$0xff]
      %435 = vst [vmem:[#allocation3 + $0x20] sm:$0xff] %v434
      %v436 = vld [vmem:[#allocation2 + $0x8] sm:$0xff]
      %v437 = vld [vmem:[#allocation2 + $0x10] sm:$0xff]
      %440 = vrot.lane.b32.xlu0 %v436, 127
      %v441 = vpop.permute.xlu0 %440
      %442 = vrot.lane.b32.xlu0 %v437, 127
      %v443 = vpop.permute.xlu0 %442
      %v444 = vsel %vm305, %v441, %v443
      %446 = vst [vmem:[#allocation3 + $0x28] sm:$0xff] %v444
      %v447 = vld [vmem:[#allocation2 + $0x8] sm:$0xff]
      %v448 = vld [vmem:[#allocation2 + $0x10] sm:$0xff]
      %451 = vrot.lane.b32.xlu0 %v447, 119
      %v452 = vpop.permute.xlu0 %451
      %453 = vrot.lane.b32.xlu0 %v448, 119
      %v454 = vpop.permute.xlu0 %453
      %v455 = vsel %vm317, %v452, %v454
      %457 = vst [vmem:[#allocation3 + $0x30] sm:$0xff] %v455
      %v458 = vld [vmem:[#allocation2 + $0x8] sm:$0xff]
      %v459 = vld [vmem:[#allocation2 + $0x10] sm:$0xff]
      %462 = vrot.lane.b32.xlu0 %v458, 118
      %v463 = vpop.permute.xlu0 %462
      %464 = vrot.lane.b32.xlu0 %v459, 118
      %v465 = vpop.permute.xlu0 %464
      %v466 = vsel %vm329, %v463, %v465
      %468 = vst [vmem:[#allocation3 + $0x38] sm:$0xff] %v466
      %v469 = vld [vmem:[#allocation2 + $0x8] sm:$0xff]
      %v470 = vld [vmem:[#allocation2 + $0x10] sm:$0xff]
      %473 = vrot.lane.b32.xlu0 %v469, 117
      %v474 = vpop.permute.xlu0 %473
      %475 = vrot.lane.b32.xlu0 %v470, 117
      %v476 = vpop.permute.xlu0 %475
      %v477 = vsel %vm341, %v474, %v476
      %479 = vst [vmem:[#allocation3 + $0x40] sm:$0xff] %v477
      %s480 = scalar_lea.vmem %s1, 4
      %v481 = vld [vmem:[%s480] sm:$0xf]
      %v482 = vld [vmem:[#allocation3] sm:$0xff]
      %v483 = vld [vmem:[#allocation3 + $0x8] sm:$0xff]
      %v484 = vld [vmem:[#allocation3 + $0x10] sm:$0xff]
      %v485 = vld [vmem:[#allocation3 + $0x18] sm:$0xff]
      %v486 = vld [vmem:[#allocation3 + $0x20] sm:$0xff]
      %v487 = vld [vmem:[#allocation3 + $0x28] sm:$0xff]
      %v488 = vld [vmem:[#allocation3 + $0x30] sm:$0xff]
      %v489 = vld [vmem:[#allocation3 + $0x38] sm:$0xff]
      %v490 = vld [vmem:[#allocation3 + $0x40] sm:$0xff]
      %v491 = vpack.c.bf16 %v483, %v482
      %v492 = vpack.c.bf16 %v485, %v484
      %v493 = vpack.c.bf16 %v487, %v486
      %v494 = vpack.c.bf16 %v489, %v488
      %v495 = vpack.c.bf16 %v490, %v490
      %s496 = scalar_lea.vmem %s2, 8
      %v497 = vld [vmem:[%s496] sm:$0xff]
      %499 = vset.pattern.permute.xlu0 0
      %500 = vperm.xlu0 %499, %v497
      %v501 = vpop.permute.xlu0 %500
      %v504 = vsel %vm366, %v481, 0
      %v507 = vsel %vm370, %v495, 0
      %509 = vmatpush.bf16.msra.mxu0 0
      %510 = vmatpush.bf16.msra.mxu0 0
      %511 = vmatpush.bf16.msra.mxu0 0
      %512 = vmatpush.bf16.msra.mxu0 %v507
      %513 = vmatpush.bf16.msra.mxu0 %v494
      %514 = vmatpush.bf16.msra.mxu0 %v493
      %515 = vmatpush.bf16.msra.mxu0 %v492
      %516 = vmatpush.bf16.msra.mxu0 %v491
      %517 = vmatmul.bf16.gmra.mxu0 %v504
      %v518 = vpop.f32.mrf.mxu0
      %v519 = vadd.f32 %v501, %v518
      %v520 = vpop.f32.mrf.mxu0
      %521 = vdwg.mxu0
      %v522 = vadd.f32 %v241, %v519
      %v523 = vmul.f32 %v522, %v243
      %524 = vst [vmem:[#allocation2 + $0x8] sm:$0xff] %v523
      %v525 = vld [vmem:[#allocation2] sm:$0xff]
      %v526 = vld [vmem:[#allocation2 + $0x8] sm:$0xff]
      %529 = vrot.lane.b32.xlu0 %v525, 11
      %v530 = vpop.permute.xlu0 %529
      %531 = vrot.lane.b32.xlu0 %v526, 11
      %v532 = vpop.permute.xlu0 %531
      %v533 = vsel %vm255, %v530, %v532
      %535 = vst [vmem:[#allocation3] sm:$0xff] %v533
      %v536 = vld [vmem:[#allocation2] sm:$0xff]
      %v537 = vld [vmem:[#allocation2 + $0x8] sm:$0xff]
      %540 = vrot.lane.b32.xlu0 %v536, 10
      %v541 = vpop.permute.xlu0 %540
      %542 = vrot.lane.b32.xlu0 %v537, 10
      %v543 = vpop.permute.xlu0 %542
      %v544 = vsel %vm267, %v541, %v543
      %546 = vst [vmem:[#allocation3 + $0x8] sm:$0xff] %v544
      %v547 = vld [vmem:[#allocation2] sm:$0xff]
      %v548 = vld [vmem:[#allocation2 + $0x8] sm:$0xff]
      %551 = vrot.lane.b32.xlu0 %v547, 9
      %v552 = vpop.permute.xlu0 %551
      %553 = vrot.lane.b32.xlu0 %v548, 9
      %v554 = vpop.permute.xlu0 %553
      %v555 = vsel %vm279, %v552, %v554
      %557 = vst [vmem:[#allocation3 + $0x10] sm:$0xff] %v555
      %v558 = vld [vmem:[#allocation2] sm:$0xff]
      %v559 = vld [vmem:[#allocation2 + $0x8] sm:$0xff]
      %562 = vrot.lane.b32.xlu0 %v558, 1
      %v563 = vpop.permute.xlu0 %562
      %564 = vrot.lane.b32.xlu0 %v559, 1
      %v565 = vpop.permute.xlu0 %564
      %v566 = vsel %vm291, %v563, %v565
      %568 = vst [vmem:[#allocation3 + $0x18] sm:$0xff] %v566
      %v569 = vld [vmem:[#allocation2 + $0x8] sm:$0xff]
      %570 = vst [vmem:[#allocation3 + $0x20] sm:$0xff] %v569
      %v571 = vld [vmem:[#allocation2 + $0x8] sm:$0xff]
      %v572 = vld [vmem:[#allocation2 + $0x10] sm:$0xff]
      %575 = vrot.lane.b32.xlu0 %v571, 127
      %v576 = vpop.permute.xlu0 %575
      %577 = vrot.lane.b32.xlu0 %v572, 127
      %v578 = vpop.permute.xlu0 %577
      %v579 = vsel %vm305, %v576, %v578
      %581 = vst [vmem:[#allocation3 + $0x28] sm:$0xff] %v579
      %v582 = vld [vmem:[#allocation2 + $0x8] sm:$0xff]
      %v583 = vld [vmem:[#allocation2 + $0x10] sm:$0xff]
      %586 = vrot.lane.b32.xlu0 %v582, 119
      %v587 = vpop.permute.xlu0 %586
      %588 = vrot.lane.b32.xlu0 %v583, 119
      %v589 = vpop.permute.xlu0 %588
      %v590 = vsel %vm317, %v587, %v589
      %592 = vst [vmem:[#allocation3 + $0x30] sm:$0xff] %v590
      %v593 = vld [vmem:[#allocation2 + $0x8] sm:$0xff]
      %v594 = vld [vmem:[#allocation2 + $0x10] sm:$0xff]
      %597 = vrot.lane.b32.xlu0 %v593, 118
      %v598 = vpop.permute.xlu0 %597
      %599 = vrot.lane.b32.xlu0 %v594, 118
      %v600 = vpop.permute.xlu0 %599
      %v601 = vsel %vm329, %v598, %v600
      %603 = vst [vmem:[#allocation3 + $0x38] sm:$0xff] %v601
      %v604 = vld [vmem:[#allocation2 + $0x8] sm:$0xff]
      %v605 = vld [vmem:[#allocation2 + $0x10] sm:$0xff]
      %608 = vrot.lane.b32.xlu0 %v604, 117
      %v609 = vpop.permute.xlu0 %608
      %610 = vrot.lane.b32.xlu0 %v605, 117
      %v611 = vpop.permute.xlu0 %610
      %v612 = vsel %vm341, %v609, %v611
      %614 = vst [vmem:[#allocation3 + $0x40] sm:$0xff] %v612
      %s615 = scalar_lea.vmem %s1, 8
      %v616 = vld [vmem:[%s615] sm:$0xf]
      %v617 = vld [vmem:[#allocation3] sm:$0xff]
      %v618 = vld [vmem:[#allocation3 + $0x8] sm:$0xff]
      %v619 = vld [vmem:[#allocation3 + $0x10] sm:$0xff]
      %v620 = vld [vmem:[#allocation3 + $0x18] sm:$0xff]
      %v621 = vld [vmem:[#allocation3 + $0x20] sm:$0xff]
      %v622 = vld [vmem:[#allocation3 + $0x28] sm:$0xff]
      %v623 = vld [vmem:[#allocation3 + $0x30] sm:$0xff]
      %v624 = vld [vmem:[#allocation3 + $0x38] sm:$0xff]
      %v625 = vld [vmem:[#allocation3 + $0x40] sm:$0xff]
      %v626 = vpack.c.bf16 %v618, %v617
      %v627 = vpack.c.bf16 %v620, %v619
      %v628 = vpack.c.bf16 %v622, %v621
      %v629 = vpack.c.bf16 %v624, %v623
      %v630 = vpack.c.bf16 %v625, %v625
      %s631 = scalar_lea.vmem %s2, 16
      %v632 = vld [vmem:[%s631] sm:$0xff]
      %634 = vset.pattern.permute.xlu0 0
      %635 = vperm.xlu0 %634, %v632
      %v636 = vpop.permute.xlu0 %635
      %v639 = vsel %vm366, %v616, 0
      %v642 = vsel %vm370, %v630, 0
      %644 = vmatpush.bf16.msra.mxu0 0
      %645 = vmatpush.bf16.msra.mxu0 0
      %646 = vmatpush.bf16.msra.mxu0 0
      %647 = vmatpush.bf16.msra.mxu0 %v642
      %648 = vmatpush.bf16.msra.mxu0 %v629
      %649 = vmatpush.bf16.msra.mxu0 %v628
      %650 = vmatpush.bf16.msra.mxu0 %v627
      %651 = vmatpush.bf16.msra.mxu0 %v626
      %652 = vmatmul.bf16.gmra.mxu0 %v639
      %v653 = vpop.f32.mrf.mxu0
      %v654 = vadd.f32 %v636, %v653
      %v655 = vpop.f32.mrf.mxu0
      %656 = vdwg.mxu0
      %v657 = vmax.f32 %v654, 0.0
      %v658 = vmul.f32 %v657, %v243
      %659 = vst [vmem:[#allocation2 + $0x8] sm:$0xff] %v658
      %v660 = vld [vmem:[#allocation2] sm:$0xff]
      %v661 = vld [vmem:[#allocation2 + $0x8] sm:$0xff]
      %664 = vrot.lane.b32.xlu0 %v660, 11
      %v665 = vpop.permute.xlu0 %664
      %666 = vrot.lane.b32.xlu0 %v661, 11
      %v667 = vpop.permute.xlu0 %666
      %v668 = vsel %vm255, %v665, %v667
      %670 = vst [vmem:[#allocation3] sm:$0xff] %v668
      %v671 = vld [vmem:[#allocation2] sm:$0xff]
      %v672 = vld [vmem:[#allocation2 + $0x8] sm:$0xff]
      %675 = vrot.lane.b32.xlu0 %v671, 10
      %v676 = vpop.permute.xlu0 %675
      %677 = vrot.lane.b32.xlu0 %v672, 10
      %v678 = vpop.permute.xlu0 %677
      %v679 = vsel %vm267, %v676, %v678
      %681 = vst [vmem:[#allocation3 + $0x8] sm:$0xff] %v679
      %v682 = vld [vmem:[#allocation2] sm:$0xff]
      %v683 = vld [vmem:[#allocation2 + $0x8] sm:$0xff]
      %686 = vrot.lane.b32.xlu0 %v682, 9
      %v687 = vpop.permute.xlu0 %686
      %688 = vrot.lane.b32.xlu0 %v683, 9
      %v689 = vpop.permute.xlu0 %688
      %v690 = vsel %vm279, %v687, %v689
      %692 = vst [vmem:[#allocation3 + $0x10] sm:$0xff] %v690
      %v693 = vld [vmem:[#allocation2] sm:$0xff]
      %v694 = vld [vmem:[#allocation2 + $0x8] sm:$0xff]
      %697 = vrot.lane.b32.xlu0 %v693, 1
      %v698 = vpop.permute.xlu0 %697
      %699 = vrot.lane.b32.xlu0 %v694, 1
      %v700 = vpop.permute.xlu0 %699
      %v701 = vsel %vm291, %v698, %v700
      %703 = vst [vmem:[#allocation3 + $0x18] sm:$0xff] %v701
      %v704 = vld [vmem:[#allocation2 + $0x8] sm:$0xff]
      %705 = vst [vmem:[#allocation3 + $0x20] sm:$0xff] %v704
      %v706 = vld [vmem:[#allocation2 + $0x8] sm:$0xff]
      %v707 = vld [vmem:[#allocation2 + $0x10] sm:$0xff]
      %710 = vrot.lane.b32.xlu0 %v706, 127
      %v711 = vpop.permute.xlu0 %710
      %712 = vrot.lane.b32.xlu0 %v707, 127
      %v713 = vpop.permute.xlu0 %712
      %v714 = vsel %vm305, %v711, %v713
      %716 = vst [vmem:[#allocation3 + $0x28] sm:$0xff] %v714
      %v717 = vld [vmem:[#allocation2 + $0x8] sm:$0xff]
      %v718 = vld [vmem:[#allocation2 + $0x10] sm:$0xff]
      %721 = vrot.lane.b32.xlu0 %v717, 119
      %v722 = vpop.permute.xlu0 %721
      %723 = vrot.lane.b32.xlu0 %v718, 119
      %v724 = vpop.permute.xlu0 %723
      %v725 = vsel %vm317, %v722, %v724
      %727 = vst [vmem:[#allocation3 + $0x30] sm:$0xff] %v725
      %v728 = vld [vmem:[#allocation2 + $0x8] sm:$0xff]
      %v729 = vld [vmem:[#allocation2 + $0x10] sm:$0xff]
      %732 = vrot.lane.b32.xlu0 %v728, 118
      %v733 = vpop.permute.xlu0 %732
      %734 = vrot.lane.b32.xlu0 %v729, 118
      %v735 = vpop.permute.xlu0 %734
      %v736 = vsel %vm329, %v733, %v735
      %738 = vst [vmem:[#allocation3 + $0x38] sm:$0xff] %v736
      %v739 = vld [vmem:[#allocation2 + $0x8] sm:$0xff]
      %v740 = vld [vmem:[#allocation2 + $0x10] sm:$0xff]
      %743 = vrot.lane.b32.xlu0 %v739, 117
      %v744 = vpop.permute.xlu0 %743
      %745 = vrot.lane.b32.xlu0 %v740, 117
      %v746 = vpop.permute.xlu0 %745
      %v747 = vsel %vm341, %v744, %v746
      %749 = vst [vmem:[#allocation3 + $0x40] sm:$0xff] %v747
      %s750 = scalar_lea.vmem %s1, 12
      %v751 = vld [vmem:[%s750] sm:$0xf]
      %v752 = vld [vmem:[#allocation3] sm:$0xff]
      %v753 = vld [vmem:[#allocation3 + $0x8] sm:$0xff]
      %v754 = vld [vmem:[#allocation3 + $0x10] sm:$0xff]
      %v755 = vld [vmem:[#allocation3 + $0x18] sm:$0xff]
      %v756 = vld [vmem:[#allocation3 + $0x20] sm:$0xff]
      %v757 = vld [vmem:[#allocation3 + $0x28] sm:$0xff]
      %v758 = vld [vmem:[#allocation3 + $0x30] sm:$0xff]
      %v759 = vld [vmem:[#allocation3 + $0x38] sm:$0xff]
      %v760 = vld [vmem:[#allocation3 + $0x40] sm:$0xff]
      %v761 = vpack.c.bf16 %v753, %v752
      %v762 = vpack.c.bf16 %v755, %v754
      %v763 = vpack.c.bf16 %v757, %v756
      %v764 = vpack.c.bf16 %v759, %v758
      %v765 = vpack.c.bf16 %v760, %v760
      %s766 = scalar_lea.vmem %s2, 24
      %v767 = vld [vmem:[%s766] sm:$0xff]
      %769 = vset.pattern.permute.xlu0 0
      %770 = vperm.xlu0 %769, %v767
      %v771 = vpop.permute.xlu0 %770
      %v774 = vsel %vm366, %v751, 0
      %v777 = vsel %vm370, %v765, 0
      %779 = vmatpush.bf16.msra.mxu0 0
      %780 = vmatpush.bf16.msra.mxu0 0
      %781 = vmatpush.bf16.msra.mxu0 0
      %782 = vmatpush.bf16.msra.mxu0 %v777
      %783 = vmatpush.bf16.msra.mxu0 %v764
      %784 = vmatpush.bf16.msra.mxu0 %v763
      %785 = vmatpush.bf16.msra.mxu0 %v762
      %786 = vmatpush.bf16.msra.mxu0 %v761
      %787 = vmatmul.bf16.gmra.mxu0 %v774
      %v788 = vpop.f32.mrf.mxu0
      %v789 = vadd.f32 %v771, %v788
      %v790 = vpop.f32.mrf.mxu0
      %791 = vdwg.mxu0
      %v792 = vadd.f32 %v522, %v789
      %v793 = vld [vmem:[%s232] sm:$0xff]
      %v794 = vadd.f32 %v792, %v793
      %v795 = vmul.f32 %v794, %v243
      %796 = vst [vmem:[#allocation2 + $0x8] sm:$0xff] %v795
      %v797 = vld [vmem:[#allocation2] sm:$0xff]
      %v798 = vld [vmem:[#allocation2 + $0x8] sm:$0xff]
      %801 = vrot.lane.b32.xlu0 %v797, 11
      %v802 = vpop.permute.xlu0 %801
      %803 = vrot.lane.b32.xlu0 %v798, 11
      %v804 = vpop.permute.xlu0 %803
      %v805 = vsel %vm255, %v802, %v804
      %807 = vst [vmem:[#allocation3] sm:$0xff] %v805
      %v808 = vld [vmem:[#allocation2] sm:$0xff]
      %v809 = vld [vmem:[#allocation2 + $0x8] sm:$0xff]
      %812 = vrot.lane.b32.xlu0 %v808, 10
      %v813 = vpop.permute.xlu0 %812
      %814 = vrot.lane.b32.xlu0 %v809, 10
      %v815 = vpop.permute.xlu0 %814
      %v816 = vsel %vm267, %v813, %v815
      %818 = vst [vmem:[#allocation3 + $0x8] sm:$0xff] %v816
      %v819 = vld [vmem:[#allocation2] sm:$0xff]
      %v820 = vld [vmem:[#allocation2 + $0x8] sm:$0xff]
      %823 = vrot.lane.b32.xlu0 %v819, 9
      %v824 = vpop.permute.xlu0 %823
      %825 = vrot.lane.b32.xlu0 %v820, 9
      %v826 = vpop.permute.xlu0 %825
      %v827 = vsel %vm279, %v824, %v826
      %829 = vst [vmem:[#allocation3 + $0x10] sm:$0xff] %v827
      %v830 = vld [vmem:[#allocation2] sm:$0xff]
      %v831 = vld [vmem:[#allocation2 + $0x8] sm:$0xff]
      %834 = vrot.lane.b32.xlu0 %v830, 1
      %v835 = vpop.permute.xlu0 %834
      %836 = vrot.lane.b32.xlu0 %v831, 1
      %v837 = vpop.permute.xlu0 %836
      %v838 = vsel %vm291, %v835, %v837
      %840 = vst [vmem:[#allocation3 + $0x18] sm:$0xff] %v838
      %v841 = vld [vmem:[#allocation2 + $0x8] sm:$0xff]
      %842 = vst [vmem:[#allocation3 + $0x20] sm:$0xff] %v841
      %v843 = vld [vmem:[#allocation2 + $0x8] sm:$0xff]
      %v844 = vld [vmem:[#allocation2 + $0x10] sm:$0xff]
      %847 = vrot.lane.b32.xlu0 %v843, 127
      %v848 = vpop.permute.xlu0 %847
      %849 = vrot.lane.b32.xlu0 %v844, 127
      %v850 = vpop.permute.xlu0 %849
      %v851 = vsel %vm305, %v848, %v850
      %853 = vst [vmem:[#allocation3 + $0x28] sm:$0xff] %v851
      %v854 = vld [vmem:[#allocation2 + $0x8] sm:$0xff]
      %v855 = vld [vmem:[#allocation2 + $0x10] sm:$0xff]
      %858 = vrot.lane.b32.xlu0 %v854, 119
      %v859 = vpop.permute.xlu0 %858
      %860 = vrot.lane.b32.xlu0 %v855, 119
      %v861 = vpop.permute.xlu0 %860
      %v862 = vsel %vm317, %v859, %v861
      %864 = vst [vmem:[#allocation3 + $0x30] sm:$0xff] %v862
      %v865 = vld [vmem:[#allocation2 + $0x8] sm:$0xff]
      %v866 = vld [vmem:[#allocation2 + $0x10] sm:$0xff]
      %869 = vrot.lane.b32.xlu0 %v865, 118
      %v870 = vpop.permute.xlu0 %869
      %871 = vrot.lane.b32.xlu0 %v866, 118
      %v872 = vpop.permute.xlu0 %871
      %v873 = vsel %vm329, %v870, %v872
      %875 = vst [vmem:[#allocation3 + $0x38] sm:$0xff] %v873
      %v876 = vld [vmem:[#allocation2 + $0x8] sm:$0xff]
      %v877 = vld [vmem:[#allocation2 + $0x10] sm:$0xff]
      %880 = vrot.lane.b32.xlu0 %v876, 117
      %v881 = vpop.permute.xlu0 %880
      %882 = vrot.lane.b32.xlu0 %v877, 117
      %v883 = vpop.permute.xlu0 %882
      %v884 = vsel %vm341, %v881, %v883
      %886 = vst [vmem:[#allocation3 + $0x40] sm:$0xff] %v884
      %s887 = scalar_lea.vmem %s1, 16
      %v888 = vld [vmem:[%s887] sm:$0xf]
      %v889 = vld [vmem:[#allocation3] sm:$0xff]
      %v890 = vld [vmem:[#allocation3 + $0x8] sm:$0xff]
      %v891 = vld [vmem:[#allocation3 + $0x10] sm:$0xff]
      %v892 = vld [vmem:[#allocation3 + $0x18] sm:$0xff]
      %v893 = vld [vmem:[#allocation3 + $0x20] sm:$0xff]
      %v894 = vld [vmem:[#allocation3 + $0x28] sm:$0xff]
      %v895 = vld [vmem:[#allocation3 + $0x30] sm:$0xff]
      %v896 = vld [vmem:[#allocation3 + $0x38] sm:$0xff]
      %v897 = vld [vmem:[#allocation3 + $0x40] sm:$0xff]
      %v898 = vpack.c.bf16 %v890, %v889
      %v899 = vpack.c.bf16 %v892, %v891
      %v900 = vpack.c.bf16 %v894, %v893
      %v901 = vpack.c.bf16 %v896, %v895
      %v902 = vpack.c.bf16 %v897, %v897
      %s903 = scalar_lea.vmem %s2, 32
      %v904 = vld [vmem:[%s903] sm:$0xff]
      %906 = vset.pattern.permute.xlu0 0
      %907 = vperm.xlu0 %906, %v904
      %v908 = vpop.permute.xlu0 %907
      %v911 = vsel %vm366, %v888, 0
      %v914 = vsel %vm370, %v902, 0
      %916 = vmatpush.bf16.msra.mxu0 0
      %917 = vmatpush.bf16.msra.mxu0 0
      %918 = vmatpush.bf16.msra.mxu0 0
      %919 = vmatpush.bf16.msra.mxu0 %v914
      %920 = vmatpush.bf16.msra.mxu0 %v901
      %921 = vmatpush.bf16.msra.mxu0 %v900
      %922 = vmatpush.bf16.msra.mxu0 %v899
      %923 = vmatpush.bf16.msra.mxu0 %v898
      %924 = vmatmul.bf16.gmra.mxu0 %v911
      %v925 = vpop.f32.mrf.mxu0
      %v926 = vadd.f32 %v908, %v925
      %v927 = vpop.f32.mrf.mxu0
      %928 = vdwg.mxu0
      %v929 = vmax.f32 %v926, 0.0
      %v930 = vmul.f32 %v929, %v243
      %931 = vst [vmem:[#allocation2 + $0x8] sm:$0xff] %v930
      %v932 = vld [vmem:[#allocation2] sm:$0xff]
      %v933 = vld [vmem:[#allocation2 + $0x8] sm:$0xff]
      %936 = vrot.lane.b32.xlu0 %v932, 11
      %v937 = vpop.permute.xlu0 %936
      %938 = vrot.lane.b32.xlu0 %v933, 11
      %v939 = vpop.permute.xlu0 %938
      %v940 = vsel %vm255, %v937, %v939
      %942 = vst [vmem:[#allocation3] sm:$0xff] %v940
      %v943 = vld [vmem:[#allocation2] sm:$0xff]
      %v944 = vld [vmem:[#allocation2 + $0x8] sm:$0xff]
      %947 = vrot.lane.b32.xlu0 %v943, 10
      %v948 = vpop.permute.xlu0 %947
      %949 = vrot.lane.b32.xlu0 %v944, 10
      %v950 = vpop.permute.xlu0 %949
      %v951 = vsel %vm267, %v948, %v950
      %953 = vst [vmem:[#allocation3 + $0x8] sm:$0xff] %v951
      %v954 = vld [vmem:[#allocation2] sm:$0xff]
      %v955 = vld [vmem:[#allocation2 + $0x8] sm:$0xff]
      %958 = vrot.lane.b32.xlu0 %v954, 9
      %v959 = vpop.permute.xlu0 %958
      %960 = vrot.lane.b32.xlu0 %v955, 9
      %v961 = vpop.permute.xlu0 %960
      %v962 = vsel %vm279, %v959, %v961
      %964 = vst [vmem:[#allocation3 + $0x10] sm:$0xff] %v962
      %v965 = vld [vmem:[#allocation2] sm:$0xff]
      %v966 = vld [vmem:[#allocation2 + $0x8] sm:$0xff]
      %969 = vrot.lane.b32.xlu0 %v965, 1
      %v970 = vpop.permute.xlu0 %969
      %971 = vrot.lane.b32.xlu0 %v966, 1
      %v972 = vpop.permute.xlu0 %971
      %v973 = vsel %vm291, %v970, %v972
      %975 = vst [vmem:[#allocation3 + $0x18] sm:$0xff] %v973
      %v976 = vld [vmem:[#allocation2 + $0x8] sm:$0xff]
      %977 = vst [vmem:[#allocation3 + $0x20] sm:$0xff] %v976
      %v978 = vld [vmem:[#allocation2 + $0x8] sm:$0xff]
      %v979 = vld [vmem:[#allocation2 + $0x10] sm:$0xff]
      %982 = vrot.lane.b32.xlu0 %v978, 127
      %v983 = vpop.permute.xlu0 %982
      %984 = vrot.lane.b32.xlu0 %v979, 127
      %v985 = vpop.permute.xlu0 %984
      %v986 = vsel %vm305, %v983, %v985
      %988 = vst [vmem:[#allocation3 + $0x28] sm:$0xff] %v986
      %v989 = vld [vmem:[#allocation2 + $0x8] sm:$0xff]
      %v990 = vld [vmem:[#allocation2 + $0x10] sm:$0xff]
      %993 = vrot.lane.b32.xlu0 %v989, 119
      %v994 = vpop.permute.xlu0 %993
      %995 = vrot.lane.b32.xlu0 %v990, 119
      %v996 = vpop.permute.xlu0 %995
      %v997 = vsel %vm317, %v994, %v996
      %999 = vst [vmem:[#allocation3 + $0x30] sm:$0xff] %v997
      %v1000 = vld [vmem:[#allocation2 + $0x8] sm:$0xff]
      %v1001 = vld [vmem:[#allocation2 + $0x10] sm:$0xff]
      %1004 = vrot.lane.b32.xlu0 %v1000, 118
      %v1005 = vpop.permute.xlu0 %1004
      %1006 = vrot.lane.b32.xlu0 %v1001, 118
      %v1007 = vpop.permute.xlu0 %1006
      %v1008 = vsel %vm329, %v1005, %v1007
      %1010 = vst [vmem:[#allocation3 + $0x38] sm:$0xff] %v1008
      %v1011 = vld [vmem:[#allocation2 + $0x8] sm:$0xff]
      %v1012 = vld [vmem:[#allocation2 + $0x10] sm:$0xff]
      %1015 = vrot.lane.b32.xlu0 %v1011, 117
      %v1016 = vpop.permute.xlu0 %1015
      %1017 = vrot.lane.b32.xlu0 %v1012, 117
      %v1018 = vpop.permute.xlu0 %1017
      %v1019 = vsel %vm341, %v1016, %v1018
      %1021 = vst [vmem:[#allocation3 + $0x40] sm:$0xff] %v1019
      %s1022 = scalar_lea.vmem %s1, 20
      %v1023 = vld [vmem:[%s1022] sm:$0xf]
      %v1024 = vld [vmem:[#allocation3] sm:$0xff]
      %v1025 = vld [vmem:[#allocation3 + $0x8] sm:$0xff]
      %v1026 = vld [vmem:[#allocation3 + $0x10] sm:$0xff]
      %v1027 = vld [vmem:[#allocation3 + $0x18] sm:$0xff]
      %v1028 = vld [vmem:[#allocation3 + $0x20] sm:$0xff]
      %v1029 = vld [vmem:[#allocation3 + $0x28] sm:$0xff]
      %v1030 = vld [vmem:[#allocation3 + $0x30] sm:$0xff]
      %v1031 = vld [vmem:[#allocation3 + $0x38] sm:$0xff]
      %v1032 = vld [vmem:[#allocation3 + $0x40] sm:$0xff]
      %v1033 = vpack.c.bf16 %v1025, %v1024
      %v1034 = vpack.c.bf16 %v1027, %v1026
      %v1035 = vpack.c.bf16 %v1029, %v1028
      %v1036 = vpack.c.bf16 %v1031, %v1030
      %v1037 = vpack.c.bf16 %v1032, %v1032
      %s1038 = scalar_lea.vmem %s2, 40
      %v1039 = vld [vmem:[%s1038] sm:$0xff]
      %1041 = vset.pattern.permute.xlu0 0
      %1042 = vperm.xlu0 %1041, %v1039
      %v1043 = vpop.permute.xlu0 %1042
      %v1046 = vsel %vm366, %v1023, 0
      %v1049 = vsel %vm370, %v1037, 0
      %1051 = vmatpush.bf16.msra.mxu0 0
      %1052 = vmatpush.bf16.msra.mxu0 0
      %1053 = vmatpush.bf16.msra.mxu0 0
      %1054 = vmatpush.bf16.msra.mxu0 %v1049
      %1055 = vmatpush.bf16.msra.mxu0 %v1036
      %1056 = vmatpush.bf16.msra.mxu0 %v1035
      %1057 = vmatpush.bf16.msra.mxu0 %v1034
      %1058 = vmatpush.bf16.msra.mxu0 %v1033
      %1059 = vmatmul.bf16.gmra.mxu0 %v1046
      %v1060 = vpop.f32.mrf.mxu0
      %v1061 = vadd.f32 %v1043, %v1060
      %v1062 = vpop.f32.mrf.mxu0
      %1063 = vdwg.mxu0
      %v1064 = vadd.f32 %v794, %v1061
      %v1065 = vmul.f32 %v1064, %v243
      %1066 = vst [vmem:[#allocation2 + $0x8] sm:$0xff] %v1065
      %v1067 = vld [vmem:[#allocation2] sm:$0xff]
      %v1068 = vld [vmem:[#allocation2 + $0x8] sm:$0xff]
      %1071 = vrot.lane.b32.xlu0 %v1067, 11
      %v1072 = vpop.permute.xlu0 %1071
      %1073 = vrot.lane.b32.xlu0 %v1068, 11
      %v1074 = vpop.permute.xlu0 %1073
      %v1075 = vsel %vm255, %v1072, %v1074
      %1077 = vst [vmem:[#allocation3] sm:$0xff] %v1075
      %v1078 = vld [vmem:[#allocation2] sm:$0xff]
      %v1079 = vld [vmem:[#allocation2 + $0x8] sm:$0xff]
      %1082 = vrot.lane.b32.xlu0 %v1078, 10
      %v1083 = vpop.permute.xlu0 %1082
      %1084 = vrot.lane.b32.xlu0 %v1079, 10
      %v1085 = vpop.permute.xlu0 %1084
      %v1086 = vsel %vm267, %v1083, %v1085
      %1088 = vst [vmem:[#allocation3 + $0x8] sm:$0xff] %v1086
      %v1089 = vld [vmem:[#allocation2] sm:$0xff]
      %v1090 = vld [vmem:[#allocation2 + $0x8] sm:$0xff]
      %1093 = vrot.lane.b32.xlu0 %v1089, 9
      %v1094 = vpop.permute.xlu0 %1093
      %1095 = vrot.lane.b32.xlu0 %v1090, 9
      %v1096 = vpop.permute.xlu0 %1095
      %v1097 = vsel %vm279, %v1094, %v1096
      %1099 = vst [vmem:[#allocation3 + $0x10] sm:$0xff] %v1097
      %v1100 = vld [vmem:[#allocation2] sm:$0xff]
      %v1101 = vld [vmem:[#allocation2 + $0x8] sm:$0xff]
      %1104 = vrot.lane.b32.xlu0 %v1100, 1
      %v1105 = vpop.permute.xlu0 %1104
      %1106 = vrot.lane.b32.xlu0 %v1101, 1
      %v1107 = vpop.permute.xlu0 %1106
      %v1108 = vsel %vm291, %v1105, %v1107
      %1110 = vst [vmem:[#allocation3 + $0x18] sm:$0xff] %v1108
      %v1111 = vld [vmem:[#allocation2 + $0x8] sm:$0xff]
      %1112 = vst [vmem:[#allocation3 + $0x20] sm:$0xff] %v1111
      %v1113 = vld [vmem:[#allocation2 + $0x8] sm:$0xff]
      %v1114 = vld [vmem:[#allocation2 + $0x10] sm:$0xff]
      %1117 = vrot.lane.b32.xlu0 %v1113, 127
      %v1118 = vpop.permute.xlu0 %1117
      %1119 = vrot.lane.b32.xlu0 %v1114, 127
      %v1120 = vpop.permute.xlu0 %1119
      %v1121 = vsel %vm305, %v1118, %v1120
      %1123 = vst [vmem:[#allocation3 + $0x28] sm:$0xff] %v1121
      %v1124 = vld [vmem:[#allocation2 + $0x8] sm:$0xff]
      %v1125 = vld [vmem:[#allocation2 + $0x10] sm:$0xff]
      %1128 = vrot.lane.b32.xlu0 %v1124, 119
      %v1129 = vpop.permute.xlu0 %1128
      %1130 = vrot.lane.b32.xlu0 %v1125, 119
      %v1131 = vpop.permute.xlu0 %1130
      %v1132 = vsel %vm317, %v1129, %v1131
      %1134 = vst [vmem:[#allocation3 + $0x30] sm:$0xff] %v1132
      %v1135 = vld [vmem:[#allocation2 + $0x8] sm:$0xff]
      %v1136 = vld [vmem:[#allocation2 + $0x10] sm:$0xff]
      %1139 = vrot.lane.b32.xlu0 %v1135, 118
      %v1140 = vpop.permute.xlu0 %1139
      %1141 = vrot.lane.b32.xlu0 %v1136, 118
      %v1142 = vpop.permute.xlu0 %1141
      %v1143 = vsel %vm329, %v1140, %v1142
      %1145 = vst [vmem:[#allocation3 + $0x38] sm:$0xff] %v1143
      %v1146 = vld [vmem:[#allocation2 + $0x8] sm:$0xff]
      %v1147 = vld [vmem:[#allocation2 + $0x10] sm:$0xff]
      %1150 = vrot.lane.b32.xlu0 %v1146, 117
      %v1151 = vpop.permute.xlu0 %1150
      %1152 = vrot.lane.b32.xlu0 %v1147, 117
      %v1153 = vpop.permute.xlu0 %1152
      %v1154 = vsel %vm341, %v1151, %v1153
      %1156 = vst [vmem:[#allocation3 + $0x40] sm:$0xff] %v1154
      %s1157 = scalar_lea.vmem %s1, 24
      %v1158 = vld [vmem:[%s1157] sm:$0xf]
      %v1159 = vld [vmem:[#allocation3] sm:$0xff]
      %v1160 = vld [vmem:[#allocation3 + $0x8] sm:$0xff]
      %v1161 = vld [vmem:[#allocation3 + $0x10] sm:$0xff]
      %v1162 = vld [vmem:[#allocation3 + $0x18] sm:$0xff]
      %v1163 = vld [vmem:[#allocation3 + $0x20] sm:$0xff]
      %v1164 = vld [vmem:[#allocation3 + $0x28] sm:$0xff]
      %v1165 = vld [vmem:[#allocation3 + $0x30] sm:$0xff]
      %v1166 = vld [vmem:[#allocation3 + $0x38] sm:$0xff]
      %v1167 = vld [vmem:[#allocation3 + $0x40] sm:$0xff]
      %v1168 = vpack.c.bf16 %v1160, %v1159
      %v1169 = vpack.c.bf16 %v1162, %v1161
      %v1170 = vpack.c.bf16 %v1164, %v1163
      %v1171 = vpack.c.bf16 %v1166, %v1165
      %v1172 = vpack.c.bf16 %v1167, %v1167
      %s1173 = scalar_lea.vmem %s2, 48
      %v1174 = vld [vmem:[%s1173] sm:$0xff]
      %1176 = vset.pattern.permute.xlu0 0
      %1177 = vperm.xlu0 %1176, %v1174
      %v1178 = vpop.permute.xlu0 %1177
      %v1181 = vsel %vm366, %v1158, 0
      %v1184 = vsel %vm370, %v1172, 0
      %1186 = vmatpush.bf16.msra.mxu0 0
      %1187 = vmatpush.bf16.msra.mxu0 0
      %1188 = vmatpush.bf16.msra.mxu0 0
      %1189 = vmatpush.bf16.msra.mxu0 %v1184
      %1190 = vmatpush.bf16.msra.mxu0 %v1171
      %1191 = vmatpush.bf16.msra.mxu0 %v1170
      %1192 = vmatpush.bf16.msra.mxu0 %v1169
      %1193 = vmatpush.bf16.msra.mxu0 %v1168
      %1194 = vmatmul.bf16.gmra.mxu0 %v1181
      %v1195 = vpop.f32.mrf.mxu0
      %v1196 = vadd.f32 %v1178, %v1195
      %v1197 = vpop.f32.mrf.mxu0
      %1198 = vdwg.mxu0
      %v1199 = vmax.f32 %v1196, 0.0
      %v1200 = vmul.f32 %v1199, %v243
      %1201 = vst [vmem:[#allocation2 + $0x8] sm:$0xff] %v1200
      %v1202 = vld [vmem:[#allocation2] sm:$0xff]
      %v1203 = vld [vmem:[#allocation2 + $0x8] sm:$0xff]
      %1206 = vrot.lane.b32.xlu0 %v1202, 11
      %v1207 = vpop.permute.xlu0 %1206
      %1208 = vrot.lane.b32.xlu0 %v1203, 11
      %v1209 = vpop.permute.xlu0 %1208
      %v1210 = vsel %vm255, %v1207, %v1209
      %1212 = vst [vmem:[#allocation3] sm:$0xff] %v1210
      %v1213 = vld [vmem:[#allocation2] sm:$0xff]
      %v1214 = vld [vmem:[#allocation2 + $0x8] sm:$0xff]
      %1217 = vrot.lane.b32.xlu0 %v1213, 10
      %v1218 = vpop.permute.xlu0 %1217
      %1219 = vrot.lane.b32.xlu0 %v1214, 10
      %v1220 = vpop.permute.xlu0 %1219
      %v1221 = vsel %vm267, %v1218, %v1220
      %1223 = vst [vmem:[#allocation3 + $0x8] sm:$0xff] %v1221
      %v1224 = vld [vmem:[#allocation2] sm:$0xff]
      %v1225 = vld [vmem:[#allocation2 + $0x8] sm:$0xff]
      %1228 = vrot.lane.b32.xlu0 %v1224, 9
      %v1229 = vpop.permute.xlu0 %1228
      %1230 = vrot.lane.b32.xlu0 %v1225, 9
      %v1231 = vpop.permute.xlu0 %1230
      %v1232 = vsel %vm279, %v1229, %v1231
      %1234 = vst [vmem:[#allocation3 + $0x10] sm:$0xff] %v1232
      %v1235 = vld [vmem:[#allocation2] sm:$0xff]
      %v1236 = vld [vmem:[#allocation2 + $0x8] sm:$0xff]
      %1239 = vrot.lane.b32.xlu0 %v1235, 1
      %v1240 = vpop.permute.xlu0 %1239
      %1241 = vrot.lane.b32.xlu0 %v1236, 1
      %v1242 = vpop.permute.xlu0 %1241
      %v1243 = vsel %vm291, %v1240, %v1242
      %1245 = vst [vmem:[#allocation3 + $0x18] sm:$0xff] %v1243
      %v1246 = vld [vmem:[#allocation2 + $0x8] sm:$0xff]
      %1247 = vst [vmem:[#allocation3 + $0x20] sm:$0xff] %v1246
      %v1248 = vld [vmem:[#allocation2 + $0x8] sm:$0xff]
      %v1249 = vld [vmem:[#allocation2 + $0x10] sm:$0xff]
      %1252 = vrot.lane.b32.xlu0 %v1248, 127
      %v1253 = vpop.permute.xlu0 %1252
      %1254 = vrot.lane.b32.xlu0 %v1249, 127
      %v1255 = vpop.permute.xlu0 %1254
      %v1256 = vsel %vm305, %v1253, %v1255
      %1258 = vst [vmem:[#allocation3 + $0x28] sm:$0xff] %v1256
      %v1259 = vld [vmem:[#allocation2 + $0x8] sm:$0xff]
      %v1260 = vld [vmem:[#allocation2 + $0x10] sm:$0xff]
      %1263 = vrot.lane.b32.xlu0 %v1259, 119
      %v1264 = vpop.permute.xlu0 %1263
      %1265 = vrot.lane.b32.xlu0 %v1260, 119
      %v1266 = vpop.permute.xlu0 %1265
      %v1267 = vsel %vm317, %v1264, %v1266
      %1269 = vst [vmem:[#allocation3 + $0x30] sm:$0xff] %v1267
      %v1270 = vld [vmem:[#allocation2 + $0x8] sm:$0xff]
      %v1271 = vld [vmem:[#allocation2 + $0x10] sm:$0xff]
      %1274 = vrot.lane.b32.xlu0 %v1270, 118
      %v1275 = vpop.permute.xlu0 %1274
      %1276 = vrot.lane.b32.xlu0 %v1271, 118
      %v1277 = vpop.permute.xlu0 %1276
      %v1278 = vsel %vm329, %v1275, %v1277
      %1280 = vst [vmem:[#allocation3 + $0x38] sm:$0xff] %v1278
      %v1281 = vld [vmem:[#allocation2 + $0x8] sm:$0xff]
      %v1282 = vld [vmem:[#allocation2 + $0x10] sm:$0xff]
      %1285 = vrot.lane.b32.xlu0 %v1281, 117
      %v1286 = vpop.permute.xlu0 %1285
      %1287 = vrot.lane.b32.xlu0 %v1282, 117
      %v1288 = vpop.permute.xlu0 %1287
      %v1289 = vsel %vm341, %v1286, %v1288
      %1291 = vst [vmem:[#allocation3 + $0x40] sm:$0xff] %v1289
      %s1292 = scalar_lea.vmem %s1, 28
      %v1293 = vld [vmem:[%s1292] sm:$0xf]
      %v1294 = vld [vmem:[#allocation3] sm:$0xff]
      %v1295 = vld [vmem:[#allocation3 + $0x8] sm:$0xff]
      %v1296 = vld [vmem:[#allocation3 + $0x10] sm:$0xff]
      %v1297 = vld [vmem:[#allocation3 + $0x18] sm:$0xff]
      %v1298 = vld [vmem:[#allocation3 + $0x20] sm:$0xff]
      %v1299 = vld [vmem:[#allocation3 + $0x28] sm:$0xff]
      %v1300 = vld [vmem:[#allocation3 + $0x30] sm:$0xff]
      %v1301 = vld [vmem:[#allocation3 + $0x38] sm:$0xff]
      %v1302 = vld [vmem:[#allocation3 + $0x40] sm:$0xff]
      %v1303 = vpack.c.bf16 %v1295, %v1294
      %v1304 = vpack.c.bf16 %v1297, %v1296
      %v1305 = vpack.c.bf16 %v1299, %v1298
      %v1306 = vpack.c.bf16 %v1301, %v1300
      %v1307 = vpack.c.bf16 %v1302, %v1302
      %s1308 = scalar_lea.vmem %s2, 56
      %v1309 = vld [vmem:[%s1308] sm:$0xff]
      %1311 = vset.pattern.permute.xlu0 0
      %1312 = vperm.xlu0 %1311, %v1309
      %v1313 = vpop.permute.xlu0 %1312
      %v1316 = vsel %vm366, %v1293, 0
      %v1319 = vsel %vm370, %v1307, 0
      %1321 = vmatpush.bf16.msra.mxu0 0
      %1322 = vmatpush.bf16.msra.mxu0 0
      %1323 = vmatpush.bf16.msra.mxu0 0
      %1324 = vmatpush.bf16.msra.mxu0 %v1319
      %1325 = vmatpush.bf16.msra.mxu0 %v1306
      %1326 = vmatpush.bf16.msra.mxu0 %v1305
      %1327 = vmatpush.bf16.msra.mxu0 %v1304
      %1328 = vmatpush.bf16.msra.mxu0 %v1303
      %1329 = vmatmul.bf16.gmra.mxu0 %v1316
      %v1330 = vpop.f32.mrf.mxu0
      %v1331 = vadd.f32 %v1313, %v1330
      %v1332 = vpop.f32.mrf.mxu0
      %1333 = vdwg.mxu0
      %v1334 = vadd.f32 %v1064, %v1331
      %v1335 = vmul.f32 %v1334, %v243
      %1336 = vst [vmem:[#allocation2 + $0x8] sm:$0xff] %v1335
      %v1337 = vld [vmem:[#allocation2] sm:$0xff]
      %v1338 = vld [vmem:[#allocation2 + $0x8] sm:$0xff]
      %1341 = vrot.lane.b32.xlu0 %v1337, 11
      %v1342 = vpop.permute.xlu0 %1341
      %1343 = vrot.lane.b32.xlu0 %v1338, 11
      %v1344 = vpop.permute.xlu0 %1343
      %v1345 = vsel %vm255, %v1342, %v1344
      %1347 = vst [vmem:[#allocation3] sm:$0xff] %v1345
      %v1348 = vld [vmem:[#allocation2] sm:$0xff]
      %v1349 = vld [vmem:[#allocation2 + $0x8] sm:$0xff]
      %1352 = vrot.lane.b32.xlu0 %v1348, 10
      %v1353 = vpop.permute.xlu0 %1352
      %1354 = vrot.lane.b32.xlu0 %v1349, 10
      %v1355 = vpop.permute.xlu0 %1354
      %v1356 = vsel %vm267, %v1353, %v1355
      %1358 = vst [vmem:[#allocation3 + $0x8] sm:$0xff] %v1356
      %v1359 = vld [vmem:[#allocation2] sm:$0xff]
      %v1360 = vld [vmem:[#allocation2 + $0x8] sm:$0xff]
      %1363 = vrot.lane.b32.xlu0 %v1359, 9
      %v1364 = vpop.permute.xlu0 %1363
      %1365 = vrot.lane.b32.xlu0 %v1360, 9
      %v1366 = vpop.permute.xlu0 %1365
      %v1367 = vsel %vm279, %v1364, %v1366
      %1369 = vst [vmem:[#allocation3 + $0x10] sm:$0xff] %v1367
      %v1370 = vld [vmem:[#allocation2] sm:$0xff]
      %v1371 = vld [vmem:[#allocation2 + $0x8] sm:$0xff]
      %1374 = vrot.lane.b32.xlu0 %v1370, 1
      %v1375 = vpop.permute.xlu0 %1374
      %1376 = vrot.lane.b32.xlu0 %v1371, 1
      %v1377 = vpop.permute.xlu0 %1376
      %v1378 = vsel %vm291, %v1375, %v1377
      %1380 = vst [vmem:[#allocation3 + $0x18] sm:$0xff] %v1378
      %v1381 = vld [vmem:[#allocation2 + $0x8] sm:$0xff]
      %1382 = vst [vmem:[#allocation3 + $0x20] sm:$0xff] %v1381
      %v1383 = vld [vmem:[#allocation2 + $0x8] sm:$0xff]
      %v1384 = vld [vmem:[#allocation2 + $0x10] sm:$0xff]
      %1387 = vrot.lane.b32.xlu0 %v1383, 127
      %v1388 = vpop.permute.xlu0 %1387
      %1389 = vrot.lane.b32.xlu0 %v1384, 127
      %v1390 = vpop.permute.xlu0 %1389
      %v1391 = vsel %vm305, %v1388, %v1390
      %1393 = vst [vmem:[#allocation3 + $0x28] sm:$0xff] %v1391
      %v1394 = vld [vmem:[#allocation2 + $0x8] sm:$0xff]
      %v1395 = vld [vmem:[#allocation2 + $0x10] sm:$0xff]
      %1398 = vrot.lane.b32.xlu0 %v1394, 119
      %v1399 = vpop.permute.xlu0 %1398
      %1400 = vrot.lane.b32.xlu0 %v1395, 119
      %v1401 = vpop.permute.xlu0 %1400
      %v1402 = vsel %vm317, %v1399, %v1401
      %1404 = vst [vmem:[#allocation3 + $0x30] sm:$0xff] %v1402
      %v1405 = vld [vmem:[#allocation2 + $0x8] sm:$0xff]
      %v1406 = vld [vmem:[#allocation2 + $0x10] sm:$0xff]
      %1409 = vrot.lane.b32.xlu0 %v1405, 118
      %v1410 = vpop.permute.xlu0 %1409
      %1411 = vrot.lane.b32.xlu0 %v1406, 118
      %v1412 = vpop.permute.xlu0 %1411
      %v1413 = vsel %vm329, %v1410, %v1412
      %1415 = vst [vmem:[#allocation3 + $0x38] sm:$0xff] %v1413
      %v1416 = vld [vmem:[#allocation2 + $0x8] sm:$0xff]
      %v1417 = vld [vmem:[#allocation2 + $0x10] sm:$0xff]
      %1420 = vrot.lane.b32.xlu0 %v1416, 117
      %v1421 = vpop.permute.xlu0 %1420
      %1422 = vrot.lane.b32.xlu0 %v1417, 117
      %v1423 = vpop.permute.xlu0 %1422
      %v1424 = vsel %vm341, %v1421, %v1423
      %1426 = vst [vmem:[#allocation3 + $0x40] sm:$0xff] %v1424
      %s1427 = scalar_lea.vmem %s1, 32
      %v1428 = vld [vmem:[%s1427] sm:$0xf]
      %v1429 = vld [vmem:[#allocation3] sm:$0xff]
      %v1430 = vld [vmem:[#allocation3 + $0x8] sm:$0xff]
      %v1431 = vld [vmem:[#allocation3 + $0x10] sm:$0xff]
      %v1432 = vld [vmem:[#allocation3 + $0x18] sm:$0xff]
      %v1433 = vld [vmem:[#allocation3 + $0x20] sm:$0xff]
      %v1434 = vld [vmem:[#allocation3 + $0x28] sm:$0xff]
      %v1435 = vld [vmem:[#allocation3 + $0x30] sm:$0xff]
      %v1436 = vld [vmem:[#allocation3 + $0x38] sm:$0xff]
      %v1437 = vld [vmem:[#allocation3 + $0x40] sm:$0xff]
      %v1438 = vpack.c.bf16 %v1430, %v1429
      %v1439 = vpack.c.bf16 %v1432, %v1431
      %v1440 = vpack.c.bf16 %v1434, %v1433
      %v1441 = vpack.c.bf16 %v1436, %v1435
      %v1442 = vpack.c.bf16 %v1437, %v1437
      %s1443 = scalar_lea.vmem %s2, 64
      %v1444 = vld [vmem:[%s1443] sm:$0xff]
      %1446 = vset.pattern.permute.xlu0 0
      %1447 = vperm.xlu0 %1446, %v1444
      %v1448 = vpop.permute.xlu0 %1447
      %v1451 = vsel %vm366, %v1428, 0
      %v1454 = vsel %vm370, %v1442, 0
      %1456 = vmatpush.bf16.msra.mxu0 0
      %1457 = vmatpush.bf16.msra.mxu0 0
      %1458 = vmatpush.bf16.msra.mxu0 0
      %1459 = vmatpush.bf16.msra.mxu0 %v1454
      %1460 = vmatpush.bf16.msra.mxu0 %v1441
      %1461 = vmatpush.bf16.msra.mxu0 %v1440
      %1462 = vmatpush.bf16.msra.mxu0 %v1439
      %1463 = vmatpush.bf16.msra.mxu0 %v1438
      %1464 = vmatmul.bf16.gmra.mxu0 %v1451
      %v1465 = vpop.f32.mrf.mxu0
      %v1466 = vadd.f32 %v1448, %v1465
      %v1467 = vpop.f32.mrf.mxu0
      %1468 = vdwg.mxu0
      %v1469 = vmax.f32 %v1466, 0.0
      %v1470 = vmul.f32 %v1469, %v243
      %1471 = vst [vmem:[#allocation2 + $0x8] sm:$0xff] %v1470
      %v1472 = vld [vmem:[#allocation2] sm:$0xff]
      %v1473 = vld [vmem:[#allocation2 + $0x8] sm:$0xff]
      %1476 = vrot.lane.b32.xlu0 %v1472, 11
      %v1477 = vpop.permute.xlu0 %1476
      %1478 = vrot.lane.b32.xlu0 %v1473, 11
      %v1479 = vpop.permute.xlu0 %1478
      %v1480 = vsel %vm255, %v1477, %v1479
      %1482 = vst [vmem:[#allocation3] sm:$0xff] %v1480
      %v1483 = vld [vmem:[#allocation2] sm:$0xff]
      %v1484 = vld [vmem:[#allocation2 + $0x8] sm:$0xff]
      %1487 = vrot.lane.b32.xlu0 %v1483, 10
      %v1488 = vpop.permute.xlu0 %1487
      %1489 = vrot.lane.b32.xlu0 %v1484, 10
      %v1490 = vpop.permute.xlu0 %1489
      %v1491 = vsel %vm267, %v1488, %v1490
      %1493 = vst [vmem:[#allocation3 + $0x8] sm:$0xff] %v1491
      %v1494 = vld [vmem:[#allocation2] sm:$0xff]
      %v1495 = vld [vmem:[#allocation2 + $0x8] sm:$0xff]
      %1498 = vrot.lane.b32.xlu0 %v1494, 9
      %v1499 = vpop.permute.xlu0 %1498
      %1500 = vrot.lane.b32.xlu0 %v1495, 9
      %v1501 = vpop.permute.xlu0 %1500
      %v1502 = vsel %vm279, %v1499, %v1501
      %1504 = vst [vmem:[#allocation3 + $0x10] sm:$0xff] %v1502
      %v1505 = vld [vmem:[#allocation2] sm:$0xff]
      %v1506 = vld [vmem:[#allocation2 + $0x8] sm:$0xff]
      %1509 = vrot.lane.b32.xlu0 %v1505, 1
      %v1510 = vpop.permute.xlu0 %1509
      %1511 = vrot.lane.b32.xlu0 %v1506, 1
      %v1512 = vpop.permute.xlu0 %1511
      %v1513 = vsel %vm291, %v1510, %v1512
      %1515 = vst [vmem:[#allocation3 + $0x18] sm:$0xff] %v1513
      %v1516 = vld [vmem:[#allocation2 + $0x8] sm:$0xff]
      %1517 = vst [vmem:[#allocation3 + $0x20] sm:$0xff] %v1516
      %v1518 = vld [vmem:[#allocation2 + $0x8] sm:$0xff]
      %v1519 = vld [vmem:[#allocation2 + $0x10] sm:$0xff]
      %1522 = vrot.lane.b32.xlu0 %v1518, 127
      %v1523 = vpop.permute.xlu0 %1522
      %1524 = vrot.lane.b32.xlu0 %v1519, 127
      %v1525 = vpop.permute.xlu0 %1524
      %v1526 = vsel %vm305, %v1523, %v1525
      %1528 = vst [vmem:[#allocation3 + $0x28] sm:$0xff] %v1526
      %v1529 = vld [vmem:[#allocation2 + $0x8] sm:$0xff]
      %v1530 = vld [vmem:[#allocation2 + $0x10] sm:$0xff]
      %1533 = vrot.lane.b32.xlu0 %v1529, 119
      %v1534 = vpop.permute.xlu0 %1533
      %1535 = vrot.lane.b32.xlu0 %v1530, 119
      %v1536 = vpop.permute.xlu0 %1535
      %v1537 = vsel %vm317, %v1534, %v1536
      %1539 = vst [vmem:[#allocation3 + $0x30] sm:$0xff] %v1537
      %v1540 = vld [vmem:[#allocation2 + $0x8] sm:$0xff]
      %v1541 = vld [vmem:[#allocation2 + $0x10] sm:$0xff]
      %1544 = vrot.lane.b32.xlu0 %v1540, 118
      %v1545 = vpop.permute.xlu0 %1544
      %1546 = vrot.lane.b32.xlu0 %v1541, 118
      %v1547 = vpop.permute.xlu0 %1546
      %v1548 = vsel %vm329, %v1545, %v1547
      %1550 = vst [vmem:[#allocation3 + $0x38] sm:$0xff] %v1548
      %v1551 = vld [vmem:[#allocation2 + $0x8] sm:$0xff]
      %v1552 = vld [vmem:[#allocation2 + $0x10] sm:$0xff]
      %1555 = vrot.lane.b32.xlu0 %v1551, 117
      %v1556 = vpop.permute.xlu0 %1555
      %1557 = vrot.lane.b32.xlu0 %v1552, 117
      %v1558 = vpop.permute.xlu0 %1557
      %v1559 = vsel %vm341, %v1556, %v1558
      %1561 = vst [vmem:[#allocation3 + $0x40] sm:$0xff] %v1559
      %s1562 = scalar_lea.vmem %s1, 36
      %v1563 = vld [vmem:[%s1562] sm:$0xf]
      %v1564 = vld [vmem:[#allocation3] sm:$0xff]
      %v1565 = vld [vmem:[#allocation3 + $0x8] sm:$0xff]
      %v1566 = vld [vmem:[#allocation3 + $0x10] sm:$0xff]
      %v1567 = vld [vmem:[#allocation3 + $0x18] sm:$0xff]
      %v1568 = vld [vmem:[#allocation3 + $0x20] sm:$0xff]
      %v1569 = vld [vmem:[#allocation3 + $0x28] sm:$0xff]
      %v1570 = vld [vmem:[#allocation3 + $0x30] sm:$0xff]
      %v1571 = vld [vmem:[#allocation3 + $0x38] sm:$0xff]
      %v1572 = vld [vmem:[#allocation3 + $0x40] sm:$0xff]
      %v1573 = vpack.c.bf16 %v1565, %v1564
      %v1574 = vpack.c.bf16 %v1567, %v1566
      %v1575 = vpack.c.bf16 %v1569, %v1568
      %v1576 = vpack.c.bf16 %v1571, %v1570
      %v1577 = vpack.c.bf16 %v1572, %v1572
      %s1578 = scalar_lea.vmem %s2, 72
      %v1579 = vld [vmem:[%s1578] sm:$0xff]
      %1581 = vset.pattern.permute.xlu0 0
      %1582 = vperm.xlu0 %1581, %v1579
      %v1583 = vpop.permute.xlu0 %1582
      %v1586 = vsel %vm366, %v1563, 0
      %v1589 = vsel %vm370, %v1577, 0
      %1591 = vmatpush.bf16.msra.mxu0 0
      %1592 = vmatpush.bf16.msra.mxu0 0
      %1593 = vmatpush.bf16.msra.mxu0 0
      %1594 = vmatpush.bf16.msra.mxu0 %v1589
      %1595 = vmatpush.bf16.msra.mxu0 %v1576
      %1596 = vmatpush.bf16.msra.mxu0 %v1575
      %1597 = vmatpush.bf16.msra.mxu0 %v1574
      %1598 = vmatpush.bf16.msra.mxu0 %v1573
      %1599 = vmatmul.bf16.gmra.mxu0 %v1586
      %v1600 = vpop.f32.mrf.mxu0
      %v1601 = vadd.f32 %v1583, %v1600
      %v1602 = vpop.f32.mrf.mxu0
      %1603 = vdwg.mxu0
      %v1604 = vadd.f32 %v1334, %v1601
      %1605 = vst [vmem:[%s236] sm:$0xff] %v1604
      %p1606 = scmp.lt.s32.totalorder %s16, 1
      %s1607 = scalar_select %p1606, %s16, 1
      %s1608 = smul.addr %s1607, 8
      %s1609 = scalar_lea.vmem %s5, %s1608
      // Predicated region
      $region41: #{predeblur_forward.13} parent=39 // pred_check
        %p1610 = pneg %p149
      $region42: #{predeblur_forward.13} parent=39 // pred_check_branch
        %1612 = sbr.rel (%p1610) target = $region44
      $region43: #{predeblur_forward.13} parent=39 // pred_region
        _
      $region44: #{predeblur_forward.13} parent=39 // pred_fallthru
        _
    $region40: #{predeblur_forward.13} parent=5 // pred_fallthru
      _
    %p1613 = scmp.le.s32.totalorder 2, %s11
    // Predicated region
    $region45: #{predeblur_forward.13} parent=5 // pred_check
      %p1614 = pneg %p1613
    $region46: #{predeblur_forward.13} parent=5 // pred_check_branch
      %1616 = sbr.rel (%p1614) target = $region48
    $region47: #{predeblur_forward.13} parent=5 // pred_region
      %s1617 = ssub.s32 %s11, 2
      // Predicated region
      $region49: #{predeblur_forward.13} parent=47 // pred_check
        %p1618 = pneg %p155
      $region50: #{predeblur_forward.13} parent=47 // pred_check_branch
        %1620 = sbr.rel (%p1618) target = $region52
      $region51: #{predeblur_forward.13} parent=47 // pred_region
        %p1621 = scmp.lt.s32.totalorder %s17, 1
        %s1622 = scalar_select %p1621, %s17, 1
        %s1623 = smul.addr %s1622, 8
        %s1624 = scalar_lea.vmem %s5, %s1623
      $region52: #{predeblur_forward.13} parent=47 // pred_fallthru
        _
    $region48: #{predeblur_forward.13} parent=5 // pred_fallthru
      _
  $region6: #{predeblur_forward.13} parent=0 // loop_footer
    %s15 = sadd.s32 1, %s11
  $region7: #{predeblur_forward.13} parent=0 // loop_footer_branch
    %10 = sbr.rel target = $region3
  $region8: #{predeblur_forward.13} parent=0 // loop_exit
    _

</llo_original>
